<compile_context>
chip_gen: v5e
topology: v5e:2x2
jax: 0.10.0
libtpu: 0.0.40
codegen_flags: <defaults>
</compile_context>

<pallas_src>
import functools

import jax
import jax.numpy as jnp
from jax import lax
from jax.experimental import pallas as pl
from jax.experimental.pallas import tpu as pltpu


# ---------------------------------------------------------------------------
# Conv_PDC taps: 3x3 weight with zero centre tap, 1x1 diff conv folded into the
# centre tap as -theta * kernel_diff (exact rewrite of the PyTorch forward).
# ---------------------------------------------------------------------------
def build_fused_pdc_weights(conv_weight_18, theta):
    """(C_out, C_in, 1, 8) PyTorch Conv_PDC weight -> (3, 3, C_in, C_out) fused taps."""
    w8 = conv_weight_18[:, :, 0, :]                      # (C_out, C_in, 8)
    kernel_diff = jnp.sum(w8, axis=-1)                   # (C_out, C_in)
    center = -theta * kernel_diff                        # centre tap absorbs -theta*conv1x1
    taps = jnp.stack(
        [w8[..., 0], w8[..., 1], w8[..., 2],
         w8[..., 3], center,     w8[..., 4],
         w8[..., 5], w8[..., 6], w8[..., 7]], axis=0)    # (9, C_out, C_in), row-major (kh,kw)
    return jnp.transpose(taps, (0, 2, 1)).reshape(3, 3, w8.shape[1], w8.shape[0])


# ---------------------------------------------------------------------------
# Kernel 1: fused K+V PDC conv with fc_k / fc_v folded into the taps.
# ---------------------------------------------------------------------------
def conv_kv_kernel(x_ref, w_ref, b_ref, o_ref, *, height, width):
    # x_ref : (1, H+2, W+2, C_in) padded image (f32)
    # w_ref : (9*C_in, F_out)     fused taps composed with fc_k|fc_v (bf16)
    # b_ref : (1, F_out)          concat(bk, bv) (f32)
    # o_ref : (1, H*W, F_out)     lane-dense f32 output (F_out = 2*heads*d_k = 128)
    c_in = x_ref.shape[-1]
    cols = []
    for kh in range(3):
        for kw in range(3):
            tap = x_ref[0, kh:kh + height, kw:kw + width, :]     # static-offset slice
            cols.append(tap.reshape(height * width, c_in))
    # In-VMEM im2col: single deep matmul (K = 9*C_in) instead of 9 shallow ones.
    patch = jnp.concatenate(cols, axis=-1).astype(jnp.bfloat16)  # (S, 9*C_in)
    acc = jnp.dot(patch, w_ref[...], preferred_element_type=jnp.float32)
    o_ref[0] = (acc + b_ref[...]).astype(o_ref.dtype)


def conv_kv_forward(x_nhwc, wk_conv, wv_conv, wk, wv, bk, bv, *, theta):
    """Fused (Conv_PDC -> fc_k) || (Conv_PDC -> fc_v).  Returns (N, H*W, f_k+f_v) f32."""
    N, H, W, C_in = x_nhwc.shape
    f_k, f_v = wk.shape[0], wv.shape[0]
    F_out = f_k + f_v

    taps_k = build_fused_pdc_weights(wk_conv, theta)             # (3,3,C_in,C)
    taps_v = build_fused_pdc_weights(wv_conv, theta)
    # Compose each tap with the following nn.Linear and concatenate K|V outputs.
    w_fold = jnp.concatenate(
        [jnp.einsum("hwio,fo->hwif", taps_k, wk),
         jnp.einsum("hwio,fo->hwif", taps_v, wv)], axis=-1)      # (3,3,C_in,F_out)
    w2d = w_fold.reshape(9 * C_in, F_out).astype(jnp.bfloat16)
    bias = jnp.concatenate([bk, bv]).reshape(1, F_out).astype(jnp.float32)

    x_pad = jnp.pad(x_nhwc, ((0, 0), (1, 1), (1, 1), (0, 0))).astype(jnp.float32)
    Hp, Wp = H + 2, W + 2

    return pl.pallas_call(
        functools.partial(conv_kv_kernel, height=H, width=W),
        out_shape=jax.ShapeDtypeStruct((N, H * W, F_out), jnp.float32),
        grid_spec=pl.GridSpec(
            grid=(N,),
            in_specs=[
                pl.BlockSpec((1, Hp, Wp, C_in), lambda n: (n, 0, 0, 0)),  # image (streamed once)
                pl.BlockSpec((9 * C_in, F_out), lambda n: (0, 0)),        # resident fused weights
                pl.BlockSpec((1, F_out), lambda n: (0, 0)),               # resident bias
            ],
            out_specs=pl.BlockSpec((1, H * W, F_out), lambda n: (n, 0, 0)),
        ),
        compiler_params=pltpu.CompilerParams(dimension_semantics=("parallel",)),
    )(x_pad, w2d, bias)


# ---------------------------------------------------------------------------
# Kernel 2: fc_q (layernorm + scale folded) + softmax(qk^T + B) @ v + fc_o + residual.
# ---------------------------------------------------------------------------
def attention_kernel(xq_ref, kv_ref, resid_ref, wq_ref, bq_ref, bias_ref,
                     wo_ref, bo_ref, o_ref, *, heads, d_k, d_v):
    f_k = heads * d_k
    # q for all heads; global layer_norm and d_k^-0.5 already folded into wq/bq.
    q = jnp.dot(xq_ref[0].astype(jnp.bfloat16), wq_ref[...],
                preferred_element_type=jnp.float32) + bq_ref[...]          # (S, heads*d_k)
    kv = kv_ref[0]                                                         # (S, f_k+f_v) f32
    k_all = kv[:, :f_k].astype(jnp.bfloat16)
    v_all = kv[:, f_k:].astype(jnp.bfloat16)

    head_outs = []
    for hd in range(heads):                                                # static unroll
        q_h = q[:, hd * d_k:(hd + 1) * d_k].astype(jnp.bfloat16)
        k_h = k_all[:, hd * d_k:(hd + 1) * d_k]
        v_h = v_all[:, hd * d_v:(hd + 1) * d_v]
        s = lax.dot_general(q_h, k_h, (((1,), (1,)), ((), ())),
                            preferred_element_type=jnp.float32)            # (S, S_kv)
        s = s + bias_ref[0, hd]
        m = jnp.max(s, axis=-1, keepdims=True)
        p = jnp.exp(s - m)
        l = jnp.sum(p, axis=-1, keepdims=True)
        p = p * pl.reciprocal(l, approx=True)                              # EUP divide
        head_outs.append(jnp.dot(p.astype(jnp.bfloat16), v_h,
                                 preferred_element_type=jnp.float32))      # (S, d_v)

    res = jnp.concatenate(head_outs, axis=-1).astype(jnp.bfloat16)         # (S, heads*d_v)
    out = jnp.dot(res, wo_ref[...], preferred_element_type=jnp.float32)    # fc_o
    o_ref[0] = (out + bo_ref[...] + resid_ref[0]).astype(o_ref.dtype)      # + residual


def attention_fused(x_tok, kv, resid, wq_eff, bq_eff, rel_bias, wo_t, bo,
                    *, heads, d_k, d_v):
    b, S, c = x_tok.shape
    f_k = heads * d_k
    f_v = heads * d_v
    S_kv = rel_bias.shape[-1]
    return pl.pallas_call(
        functools.partial(attention_kernel, heads=heads, d_k=d_k, d_v=d_v),
        out_shape=jax.ShapeDtypeStruct((b, S, c), jnp.float32),
        grid_spec=pl.GridSpec(
            grid=(b,),
            in_specs=[
                pl.BlockSpec((1, S, c), lambda i: (i, 0, 0)),                 # x (token-major)
                pl.BlockSpec((1, S, f_k + f_v), lambda i: (i, 0, 0)),         # fused k|v
                pl.BlockSpec((1, S, c), lambda i: (i, 0, 0)),                 # residual
                pl.BlockSpec((c, f_k), lambda i: (0, 0)),                     # wq_eff (resident)
                pl.BlockSpec((1, f_k), lambda i: (0, 0)),                     # bq_eff
                pl.BlockSpec((1, heads, S, S_kv), lambda i: (0, 0, 0, 0)),    # B (resident)
                pl.BlockSpec((f_v, c), lambda i: (0, 0)),                     # wo^T (resident)
                pl.BlockSpec((1, c), lambda i: (0, 0)),                       # bo
            ],
            out_specs=pl.BlockSpec((1, S, c), lambda i: (i, 0, 0)),
        ),
        compiler_params=pltpu.CompilerParams(dimension_semantics=("parallel",)),
    )(x_tok, kv, resid, wq_eff, bq_eff, rel_bias, wo_t, bo)


# ---------------------------------------------------------------------------
# Full EnhanceMHSA forward (2 Pallas kernels + thin trace-time glue)
# ---------------------------------------------------------------------------
def enhance_mhsa_forward(x, params, *, heads, d_k, d_v, theta=0.5):
    # TODO(synk): stride > 1 (down-sampled K/V path) not implemented; module used with stride=1.
    b, c, h, w = x.shape
    S = h * w
    scale = d_k ** (-0.5)

    # Token-major (b, S, c) view == x.view(b,c,hw).permute(0,2,1) == NHWC flatten.
    x_nhwc = jnp.transpose(x, (0, 2, 3, 1))
    x_tok = x_nhwc.reshape(b, S, c)

    # F.layer_norm(x_tok, (b, h*w, c)): a single global mean/var, no affine.  mu/rstd are
    # scalars, so the normalization and the d_k^-0.5 scale fold into fc_q's weight/bias.
    mu = jnp.mean(x_tok)
    var = jnp.mean(jnp.square(x_tok - mu))
    rstd = lax.rsqrt(var + 1e-5)
    wq_eff = (jnp.transpose(params["wq"]) * (rstd * scale)).astype(jnp.bfloat16)   # (c, h*d_k)
    bq_eff = ((params["bq"] - mu * rstd * jnp.sum(params["wq"], axis=1)) * scale)
    bq_eff = bq_eff.reshape(1, heads * d_k).astype(jnp.float32)

    # K and V paths: one fused PDC conv with fc_k / fc_v folded into its taps.
    kv = conv_kv_forward(x_nhwc, params["wk_conv"], params["wv_conv"],
                         params["wk"], params["wv"], params["bk"], params["bv"],
                         theta=theta)                                               # (b, S, 128)

    wo_t = jnp.transpose(params["wo"]).astype(jnp.bfloat16)                         # (h*d_v, c)
    bo = params["bo"].reshape(1, c).astype(jnp.float32)
    # PyTorch's final .view(b, c, h, w) is a raw reinterpret, so the residual is x raw-reshaped.
    resid = x.reshape(b, S, c)

    out_flat = attention_fused(x_tok, kv, resid, wq_eff, bq_eff, params["B"],
                               wo_t, bo, heads=heads, d_k=d_k, d_v=d_v)             # (b, S, c)
    return out_flat.reshape(b, c, h, w)


# ---------------------------------------------------------------------------
# Pure-JAX f32 reference mirroring the PyTorch forward exactly
# ---------------------------------------------------------------------------
def conv_pdc_reference(x_nchw, conv_weight_18, theta):
    C_out, C_in = conv_weight_18.shape[0], conv_weight_18.shape[1]
    w8 = conv_weight_18[:, :, 0, :]
    zeros = jnp.zeros((C_out, C_in), conv_weight_18.dtype)
    w3x3 = jnp.stack(
        [w8[..., 0], w8[..., 1], w8[..., 2],
         w8[..., 3], zeros,      w8[..., 4],
         w8[..., 5], w8[..., 6], w8[..., 7]], axis=-1).reshape(C_out, C_in, 3, 3)
    kernel_diff = jnp.sum(w8, axis=-1)[:, :, None, None]
    out_normal = lax.conv_general_dilated(
        x_nchw, w3x3, (1, 1), ((1, 1), (1, 1)),
        dimension_numbers=("NCHW", "OIHW", "NCHW"))
    out_diff = lax.conv_general_dilated(
        x_nchw, kernel_diff, (1, 1), ((0, 0), (0, 0)),
        dimension_numbers=("NCHW", "OIHW", "NCHW"))
    return out_normal - theta * out_diff


def enhance_mhsa_reference(x, params, *, heads, d_k, d_v, theta=0.5):
    b, c, h, w = x.shape
    S = h * w
    xr = jnp.transpose(x.reshape(b, c, S), (0, 2, 1))
    mu = jnp.mean(xr)
    var = jnp.mean(jnp.square(xr - mu))
    xn = (xr - mu) / jnp.sqrt(var + 1e-5)
    q = (xn @ params["wq"].T + params["bq"]).reshape(b, S, heads, d_k).transpose(0, 2, 1, 3)
    kc = conv_pdc_reference(x, params["wk_conv"], theta)
    kc = jnp.transpose(kc.reshape(b, c, S), (0, 2, 1))
    k = (kc @ params["wk"].T + params["bk"]).reshape(b, S, heads, d_k).transpose(0, 2, 1, 3)
    vc = conv_pdc_reference(x, params["wv_conv"], theta)
    vc = jnp.transpose(vc.reshape(b, c, S), (0, 2, 1))
    v = (vc @ params["wv"].T + params["bv"]).reshape(b, S, heads, d_v).transpose(0, 2, 1, 3)
    attn = jnp.einsum("bhid,bhjd->bhij", q, k) * (d_k ** (-0.5)) + params["B"]
    attn = jax.nn.softmax(attn, axis=-1)
    res = jnp.einsum("bhij,bhjd->bhid", attn, v).transpose(0, 2, 1, 3).reshape(b, S, heads * d_v)
    out = (res @ params["wo"].T + params["bo"]).reshape(b, c, h, w)
    return out + x


if __name__ == "__main__":
    key = jax.random.PRNGKey(0)
    keys = jax.random.split(key, 16)

    b, channels, h, w = 2, 32, 16, 16
    heads, d_k, d_v, stride = 4, 16, 16, 1   # d_k == d_v required by fc_o in the module
    theta = 0.5
    S = h * w

    def rnd(k, shape, scale=0.1):
        return jax.random.normal(k, shape, dtype=jnp.float32) * scale

    x = jax.random.normal(keys[0], (b, channels, h, w), dtype=jnp.float32)
    params = {
        "wk_conv": rnd(keys[1], (channels, channels, 1, 8)),   # Conv_PDC (1,8) weight
        "wv_conv": rnd(keys[2], (channels, channels, 1, 8)),
        "wq": rnd(keys[3], (heads * d_k, channels)), "bq": rnd(keys[4], (heads * d_k,)),
        "wk": rnd(keys[5], (heads * d_k, channels)), "bk": rnd(keys[6], (heads * d_k,)),
        "wv": rnd(keys[7], (heads * d_v, channels)), "bv": rnd(keys[8], (heads * d_v,)),
        "wo": rnd(keys[9], (channels, heads * d_k)), "bo": rnd(keys[10], (channels,)),
        "B":  rnd(keys[11], (1, heads, S, (h // stride) * (w // stride))),
    }

    fwd = jax.jit(functools.partial(enhance_mhsa_forward,
                                    heads=heads, d_k=d_k, d_v=d_v, theta=theta))
    out = jax.block_until_ready(fwd(x, params))

    ref = jax.block_until_ready(
        enhance_mhsa_reference(x, params, heads=heads, d_k=d_k, d_v=d_v, theta=theta))

    assert out.shape == (b, channels, h, w), out.shape
    max_err = float(jnp.max(jnp.abs(out - ref)))
    # bf16 MXU operands (f32 accumulation) everywhere + approx softmax reciprocal.
    assert jnp.allclose(out, ref, atol=3e-2, rtol=3e-2), f"max_err={max_err}"
    print("KERNEL_OK")
</pallas_src>

<mosaic_0001>
module attributes {stable_mosaic.version = 11 : i64} {
  func.func @conv_kv_kernel(%arg0: i32, %arg1: memref<1x18x18x32xf32, #tpu.memory_space<vmem>>, %arg2: memref<288x128xbf16, #tpu.memory_space<vmem>>, %arg3: memref<1x128xf32, #tpu.memory_space<vmem>>, %arg4: memref<1x256x128xf32, #tpu.memory_space<vmem>>) attributes {dimension_semantics = [#tpu.dimension_semantics<parallel>], iteration_bounds = array<i64: 2>, scalar_prefetch = 0 : i64, scratch_operands = 0 : i64, tpu.core_type = #tpu.core_type<tc>, window_params = [{transform_indices = @transform_0, window_bounds = array<i64: 1, 18, 18, 32>}, {pipeline_mode = #tpu.pipeline_mode<synchronous>, transform_indices = @transform_1, window_bounds = array<i64: 288, 128>}, {pipeline_mode = #tpu.pipeline_mode<synchronous>, transform_indices = @transform_2, window_bounds = array<i64: 1, 128>}, {transform_indices = @transform_3, window_bounds = array<i64: 1, 256, 128>}]} {
    %c0 = arith.constant 0 : index
    %c0_0 = arith.constant 0 : index
    %c0_1 = arith.constant 0 : index
    %c0_2 = arith.constant 0 : index
    %0 = vector.load %arg1[%c0, %c0_0, %c0_1, %c0_2] : memref<1x18x18x32xf32, #tpu.memory_space<vmem>>, vector<1x16x16x32xf32>
    %1 = vector.shape_cast %0 : vector<1x16x16x32xf32> to vector<16x16x32xf32>
    %2 = vector.shape_cast %1 : vector<16x16x32xf32> to vector<256x32xf32>
    %c0_3 = arith.constant 0 : index
    %c0_4 = arith.constant 0 : index
    %c1 = arith.constant 1 : index
    %c0_5 = arith.constant 0 : index
    %3 = vector.load %arg1[%c0_3, %c0_4, %c1, %c0_5] : memref<1x18x18x32xf32, #tpu.memory_space<vmem>>, vector<1x16x16x32xf32>
    %4 = vector.shape_cast %3 : vector<1x16x16x32xf32> to vector<16x16x32xf32>
    %5 = vector.shape_cast %4 : vector<16x16x32xf32> to vector<256x32xf32>
    %c0_6 = arith.constant 0 : index
    %c0_7 = arith.constant 0 : index
    %c2 = arith.constant 2 : index
    %c0_8 = arith.constant 0 : index
    %6 = vector.load %arg1[%c0_6, %c0_7, %c2, %c0_8] : memref<1x18x18x32xf32, #tpu.memory_space<vmem>>, vector<1x16x16x32xf32>
    %7 = vector.shape_cast %6 : vector<1x16x16x32xf32> to vector<16x16x32xf32>
    %8 = vector.shape_cast %7 : vector<16x16x32xf32> to vector<256x32xf32>
    %c0_9 = arith.constant 0 : index
    %c1_10 = arith.constant 1 : index
    %c0_11 = arith.constant 0 : index
    %c0_12 = arith.constant 0 : index
    %9 = vector.load %arg1[%c0_9, %c1_10, %c0_11, %c0_12] : memref<1x18x18x32xf32, #tpu.memory_space<vmem>>, vector<1x16x16x32xf32>
    %10 = vector.shape_cast %9 : vector<1x16x16x32xf32> to vector<16x16x32xf32>
    %11 = vector.shape_cast %10 : vector<16x16x32xf32> to vector<256x32xf32>
    %c0_13 = arith.constant 0 : index
    %c1_14 = arith.constant 1 : index
    %c1_15 = arith.constant 1 : index
    %c0_16 = arith.constant 0 : index
    %12 = vector.load %arg1[%c0_13, %c1_14, %c1_15, %c0_16] : memref<1x18x18x32xf32, #tpu.memory_space<vmem>>, vector<1x16x16x32xf32>
    %13 = vector.shape_cast %12 : vector<1x16x16x32xf32> to vector<16x16x32xf32>
    %14 = vector.shape_cast %13 : vector<16x16x32xf32> to vector<256x32xf32>
    %c0_17 = arith.constant 0 : index
    %c1_18 = arith.constant 1 : index
    %c2_19 = arith.constant 2 : index
    %c0_20 = arith.constant 0 : index
    %15 = vector.load %arg1[%c0_17, %c1_18, %c2_19, %c0_20] : memref<1x18x18x32xf32, #tpu.memory_space<vmem>>, vector<1x16x16x32xf32>
    %16 = vector.shape_cast %15 : vector<1x16x16x32xf32> to vector<16x16x32xf32>
    %17 = vector.shape_cast %16 : vector<16x16x32xf32> to vector<256x32xf32>
    %c0_21 = arith.constant 0 : index
    %c2_22 = arith.constant 2 : index
    %c0_23 = arith.constant 0 : index
    %c0_24 = arith.constant 0 : index
    %18 = vector.load %arg1[%c0_21, %c2_22, %c0_23, %c0_24] : memref<1x18x18x32xf32, #tpu.memory_space<vmem>>, vector<1x16x16x32xf32>
    %19 = vector.shape_cast %18 : vector<1x16x16x32xf32> to vector<16x16x32xf32>
    %20 = vector.shape_cast %19 : vector<16x16x32xf32> to vector<256x32xf32>
    %c0_25 = arith.constant 0 : index
    %c2_26 = arith.constant 2 : index
    %c1_27 = arith.constant 1 : index
    %c0_28 = arith.constant 0 : index
    %21 = vector.load %arg1[%c0_25, %c2_26, %c1_27, %c0_28] : memref<1x18x18x32xf32, #tpu.memory_space<vmem>>, vector<1x16x16x32xf32>
    %22 = vector.shape_cast %21 : vector<1x16x16x32xf32> to vector<16x16x32xf32>
    %23 = vector.shape_cast %22 : vector<16x16x32xf32> to vector<256x32xf32>
    %c0_29 = arith.constant 0 : index
    %c2_30 = arith.constant 2 : index
    %c2_31 = arith.constant 2 : index
    %c0_32 = arith.constant 0 : index
    %24 = vector.load %arg1[%c0_29, %c2_30, %c2_31, %c0_32] : memref<1x18x18x32xf32, #tpu.memory_space<vmem>>, vector<1x16x16x32xf32>
    %25 = vector.shape_cast %24 : vector<1x16x16x32xf32> to vector<16x16x32xf32>
    %26 = vector.shape_cast %25 : vector<16x16x32xf32> to vector<256x32xf32>
    %27 = tpu.concatenate %2, %5, %8, %11, %14, %17, %20, %23, %26 in 1 : vector<256x32xf32>, vector<256x32xf32>, vector<256x32xf32>, vector<256x32xf32>, vector<256x32xf32>, vector<256x32xf32>, vector<256x32xf32>, vector<256x32xf32>, vector<256x32xf32> -> vector<256x288xf32>
    %28 = arith.truncf %27 : vector<256x288xf32> to vector<256x288xbf16>
    %c0_33 = arith.constant 0 : index
    %c0_34 = arith.constant 0 : index
    %29 = vector.load %arg2[%c0_33, %c0_34] : memref<288x128xbf16, #tpu.memory_space<vmem>>, vector<288x128xbf16>
    %cst = arith.constant dense<0.000000e+00> : vector<256x128xf32>
    %30 = tpu.matmul %28, %29, %cst {dimension_numbers = #tpu.dot_dimension_numbers<[1], [0], [0], [1], [0, 0, 1, 1], [], []>} : vector<256x288xbf16>, vector<288x128xbf16>, vector<256x128xf32> -> vector<256x128xf32>
    %c0_35 = arith.constant 0 : index
    %c0_36 = arith.constant 0 : index
    %31 = vector.load %arg3[%c0_35, %c0_36] : memref<1x128xf32, #tpu.memory_space<vmem>>, vector<1x128xf32>
    %32 = vector.broadcast %31 : vector<1x128xf32> to vector<256x128xf32>
    %33 = arith.addf %30, %32 : vector<256x128xf32>
    %c0_37 = arith.constant 0 : index
    %c0_38 = arith.constant 0 : index
    %c0_39 = arith.constant 0 : index
    %34 = vector.load %arg4[%c0_37, %c0_38, %c0_39] : memref<1x256x128xf32, #tpu.memory_space<vmem>>, vector<1x256x128xf32>
    %35 = vector.shape_cast %34 : vector<1x256x128xf32> to vector<256x128xf32>
    %36 = vector.shape_cast %33 : vector<256x128xf32> to vector<1x256x128xf32>
    tpu.vector_store %arg4[%c0_37, %c0_38, %c0_39], %36 {strides = array<i32>} : memref<1x256x128xf32, #tpu.memory_space<vmem>>, vector<1x256x128xf32>,
    return
  }
  func.func @transform_0(%arg0: i32) -> (i32, i32, i32, i32) {
    %c0_i32 = arith.constant 0 : i32
    %c0_i32_0 = arith.constant 0 : i32
    %c0_i32_1 = arith.constant 0 : i32
    %c0_i32_2 = arith.constant 0 : i32
    return %arg0, %c0_i32, %c0_i32_0, %c0_i32_1 : i32, i32, i32, i32
  }
  func.func @transform_1(%arg0: i32) -> (i32, i32) {
    %c0_i32 = arith.constant 0 : i32
    %c0_i32_0 = arith.constant 0 : i32
    %c0_i32_1 = arith.constant 0 : i32
    return %c0_i32, %c0_i32_0 : i32, i32
  }
  func.func @transform_2(%arg0: i32) -> (i32, i32) {
    %c0_i32 = arith.constant 0 : i32
    %c0_i32_0 = arith.constant 0 : i32
    %c0_i32_1 = arith.constant 0 : i32
    return %c0_i32, %c0_i32_0 : i32, i32
  }
  func.func @transform_3(%arg0: i32) -> (i32, i32, i32) {
    %c0_i32 = arith.constant 0 : i32
    %c0_i32_0 = arith.constant 0 : i32
    %c0_i32_1 = arith.constant 0 : i32
    return %arg0, %c0_i32, %c0_i32_0 : i32, i32, i32
  }
}

module attributes {stable_mosaic.version = 11 : i64} {
  func.func @attention_kernel(%arg0: i32, %arg1: memref<1x256x32xf32, #tpu.memory_space<vmem>>, %arg2: memref<1x256x128xf32, #tpu.memory_space<vmem>>, %arg3: memref<1x256x32xf32, #tpu.memory_space<vmem>>, %arg4: memref<32x64xbf16, #tpu.memory_space<vmem>>, %arg5: memref<1x64xf32, #tpu.memory_space<vmem>>, %arg6: memref<1x4x256x256xf32, #tpu.memory_space<vmem>>, %arg7: memref<64x32xbf16, #tpu.memory_space<vmem>>, %arg8: memref<1x32xf32, #tpu.memory_space<vmem>>, %arg9: memref<1x256x32xf32, #tpu.memory_space<vmem>>) attributes {dimension_semantics = [#tpu.dimension_semantics<parallel>], iteration_bounds = array<i64: 2>, scalar_prefetch = 0 : i64, scratch_operands = 0 : i64, tpu.core_type = #tpu.core_type<tc>, window_params = [{transform_indices = @transform_0, window_bounds = array<i64: 1, 256, 32>}, {transform_indices = @transform_1, window_bounds = array<i64: 1, 256, 128>}, {transform_indices = @transform_2, window_bounds = array<i64: 1, 256, 32>}, {pipeline_mode = #tpu.pipeline_mode<synchronous>, transform_indices = @transform_3, window_bounds = array<i64: 32, 64>}, {pipeline_mode = #tpu.pipeline_mode<synchronous>, transform_indices = @transform_4, window_bounds = array<i64: 1, 64>}, {pipeline_mode = #tpu.pipeline_mode<synchronous>, transform_indices = @transform_5, window_bounds = array<i64: 1, 4, 256, 256>}, {pipeline_mode = #tpu.pipeline_mode<synchronous>, transform_indices = @transform_6, window_bounds = array<i64: 64, 32>}, {pipeline_mode = #tpu.pipeline_mode<synchronous>, transform_indices = @transform_7, window_bounds = array<i64: 1, 32>}, {transform_indices = @transform_8, window_bounds = array<i64: 1, 256, 32>}]} {
    %c0 = arith.constant 0 : index
    %c0_0 = arith.constant 0 : index
    %c0_1 = arith.constant 0 : index
    %0 = vector.load %arg1[%c0, %c0_0, %c0_1] : memref<1x256x32xf32, #tpu.memory_space<vmem>>, vector<1x256x32xf32>
    %1 = vector.shape_cast %0 : vector<1x256x32xf32> to vector<256x32xf32>
    %2 = arith.truncf %1 : vector<256x32xf32> to vector<256x32xbf16>
    %c0_2 = arith.constant 0 : index
    %c0_3 = arith.constant 0 : index
    %3 = vector.load %arg4[%c0_2, %c0_3] : memref<32x64xbf16, #tpu.memory_space<vmem>>, vector<32x64xbf16>
    %cst = arith.constant dense<0.000000e+00> : vector<256x64xf32>
    %4 = tpu.matmul %2, %3, %cst {dimension_numbers = #tpu.dot_dimension_numbers<[1], [0], [0], [1], [0, 0, 1, 1], [], []>} : vector<256x32xbf16>, vector<32x64xbf16>, vector<256x64xf32> -> vector<256x64xf32>
    %c0_4 = arith.constant 0 : index
    %c0_5 = arith.constant 0 : index
    %5 = vector.load %arg5[%c0_4, %c0_5] : memref<1x64xf32, #tpu.memory_space<vmem>>, vector<1x64xf32>
    %6 = vector.broadcast %5 : vector<1x64xf32> to vector<256x64xf32>
    %7 = arith.addf %4, %6 : vector<256x64xf32>
    %c0_6 = arith.constant 0 : index
    %c0_7 = arith.constant 0 : index
    %c0_8 = arith.constant 0 : index
    %8 = vector.load %arg2[%c0_6, %c0_7, %c0_8] : memref<1x256x128xf32, #tpu.memory_space<vmem>>, vector<1x256x128xf32>
    %9 = vector.shape_cast %8 : vector<1x256x128xf32> to vector<256x128xf32>
    %10 = vector.extract_strided_slice %9 {offsets = [0, 0], sizes = [256, 64], strides = [1, 1]} : vector<256x128xf32> to vector<256x64xf32>
    %11 = arith.truncf %10 : vector<256x64xf32> to vector<256x64xbf16>
    %12 = vector.extract_strided_slice %9 {offsets = [0, 64], sizes = [256, 64], strides = [1, 1]} : vector<256x128xf32> to vector<256x64xf32>
    %13 = arith.truncf %12 : vector<256x64xf32> to vector<256x64xbf16>
    %14 = vector.extract_strided_slice %7 {offsets = [0, 0], sizes = [256, 16], strides = [1, 1]} : vector<256x64xf32> to vector<256x16xf32>
    %15 = arith.truncf %14 : vector<256x16xf32> to vector<256x16xbf16>
    %16 = vector.extract_strided_slice %11 {offsets = [0, 0], sizes = [256, 16], strides = [1, 1]} : vector<256x64xbf16> to vector<256x16xbf16>
    %17 = vector.extract_strided_slice %13 {offsets = [0, 0], sizes = [256, 16], strides = [1, 1]} : vector<256x64xbf16> to vector<256x16xbf16>
    %cst_9 = arith.constant dense<0.000000e+00> : vector<256x256xf32>
    %18 = tpu.matmul %15, %16, %cst_9 {dimension_numbers = #tpu.dot_dimension_numbers<[1], [1], [0], [0], [0, 0, 1, 0], [], []>} : vector<256x16xbf16>, vector<256x16xbf16>, vector<256x256xf32> -> vector<256x256xf32>
    %c0_10 = arith.constant 0 : index
    %c0_11 = arith.constant 0 : index
    %c0_12 = arith.constant 0 : index
    %c0_13 = arith.constant 0 : index
    %19 = vector.load %arg6[%c0_10, %c0_11, %c0_12, %c0_13] : memref<1x4x256x256xf32, #tpu.memory_space<vmem>>, vector<1x1x256x256xf32>
    %20 = vector.shape_cast %19 : vector<1x1x256x256xf32> to vector<256x256xf32>
    %21 = arith.addf %18, %20 : vector<256x256xf32>
    %cst_14 = arith.constant dense<0xFF800000> : vector<256xf32>
    %22 = vector.multi_reduction <maximumf>, %21, %cst_14 [1] : vector<256x256xf32> to vector<256xf32>
    %23 = vector.shape_cast %22 : vector<256xf32> to vector<256x1xf32>
    %24 = vector.broadcast %23 : vector<256x1xf32> to vector<256x256xf32>
    %25 = arith.subf %21, %24 : vector<256x256xf32>
    %26 = math.exp %25 : vector<256x256xf32>
    %cst_15 = arith.constant dense<0.000000e+00> : vector<256xf32>
    %27 = vector.multi_reduction <add>, %26, %cst_15 [1] : vector<256x256xf32> to vector<256xf32>
    %28 = vector.shape_cast %27 : vector<256xf32> to vector<256x1xf32>
    %29 = tpu.reciprocal %28 {approx = true} : vector<256x1xf32> -> vector<256x1xf32>
    %30 = vector.broadcast %29 : vector<256x1xf32> to vector<256x256xf32>
    %31 = arith.mulf %26, %30 : vector<256x256xf32>
    %32 = arith.truncf %31 : vector<256x256xf32> to vector<256x256xbf16>
    %cst_16 = arith.constant dense<0.000000e+00> : vector<256x16xf32>
    %33 = tpu.matmul %32, %17, %cst_16 {dimension_numbers = #tpu.dot_dimension_numbers<[1], [0], [0], [1], [0, 0, 1, 1], [], []>} : vector<256x256xbf16>, vector<256x16xbf16>, vector<256x16xf32> -> vector<256x16xf32>
    %34 = vector.extract_strided_slice %7 {offsets = [0, 16], sizes = [256, 16], strides = [1, 1]} : vector<256x64xf32> to vector<256x16xf32>
    %35 = arith.truncf %34 : vector<256x16xf32> to vector<256x16xbf16>
    %36 = vector.extract_strided_slice %11 {offsets = [0, 16], sizes = [256, 16], strides = [1, 1]} : vector<256x64xbf16> to vector<256x16xbf16>
    %37 = vector.extract_strided_slice %13 {offsets = [0, 16], sizes = [256, 16], strides = [1, 1]} : vector<256x64xbf16> to vector<256x16xbf16>
    %cst_17 = arith.constant dense<0.000000e+00> : vector<256x256xf32>
    %38 = tpu.matmul %35, %36, %cst_17 {dimension_numbers = #tpu.dot_dimension_numbers<[1], [1], [0], [0], [0, 0, 1, 0], [], []>} : vector<256x16xbf16>, vector<256x16xbf16>, vector<256x256xf32> -> vector<256x256xf32>
    %c0_18 = arith.constant 0 : index
    %c1 = arith.constant 1 : index
    %c0_19 = arith.constant 0 : index
    %c0_20 = arith.constant 0 : index
    %39 = vector.load %arg6[%c0_18, %c1, %c0_19, %c0_20] : memref<1x4x256x256xf32, #tpu.memory_space<vmem>>, vector<1x1x256x256xf32>
    %40 = vector.shape_cast %39 : vector<1x1x256x256xf32> to vector<256x256xf32>
    %41 = arith.addf %38, %40 : vector<256x256xf32>
    %cst_21 = arith.constant dense<0xFF800000> : vector<256xf32>
    %42 = vector.multi_reduction <maximumf>, %41, %cst_21 [1] : vector<256x256xf32> to vector<256xf32>
    %43 = vector.shape_cast %42 : vector<256xf32> to vector<256x1xf32>
    %44 = vector.broadcast %43 : vector<256x1xf32> to vector<256x256xf32>
    %45 = arith.subf %41, %44 : vector<256x256xf32>
    %46 = math.exp %45 : vector<256x256xf32>
    %cst_22 = arith.constant dense<0.000000e+00> : vector<256xf32>
    %47 = vector.multi_reduction <add>, %46, %cst_22 [1] : vector<256x256xf32> to vector<256xf32>
    %48 = vector.shape_cast %47 : vector<256xf32> to vector<256x1xf32>
    %49 = tpu.reciprocal %48 {approx = true} : vector<256x1xf32> -> vector<256x1xf32>
    %50 = vector.broadcast %49 : vector<256x1xf32> to vector<256x256xf32>
    %51 = arith.mulf %46, %50 : vector<256x256xf32>
    %52 = arith.truncf %51 : vector<256x256xf32> to vector<256x256xbf16>
    %cst_23 = arith.constant dense<0.000000e+00> : vector<256x16xf32>
    %53 = tpu.matmul %52, %37, %cst_23 {dimension_numbers = #tpu.dot_dimension_numbers<[1], [0], [0], [1], [0, 0, 1, 1], [], []>} : vector<256x256xbf16>, vector<256x16xbf16>, vector<256x16xf32> -> vector<256x16xf32>
    %54 = vector.extract_strided_slice %7 {offsets = [0, 32], sizes = [256, 16], strides = [1, 1]} : vector<256x64xf32> to vector<256x16xf32>
    %55 = arith.truncf %54 : vector<256x16xf32> to vector<256x16xbf16>
    %56 = vector.extract_strided_slice %11 {offsets = [0, 32], sizes = [256, 16], strides = [1, 1]} : vector<256x64xbf16> to vector<256x16xbf16>
    %57 = vector.extract_strided_slice %13 {offsets = [0, 32], sizes = [256, 16], strides = [1, 1]} : vector<256x64xbf16> to vector<256x16xbf16>
    %cst_24 = arith.constant dense<0.000000e+00> : vector<256x256xf32>
    %58 = tpu.matmul %55, %56, %cst_24 {dimension_numbers = #tpu.dot_dimension_numbers<[1], [1], [0], [0], [0, 0, 1, 0], [], []>} : vector<256x16xbf16>, vector<256x16xbf16>, vector<256x256xf32> -> vector<256x256xf32>
    %c0_25 = arith.constant 0 : index
    %c2 = arith.constant 2 : index
    %c0_26 = arith.constant 0 : index
    %c0_27 = arith.constant 0 : index
    %59 = vector.load %arg6[%c0_25, %c2, %c0_26, %c0_27] : memref<1x4x256x256xf32, #tpu.memory_space<vmem>>, vector<1x1x256x256xf32>
    %60 = vector.shape_cast %59 : vector<1x1x256x256xf32> to vector<256x256xf32>
    %61 = arith.addf %58, %60 : vector<256x256xf32>
    %cst_28 = arith.constant dense<0xFF800000> : vector<256xf32>
    %62 = vector.multi_reduction <maximumf>, %61, %cst_28 [1] : vector<256x256xf32> to vector<256xf32>
    %63 = vector.shape_cast %62 : vector<256xf32> to vector<256x1xf32>
    %64 = vector.broadcast %63 : vector<256x1xf32> to vector<256x256xf32>
    %65 = arith.subf %61, %64 : vector<256x256xf32>
    %66 = math.exp %65 : vector<256x256xf32>
    %cst_29 = arith.constant dense<0.000000e+00> : vector<256xf32>
    %67 = vector.multi_reduction <add>, %66, %cst_29 [1] : vector<256x256xf32> to vector<256xf32>
    %68 = vector.shape_cast %67 : vector<256xf32> to vector<256x1xf32>
    %69 = tpu.reciprocal %68 {approx = true} : vector<256x1xf32> -> vector<256x1xf32>
    %70 = vector.broadcast %69 : vector<256x1xf32> to vector<256x256xf32>
    %71 = arith.mulf %66, %70 : vector<256x256xf32>
    %72 = arith.truncf %71 : vector<256x256xf32> to vector<256x256xbf16>
    %cst_30 = arith.constant dense<0.000000e+00> : vector<256x16xf32>
    %73 = tpu.matmul %72, %57, %cst_30 {dimension_numbers = #tpu.dot_dimension_numbers<[1], [0], [0], [1], [0, 0, 1, 1], [], []>} : vector<256x256xbf16>, vector<256x16xbf16>, vector<256x16xf32> -> vector<256x16xf32>
    %74 = vector.extract_strided_slice %7 {offsets = [0, 48], sizes = [256, 16], strides = [1, 1]} : vector<256x64xf32> to vector<256x16xf32>
    %75 = arith.truncf %74 : vector<256x16xf32> to vector<256x16xbf16>
    %76 = vector.extract_strided_slice %11 {offsets = [0, 48], sizes = [256, 16], strides = [1, 1]} : vector<256x64xbf16> to vector<256x16xbf16>
    %77 = vector.extract_strided_slice %13 {offsets = [0, 48], sizes = [256, 16], strides = [1, 1]} : vector<256x64xbf16> to vector<256x16xbf16>
    %cst_31 = arith.constant dense<0.000000e+00> : vector<256x256xf32>
    %78 = tpu.matmul %75, %76, %cst_31 {dimension_numbers = #tpu.dot_dimension_numbers<[1], [1], [0], [0], [0, 0, 1, 0], [], []>} : vector<256x16xbf16>, vector<256x16xbf16>, vector<256x256xf32> -> vector<256x256xf32>
    %c0_32 = arith.constant 0 : index
    %c3 = arith.constant 3 : index
    %c0_33 = arith.constant 0 : index
    %c0_34 = arith.constant 0 : index
    %79 = vector.load %arg6[%c0_32, %c3, %c0_33, %c0_34] : memref<1x4x256x256xf32, #tpu.memory_space<vmem>>, vector<1x1x256x256xf32>
    %80 = vector.shape_cast %79 : vector<1x1x256x256xf32> to vector<256x256xf32>
    %81 = arith.addf %78, %80 : vector<256x256xf32>
    %cst_35 = arith.constant dense<0xFF800000> : vector<256xf32>
    %82 = vector.multi_reduction <maximumf>, %81, %cst_35 [1] : vector<256x256xf32> to vector<256xf32>
    %83 = vector.shape_cast %82 : vector<256xf32> to vector<256x1xf32>
    %84 = vector.broadcast %83 : vector<256x1xf32> to vector<256x256xf32>
    %85 = arith.subf %81, %84 : vector<256x256xf32>
    %86 = math.exp %85 : vector<256x256xf32>
    %cst_36 = arith.constant dense<0.000000e+00> : vector<256xf32>
    %87 = vector.multi_reduction <add>, %86, %cst_36 [1] : vector<256x256xf32> to vector<256xf32>
    %88 = vector.shape_cast %87 : vector<256xf32> to vector<256x1xf32>
    %89 = tpu.reciprocal %88 {approx = true} : vector<256x1xf32> -> vector<256x1xf32>
    %90 = vector.broadcast %89 : vector<256x1xf32> to vector<256x256xf32>
    %91 = arith.mulf %86, %90 : vector<256x256xf32>
    %92 = arith.truncf %91 : vector<256x256xf32> to vector<256x256xbf16>
    %cst_37 = arith.constant dense<0.000000e+00> : vector<256x16xf32>
    %93 = tpu.matmul %92, %77, %cst_37 {dimension_numbers = #tpu.dot_dimension_numbers<[1], [0], [0], [1], [0, 0, 1, 1], [], []>} : vector<256x256xbf16>, vector<256x16xbf16>, vector<256x16xf32> -> vector<256x16xf32>
    %94 = tpu.concatenate %33, %53, %73, %93 in 1 : vector<256x16xf32>, vector<256x16xf32>, vector<256x16xf32>, vector<256x16xf32> -> vector<256x64xf32>
    %95 = arith.truncf %94 : vector<256x64xf32> to vector<256x64xbf16>
    %c0_38 = arith.constant 0 : index
    %c0_39 = arith.constant 0 : index
    %96 = vector.load %arg7[%c0_38, %c0_39] : memref<64x32xbf16, #tpu.memory_space<vmem>>, vector<64x32xbf16>
    %cst_40 = arith.constant dense<0.000000e+00> : vector<256x32xf32>
    %97 = tpu.matmul %95, %96, %cst_40 {dimension_numbers = #tpu.dot_dimension_numbers<[1], [0], [0], [1], [0, 0, 1, 1], [], []>} : vector<256x64xbf16>, vector<64x32xbf16>, vector<256x32xf32> -> vector<256x32xf32>
    %c0_41 = arith.constant 0 : index
    %c0_42 = arith.constant 0 : index
    %98 = vector.load %arg8[%c0_41, %c0_42] : memref<1x32xf32, #tpu.memory_space<vmem>>, vector<1x32xf32>
    %99 = vector.broadcast %98 : vector<1x32xf32> to vector<256x32xf32>
    %100 = arith.addf %97, %99 : vector<256x32xf32>
    %c0_43 = arith.constant 0 : index
    %c0_44 = arith.constant 0 : index
    %c0_45 = arith.constant 0 : index
    %101 = vector.load %arg3[%c0_43, %c0_44, %c0_45] : memref<1x256x32xf32, #tpu.memory_space<vmem>>, vector<1x256x32xf32>
    %102 = vector.shape_cast %101 : vector<1x256x32xf32> to vector<256x32xf32>
    %103 = arith.addf %100, %102 : vector<256x32xf32>
    %c0_46 = arith.constant 0 : index
    %c0_47 = arith.constant 0 : index
    %c0_48 = arith.constant 0 : index
    %104 = vector.load %arg9[%c0_46, %c0_47, %c0_48] : memref<1x256x32xf32, #tpu.memory_space<vmem>>, vector<1x256x32xf32>
    %105 = vector.shape_cast %104 : vector<1x256x32xf32> to vector<256x32xf32>
    %106 = vector.shape_cast %103 : vector<256x32xf32> to vector<1x256x32xf32>
    tpu.vector_store %arg9[%c0_46, %c0_47, %c0_48], %106 {strides = array<i32>} : memref<1x256x32xf32, #tpu.memory_space<vmem>>, vector<1x256x32xf32>,
    return
  }
  func.func @transform_0(%arg0: i32) -> (i32, i32, i32) {
    %c0_i32 = arith.constant 0 : i32
    %c0_i32_0 = arith.constant 0 : i32
    %c0_i32_1 = arith.constant 0 : i32
    return %arg0, %c0_i32, %c0_i32_0 : i32, i32, i32
  }
  func.func @transform_1(%arg0: i32) -> (i32, i32, i32) {
    %c0_i32 = arith.constant 0 : i32
    %c0_i32_0 = arith.constant 0 : i32
    %c0_i32_1 = arith.constant 0 : i32
    return %arg0, %c0_i32, %c0_i32_0 : i32, i32, i32
  }
  func.func @transform_2(%arg0: i32) -> (i32, i32, i32) {
    %c0_i32 = arith.constant 0 : i32
    %c0_i32_0 = arith.constant 0 : i32
    %c0_i32_1 = arith.constant 0 : i32
    return %arg0, %c0_i32, %c0_i32_0 : i32, i32, i32
  }
  func.func @transform_3(%arg0: i32) -> (i32, i32) {
    %c0_i32 = arith.constant 0 : i32
    %c0_i32_0 = arith.constant 0 : i32
    %c0_i32_1 = arith.constant 0 : i32
    return %c0_i32, %c0_i32_0 : i32, i32
  }
  func.func @transform_4(%arg0: i32) -> (i32, i32) {
    %c0_i32 = arith.constant 0 : i32
    %c0_i32_0 = arith.constant 0 : i32
    %c0_i32_1 = arith.constant 0 : i32
    return %c0_i32, %c0_i32_0 : i32, i32
  }
  func.func @transform_5(%arg0: i32) -> (i32, i32, i32, i32) {
    %c0_i32 = arith.constant 0 : i32
    %c0_i32_0 = arith.constant 0 : i32
    %c0_i32_1 = arith.constant 0 : i32
    %c0_i32_2 = arith.constant 0 : i32
    %c0_i32_3 = arith.constant 0 : i32
    return %c0_i32, %c0_i32_0, %c0_i32_1, %c0_i32_2 : i32, i32, i32, i32
  }
  func.func @transform_6(%arg0: i32) -> (i32, i32) {
    %c0_i32 = arith.constant 0 : i32
    %c0_i32_0 = arith.constant 0 : i32
    %c0_i32_1 = arith.constant 0 : i32
    return %c0_i32, %c0_i32_0 : i32, i32
  }
  func.func @transform_7(%arg0: i32) -> (i32, i32) {
    %c0_i32 = arith.constant 0 : i32
    %c0_i32_0 = arith.constant 0 : i32
    %c0_i32_1 = arith.constant 0 : i32
    return %c0_i32, %c0_i32_0 : i32, i32
  }
  func.func @transform_8(%arg0: i32) -> (i32, i32, i32) {
    %c0_i32 = arith.constant 0 : i32
    %c0_i32_0 = arith.constant 0 : i32
    %c0_i32_1 = arith.constant 0 : i32
    return %arg0, %c0_i32, %c0_i32_0 : i32, i32, i32
  }
}

</mosaic_0001>

<llo_original>
// kernel: enhance_mhsa_forward.2
$region0: #{enhance_mhsa_forward.2}
  #allocation0 [shape = 'u32[]', space=smem, size = 0x4, offset = 0x4, fixed_abs, tag = 'smem constant byte address 0x4 - core index']
  #allocation1 [shape = 'u32[72,128]{1,0:T(1,128)}', space=vmem, size = 0x9000, scoped, tag = 'internal scratch']
  %s0 = inlined_call_operand.vmem [shape: f32[2,18,18,32], index: 0, kind: input, shape index: {}]
  %s1 = inlined_call_operand.vmem [shape: bf16[288,128], index: 1, kind: input, shape index: {}]
  %s2 = inlined_call_operand.vmem [shape: f32[1,128], index: 2, kind: input, shape index: {}]
  %s3 = inlined_call_operand.vmem [shape: f32[2,256,128], index: 3, kind: output, shape index: {}]
  %s4 = sld [smem:[#allocation0]]
  $region45: #{enhance_mhsa_forward.2} parent=0
    _
  %s6 = ssub.s32 1, %s4
  %s7 = scalar_select 0, %s6, %s4
  loop: start=0, step=1, limit=4
  $region2: #{enhance_mhsa_forward.2} parent=0 // loop_pre_header
    _
  $region3: #{enhance_mhsa_forward.2} parent=0 // loop_header
    %s9 = sphi 0, %s13
    %p10 = scmp.ge.s32.totalorder %s9, 4
    %s19 = sphi 0, %s21
    %s22 = sphi 0, %s19
    %s23 = sphi 0, %s22
    %s39 = sphi 0, %s23
    %s43 = sphi 0, %s43
    %s45 = sphi 0, %s43
    %s46 = sphi 0, %s45
    %s60 = sphi 0, %s46
    %s64 = sphi 0, %s64
    %s66 = sphi 0, %s64
    %s67 = sphi 0, %s66
    %s81 = sphi 0, %s67
    %s87 = sphi 0, %s89
    %s90 = sphi 0, %s87
    %s91 = sphi 0, %s90
    %s107 = sphi 0, %s91
  $region4: #{enhance_mhsa_forward.2} parent=0 // loop_header_branch
    %12 = sbr.rel (%p10) target = $region8
  $region5: #{enhance_mhsa_forward.2} parent=0 // loop_body
    %s14 = ssub.s32 %s9, 1
    %s15 = ssub.s32 %s9, 2
    %s16 = sadd.s32 %s9, 1
    %s17 = ssub.s32 %s9, %s16
    %p18 = scmp.eq.s32.totalorder %s17, 0
    %s20 = sadd.s32 %s19, 1
    %s21 = scalar_select %p18, %s19, %s20
    %p24 = pneg %p18
    %p25 = scmp.eq.s32.totalorder %s9, 1
    %p26 = por %p24, %p25
    %p27 = scmp.ne.s32.totalorder %s19, %s22
    %p28 = scmp.eq.s32.totalorder %s9, 0
    %p29 = por %p27, %p28
    %p30 = scmp.ne.s32.totalorder %s19, %s22
    %p31 = scmp.eq.s32.totalorder %s14, 1
    %p32 = por %p30, %p31
    %p33 = scmp.ne.s32.totalorder %s22, %s23
    %p34 = scmp.eq.s32.totalorder %s14, 0
    %p35 = por %p33, %p34
    %p36 = scmp.ne.s32.totalorder %s22, %s23
    %p37 = scmp.eq.s32.totalorder %s15, 1
    %p38 = por %p36, %p37
    %p40 = scmp.ne.s32.totalorder %s23, %s39
    %p41 = scmp.eq.s32.totalorder %s15, 0
    %p42 = por %p40, %p41
    %s44 = sadd.s32 %s43, 1
    %p47 = scmp.eq.s32.totalorder %s9, 1
    %p48 = scmp.ne.s32.totalorder %s43, %s45
    %p49 = scmp.eq.s32.totalorder %s9, 0
    %p50 = por %p48, %p49
    %p51 = scmp.ne.s32.totalorder %s43, %s45
    %p52 = scmp.eq.s32.totalorder %s14, 1
    %p53 = por %p51, %p52
    %p54 = scmp.ne.s32.totalorder %s45, %s46
    %p55 = scmp.eq.s32.totalorder %s14, 0
    %p56 = por %p54, %p55
    %p57 = scmp.ne.s32.totalorder %s45, %s46
    %p58 = scmp.eq.s32.totalorder %s15, 1
    %p59 = por %p57, %p58
    %p61 = scmp.ne.s32.totalorder %s46, %s60
    %p62 = scmp.eq.s32.totalorder %s15, 0
    %p63 = por %p61, %p62
    %s65 = sadd.s32 %s64, 1
    %p68 = scmp.eq.s32.totalorder %s9, 1
    %p69 = scmp.ne.s32.totalorder %s64, %s66
    %p70 = scmp.eq.s32.totalorder %s9, 0
    %p71 = por %p69, %p70
    %p72 = scmp.ne.s32.totalorder %s64, %s66
    %p73 = scmp.eq.s32.totalorder %s14, 1
    %p74 = por %p72, %p73
    %p75 = scmp.ne.s32.totalorder %s66, %s67
    %p76 = scmp.eq.s32.totalorder %s14, 0
    %p77 = por %p75, %p76
    %p78 = scmp.ne.s32.totalorder %s66, %s67
    %p79 = scmp.eq.s32.totalorder %s15, 1
    %p80 = por %p78, %p79
    %p82 = scmp.ne.s32.totalorder %s67, %s81
    %p83 = scmp.eq.s32.totalorder %s15, 0
    %p84 = por %p82, %p83
    %s85 = ssub.s32 %s9, %s16
    %p86 = scmp.eq.s32.totalorder %s85, 0
    %s88 = sadd.s32 %s87, 1
    %s89 = scalar_select %p86, %s87, %s88
    %p92 = pneg %p86
    %p93 = scmp.eq.s32.totalorder %s9, 1
    %p94 = por %p92, %p93
    %p95 = scmp.ne.s32.totalorder %s87, %s90
    %p96 = scmp.eq.s32.totalorder %s9, 0
    %p97 = por %p95, %p96
    %p98 = scmp.ne.s32.totalorder %s87, %s90
    %p99 = scmp.eq.s32.totalorder %s14, 1
    %p100 = por %p98, %p99
    %p101 = scmp.ne.s32.totalorder %s90, %s91
    %p102 = scmp.eq.s32.totalorder %s14, 0
    %p103 = por %p101, %p102
    %p104 = scmp.ne.s32.totalorder %s90, %s91
    %p105 = scmp.eq.s32.totalorder %s15, 1
    %p106 = por %p104, %p105
    %p108 = scmp.ne.s32.totalorder %s91, %s107
    %p109 = scmp.eq.s32.totalorder %s15, 0
    %p110 = por %p108, %p109
    %p111 = scmp.le.s32.totalorder 1, %s9
    %p112 = scmp.lt.s32.totalorder %s9, 3
    %p113 = pnand %p111, %p112
    %p114 = pneg %p113
    // Predicated region
    $region9: #{enhance_mhsa_forward.2} parent=5 // pred_check
      _
    $region10: #{enhance_mhsa_forward.2} parent=5 // pred_check_branch
      %116 = sbr.rel (%p113) target = $region12
    $region11: #{enhance_mhsa_forward.2} parent=5 // pred_region
      %s117 = ssub.s32 %s9, 1
      // Predicated region
      $region13: #{enhance_mhsa_forward.2} parent=11 // pred_check
        %p118 = pneg %p56
      $region14: #{enhance_mhsa_forward.2} parent=11 // pred_check_branch
        %120 = sbr.rel (%p118) target = $region16
      $region15: #{enhance_mhsa_forward.2} parent=11 // pred_region
        _
      $region16: #{enhance_mhsa_forward.2} parent=11 // pred_fallthru
        _
      // Predicated region
      $region17: #{enhance_mhsa_forward.2} parent=11 // pred_check
        %p121 = pneg %p77
      $region18: #{enhance_mhsa_forward.2} parent=11 // pred_check_branch
        %123 = sbr.rel (%p121) target = $region20
      $region19: #{enhance_mhsa_forward.2} parent=11 // pred_region
        _
      $region20: #{enhance_mhsa_forward.2} parent=11 // pred_fallthru
        _
    $region12: #{enhance_mhsa_forward.2} parent=5 // pred_fallthru
      _
    %p124 = scmp.lt.s32.totalorder %s9, 2
    // Predicated region
    $region21: #{enhance_mhsa_forward.2} parent=5 // pred_check
      %p125 = pneg %p124
    $region22: #{enhance_mhsa_forward.2} parent=5 // pred_check_branch
      %127 = sbr.rel (%p125) target = $region24
    $region23: #{enhance_mhsa_forward.2} parent=5 // pred_region
      // Predicated region
      $region25: #{enhance_mhsa_forward.2} parent=23 // pred_check
        %p128 = pneg %p29
      $region26: #{enhance_mhsa_forward.2} parent=23 // pred_check_branch
        %130 = sbr.rel (%p128) target = $region28
      $region27: #{enhance_mhsa_forward.2} parent=23 // pred_region
        %p131 = scmp.lt.s32.totalorder %s9, 1
        %s132 = scalar_select %p131, %s9, 1
        %s133 = smul.addr %s132, 54
        %s134 = smul.addr %s133, 8
        %s135 = scalar_lea.vmem %s0, %s134
      $region28: #{enhance_mhsa_forward.2} parent=23 // pred_fallthru
        _
    $region24: #{enhance_mhsa_forward.2} parent=5 // pred_fallthru
      _
    %p136 = scmp.le.s32.totalorder 1, %s9
    %p137 = scmp.lt.s32.totalorder %s9, 3
    %p138 = pnand %p136, %p137
    %p139 = pneg %p138
    // Predicated region
    $region29: #{enhance_mhsa_forward.2} parent=5 // pred_check
      _
    $region30: #{enhance_mhsa_forward.2} parent=5 // pred_check_branch
      %141 = sbr.rel (%p138) target = $region32
    $region31: #{enhance_mhsa_forward.2} parent=5 // pred_region
      %s142 = ssub.s32 %s9, 1
      %p143 = scmp.lt.s32.totalorder %s14, 1
      %s144 = scalar_select %p143, %s14, 1
      %s145 = smul.addr %s144, 54
      %s146 = smul.addr %s145, 8
      %s147 = scalar_lea.vmem %s0, %s146
      %p148 = pneg %p35
      %p149 = pneg %p32
      %p150 = pneg %p56
      %p151 = pneg %p53
      %p152 = pneg %p77
      %p153 = pneg %p74
      %p154 = pneg %p103
      %p155 = pneg %p100
      %p156 = scmp.lt.s32.totalorder %s14, 1
      %s157 = scalar_select %p156, %s14, 1
      %s158 = smul.addr %s157, 32
      %s159 = smul.addr %s158, 8
      %s160 = scalar_lea.vmem %s3, %s159
      %p161 = scmp.lt.s32.totalorder %s14, 1
      %s162 = scalar_select %p161, %s14, 1
      %s163 = smul.addr %s162, 54
      %s164 = smul.addr %s163, 8
      %s165 = scalar_lea.vmem %s0, %s164
      %p166 = scmp.lt.s32.totalorder %s14, 1
      %s167 = scalar_select %p166, %s14, 1
      %s168 = smul.addr %s167, 32
      %s169 = smul.addr %s168, 8
      %s170 = scalar_lea.vmem %s3, %s169
      %v172 = vld [vmem:[%s165] sm:$0xff]
      %v173 = vld [vmem:[%s165 + $0x8] sm:$0xff]
      %v174 = vld [vmem:[%s165 + $0x18] sm:$0xff]
      %v175 = vld [vmem:[%s165 + $0x20] sm:$0xff]
      %v176 = vld [vmem:[%s165 + $0x30] sm:$0xff]
      %v177 = vld [vmem:[%s165 + $0x38] sm:$0xff]
      %v178 = vld [vmem:[%s165 + $0x48] sm:$0xff]
      %v179 = vld [vmem:[%s165 + $0x50] sm:$0xff]
      %v180 = vld [vmem:[%s165 + $0x60] sm:$0xff]
      %v181 = vld [vmem:[%s165 + $0x68] sm:$0xff]
      %v182 = vld [vmem:[%s165 + $0x78] sm:$0xff]
      %v183 = vld [vmem:[%s165 + $0x80] sm:$0xff]
      %v184 = vld [vmem:[%s165 + $0x90] sm:$0xff]
      %v185 = vld [vmem:[%s165 + $0x98] sm:$0xff]
      %v186 = vld [vmem:[%s165 + $0xa8] sm:$0xff]
      %v187 = vld [vmem:[%s165 + $0xb0] sm:$0xff]
      %v188 = vld [vmem:[%s165 + $0xc0] sm:$0xff]
      %v189 = vld [vmem:[%s165 + $0xc8] sm:$0xff]
      %v190 = vld [vmem:[%s165 + $0xd8] sm:$0xff]
      %v191 = vld [vmem:[%s165 + $0xe0] sm:$0xff]
      %v192 = vld [vmem:[%s165 + $0xf0] sm:$0xff]
      %v193 = vld [vmem:[%s165 + $0xf8] sm:$0xff]
      %v194 = vld [vmem:[%s165 + $0x108] sm:$0xff]
      %v195 = vld [vmem:[%s165 + $0x110] sm:$0xff]
      %v196 = vld [vmem:[%s165 + $0x120] sm:$0xff]
      %v197 = vld [vmem:[%s165 + $0x128] sm:$0xff]
      %v198 = vld [vmem:[%s165 + $0x138] sm:$0xff]
      %v199 = vld [vmem:[%s165 + $0x140] sm:$0xff]
      %v200 = vld [vmem:[%s165 + $0x150] sm:$0xff]
      %v201 = vld [vmem:[%s165 + $0x158] sm:$0xff]
      %v202 = vld [vmem:[%s165 + $0x168] sm:$0xff]
      %v203 = vld [vmem:[%s165 + $0x170] sm:$0xff]
      %v204 = vld [vmem:[%s165 + $0x1] sm:$0xff]
      %v205 = vld [vmem:[%s165 + $0x9] sm:$0xff]
      %v206 = vld [vmem:[%s165 + $0x19] sm:$0xff]
      %v207 = vld [vmem:[%s165 + $0x21] sm:$0xff]
      %v208 = vld [vmem:[%s165 + $0x31] sm:$0xff]
      %v209 = vld [vmem:[%s165 + $0x39] sm:$0xff]
      %v210 = vld [vmem:[%s165 + $0x49] sm:$0xff]
      %v211 = vld [vmem:[%s165 + $0x51] sm:$0xff]
      %v212 = vld [vmem:[%s165 + $0x61] sm:$0xff]
      %v213 = vld [vmem:[%s165 + $0x69] sm:$0xff]
      %v214 = vld [vmem:[%s165 + $0x79] sm:$0xff]
      %v215 = vld [vmem:[%s165 + $0x81] sm:$0xff]
      %v216 = vld [vmem:[%s165 + $0x91] sm:$0xff]
      %v217 = vld [vmem:[%s165 + $0x99] sm:$0xff]
      %v218 = vld [vmem:[%s165 + $0xa9] sm:$0xff]
      %v219 = vld [vmem:[%s165 + $0xb1] sm:$0xff]
      %v220 = vld [vmem:[%s165 + $0xc1] sm:$0xff]
      %v221 = vld [vmem:[%s165 + $0xc9] sm:$0xff]
      %v222 = vld [vmem:[%s165 + $0xd9] sm:$0xff]
      %v223 = vld [vmem:[%s165 + $0xe1] sm:$0xff]
      %v224 = vld [vmem:[%s165 + $0xf1] sm:$0xff]
      %v225 = vld [vmem:[%s165 + $0xf9] sm:$0xff]
      %v226 = vld [vmem:[%s165 + $0x109] sm:$0xff]
      %v227 = vld [vmem:[%s165 + $0x111] sm:$0xff]
      %v228 = vld [vmem:[%s165 + $0x121] sm:$0xff]
      %v229 = vld [vmem:[%s165 + $0x129] sm:$0xff]
      %v230 = vld [vmem:[%s165 + $0x139] sm:$0xff]
      %v231 = vld [vmem:[%s165 + $0x141] sm:$0xff]
      %v232 = vld [vmem:[%s165 + $0x151] sm:$0xff]
      %v233 = vld [vmem:[%s165 + $0x159] sm:$0xff]
      %v234 = vld [vmem:[%s165 + $0x169] sm:$0xff]
      %v235 = vld [vmem:[%s165 + $0x171] sm:$0xff]
      %v236 = vld [vmem:[%s165 + $0x2] sm:$0xff]
      %v237 = vld [vmem:[%s165 + $0xa] sm:$0xff]
      %v238 = vld [vmem:[%s165 + $0x1a] sm:$0xff]
      %v239 = vld [vmem:[%s165 + $0x22] sm:$0xff]
      %v240 = vld [vmem:[%s165 + $0x32] sm:$0xff]
      %v241 = vld [vmem:[%s165 + $0x3a] sm:$0xff]
      %v242 = vld [vmem:[%s165 + $0x4a] sm:$0xff]
      %v243 = vld [vmem:[%s165 + $0x52] sm:$0xff]
      %v244 = vld [vmem:[%s165 + $0x62] sm:$0xff]
      %v245 = vld [vmem:[%s165 + $0x6a] sm:$0xff]
      %v246 = vld [vmem:[%s165 + $0x7a] sm:$0xff]
      %v247 = vld [vmem:[%s165 + $0x82] sm:$0xff]
      %v248 = vld [vmem:[%s165 + $0x92] sm:$0xff]
      %v249 = vld [vmem:[%s165 + $0x9a] sm:$0xff]
      %v250 = vld [vmem:[%s165 + $0xaa] sm:$0xff]
      %v251 = vld [vmem:[%s165 + $0xb2] sm:$0xff]
      %v252 = vld [vmem:[%s165 + $0xc2] sm:$0xff]
      %v253 = vld [vmem:[%s165 + $0xca] sm:$0xff]
      %v254 = vld [vmem:[%s165 + $0xda] sm:$0xff]
      %v255 = vld [vmem:[%s165 + $0xe2] sm:$0xff]
      %v256 = vld [vmem:[%s165 + $0xf2] sm:$0xff]
      %v257 = vld [vmem:[%s165 + $0xfa] sm:$0xff]
      %v258 = vld [vmem:[%s165 + $0x10a] sm:$0xff]
      %v259 = vld [vmem:[%s165 + $0x112] sm:$0xff]
      %v260 = vld [vmem:[%s165 + $0x122] sm:$0xff]
      %v261 = vld [vmem:[%s165 + $0x12a] sm:$0xff]
      %v262 = vld [vmem:[%s165 + $0x13a] sm:$0xff]
      %v263 = vld [vmem:[%s165 + $0x142] sm:$0xff]
      %v264 = vld [vmem:[%s165 + $0x152] sm:$0xff]
      %v265 = vld [vmem:[%s165 + $0x15a] sm:$0xff]
      %v266 = vld [vmem:[%s165 + $0x16a] sm:$0xff]
      %v267 = vld [vmem:[%s165 + $0x172] sm:$0xff]
      %s268 = scalar_lea.vmem %s165, 24
      %v269 = vld [vmem:[%s268] sm:$0xff]
      %v270 = vld [vmem:[%s268 + $0x8] sm:$0xff]
      %v271 = vld [vmem:[%s268 + $0x18] sm:$0xff]
      %v272 = vld [vmem:[%s268 + $0x20] sm:$0xff]
      %v273 = vld [vmem:[%s268 + $0x30] sm:$0xff]
      %v274 = vld [vmem:[%s268 + $0x38] sm:$0xff]
      %v275 = vld [vmem:[%s268 + $0x48] sm:$0xff]
      %v276 = vld [vmem:[%s268 + $0x50] sm:$0xff]
      %v277 = vld [vmem:[%s268 + $0x60] sm:$0xff]
      %v278 = vld [vmem:[%s268 + $0x68] sm:$0xff]
      %v279 = vld [vmem:[%s268 + $0x78] sm:$0xff]
      %v280 = vld [vmem:[%s268 + $0x80] sm:$0xff]
      %v281 = vld [vmem:[%s268 + $0x90] sm:$0xff]
      %v282 = vld [vmem:[%s268 + $0x98] sm:$0xff]
      %v283 = vld [vmem:[%s268 + $0xa8] sm:$0xff]
      %v284 = vld [vmem:[%s268 + $0xb0] sm:$0xff]
      %v285 = vld [vmem:[%s268 + $0xc0] sm:$0xff]
      %v286 = vld [vmem:[%s268 + $0xc8] sm:$0xff]
      %v287 = vld [vmem:[%s268 + $0xd8] sm:$0xff]
      %v288 = vld [vmem:[%s268 + $0xe0] sm:$0xff]
      %v289 = vld [vmem:[%s268 + $0xf0] sm:$0xff]
      %v290 = vld [vmem:[%s268 + $0xf8] sm:$0xff]
      %v291 = vld [vmem:[%s268 + $0x108] sm:$0xff]
      %v292 = vld [vmem:[%s268 + $0x110] sm:$0xff]
      %v293 = vld [vmem:[%s268 + $0x120] sm:$0xff]
      %v294 = vld [vmem:[%s268 + $0x128] sm:$0xff]
      %v295 = vld [vmem:[%s268 + $0x138] sm:$0xff]
      %v296 = vld [vmem:[%s268 + $0x140] sm:$0xff]
      %v297 = vld [vmem:[%s268 + $0x150] sm:$0xff]
      %v298 = vld [vmem:[%s268 + $0x158] sm:$0xff]
      %v299 = vld [vmem:[%s268 + $0x168] sm:$0xff]
      %v300 = vld [vmem:[%s268 + $0x170] sm:$0xff]
      %v301 = vld [vmem:[%s268 + $0x1] sm:$0xff]
      %v302 = vld [vmem:[%s268 + $0x9] sm:$0xff]
      %v303 = vld [vmem:[%s268 + $0x19] sm:$0xff]
      %v304 = vld [vmem:[%s268 + $0x21] sm:$0xff]
      %v305 = vld [vmem:[%s268 + $0x31] sm:$0xff]
      %v306 = vld [vmem:[%s268 + $0x39] sm:$0xff]
      %v307 = vld [vmem:[%s268 + $0x49] sm:$0xff]
      %v308 = vld [vmem:[%s268 + $0x51] sm:$0xff]
      %v309 = vld [vmem:[%s268 + $0x61] sm:$0xff]
      %v310 = vld [vmem:[%s268 + $0x69] sm:$0xff]
      %v311 = vld [vmem:[%s268 + $0x79] sm:$0xff]
      %v312 = vld [vmem:[%s268 + $0x81] sm:$0xff]
      %v313 = vld [vmem:[%s268 + $0x91] sm:$0xff]
      %v314 = vld [vmem:[%s268 + $0x99] sm:$0xff]
      %v315 = vld [vmem:[%s268 + $0xa9] sm:$0xff]
      %v316 = vld [vmem:[%s268 + $0xb1] sm:$0xff]
      %v317 = vld [vmem:[%s268 + $0xc1] sm:$0xff]
      %v318 = vld [vmem:[%s268 + $0xc9] sm:$0xff]
      %v319 = vld [vmem:[%s268 + $0xd9] sm:$0xff]
      %v320 = vld [vmem:[%s268 + $0xe1] sm:$0xff]
      %v321 = vld [vmem:[%s268 + $0xf1] sm:$0xff]
      %v322 = vld [vmem:[%s268 + $0xf9] sm:$0xff]
      %v323 = vld [vmem:[%s268 + $0x109] sm:$0xff]
      %v324 = vld [vmem:[%s268 + $0x111] sm:$0xff]
      %v325 = vld [vmem:[%s268 + $0x121] sm:$0xff]
      %v326 = vld [vmem:[%s268 + $0x129] sm:$0xff]
      %v327 = vld [vmem:[%s268 + $0x139] sm:$0xff]
      %v328 = vld [vmem:[%s268 + $0x141] sm:$0xff]
      %v329 = vld [vmem:[%s268 + $0x151] sm:$0xff]
      %v330 = vld [vmem:[%s268 + $0x159] sm:$0xff]
      %v331 = vld [vmem:[%s268 + $0x169] sm:$0xff]
      %v332 = vld [vmem:[%s268 + $0x171] sm:$0xff]
      %v333 = vld [vmem:[%s268 + $0x2] sm:$0xff]
      %v334 = vld [vmem:[%s268 + $0xa] sm:$0xff]
      %v335 = vld [vmem:[%s268 + $0x1a] sm:$0xff]
      %v336 = vld [vmem:[%s268 + $0x22] sm:$0xff]
      %v337 = vld [vmem:[%s268 + $0x32] sm:$0xff]
      %v338 = vld [vmem:[%s268 + $0x3a] sm:$0xff]
      %v339 = vld [vmem:[%s268 + $0x4a] sm:$0xff]
      %v340 = vld [vmem:[%s268 + $0x52] sm:$0xff]
      %v341 = vld [vmem:[%s268 + $0x62] sm:$0xff]
      %v342 = vld [vmem:[%s268 + $0x6a] sm:$0xff]
      %v343 = vld [vmem:[%s268 + $0x7a] sm:$0xff]
      %v344 = vld [vmem:[%s268 + $0x82] sm:$0xff]
      %v345 = vld [vmem:[%s268 + $0x92] sm:$0xff]
      %v346 = vld [vmem:[%s268 + $0x9a] sm:$0xff]
      %v347 = vld [vmem:[%s268 + $0xaa] sm:$0xff]
      %v348 = vld [vmem:[%s268 + $0xb2] sm:$0xff]
      %v349 = vld [vmem:[%s268 + $0xc2] sm:$0xff]
      %v350 = vld [vmem:[%s268 + $0xca] sm:$0xff]
      %v351 = vld [vmem:[%s268 + $0xda] sm:$0xff]
      %v352 = vld [vmem:[%s268 + $0xe2] sm:$0xff]
      %v353 = vld [vmem:[%s268 + $0xf2] sm:$0xff]
      %v354 = vld [vmem:[%s268 + $0xfa] sm:$0xff]
      %v355 = vld [vmem:[%s268 + $0x10a] sm:$0xff]
      %v356 = vld [vmem:[%s268 + $0x112] sm:$0xff]
      %v357 = vld [vmem:[%s268 + $0x122] sm:$0xff]
      %v358 = vld [vmem:[%s268 + $0x12a] sm:$0xff]
      %v359 = vld [vmem:[%s268 + $0x13a] sm:$0xff]
      %v360 = vld [vmem:[%s268 + $0x142] sm:$0xff]
      %v361 = vld [vmem:[%s268 + $0x152] sm:$0xff]
      %v362 = vld [vmem:[%s268 + $0x15a] sm:$0xff]
      %v363 = vld [vmem:[%s268 + $0x16a] sm:$0xff]
      %v364 = vld [vmem:[%s268 + $0x172] sm:$0xff]
      %s365 = scalar_lea.vmem %s165, 48
      %v366 = vld [vmem:[%s365] sm:$0xff]
      %v367 = vld [vmem:[%s365 + $0x8] sm:$0xff]
      %v368 = vld [vmem:[%s365 + $0x18] sm:$0xff]
      %v369 = vld [vmem:[%s365 + $0x20] sm:$0xff]
      %v370 = vld [vmem:[%s365 + $0x30] sm:$0xff]
      %v371 = vld [vmem:[%s365 + $0x38] sm:$0xff]
      %v372 = vld [vmem:[%s365 + $0x48] sm:$0xff]
      %v373 = vld [vmem:[%s365 + $0x50] sm:$0xff]
      %v374 = vld [vmem:[%s365 + $0x60] sm:$0xff]
      %v375 = vld [vmem:[%s365 + $0x68] sm:$0xff]
      %v376 = vld [vmem:[%s365 + $0x78] sm:$0xff]
      %v377 = vld [vmem:[%s365 + $0x80] sm:$0xff]
      %v378 = vld [vmem:[%s365 + $0x90] sm:$0xff]
      %v379 = vld [vmem:[%s365 + $0x98] sm:$0xff]
      %v380 = vld [vmem:[%s365 + $0xa8] sm:$0xff]
      %v381 = vld [vmem:[%s365 + $0xb0] sm:$0xff]
      %v382 = vld [vmem:[%s365 + $0xc0] sm:$0xff]
      %v383 = vld [vmem:[%s365 + $0xc8] sm:$0xff]
      %v384 = vld [vmem:[%s365 + $0xd8] sm:$0xff]
      %v385 = vld [vmem:[%s365 + $0xe0] sm:$0xff]
      %v386 = vld [vmem:[%s365 + $0xf0] sm:$0xff]
      %v387 = vld [vmem:[%s365 + $0xf8] sm:$0xff]
      %v388 = vld [vmem:[%s365 + $0x108] sm:$0xff]
      %v389 = vld [vmem:[%s365 + $0x110] sm:$0xff]
      %v390 = vld [vmem:[%s365 + $0x120] sm:$0xff]
      %v391 = vld [vmem:[%s365 + $0x128] sm:$0xff]
      %v392 = vld [vmem:[%s365 + $0x138] sm:$0xff]
      %v393 = vld [vmem:[%s365 + $0x140] sm:$0xff]
      %v394 = vld [vmem:[%s365 + $0x150] sm:$0xff]
      %v395 = vld [vmem:[%s365 + $0x158] sm:$0xff]
      %v396 = vld [vmem:[%s365 + $0x168] sm:$0xff]
      %v397 = vld [vmem:[%s365 + $0x170] sm:$0xff]
      %v398 = vld [vmem:[%s365 + $0x1] sm:$0xff]
      %v399 = vld [vmem:[%s365 + $0x9] sm:$0xff]
      %v400 = vld [vmem:[%s365 + $0x19] sm:$0xff]
      %v401 = vld [vmem:[%s365 + $0x21] sm:$0xff]
      %v402 = vld [vmem:[%s365 + $0x31] sm:$0xff]
      %v403 = vld [vmem:[%s365 + $0x39] sm:$0xff]
      %v404 = vld [vmem:[%s365 + $0x49] sm:$0xff]
      %v405 = vld [vmem:[%s365 + $0x51] sm:$0xff]
      %v406 = vld [vmem:[%s365 + $0x61] sm:$0xff]
      %v407 = vld [vmem:[%s365 + $0x69] sm:$0xff]
      %v408 = vld [vmem:[%s365 + $0x79] sm:$0xff]
      %v409 = vld [vmem:[%s365 + $0x81] sm:$0xff]
      %v410 = vld [vmem:[%s365 + $0x91] sm:$0xff]
      %v411 = vld [vmem:[%s365 + $0x99] sm:$0xff]
      %v412 = vld [vmem:[%s365 + $0xa9] sm:$0xff]
      %v413 = vld [vmem:[%s365 + $0xb1] sm:$0xff]
      %v414 = vld [vmem:[%s365 + $0xc1] sm:$0xff]
      %v415 = vld [vmem:[%s365 + $0xc9] sm:$0xff]
      %v416 = vld [vmem:[%s365 + $0xd9] sm:$0xff]
      %v417 = vld [vmem:[%s365 + $0xe1] sm:$0xff]
      %v418 = vld [vmem:[%s365 + $0xf1] sm:$0xff]
      %v419 = vld [vmem:[%s365 + $0xf9] sm:$0xff]
      %v420 = vld [vmem:[%s365 + $0x109] sm:$0xff]
      %v421 = vld [vmem:[%s365 + $0x111] sm:$0xff]
      %v422 = vld [vmem:[%s365 + $0x121] sm:$0xff]
      %v423 = vld [vmem:[%s365 + $0x129] sm:$0xff]
      %v424 = vld [vmem:[%s365 + $0x139] sm:$0xff]
      %v425 = vld [vmem:[%s365 + $0x141] sm:$0xff]
      %v426 = vld [vmem:[%s365 + $0x151] sm:$0xff]
      %v427 = vld [vmem:[%s365 + $0x159] sm:$0xff]
      %v428 = vld [vmem:[%s365 + $0x169] sm:$0xff]
      %v429 = vld [vmem:[%s365 + $0x171] sm:$0xff]
      %v430 = vld [vmem:[%s365 + $0x2] sm:$0xff]
      %v431 = vld [vmem:[%s365 + $0xa] sm:$0xff]
      %v432 = vld [vmem:[%s365 + $0x1a] sm:$0xff]
      %v433 = vld [vmem:[%s365 + $0x22] sm:$0xff]
      %v434 = vld [vmem:[%s365 + $0x32] sm:$0xff]
      %v435 = vld [vmem:[%s365 + $0x3a] sm:$0xff]
      %v436 = vld [vmem:[%s365 + $0x4a] sm:$0xff]
      %v437 = vld [vmem:[%s365 + $0x52] sm:$0xff]
      %v438 = vld [vmem:[%s365 + $0x62] sm:$0xff]
      %v439 = vld [vmem:[%s365 + $0x6a] sm:$0xff]
      %v440 = vld [vmem:[%s365 + $0x7a] sm:$0xff]
      %v441 = vld [vmem:[%s365 + $0x82] sm:$0xff]
      %v442 = vld [vmem:[%s365 + $0x92] sm:$0xff]
      %v443 = vld [vmem:[%s365 + $0x9a] sm:$0xff]
      %v444 = vld [vmem:[%s365 + $0xaa] sm:$0xff]
      %v445 = vld [vmem:[%s365 + $0xb2] sm:$0xff]
      %v446 = vld [vmem:[%s365 + $0xc2] sm:$0xff]
      %v447 = vld [vmem:[%s365 + $0xca] sm:$0xff]
      %v448 = vld [vmem:[%s365 + $0xda] sm:$0xff]
      %v449 = vld [vmem:[%s365 + $0xe2] sm:$0xff]
      %v450 = vld [vmem:[%s365 + $0xf2] sm:$0xff]
      %v451 = vld [vmem:[%s365 + $0xfa] sm:$0xff]
      %v452 = vld [vmem:[%s365 + $0x10a] sm:$0xff]
      %v453 = vld [vmem:[%s365 + $0x112] sm:$0xff]
      %v454 = vld [vmem:[%s365 + $0x122] sm:$0xff]
      %v455 = vld [vmem:[%s365 + $0x12a] sm:$0xff]
      %v456 = vld [vmem:[%s365 + $0x13a] sm:$0xff]
      %v457 = vld [vmem:[%s365 + $0x142] sm:$0xff]
      %v458 = vld [vmem:[%s365 + $0x152] sm:$0xff]
      %v459 = vld [vmem:[%s365 + $0x15a] sm:$0xff]
      %v460 = vld [vmem:[%s365 + $0x16a] sm:$0xff]
      %v461 = vld [vmem:[%s365 + $0x172] sm:$0xff]
      %494 = vrot.lane.b32.xlu0 %v204, 32
      %v495 = vpop.permute.xlu0 %494
      %496 = vrot.lane.b32.xlu0 %v205, 32
      %v497 = vpop.permute.xlu0 %496
      %498 = vrot.lane.b32.xlu0 %v206, 32
      %v499 = vpop.permute.xlu0 %498
      %500 = vrot.lane.b32.xlu0 %v207, 32
      %v501 = vpop.permute.xlu0 %500
      %502 = vrot.lane.b32.xlu0 %v208, 32
      %v503 = vpop.permute.xlu0 %502
      %504 = vrot.lane.b32.xlu0 %v209, 32
      %v505 = vpop.permute.xlu0 %504
      %506 = vrot.lane.b32.xlu0 %v210, 32
      %v507 = vpop.permute.xlu0 %506
      %508 = vrot.lane.b32.xlu0 %v211, 32
      %v509 = vpop.permute.xlu0 %508
      %510 = vrot.lane.b32.xlu0 %v212, 32
      %v511 = vpop.permute.xlu0 %510
      %512 = vrot.lane.b32.xlu0 %v213, 32
      %v513 = vpop.permute.xlu0 %512
      %514 = vrot.lane.b32.xlu0 %v214, 32
      %v515 = vpop.permute.xlu0 %514
      %516 = vrot.lane.b32.xlu0 %v215, 32
      %v517 = vpop.permute.xlu0 %516
      %518 = vrot.lane.b32.xlu0 %v216, 32
      %v519 = vpop.permute.xlu0 %518
      %520 = vrot.lane.b32.xlu0 %v217, 32
      %v521 = vpop.permute.xlu0 %520
      %522 = vrot.lane.b32.xlu0 %v218, 32
      %v523 = vpop.permute.xlu0 %522
      %524 = vrot.lane.b32.xlu0 %v219, 32
      %v525 = vpop.permute.xlu0 %524
      %526 = vrot.lane.b32.xlu0 %v220, 32
      %v527 = vpop.permute.xlu0 %526
      %528 = vrot.lane.b32.xlu0 %v221, 32
      %v529 = vpop.permute.xlu0 %528
      %530 = vrot.lane.b32.xlu0 %v222, 32
      %v531 = vpop.permute.xlu0 %530
      %532 = vrot.lane.b32.xlu0 %v223, 32
      %v533 = vpop.permute.xlu0 %532
      %534 = vrot.lane.b32.xlu0 %v224, 32
      %v535 = vpop.permute.xlu0 %534
      %536 = vrot.lane.b32.xlu0 %v225, 32
      %v537 = vpop.permute.xlu0 %536
      %538 = vrot.lane.b32.xlu0 %v226, 32
      %v539 = vpop.permute.xlu0 %538
      %540 = vrot.lane.b32.xlu0 %v227, 32
      %v541 = vpop.permute.xlu0 %540
      %542 = vrot.lane.b32.xlu0 %v228, 32
      %v543 = vpop.permute.xlu0 %542
      %544 = vrot.lane.b32.xlu0 %v229, 32
      %v545 = vpop.permute.xlu0 %544
      %546 = vrot.lane.b32.xlu0 %v230, 32
      %v547 = vpop.permute.xlu0 %546
      %548 = vrot.lane.b32.xlu0 %v231, 32
      %v549 = vpop.permute.xlu0 %548
      %550 = vrot.lane.b32.xlu0 %v232, 32
      %v551 = vpop.permute.xlu0 %550
      %552 = vrot.lane.b32.xlu0 %v233, 32
      %v553 = vpop.permute.xlu0 %552
      %554 = vrot.lane.b32.xlu0 %v234, 32
      %v555 = vpop.permute.xlu0 %554
      %556 = vrot.lane.b32.xlu0 %v235, 32
      %v557 = vpop.permute.xlu0 %556
      %622 = vrot.lane.b32.xlu0 %v236, 64
      %v623 = vpop.permute.xlu0 %622
      %624 = vrot.lane.b32.xlu0 %v237, 64
      %v625 = vpop.permute.xlu0 %624
      %626 = vrot.lane.b32.xlu0 %v238, 64
      %v627 = vpop.permute.xlu0 %626
      %628 = vrot.lane.b32.xlu0 %v239, 64
      %v629 = vpop.permute.xlu0 %628
      %630 = vrot.lane.b32.xlu0 %v240, 64
      %v631 = vpop.permute.xlu0 %630
      %632 = vrot.lane.b32.xlu0 %v241, 64
      %v633 = vpop.permute.xlu0 %632
      %634 = vrot.lane.b32.xlu0 %v242, 64
      %v635 = vpop.permute.xlu0 %634
      %636 = vrot.lane.b32.xlu0 %v243, 64
      %v637 = vpop.permute.xlu0 %636
      %638 = vrot.lane.b32.xlu0 %v244, 64
      %v639 = vpop.permute.xlu0 %638
      %640 = vrot.lane.b32.xlu0 %v245, 64
      %v641 = vpop.permute.xlu0 %640
      %642 = vrot.lane.b32.xlu0 %v246, 64
      %v643 = vpop.permute.xlu0 %642
      %644 = vrot.lane.b32.xlu0 %v247, 64
      %v645 = vpop.permute.xlu0 %644
      %646 = vrot.lane.b32.xlu0 %v248, 64
      %v647 = vpop.permute.xlu0 %646
      %648 = vrot.lane.b32.xlu0 %v249, 64
      %v649 = vpop.permute.xlu0 %648
      %650 = vrot.lane.b32.xlu0 %v250, 64
      %v651 = vpop.permute.xlu0 %650
      %652 = vrot.lane.b32.xlu0 %v251, 64
      %v653 = vpop.permute.xlu0 %652
      %654 = vrot.lane.b32.xlu0 %v252, 64
      %v655 = vpop.permute.xlu0 %654
      %656 = vrot.lane.b32.xlu0 %v253, 64
      %v657 = vpop.permute.xlu0 %656
      %658 = vrot.lane.b32.xlu0 %v254, 64
      %v659 = vpop.permute.xlu0 %658
      %660 = vrot.lane.b32.xlu0 %v255, 64
      %v661 = vpop.permute.xlu0 %660
      %662 = vrot.lane.b32.xlu0 %v256, 64
      %v663 = vpop.permute.xlu0 %662
      %664 = vrot.lane.b32.xlu0 %v257, 64
      %v665 = vpop.permute.xlu0 %664
      %666 = vrot.lane.b32.xlu0 %v258, 64
      %v667 = vpop.permute.xlu0 %666
      %668 = vrot.lane.b32.xlu0 %v259, 64
      %v669 = vpop.permute.xlu0 %668
      %670 = vrot.lane.b32.xlu0 %v260, 64
      %v671 = vpop.permute.xlu0 %670
      %672 = vrot.lane.b32.xlu0 %v261, 64
      %v673 = vpop.permute.xlu0 %672
      %674 = vrot.lane.b32.xlu0 %v262, 64
      %v675 = vpop.permute.xlu0 %674
      %676 = vrot.lane.b32.xlu0 %v263, 64
      %v677 = vpop.permute.xlu0 %676
      %678 = vrot.lane.b32.xlu0 %v264, 64
      %v679 = vpop.permute.xlu0 %678
      %680 = vrot.lane.b32.xlu0 %v265, 64
      %v681 = vpop.permute.xlu0 %680
      %682 = vrot.lane.b32.xlu0 %v266, 64
      %v683 = vpop.permute.xlu0 %682
      %684 = vrot.lane.b32.xlu0 %v267, 64
      %v685 = vpop.permute.xlu0 %684
      %750 = vrot.lane.b32.xlu0 %v269, 96
      %v751 = vpop.permute.xlu0 %750
      %752 = vrot.lane.b32.xlu0 %v270, 96
      %v753 = vpop.permute.xlu0 %752
      %754 = vrot.lane.b32.xlu0 %v271, 96
      %v755 = vpop.permute.xlu0 %754
      %756 = vrot.lane.b32.xlu0 %v272, 96
      %v757 = vpop.permute.xlu0 %756
      %758 = vrot.lane.b32.xlu0 %v273, 96
      %v759 = vpop.permute.xlu0 %758
      %760 = vrot.lane.b32.xlu0 %v274, 96
      %v761 = vpop.permute.xlu0 %760
      %762 = vrot.lane.b32.xlu0 %v275, 96
      %v763 = vpop.permute.xlu0 %762
      %764 = vrot.lane.b32.xlu0 %v276, 96
      %v765 = vpop.permute.xlu0 %764
      %766 = vrot.lane.b32.xlu0 %v277, 96
      %v767 = vpop.permute.xlu0 %766
      %768 = vrot.lane.b32.xlu0 %v278, 96
      %v769 = vpop.permute.xlu0 %768
      %770 = vrot.lane.b32.xlu0 %v279, 96
      %v771 = vpop.permute.xlu0 %770
      %772 = vrot.lane.b32.xlu0 %v280, 96
      %v773 = vpop.permute.xlu0 %772
      %774 = vrot.lane.b32.xlu0 %v281, 96
      %v775 = vpop.permute.xlu0 %774
      %776 = vrot.lane.b32.xlu0 %v282, 96
      %v777 = vpop.permute.xlu0 %776
      %778 = vrot.lane.b32.xlu0 %v283, 96
      %v779 = vpop.permute.xlu0 %778
      %780 = vrot.lane.b32.xlu0 %v284, 96
      %v781 = vpop.permute.xlu0 %780
      %782 = vrot.lane.b32.xlu0 %v285, 96
      %v783 = vpop.permute.xlu0 %782
      %784 = vrot.lane.b32.xlu0 %v286, 96
      %v785 = vpop.permute.xlu0 %784
      %786 = vrot.lane.b32.xlu0 %v287, 96
      %v787 = vpop.permute.xlu0 %786
      %788 = vrot.lane.b32.xlu0 %v288, 96
      %v789 = vpop.permute.xlu0 %788
      %790 = vrot.lane.b32.xlu0 %v289, 96
      %v791 = vpop.permute.xlu0 %790
      %792 = vrot.lane.b32.xlu0 %v290, 96
      %v793 = vpop.permute.xlu0 %792
      %794 = vrot.lane.b32.xlu0 %v291, 96
      %v795 = vpop.permute.xlu0 %794
      %796 = vrot.lane.b32.xlu0 %v292, 96
      %v797 = vpop.permute.xlu0 %796
      %798 = vrot.lane.b32.xlu0 %v293, 96
      %v799 = vpop.permute.xlu0 %798
      %800 = vrot.lane.b32.xlu0 %v294, 96
      %v801 = vpop.permute.xlu0 %800
      %802 = vrot.lane.b32.xlu0 %v295, 96
      %v803 = vpop.permute.xlu0 %802
      %804 = vrot.lane.b32.xlu0 %v296, 96
      %v805 = vpop.permute.xlu0 %804
      %806 = vrot.lane.b32.xlu0 %v297, 96
      %v807 = vpop.permute.xlu0 %806
      %808 = vrot.lane.b32.xlu0 %v298, 96
      %v809 = vpop.permute.xlu0 %808
      %810 = vrot.lane.b32.xlu0 %v299, 96
      %v811 = vpop.permute.xlu0 %810
      %812 = vrot.lane.b32.xlu0 %v300, 96
      %v813 = vpop.permute.xlu0 %812
      %878 = vrot.lane.b32.xlu0 %v333, 32
      %v879 = vpop.permute.xlu0 %878
      %880 = vrot.lane.b32.xlu0 %v334, 32
      %v881 = vpop.permute.xlu0 %880
      %882 = vrot.lane.b32.xlu0 %v335, 32
      %v883 = vpop.permute.xlu0 %882
      %884 = vrot.lane.b32.xlu0 %v336, 32
      %v885 = vpop.permute.xlu0 %884
      %886 = vrot.lane.b32.xlu0 %v337, 32
      %v887 = vpop.permute.xlu0 %886
      %888 = vrot.lane.b32.xlu0 %v338, 32
      %v889 = vpop.permute.xlu0 %888
      %890 = vrot.lane.b32.xlu0 %v339, 32
      %v891 = vpop.permute.xlu0 %890
      %892 = vrot.lane.b32.xlu0 %v340, 32
      %v893 = vpop.permute.xlu0 %892
      %894 = vrot.lane.b32.xlu0 %v341, 32
      %v895 = vpop.permute.xlu0 %894
      %896 = vrot.lane.b32.xlu0 %v342, 32
      %v897 = vpop.permute.xlu0 %896
      %898 = vrot.lane.b32.xlu0 %v343, 32
      %v899 = vpop.permute.xlu0 %898
      %900 = vrot.lane.b32.xlu0 %v344, 32
      %v901 = vpop.permute.xlu0 %900
      %902 = vrot.lane.b32.xlu0 %v345, 32
      %v903 = vpop.permute.xlu0 %902
      %904 = vrot.lane.b32.xlu0 %v346, 32
      %v905 = vpop.permute.xlu0 %904
      %906 = vrot.lane.b32.xlu0 %v347, 32
      %v907 = vpop.permute.xlu0 %906
      %908 = vrot.lane.b32.xlu0 %v348, 32
      %v909 = vpop.permute.xlu0 %908
      %910 = vrot.lane.b32.xlu0 %v349, 32
      %v911 = vpop.permute.xlu0 %910
      %912 = vrot.lane.b32.xlu0 %v350, 32
      %v913 = vpop.permute.xlu0 %912
      %914 = vrot.lane.b32.xlu0 %v351, 32
      %v915 = vpop.permute.xlu0 %914
      %916 = vrot.lane.b32.xlu0 %v352, 32
      %v917 = vpop.permute.xlu0 %916
      %918 = vrot.lane.b32.xlu0 %v353, 32
      %v919 = vpop.permute.xlu0 %918
      %920 = vrot.lane.b32.xlu0 %v354, 32
      %v921 = vpop.permute.xlu0 %920
      %922 = vrot.lane.b32.xlu0 %v355, 32
      %v923 = vpop.permute.xlu0 %922
      %924 = vrot.lane.b32.xlu0 %v356, 32
      %v925 = vpop.permute.xlu0 %924
      %926 = vrot.lane.b32.xlu0 %v357, 32
      %v927 = vpop.permute.xlu0 %926
      %928 = vrot.lane.b32.xlu0 %v358, 32
      %v929 = vpop.permute.xlu0 %928
      %930 = vrot.lane.b32.xlu0 %v359, 32
      %v931 = vpop.permute.xlu0 %930
      %932 = vrot.lane.b32.xlu0 %v360, 32
      %v933 = vpop.permute.xlu0 %932
      %934 = vrot.lane.b32.xlu0 %v361, 32
      %v935 = vpop.permute.xlu0 %934
      %936 = vrot.lane.b32.xlu0 %v362, 32
      %v937 = vpop.permute.xlu0 %936
      %938 = vrot.lane.b32.xlu0 %v363, 32
      %v939 = vpop.permute.xlu0 %938
      %940 = vrot.lane.b32.xlu0 %v364, 32
      %v941 = vpop.permute.xlu0 %940
      %1006 = vrot.lane.b32.xlu0 %v366, 64
      %v1007 = vpop.permute.xlu0 %1006
      %1008 = vrot.lane.b32.xlu0 %v367, 64
      %v1009 = vpop.permute.xlu0 %1008
      %1010 = vrot.lane.b32.xlu0 %v368, 64
      %v1011 = vpop.permute.xlu0 %1010
      %1012 = vrot.lane.b32.xlu0 %v369, 64
      %v1013 = vpop.permute.xlu0 %1012
      %1014 = vrot.lane.b32.xlu0 %v370, 64
      %v1015 = vpop.permute.xlu0 %1014
      %1016 = vrot.lane.b32.xlu0 %v371, 64
      %v1017 = vpop.permute.xlu0 %1016
      %1018 = vrot.lane.b32.xlu0 %v372, 64
      %v1019 = vpop.permute.xlu0 %1018
      %1020 = vrot.lane.b32.xlu0 %v373, 64
      %v1021 = vpop.permute.xlu0 %1020
      %1022 = vrot.lane.b32.xlu0 %v374, 64
      %v1023 = vpop.permute.xlu0 %1022
      %1024 = vrot.lane.b32.xlu0 %v375, 64
      %v1025 = vpop.permute.xlu0 %1024
      %1026 = vrot.lane.b32.xlu0 %v376, 64
      %v1027 = vpop.permute.xlu0 %1026
      %1028 = vrot.lane.b32.xlu0 %v377, 64
      %v1029 = vpop.permute.xlu0 %1028
      %1030 = vrot.lane.b32.xlu0 %v378, 64
      %v1031 = vpop.permute.xlu0 %1030
      %1032 = vrot.lane.b32.xlu0 %v379, 64
      %v1033 = vpop.permute.xlu0 %1032
      %1034 = vrot.lane.b32.xlu0 %v380, 64
      %v1035 = vpop.permute.xlu0 %1034
      %1036 = vrot.lane.b32.xlu0 %v381, 64
      %v1037 = vpop.permute.xlu0 %1036
      %1038 = vrot.lane.b32.xlu0 %v382, 64
      %v1039 = vpop.permute.xlu0 %1038
      %1040 = vrot.lane.b32.xlu0 %v383, 64
      %v1041 = vpop.permute.xlu0 %1040
      %1042 = vrot.lane.b32.xlu0 %v384, 64
      %v1043 = vpop.permute.xlu0 %1042
      %1044 = vrot.lane.b32.xlu0 %v385, 64
      %v1045 = vpop.permute.xlu0 %1044
      %1046 = vrot.lane.b32.xlu0 %v386, 64
      %v1047 = vpop.permute.xlu0 %1046
      %1048 = vrot.lane.b32.xlu0 %v387, 64
      %v1049 = vpop.permute.xlu0 %1048
      %1050 = vrot.lane.b32.xlu0 %v388, 64
      %v1051 = vpop.permute.xlu0 %1050
      %1052 = vrot.lane.b32.xlu0 %v389, 64
      %v1053 = vpop.permute.xlu0 %1052
      %1054 = vrot.lane.b32.xlu0 %v390, 64
      %v1055 = vpop.permute.xlu0 %1054
      %1056 = vrot.lane.b32.xlu0 %v391, 64
      %v1057 = vpop.permute.xlu0 %1056
      %1058 = vrot.lane.b32.xlu0 %v392, 64
      %v1059 = vpop.permute.xlu0 %1058
      %1060 = vrot.lane.b32.xlu0 %v393, 64
      %v1061 = vpop.permute.xlu0 %1060
      %1062 = vrot.lane.b32.xlu0 %v394, 64
      %v1063 = vpop.permute.xlu0 %1062
      %1064 = vrot.lane.b32.xlu0 %v395, 64
      %v1065 = vpop.permute.xlu0 %1064
      %1066 = vrot.lane.b32.xlu0 %v396, 64
      %v1067 = vpop.permute.xlu0 %1066
      %1068 = vrot.lane.b32.xlu0 %v397, 64
      %v1069 = vpop.permute.xlu0 %1068
      %1134 = vrot.lane.b32.xlu0 %v398, 96
      %v1135 = vpop.permute.xlu0 %1134
      %1136 = vrot.lane.b32.xlu0 %v399, 96
      %v1137 = vpop.permute.xlu0 %1136
      %1138 = vrot.lane.b32.xlu0 %v400, 96
      %v1139 = vpop.permute.xlu0 %1138
      %1140 = vrot.lane.b32.xlu0 %v401, 96
      %v1141 = vpop.permute.xlu0 %1140
      %1142 = vrot.lane.b32.xlu0 %v402, 96
      %v1143 = vpop.permute.xlu0 %1142
      %1144 = vrot.lane.b32.xlu0 %v403, 96
      %v1145 = vpop.permute.xlu0 %1144
      %1146 = vrot.lane.b32.xlu0 %v404, 96
      %v1147 = vpop.permute.xlu0 %1146
      %1148 = vrot.lane.b32.xlu0 %v405, 96
      %v1149 = vpop.permute.xlu0 %1148
      %1150 = vrot.lane.b32.xlu0 %v406, 96
      %v1151 = vpop.permute.xlu0 %1150
      %1152 = vrot.lane.b32.xlu0 %v407, 96
      %v1153 = vpop.permute.xlu0 %1152
      %1154 = vrot.lane.b32.xlu0 %v408, 96
      %v1155 = vpop.permute.xlu0 %1154
      %1156 = vrot.lane.b32.xlu0 %v409, 96
      %v1157 = vpop.permute.xlu0 %1156
      %1158 = vrot.lane.b32.xlu0 %v410, 96
      %v1159 = vpop.permute.xlu0 %1158
      %1160 = vrot.lane.b32.xlu0 %v411, 96
      %v1161 = vpop.permute.xlu0 %1160
      %1162 = vrot.lane.b32.xlu0 %v412, 96
      %v1163 = vpop.permute.xlu0 %1162
      %1164 = vrot.lane.b32.xlu0 %v413, 96
      %v1165 = vpop.permute.xlu0 %1164
      %1166 = vrot.lane.b32.xlu0 %v414, 96
      %v1167 = vpop.permute.xlu0 %1166
      %1168 = vrot.lane.b32.xlu0 %v415, 96
      %v1169 = vpop.permute.xlu0 %1168
      %1170 = vrot.lane.b32.xlu0 %v416, 96
      %v1171 = vpop.permute.xlu0 %1170
      %1172 = vrot.lane.b32.xlu0 %v417, 96
      %v1173 = vpop.permute.xlu0 %1172
      %1174 = vrot.lane.b32.xlu0 %v418, 96
      %v1175 = vpop.permute.xlu0 %1174
      %1176 = vrot.lane.b32.xlu0 %v419, 96
      %v1177 = vpop.permute.xlu0 %1176
      %1178 = vrot.lane.b32.xlu0 %v420, 96
      %v1179 = vpop.permute.xlu0 %1178
      %1180 = vrot.lane.b32.xlu0 %v421, 96
      %v1181 = vpop.permute.xlu0 %1180
      %1182 = vrot.lane.b32.xlu0 %v422, 96
      %v1183 = vpop.permute.xlu0 %1182
      %1184 = vrot.lane.b32.xlu0 %v423, 96
      %v1185 = vpop.permute.xlu0 %1184
      %1186 = vrot.lane.b32.xlu0 %v424, 96
      %v1187 = vpop.permute.xlu0 %1186
      %1188 = vrot.lane.b32.xlu0 %v425, 96
      %v1189 = vpop.permute.xlu0 %1188
      %1190 = vrot.lane.b32.xlu0 %v426, 96
      %v1191 = vpop.permute.xlu0 %1190
      %1192 = vrot.lane.b32.xlu0 %v427, 96
      %v1193 = vpop.permute.xlu0 %1192
      %1194 = vrot.lane.b32.xlu0 %v428, 96
      %v1195 = vpop.permute.xlu0 %1194
      %1196 = vrot.lane.b32.xlu0 %v429, 96
      %v1197 = vpop.permute.xlu0 %1196
      %vm1230 = vcmask 261120
      %v1231 = vsel %vm1230, %v172, %v495
      %v1232 = vsel %vm1230, %v173, %v497
      %v1233 = vsel %vm1230, %v174, %v499
      %v1234 = vsel %vm1230, %v175, %v501
      %v1235 = vsel %vm1230, %v176, %v503
      %v1236 = vsel %vm1230, %v177, %v505
      %v1237 = vsel %vm1230, %v178, %v507
      %v1238 = vsel %vm1230, %v179, %v509
      %v1239 = vsel %vm1230, %v180, %v511
      %v1240 = vsel %vm1230, %v181, %v513
      %v1241 = vsel %vm1230, %v182, %v515
      %v1242 = vsel %vm1230, %v183, %v517
      %v1243 = vsel %vm1230, %v184, %v519
      %v1244 = vsel %vm1230, %v185, %v521
      %v1245 = vsel %vm1230, %v186, %v523
      %v1246 = vsel %vm1230, %v187, %v525
      %v1247 = vsel %vm1230, %v188, %v527
      %v1248 = vsel %vm1230, %v189, %v529
      %v1249 = vsel %vm1230, %v190, %v531
      %v1250 = vsel %vm1230, %v191, %v533
      %v1251 = vsel %vm1230, %v192, %v535
      %v1252 = vsel %vm1230, %v193, %v537
      %v1253 = vsel %vm1230, %v194, %v539
      %v1254 = vsel %vm1230, %v195, %v541
      %v1255 = vsel %vm1230, %v196, %v543
      %v1256 = vsel %vm1230, %v197, %v545
      %v1257 = vsel %vm1230, %v198, %v547
      %v1258 = vsel %vm1230, %v199, %v549
      %v1259 = vsel %vm1230, %v200, %v551
      %v1260 = vsel %vm1230, %v201, %v553
      %v1261 = vsel %vm1230, %v202, %v555
      %v1262 = vsel %vm1230, %v203, %v557
      %vm1263 = vcmask 523264
      %v1264 = vsel %vm1263, %v1231, %v623
      %v1265 = vsel %vm1263, %v1232, %v625
      %v1266 = vsel %vm1263, %v1233, %v627
      %v1267 = vsel %vm1263, %v1234, %v629
      %v1268 = vsel %vm1263, %v1235, %v631
      %v1269 = vsel %vm1263, %v1236, %v633
      %v1270 = vsel %vm1263, %v1237, %v635
      %v1271 = vsel %vm1263, %v1238, %v637
      %v1272 = vsel %vm1263, %v1239, %v639
      %v1273 = vsel %vm1263, %v1240, %v641
      %v1274 = vsel %vm1263, %v1241, %v643
      %v1275 = vsel %vm1263, %v1242, %v645
      %v1276 = vsel %vm1263, %v1243, %v647
      %v1277 = vsel %vm1263, %v1244, %v649
      %v1278 = vsel %vm1263, %v1245, %v651
      %v1279 = vsel %vm1263, %v1246, %v653
      %v1280 = vsel %vm1263, %v1247, %v655
      %v1281 = vsel %vm1263, %v1248, %v657
      %v1282 = vsel %vm1263, %v1249, %v659
      %v1283 = vsel %vm1263, %v1250, %v661
      %v1284 = vsel %vm1263, %v1251, %v663
      %v1285 = vsel %vm1263, %v1252, %v665
      %v1286 = vsel %vm1263, %v1253, %v667
      %v1287 = vsel %vm1263, %v1254, %v669
      %v1288 = vsel %vm1263, %v1255, %v671
      %v1289 = vsel %vm1263, %v1256, %v673
      %v1290 = vsel %vm1263, %v1257, %v675
      %v1291 = vsel %vm1263, %v1258, %v677
      %v1292 = vsel %vm1263, %v1259, %v679
      %v1293 = vsel %vm1263, %v1260, %v681
      %v1294 = vsel %vm1263, %v1261, %v683
      %v1295 = vsel %vm1263, %v1262, %v685
      %vm1296 = vcmask 785408
      %v1297 = vsel %vm1296, %v1264, %v751
      %v1298 = vsel %vm1296, %v1265, %v753
      %v1299 = vsel %vm1296, %v1266, %v755
      %v1300 = vsel %vm1296, %v1267, %v757
      %v1301 = vsel %vm1296, %v1268, %v759
      %v1302 = vsel %vm1296, %v1269, %v761
      %v1303 = vsel %vm1296, %v1270, %v763
      %v1304 = vsel %vm1296, %v1271, %v765
      %v1305 = vsel %vm1296, %v1272, %v767
      %v1306 = vsel %vm1296, %v1273, %v769
      %v1307 = vsel %vm1296, %v1274, %v771
      %v1308 = vsel %vm1296, %v1275, %v773
      %v1309 = vsel %vm1296, %v1276, %v775
      %v1310 = vsel %vm1296, %v1277, %v777
      %v1311 = vsel %vm1296, %v1278, %v779
      %v1312 = vsel %vm1296, %v1279, %v781
      %v1313 = vsel %vm1296, %v1280, %v783
      %v1314 = vsel %vm1296, %v1281, %v785
      %v1315 = vsel %vm1296, %v1282, %v787
      %v1316 = vsel %vm1296, %v1283, %v789
      %v1317 = vsel %vm1296, %v1284, %v791
      %v1318 = vsel %vm1296, %v1285, %v793
      %v1319 = vsel %vm1296, %v1286, %v795
      %v1320 = vsel %vm1296, %v1287, %v797
      %v1321 = vsel %vm1296, %v1288, %v799
      %v1322 = vsel %vm1296, %v1289, %v801
      %v1323 = vsel %vm1296, %v1290, %v803
      %v1324 = vsel %vm1296, %v1291, %v805
      %v1325 = vsel %vm1296, %v1292, %v807
      %v1326 = vsel %vm1296, %v1293, %v809
      %v1327 = vsel %vm1296, %v1294, %v811
      %v1328 = vsel %vm1296, %v1295, %v813
      %v1329 = vsel %vm1230, %v301, %v879
      %v1330 = vsel %vm1230, %v302, %v881
      %v1331 = vsel %vm1230, %v303, %v883
      %v1332 = vsel %vm1230, %v304, %v885
      %v1333 = vsel %vm1230, %v305, %v887
      %v1334 = vsel %vm1230, %v306, %v889
      %v1335 = vsel %vm1230, %v307, %v891
      %v1336 = vsel %vm1230, %v308, %v893
      %v1337 = vsel %vm1230, %v309, %v895
      %v1338 = vsel %vm1230, %v310, %v897
      %v1339 = vsel %vm1230, %v311, %v899
      %v1340 = vsel %vm1230, %v312, %v901
      %v1341 = vsel %vm1230, %v313, %v903
      %v1342 = vsel %vm1230, %v314, %v905
      %v1343 = vsel %vm1230, %v315, %v907
      %v1344 = vsel %vm1230, %v316, %v909
      %v1345 = vsel %vm1230, %v317, %v911
      %v1346 = vsel %vm1230, %v318, %v913
      %v1347 = vsel %vm1230, %v319, %v915
      %v1348 = vsel %vm1230, %v320, %v917
      %v1349 = vsel %vm1230, %v321, %v919
      %v1350 = vsel %vm1230, %v322, %v921
      %v1351 = vsel %vm1230, %v323, %v923
      %v1352 = vsel %vm1230, %v324, %v925
      %v1353 = vsel %vm1230, %v325, %v927
      %v1354 = vsel %vm1230, %v326, %v929
      %v1355 = vsel %vm1230, %v327, %v931
      %v1356 = vsel %vm1230, %v328, %v933
      %v1357 = vsel %vm1230, %v329, %v935
      %v1358 = vsel %vm1230, %v330, %v937
      %v1359 = vsel %vm1230, %v331, %v939
      %v1360 = vsel %vm1230, %v332, %v941
      %v1361 = vsel %vm1263, %v1329, %v1007
      %v1362 = vsel %vm1263, %v1330, %v1009
      %v1363 = vsel %vm1263, %v1331, %v1011
      %v1364 = vsel %vm1263, %v1332, %v1013
      %v1365 = vsel %vm1263, %v1333, %v1015
      %v1366 = vsel %vm1263, %v1334, %v1017
      %v1367 = vsel %vm1263, %v1335, %v1019
      %v1368 = vsel %vm1263, %v1336, %v1021
      %v1369 = vsel %vm1263, %v1337, %v1023
      %v1370 = vsel %vm1263, %v1338, %v1025
      %v1371 = vsel %vm1263, %v1339, %v1027
      %v1372 = vsel %vm1263, %v1340, %v1029
      %v1373 = vsel %vm1263, %v1341, %v1031
      %v1374 = vsel %vm1263, %v1342, %v1033
      %v1375 = vsel %vm1263, %v1343, %v1035
      %v1376 = vsel %vm1263, %v1344, %v1037
      %v1377 = vsel %vm1263, %v1345, %v1039
      %v1378 = vsel %vm1263, %v1346, %v1041
      %v1379 = vsel %vm1263, %v1347, %v1043
      %v1380 = vsel %vm1263, %v1348, %v1045
      %v1381 = vsel %vm1263, %v1349, %v1047
      %v1382 = vsel %vm1263, %v1350, %v1049
      %v1383 = vsel %vm1263, %v1351, %v1051
      %v1384 = vsel %vm1263, %v1352, %v1053
      %v1385 = vsel %vm1263, %v1353, %v1055
      %v1386 = vsel %vm1263, %v1354, %v1057
      %v1387 = vsel %vm1263, %v1355, %v1059
      %v1388 = vsel %vm1263, %v1356, %v1061
      %v1389 = vsel %vm1263, %v1357, %v1063
      %v1390 = vsel %vm1263, %v1358, %v1065
      %v1391 = vsel %vm1263, %v1359, %v1067
      %v1392 = vsel %vm1263, %v1360, %v1069
      %v1393 = vsel %vm1296, %v1361, %v1135
      %v1394 = vsel %vm1296, %v1362, %v1137
      %v1395 = vsel %vm1296, %v1363, %v1139
      %v1396 = vsel %vm1296, %v1364, %v1141
      %v1397 = vsel %vm1296, %v1365, %v1143
      %v1398 = vsel %vm1296, %v1366, %v1145
      %v1399 = vsel %vm1296, %v1367, %v1147
      %v1400 = vsel %vm1296, %v1368, %v1149
      %v1401 = vsel %vm1296, %v1369, %v1151
      %v1402 = vsel %vm1296, %v1370, %v1153
      %v1403 = vsel %vm1296, %v1371, %v1155
      %v1404 = vsel %vm1296, %v1372, %v1157
      %v1405 = vsel %vm1296, %v1373, %v1159
      %v1406 = vsel %vm1296, %v1374, %v1161
      %v1407 = vsel %vm1296, %v1375, %v1163
      %v1408 = vsel %vm1296, %v1376, %v1165
      %v1409 = vsel %vm1296, %v1377, %v1167
      %v1410 = vsel %vm1296, %v1378, %v1169
      %v1411 = vsel %vm1296, %v1379, %v1171
      %v1412 = vsel %vm1296, %v1380, %v1173
      %v1413 = vsel %vm1296, %v1381, %v1175
      %v1414 = vsel %vm1296, %v1382, %v1177
      %v1415 = vsel %vm1296, %v1383, %v1179
      %v1416 = vsel %vm1296, %v1384, %v1181
      %v1417 = vsel %vm1296, %v1385, %v1183
      %v1418 = vsel %vm1296, %v1386, %v1185
      %v1419 = vsel %vm1296, %v1387, %v1187
      %v1420 = vsel %vm1296, %v1388, %v1189
      %v1421 = vsel %vm1296, %v1389, %v1191
      %v1422 = vsel %vm1296, %v1390, %v1193
      %v1423 = vsel %vm1296, %v1391, %v1195
      %v1424 = vsel %vm1296, %v1392, %v1197
      %v1425 = vpack.c.bf16 %v1298, %v1297
      %v1426 = vpack.c.bf16 %v1394, %v1393
      %v1427 = vpack.c.bf16 %v431, %v430
      %v1428 = vpack.c.bf16 %v1300, %v1299
      %v1429 = vpack.c.bf16 %v1396, %v1395
      %v1430 = vpack.c.bf16 %v433, %v432
      %v1431 = vpack.c.bf16 %v1302, %v1301
      %v1432 = vpack.c.bf16 %v1398, %v1397
      %v1433 = vpack.c.bf16 %v435, %v434
      %v1434 = vpack.c.bf16 %v1304, %v1303
      %v1435 = vpack.c.bf16 %v1400, %v1399
      %v1436 = vpack.c.bf16 %v437, %v436
      %v1437 = vpack.c.bf16 %v1306, %v1305
      %v1438 = vpack.c.bf16 %v1402, %v1401
      %v1439 = vpack.c.bf16 %v439, %v438
      %v1440 = vpack.c.bf16 %v1308, %v1307
      %v1441 = vpack.c.bf16 %v1404, %v1403
      %v1442 = vpack.c.bf16 %v441, %v440
      %v1443 = vpack.c.bf16 %v1310, %v1309
      %v1444 = vpack.c.bf16 %v1406, %v1405
      %v1445 = vpack.c.bf16 %v443, %v442
      %v1446 = vpack.c.bf16 %v1312, %v1311
      %v1447 = vpack.c.bf16 %v1408, %v1407
      %v1448 = vpack.c.bf16 %v445, %v444
      %v1449 = vpack.c.bf16 %v1314, %v1313
      %v1450 = vpack.c.bf16 %v1410, %v1409
      %v1451 = vpack.c.bf16 %v447, %v446
      %v1452 = vpack.c.bf16 %v1316, %v1315
      %v1453 = vpack.c.bf16 %v1412, %v1411
      %v1454 = vpack.c.bf16 %v449, %v448
      %v1455 = vpack.c.bf16 %v1318, %v1317
      %v1456 = vpack.c.bf16 %v1414, %v1413
      %v1457 = vpack.c.bf16 %v451, %v450
      %v1458 = vpack.c.bf16 %v1320, %v1319
      %v1459 = vpack.c.bf16 %v1416, %v1415
      %v1460 = vpack.c.bf16 %v453, %v452
      %v1461 = vpack.c.bf16 %v1322, %v1321
      %v1462 = vpack.c.bf16 %v1418, %v1417
      %v1463 = vpack.c.bf16 %v455, %v454
      %v1464 = vpack.c.bf16 %v1324, %v1323
      %v1465 = vpack.c.bf16 %v1420, %v1419
      %v1466 = vpack.c.bf16 %v457, %v456
      %v1467 = vpack.c.bf16 %v1326, %v1325
      %v1468 = vpack.c.bf16 %v1422, %v1421
      %v1469 = vpack.c.bf16 %v459, %v458
      %v1470 = vpack.c.bf16 %v1328, %v1327
      %v1471 = vpack.c.bf16 %v1424, %v1423
      %v1472 = vpack.c.bf16 %v461, %v460
      %v1473 = vld [vmem:[%s1] sm:$0xf]
      %v1474 = vld [vmem:[%s1 + $0x4] sm:$0xf]
      %v1475 = vld [vmem:[%s1 + $0x8] sm:$0xf]
      %v1476 = vld [vmem:[%s1 + $0xc] sm:$0xf]
      %v1477 = vld [vmem:[%s1 + $0x10] sm:$0xf]
      %v1478 = vld [vmem:[%s1 + $0x14] sm:$0xf]
      %v1479 = vld [vmem:[%s1 + $0x18] sm:$0xf]
      %v1480 = vld [vmem:[%s1 + $0x1c] sm:$0xf]
      %v1481 = vld [vmem:[%s1 + $0x20] sm:$0xf]
      %v1482 = vld [vmem:[%s1 + $0x24] sm:$0xf]
      %v1483 = vld [vmem:[%s1 + $0x28] sm:$0xf]
      %v1484 = vld [vmem:[%s1 + $0x2c] sm:$0xf]
      %v1485 = vld [vmem:[%s1 + $0x30] sm:$0xf]
      %v1486 = vld [vmem:[%s1 + $0x34] sm:$0xf]
      %v1487 = vld [vmem:[%s1 + $0x38] sm:$0xf]
      %v1488 = vld [vmem:[%s1 + $0x3c] sm:$0xf]
      %v1489 = vld [vmem:[%s1 + $0x40] sm:$0xf]
      %v1490 = vld [vmem:[%s1 + $0x44] sm:$0xf]
      %v1491 = vld [vmem:[%s1 + $0x48] sm:$0xf]
      %v1492 = vld [vmem:[%s1 + $0x4c] sm:$0xf]
      %v1493 = vld [vmem:[%s1 + $0x50] sm:$0xf]
      %v1494 = vld [vmem:[%s1 + $0x54] sm:$0xf]
      %v1495 = vld [vmem:[%s1 + $0x58] sm:$0xf]
      %v1496 = vld [vmem:[%s1 + $0x5c] sm:$0xf]
      %v1497 = vld [vmem:[%s1 + $0x60] sm:$0xf]
      %v1498 = vld [vmem:[%s1 + $0x64] sm:$0xf]
      %v1499 = vld [vmem:[%s1 + $0x68] sm:$0xf]
      %v1500 = vld [vmem:[%s1 + $0x6c] sm:$0xf]
      %v1501 = vld [vmem:[%s1 + $0x70] sm:$0xf]
      %v1502 = vld [vmem:[%s1 + $0x74] sm:$0xf]
      %v1503 = vld [vmem:[%s1 + $0x78] sm:$0xf]
      %v1504 = vld [vmem:[%s1 + $0x7c] sm:$0xf]
      %v1505 = vld [vmem:[%s1 + $0x80] sm:$0xf]
      %v1506 = vld [vmem:[%s1 + $0x84] sm:$0xf]
      %v1507 = vld [vmem:[%s1 + $0x88] sm:$0xf]
      %v1508 = vld [vmem:[%s1 + $0x8c] sm:$0xf]
      %v1509 = vld [vmem:[%s2] sm:$0x1]
      %v1511 = vperm.slane %v1509, 0
      %v1549 = vunpack.c.l.b16 %v1473
      %v1550 = vunpack.c.l.b16 %v1474
      %v1551 = vunpack.c.l.b16 %v1475
      %v1552 = vunpack.c.l.b16 %v1476
      %v1553 = vunpack.c.l.b16 %v1477
      %v1554 = vunpack.c.l.b16 %v1478
      %v1555 = vunpack.c.l.b16 %v1479
      %v1556 = vunpack.c.l.b16 %v1480
      %v1557 = vunpack.c.l.b16 %v1481
      %v1558 = vunpack.c.l.b16 %v1482
      %v1559 = vunpack.c.l.b16 %v1483
      %v1560 = vunpack.c.l.b16 %v1484
      %v1561 = vunpack.c.l.b16 %v1485
      %v1562 = vunpack.c.l.b16 %v1486
      %v1563 = vunpack.c.l.b16 %v1487
      %v1564 = vunpack.c.l.b16 %v1488
      %v1565 = vunpack.c.l.b16 %v1489
      %v1566 = vunpack.c.l.b16 %v1490
      %v1567 = vunpack.c.l.b16 %v1491
      %v1568 = vunpack.c.l.b16 %v1492
      %v1569 = vunpack.c.l.b16 %v1493
      %v1570 = vunpack.c.l.b16 %v1494
      %v1571 = vunpack.c.l.b16 %v1495
      %v1572 = vunpack.c.l.b16 %v1496
      %v1573 = vunpack.c.l.b16 %v1497
      %v1574 = vunpack.c.l.b16 %v1498
      %v1575 = vunpack.c.l.b16 %v1499
      %v1576 = vunpack.c.l.b16 %v1500
      %v1577 = vunpack.c.l.b16 %v1501
      %v1578 = vunpack.c.l.b16 %v1502
      %v1579 = vunpack.c.l.b16 %v1503
      %v1580 = vunpack.c.l.b16 %v1504
      %v1581 = vunpack.c.l.b16 %v1505
      %v1582 = vunpack.c.l.b16 %v1506
      %v1583 = vunpack.c.l.b16 %v1507
      %v1584 = vunpack.c.l.b16 %v1508
      %v1585 = vpack.c.b16 %v1550, %v1549
      %v1586 = vpack.c.b16 %v1552, %v1551
      %v1587 = vpack.c.b16 %v1554, %v1553
      %v1588 = vpack.c.b16 %v1556, %v1555
      %v1589 = vpack.c.b16 %v1558, %v1557
      %v1590 = vpack.c.b16 %v1560, %v1559
      %v1591 = vpack.c.b16 %v1562, %v1561
      %v1592 = vpack.c.b16 %v1564, %v1563
      %v1593 = vpack.c.b16 %v1566, %v1565
      %v1594 = vpack.c.b16 %v1568, %v1567
      %v1595 = vpack.c.b16 %v1570, %v1569
      %v1596 = vpack.c.b16 %v1572, %v1571
      %v1597 = vpack.c.b16 %v1574, %v1573
      %v1598 = vpack.c.b16 %v1576, %v1575
      %v1599 = vpack.c.b16 %v1578, %v1577
      %v1600 = vpack.c.b16 %v1580, %v1579
      %v1601 = vpack.c.b16 %v1582, %v1581
      %v1602 = vpack.c.b16 %v1584, %v1583
      %v1622 = vsel %vm1230, %v1427, 0
      %v1625 = vsel %vm1230, %v1430, 0
      %v1628 = vsel %vm1230, %v1433, 0
      %v1631 = vsel %vm1230, %v1436, 0
      %v1634 = vsel %vm1230, %v1439, 0
      %v1637 = vsel %vm1230, %v1442, 0
      %v1640 = vsel %vm1230, %v1445, 0
      %v1643 = vsel %vm1230, %v1448, 0
      %v1646 = vsel %vm1230, %v1451, 0
      %v1649 = vsel %vm1230, %v1454, 0
      %v1652 = vsel %vm1230, %v1457, 0
      %v1655 = vsel %vm1230, %v1460, 0
      %v1658 = vsel %vm1230, %v1463, 0
      %v1661 = vsel %vm1230, %v1466, 0
      %v1664 = vsel %vm1230, %v1469, 0
      %v1667 = vsel %vm1230, %v1472, 0
      %1669 = vmatpush.bf16.msra.mxu0 %v1592
      %1670 = vmatpush.bf16.msra.mxu0 %v1591
      %1671 = vmatpush.bf16.msra.mxu0 %v1590
      %1672 = vmatpush.bf16.msra.mxu0 %v1589
      %1673 = vmatpush.bf16.msra.mxu0 %v1588
      %1674 = vmatpush.bf16.msra.mxu0 %v1587
      %1675 = vmatpush.bf16.msra.mxu0 %v1586
      %1676 = vmatpush.bf16.msra.mxu0 %v1585
      %1677 = vmatmul.bf16.gmra.mxu0 %v1425
      %v1678 = vpop.f32.mrf.mxu0
      %v1679 = vadd.f32 %v1511, %v1678
      %v1680 = vpop.f32.mrf.mxu0
      %v1681 = vadd.f32 %v1511, %v1680
      %1682 = vmatmul.bf16.gmra.mxu0 %v1428
      %v1683 = vpop.f32.mrf.mxu0
      %v1684 = vadd.f32 %v1511, %v1683
      %v1685 = vpop.f32.mrf.mxu0
      %v1686 = vadd.f32 %v1511, %v1685
      %1687 = vmatmul.bf16.gmra.mxu0 %v1431
      %v1688 = vpop.f32.mrf.mxu0
      %v1689 = vadd.f32 %v1511, %v1688
      %v1690 = vpop.f32.mrf.mxu0
      %v1691 = vadd.f32 %v1511, %v1690
      %1692 = vmatmul.bf16.gmra.mxu0 %v1434
      %v1693 = vpop.f32.mrf.mxu0
      %v1694 = vadd.f32 %v1511, %v1693
      %v1695 = vpop.f32.mrf.mxu0
      %v1696 = vadd.f32 %v1511, %v1695
      %1697 = vmatmul.bf16.gmra.mxu0 %v1437
      %v1698 = vpop.f32.mrf.mxu0
      %v1699 = vadd.f32 %v1511, %v1698
      %v1700 = vpop.f32.mrf.mxu0
      %v1701 = vadd.f32 %v1511, %v1700
      %1702 = vmatmul.bf16.gmra.mxu0 %v1440
      %v1703 = vpop.f32.mrf.mxu0
      %v1704 = vadd.f32 %v1511, %v1703
      %v1705 = vpop.f32.mrf.mxu0
      %v1706 = vadd.f32 %v1511, %v1705
      %1707 = vmatmul.bf16.gmra.mxu0 %v1443
      %v1708 = vpop.f32.mrf.mxu0
      %v1709 = vadd.f32 %v1511, %v1708
      %v1710 = vpop.f32.mrf.mxu0
      %v1711 = vadd.f32 %v1511, %v1710
      %1712 = vmatmul.bf16.gmra.mxu0 %v1446
      %v1713 = vpop.f32.mrf.mxu0
      %v1714 = vadd.f32 %v1511, %v1713
      %v1715 = vpop.f32.mrf.mxu0
      %v1716 = vadd.f32 %v1511, %v1715
      %1717 = vmatmul.bf16.gmra.mxu0 %v1449
      %v1718 = vpop.f32.mrf.mxu0
      %v1719 = vadd.f32 %v1511, %v1718
      %v1720 = vpop.f32.mrf.mxu0
      %v1721 = vadd.f32 %v1511, %v1720
      %1722 = vmatmul.bf16.gmra.mxu0 %v1452
      %v1723 = vpop.f32.mrf.mxu0
      %v1724 = vadd.f32 %v1511, %v1723
      %v1725 = vpop.f32.mrf.mxu0
      %v1726 = vadd.f32 %v1511, %v1725
      %1727 = vmatmul.bf16.gmra.mxu0 %v1455
      %v1728 = vpop.f32.mrf.mxu0
      %v1729 = vadd.f32 %v1511, %v1728
      %v1730 = vpop.f32.mrf.mxu0
      %v1731 = vadd.f32 %v1511, %v1730
      %1732 = vmatmul.bf16.gmra.mxu0 %v1458
      %v1733 = vpop.f32.mrf.mxu0
      %v1734 = vadd.f32 %v1511, %v1733
      %v1735 = vpop.f32.mrf.mxu0
      %v1736 = vadd.f32 %v1511, %v1735
      %1737 = vmatmul.bf16.gmra.mxu0 %v1461
      %v1738 = vpop.f32.mrf.mxu0
      %v1739 = vadd.f32 %v1511, %v1738
      %v1740 = vpop.f32.mrf.mxu0
      %v1741 = vadd.f32 %v1511, %v1740
      %1742 = vmatmul.bf16.gmra.mxu0 %v1464
      %v1743 = vpop.f32.mrf.mxu0
      %v1744 = vadd.f32 %v1511, %v1743
      %v1745 = vpop.f32.mrf.mxu0
      %v1746 = vadd.f32 %v1511, %v1745
      %1747 = vmatmul.bf16.gmra.mxu0 %v1467
      %v1748 = vpop.f32.mrf.mxu0
      %v1749 = vadd.f32 %v1511, %v1748
      %v1750 = vpop.f32.mrf.mxu0
      %v1751 = vadd.f32 %v1511, %v1750
      %1752 = vmatmul.bf16.gmra.mxu0 %v1470
      %v1753 = vpop.f32.mrf.mxu0
      %v1754 = vadd.f32 %v1511, %v1753
      %v1755 = vpop.f32.mrf.mxu0
      %v1756 = vadd.f32 %v1511, %v1755
      %1757 = vdwg.mxu0
      %1758 = vmatpush.bf16.msra.mxu0 %v1600
      %1759 = vmatpush.bf16.msra.mxu0 %v1599
      %1760 = vmatpush.bf16.msra.mxu0 %v1598
      %1761 = vmatpush.bf16.msra.mxu0 %v1597
      %1762 = vmatpush.bf16.msra.mxu0 %v1596
      %1763 = vmatpush.bf16.msra.mxu0 %v1595
      %1764 = vmatpush.bf16.msra.mxu0 %v1594
      %1765 = vmatpush.bf16.msra.mxu0 %v1593
      %1766 = vmatmul.bf16.gmra.mxu0 %v1426
      %v1767 = vpop.f32.mrf.mxu0
      %v1768 = vadd.f32 %v1679, %v1767
      %v1769 = vpop.f32.mrf.mxu0
      %v1770 = vadd.f32 %v1681, %v1769
      %1771 = vmatmul.bf16.gmra.mxu0 %v1429
      %v1772 = vpop.f32.mrf.mxu0
      %v1773 = vadd.f32 %v1684, %v1772
      %v1774 = vpop.f32.mrf.mxu0
      %v1775 = vadd.f32 %v1686, %v1774
      %1776 = vmatmul.bf16.gmra.mxu0 %v1432
      %v1777 = vpop.f32.mrf.mxu0
      %v1778 = vadd.f32 %v1689, %v1777
      %v1779 = vpop.f32.mrf.mxu0
      %v1780 = vadd.f32 %v1691, %v1779
      %1781 = vmatmul.bf16.gmra.mxu0 %v1435
      %v1782 = vpop.f32.mrf.mxu0
      %v1783 = vadd.f32 %v1694, %v1782
      %v1784 = vpop.f32.mrf.mxu0
      %v1785 = vadd.f32 %v1696, %v1784
      %1786 = vmatmul.bf16.gmra.mxu0 %v1438
      %v1787 = vpop.f32.mrf.mxu0
      %v1788 = vadd.f32 %v1699, %v1787
      %v1789 = vpop.f32.mrf.mxu0
      %v1790 = vadd.f32 %v1701, %v1789
      %1791 = vmatmul.bf16.gmra.mxu0 %v1441
      %v1792 = vpop.f32.mrf.mxu0
      %v1793 = vadd.f32 %v1704, %v1792
      %v1794 = vpop.f32.mrf.mxu0
      %v1795 = vadd.f32 %v1706, %v1794
      %1796 = vmatmul.bf16.gmra.mxu0 %v1444
      %v1797 = vpop.f32.mrf.mxu0
      %v1798 = vadd.f32 %v1709, %v1797
      %v1799 = vpop.f32.mrf.mxu0
      %v1800 = vadd.f32 %v1711, %v1799
      %1801 = vmatmul.bf16.gmra.mxu0 %v1447
      %v1802 = vpop.f32.mrf.mxu0
      %v1803 = vadd.f32 %v1714, %v1802
      %v1804 = vpop.f32.mrf.mxu0
      %v1805 = vadd.f32 %v1716, %v1804
      %1806 = vmatmul.bf16.gmra.mxu0 %v1450
      %v1807 = vpop.f32.mrf.mxu0
      %v1808 = vadd.f32 %v1719, %v1807
      %v1809 = vpop.f32.mrf.mxu0
      %v1810 = vadd.f32 %v1721, %v1809
      %1811 = vmatmul.bf16.gmra.mxu0 %v1453
      %v1812 = vpop.f32.mrf.mxu0
      %v1813 = vadd.f32 %v1724, %v1812
      %v1814 = vpop.f32.mrf.mxu0
      %v1815 = vadd.f32 %v1726, %v1814
      %1816 = vmatmul.bf16.gmra.mxu0 %v1456
      %v1817 = vpop.f32.mrf.mxu0
      %v1818 = vadd.f32 %v1729, %v1817
      %v1819 = vpop.f32.mrf.mxu0
      %v1820 = vadd.f32 %v1731, %v1819
      %1821 = vmatmul.bf16.gmra.mxu0 %v1459
      %v1822 = vpop.f32.mrf.mxu0
      %v1823 = vadd.f32 %v1734, %v1822
      %v1824 = vpop.f32.mrf.mxu0
      %v1825 = vadd.f32 %v1736, %v1824
      %1826 = vmatmul.bf16.gmra.mxu0 %v1462
      %v1827 = vpop.f32.mrf.mxu0
      %v1828 = vadd.f32 %v1739, %v1827
      %v1829 = vpop.f32.mrf.mxu0
      %v1830 = vadd.f32 %v1741, %v1829
      %1831 = vmatmul.bf16.gmra.mxu0 %v1465
      %v1832 = vpop.f32.mrf.mxu0
      %v1833 = vadd.f32 %v1744, %v1832
      %v1834 = vpop.f32.mrf.mxu0
      %v1835 = vadd.f32 %v1746, %v1834
      %1836 = vmatmul.bf16.gmra.mxu0 %v1468
      %v1837 = vpop.f32.mrf.mxu0
      %v1838 = vadd.f32 %v1749, %v1837
      %v1839 = vpop.f32.mrf.mxu0
      %v1840 = vadd.f32 %v1751, %v1839
      %1841 = vmatmul.bf16.gmra.mxu0 %v1471
      %v1842 = vpop.f32.mrf.mxu0
      %v1843 = vadd.f32 %v1754, %v1842
      %v1844 = vpop.f32.mrf.mxu0
      %v1845 = vadd.f32 %v1756, %v1844
      %1846 = vdwg.mxu0
      %1847 = vmatpush.bf16.msra.mxu0 0
      %1848 = vmatpush.bf16.msra.mxu0 0
      %1849 = vmatpush.bf16.msra.mxu0 0
      %1850 = vmatpush.bf16.msra.mxu0 0
      %1851 = vmatpush.bf16.msra.mxu0 0
      %1852 = vmatpush.bf16.msra.mxu0 0
      %1853 = vmatpush.bf16.msra.mxu0 %v1602
      %1854 = vmatpush.bf16.msra.mxu0 %v1601
      %1855 = vmatmul.bf16.gmra.mxu0 %v1622
      %v1856 = vpop.f32.mrf.mxu0
      %v1857 = vadd.f32 %v1768, %v1856
      %v1858 = vpop.f32.mrf.mxu0
      %v1859 = vadd.f32 %v1770, %v1858
      %1860 = vmatmul.bf16.gmra.mxu0 %v1625
      %v1861 = vpop.f32.mrf.mxu0
      %v1862 = vadd.f32 %v1773, %v1861
      %v1863 = vpop.f32.mrf.mxu0
      %v1864 = vadd.f32 %v1775, %v1863
      %1865 = vmatmul.bf16.gmra.mxu0 %v1628
      %v1866 = vpop.f32.mrf.mxu0
      %v1867 = vadd.f32 %v1778, %v1866
      %v1868 = vpop.f32.mrf.mxu0
      %v1869 = vadd.f32 %v1780, %v1868
      %1870 = vmatmul.bf16.gmra.mxu0 %v1631
      %v1871 = vpop.f32.mrf.mxu0
      %v1872 = vadd.f32 %v1783, %v1871
      %v1873 = vpop.f32.mrf.mxu0
      %v1874 = vadd.f32 %v1785, %v1873
      %1875 = vmatmul.bf16.gmra.mxu0 %v1634
      %v1876 = vpop.f32.mrf.mxu0
      %v1877 = vadd.f32 %v1788, %v1876
      %v1878 = vpop.f32.mrf.mxu0
      %v1879 = vadd.f32 %v1790, %v1878
      %1880 = vmatmul.bf16.gmra.mxu0 %v1637
      %v1881 = vpop.f32.mrf.mxu0
      %v1882 = vadd.f32 %v1793, %v1881
      %v1883 = vpop.f32.mrf.mxu0
      %v1884 = vadd.f32 %v1795, %v1883
      %1885 = vmatmul.bf16.gmra.mxu0 %v1640
      %v1886 = vpop.f32.mrf.mxu0
      %v1887 = vadd.f32 %v1798, %v1886
      %v1888 = vpop.f32.mrf.mxu0
      %v1889 = vadd.f32 %v1800, %v1888
      %1890 = vmatmul.bf16.gmra.mxu0 %v1643
      %v1891 = vpop.f32.mrf.mxu0
      %v1892 = vadd.f32 %v1803, %v1891
      %v1893 = vpop.f32.mrf.mxu0
      %v1894 = vadd.f32 %v1805, %v1893
      %1895 = vmatmul.bf16.gmra.mxu0 %v1646
      %v1896 = vpop.f32.mrf.mxu0
      %v1897 = vadd.f32 %v1808, %v1896
      %v1898 = vpop.f32.mrf.mxu0
      %v1899 = vadd.f32 %v1810, %v1898
      %1900 = vmatmul.bf16.gmra.mxu0 %v1649
      %v1901 = vpop.f32.mrf.mxu0
      %v1902 = vadd.f32 %v1813, %v1901
      %v1903 = vpop.f32.mrf.mxu0
      %v1904 = vadd.f32 %v1815, %v1903
      %1905 = vmatmul.bf16.gmra.mxu0 %v1652
      %v1906 = vpop.f32.mrf.mxu0
      %v1907 = vadd.f32 %v1818, %v1906
      %v1908 = vpop.f32.mrf.mxu0
      %v1909 = vadd.f32 %v1820, %v1908
      %1910 = vmatmul.bf16.gmra.mxu0 %v1655
      %v1911 = vpop.f32.mrf.mxu0
      %v1912 = vadd.f32 %v1823, %v1911
      %v1913 = vpop.f32.mrf.mxu0
      %v1914 = vadd.f32 %v1825, %v1913
      %1915 = vmatmul.bf16.gmra.mxu0 %v1658
      %v1916 = vpop.f32.mrf.mxu0
      %v1917 = vadd.f32 %v1828, %v1916
      %v1918 = vpop.f32.mrf.mxu0
      %v1919 = vadd.f32 %v1830, %v1918
      %1920 = vmatmul.bf16.gmra.mxu0 %v1661
      %v1921 = vpop.f32.mrf.mxu0
      %v1922 = vadd.f32 %v1833, %v1921
      %v1923 = vpop.f32.mrf.mxu0
      %v1924 = vadd.f32 %v1835, %v1923
      %1925 = vmatmul.bf16.gmra.mxu0 %v1664
      %v1926 = vpop.f32.mrf.mxu0
      %v1927 = vadd.f32 %v1838, %v1926
      %v1928 = vpop.f32.mrf.mxu0
      %v1929 = vadd.f32 %v1840, %v1928
      %1930 = vmatmul.bf16.gmra.mxu0 %v1667
      %v1931 = vpop.f32.mrf.mxu0
      %v1932 = vadd.f32 %v1843, %v1931
      %v1933 = vpop.f32.mrf.mxu0
      %v1934 = vadd.f32 %v1845, %v1933
      %1935 = vdwg.mxu0
      %1936 = vst [vmem:[%s170] sm:$0xff] %v1857
      %1937 = vst [vmem:[%s170 + $0x8] sm:$0xff] %v1859
      %1938 = vst [vmem:[%s170 + $0x10] sm:$0xff] %v1862
      %1939 = vst [vmem:[%s170 + $0x18] sm:$0xff] %v1864
      %1940 = vst [vmem:[%s170 + $0x20] sm:$0xff] %v1867
      %1941 = vst [vmem:[%s170 + $0x28] sm:$0xff] %v1869
      %1942 = vst [vmem:[%s170 + $0x30] sm:$0xff] %v1872
      %1943 = vst [vmem:[%s170 + $0x38] sm:$0xff] %v1874
      %1944 = vst [vmem:[%s170 + $0x40] sm:$0xff] %v1877
      %1945 = vst [vmem:[%s170 + $0x48] sm:$0xff] %v1879
      %1946 = vst [vmem:[%s170 + $0x50] sm:$0xff] %v1882
      %1947 = vst [vmem:[%s170 + $0x58] sm:$0xff] %v1884
      %1948 = vst [vmem:[%s170 + $0x60] sm:$0xff] %v1887
      %1949 = vst [vmem:[%s170 + $0x68] sm:$0xff] %v1889
      %1950 = vst [vmem:[%s170 + $0x70] sm:$0xff] %v1892
      %1951 = vst [vmem:[%s170 + $0x78] sm:$0xff] %v1894
      %1952 = vst [vmem:[%s170 + $0x80] sm:$0xff] %v1897
      %1953 = vst [vmem:[%s170 + $0x88] sm:$0xff] %v1899
      %1954 = vst [vmem:[%s170 + $0x90] sm:$0xff] %v1902
      %1955 = vst [vmem:[%s170 + $0x98] sm:$0xff] %v1904
      %1956 = vst [vmem:[%s170 + $0xa0] sm:$0xff] %v1907
      %1957 = vst [vmem:[%s170 + $0xa8] sm:$0xff] %v1909
      %1958 = vst [vmem:[%s170 + $0xb0] sm:$0xff] %v1912
      %1959 = vst [vmem:[%s170 + $0xb8] sm:$0xff] %v1914
      %1960 = vst [vmem:[%s170 + $0xc0] sm:$0xff] %v1917
      %1961 = vst [vmem:[%s170 + $0xc8] sm:$0xff] %v1919
      %1962 = vst [vmem:[%s170 + $0xd0] sm:$0xff] %v1922
      %1963 = vst [vmem:[%s170 + $0xd8] sm:$0xff] %v1924
      %1964 = vst [vmem:[%s170 + $0xe0] sm:$0xff] %v1927
      %1965 = vst [vmem:[%s170 + $0xe8] sm:$0xff] %v1929
      %1966 = vst [vmem:[%s170 + $0xf0] sm:$0xff] %v1932
      %1967 = vst [vmem:[%s170 + $0xf8] sm:$0xff] %v1934
      %p1968 = scmp.lt.s32.totalorder %s14, 1
      %s1969 = scalar_select %p1968, %s14, 1
      %s1970 = smul.addr %s1969, 32
      %s1971 = smul.addr %s1970, 8
      %s1972 = scalar_lea.vmem %s3, %s1971
      // Predicated region
      $region33: #{enhance_mhsa_forward.2} parent=31 // pred_check
        %p1973 = pneg %p100
      $region34: #{enhance_mhsa_forward.2} parent=31 // pred_check_branch
        %1975 = sbr.rel (%p1973) target = $region36
      $region35: #{enhance_mhsa_forward.2} parent=31 // pred_region
        _
      $region36: #{enhance_mhsa_forward.2} parent=31 // pred_fallthru
        _
    $region32: #{enhance_mhsa_forward.2} parent=5 // pred_fallthru
      _
    %p1976 = scmp.le.s32.totalorder 2, %s9
    // Predicated region
    $region37: #{enhance_mhsa_forward.2} parent=5 // pred_check
      %p1977 = pneg %p1976
    $region38: #{enhance_mhsa_forward.2} parent=5 // pred_check_branch
      %1979 = sbr.rel (%p1977) target = $region40
    $region39: #{enhance_mhsa_forward.2} parent=5 // pred_region
      %s1980 = ssub.s32 %s9, 2
      // Predicated region
      $region41: #{enhance_mhsa_forward.2} parent=39 // pred_check
        %p1981 = pneg %p106
      $region42: #{enhance_mhsa_forward.2} parent=39 // pred_check_branch
        %1983 = sbr.rel (%p1981) target = $region44
      $region43: #{enhance_mhsa_forward.2} parent=39 // pred_region
        %p1984 = scmp.lt.s32.totalorder %s15, 1
        %s1985 = scalar_select %p1984, %s15, 1
        %s1986 = smul.addr %s1985, 32
        %s1987 = smul.addr %s1986, 8
        %s1988 = scalar_lea.vmem %s3, %s1987
      $region44: #{enhance_mhsa_forward.2} parent=39 // pred_fallthru
        _
    $region40: #{enhance_mhsa_forward.2} parent=5 // pred_fallthru
      _
  $region6: #{enhance_mhsa_forward.2} parent=0 // loop_footer
    %s13 = sadd.s32 1, %s9
  $region7: #{enhance_mhsa_forward.2} parent=0 // loop_footer_branch
    %8 = sbr.rel target = $region3
  $region8: #{enhance_mhsa_forward.2} parent=0 // loop_exit
    _

// kernel: enhance_mhsa_forward.3
$region0: #{enhance_mhsa_forward.3}
  #allocation0 [shape = 'u32[]', space=smem, size = 0x4, offset = 0x4, fixed_abs, tag = 'smem constant byte address 0x4 - core index']
  #allocation1 [shape = 'u32[72,128]{1,0:T(1,128)}', space=vmem, size = 0x9000, scoped, tag = 'internal scratch']
  %s0 = inlined_call_operand.vmem [shape: f32[2,256,32], index: 0, kind: input, shape index: {}]
  %s1 = inlined_call_operand.vmem [shape: f32[2,256,128], index: 1, kind: input, shape index: {}]
  %s2 = inlined_call_operand.vmem [shape: f32[2,256,32], index: 2, kind: input, shape index: {}]
  %s3 = inlined_call_operand.vmem [shape: bf16[32,64], index: 3, kind: input, shape index: {}]
  %s4 = inlined_call_operand.vmem [shape: f32[1,64], index: 4, kind: input, shape index: {}]
  %s5 = inlined_call_operand.vmem [shape: f32[1,4,256,256], index: 5, kind: input, shape index: {}]
  %s6 = inlined_call_operand.vmem [shape: bf16[64,32], index: 6, kind: input, shape index: {}]
  %s7 = inlined_call_operand.vmem [shape: f32[1,32], index: 7, kind: input, shape index: {}]
  %s8 = inlined_call_operand.vmem [shape: f32[2,256,32], index: 8, kind: output, shape index: {}]
  %s9 = sld [smem:[#allocation0]]
  $region65: #{enhance_mhsa_forward.3} parent=0
    _
  %s11 = ssub.s32 1, %s9
  %s12 = scalar_select 0, %s11, %s9
  loop: start=0, step=1, limit=4
  $region2: #{enhance_mhsa_forward.3} parent=0 // loop_pre_header
    _
  $region3: #{enhance_mhsa_forward.3} parent=0 // loop_header
    %s14 = sphi 0, %s18
    %p15 = scmp.ge.s32.totalorder %s14, 4
    %s24 = sphi 0, %s26
    %s27 = sphi 0, %s24
    %s28 = sphi 0, %s27
    %s44 = sphi 0, %s28
    %s50 = sphi 0, %s52
    %s53 = sphi 0, %s50
    %s54 = sphi 0, %s53
    %s70 = sphi 0, %s54
    %s76 = sphi 0, %s78
    %s79 = sphi 0, %s76
    %s80 = sphi 0, %s79
    %s96 = sphi 0, %s80
    %s100 = sphi 0, %s100
    %s102 = sphi 0, %s100
    %s103 = sphi 0, %s102
    %s117 = sphi 0, %s103
    %s121 = sphi 0, %s121
    %s123 = sphi 0, %s121
    %s124 = sphi 0, %s123
    %s138 = sphi 0, %s124
    %s142 = sphi 0, %s142
    %s144 = sphi 0, %s142
    %s145 = sphi 0, %s144
    %s159 = sphi 0, %s145
    %s163 = sphi 0, %s163
    %s165 = sphi 0, %s163
    %s166 = sphi 0, %s165
    %s180 = sphi 0, %s166
    %s184 = sphi 0, %s184
    %s186 = sphi 0, %s184
    %s187 = sphi 0, %s186
    %s201 = sphi 0, %s187
    %s207 = sphi 0, %s209
    %s210 = sphi 0, %s207
    %s211 = sphi 0, %s210
    %s227 = sphi 0, %s211
  $region4: #{enhance_mhsa_forward.3} parent=0 // loop_header_branch
    %17 = sbr.rel (%p15) target = $region8
  $region5: #{enhance_mhsa_forward.3} parent=0 // loop_body
    %s19 = ssub.s32 %s14, 1
    %s20 = ssub.s32 %s14, 2
    %s21 = sadd.s32 %s14, 1
    %s22 = ssub.s32 %s14, %s21
    %p23 = scmp.eq.s32.totalorder %s22, 0
    %s25 = sadd.s32 %s24, 1
    %s26 = scalar_select %p23, %s24, %s25
    %p29 = pneg %p23
    %p30 = scmp.eq.s32.totalorder %s14, 1
    %p31 = por %p29, %p30
    %p32 = scmp.ne.s32.totalorder %s24, %s27
    %p33 = scmp.eq.s32.totalorder %s14, 0
    %p34 = por %p32, %p33
    %p35 = scmp.ne.s32.totalorder %s24, %s27
    %p36 = scmp.eq.s32.totalorder %s19, 1
    %p37 = por %p35, %p36
    %p38 = scmp.ne.s32.totalorder %s27, %s28
    %p39 = scmp.eq.s32.totalorder %s19, 0
    %p40 = por %p38, %p39
    %p41 = scmp.ne.s32.totalorder %s27, %s28
    %p42 = scmp.eq.s32.totalorder %s20, 1
    %p43 = por %p41, %p42
    %p45 = scmp.ne.s32.totalorder %s28, %s44
    %p46 = scmp.eq.s32.totalorder %s20, 0
    %p47 = por %p45, %p46
    %s48 = ssub.s32 %s14, %s21
    %p49 = scmp.eq.s32.totalorder %s48, 0
    %s51 = sadd.s32 %s50, 1
    %s52 = scalar_select %p49, %s50, %s51
    %p55 = pneg %p49
    %p56 = scmp.eq.s32.totalorder %s14, 1
    %p57 = por %p55, %p56
    %p58 = scmp.ne.s32.totalorder %s50, %s53
    %p59 = scmp.eq.s32.totalorder %s14, 0
    %p60 = por %p58, %p59
    %p61 = scmp.ne.s32.totalorder %s50, %s53
    %p62 = scmp.eq.s32.totalorder %s19, 1
    %p63 = por %p61, %p62
    %p64 = scmp.ne.s32.totalorder %s53, %s54
    %p65 = scmp.eq.s32.totalorder %s19, 0
    %p66 = por %p64, %p65
    %p67 = scmp.ne.s32.totalorder %s53, %s54
    %p68 = scmp.eq.s32.totalorder %s20, 1
    %p69 = por %p67, %p68
    %p71 = scmp.ne.s32.totalorder %s54, %s70
    %p72 = scmp.eq.s32.totalorder %s20, 0
    %p73 = por %p71, %p72
    %s74 = ssub.s32 %s14, %s21
    %p75 = scmp.eq.s32.totalorder %s74, 0
    %s77 = sadd.s32 %s76, 1
    %s78 = scalar_select %p75, %s76, %s77
    %p81 = pneg %p75
    %p82 = scmp.eq.s32.totalorder %s14, 1
    %p83 = por %p81, %p82
    %p84 = scmp.ne.s32.totalorder %s76, %s79
    %p85 = scmp.eq.s32.totalorder %s14, 0
    %p86 = por %p84, %p85
    %p87 = scmp.ne.s32.totalorder %s76, %s79
    %p88 = scmp.eq.s32.totalorder %s19, 1
    %p89 = por %p87, %p88
    %p90 = scmp.ne.s32.totalorder %s79, %s80
    %p91 = scmp.eq.s32.totalorder %s19, 0
    %p92 = por %p90, %p91
    %p93 = scmp.ne.s32.totalorder %s79, %s80
    %p94 = scmp.eq.s32.totalorder %s20, 1
    %p95 = por %p93, %p94
    %p97 = scmp.ne.s32.totalorder %s80, %s96
    %p98 = scmp.eq.s32.totalorder %s20, 0
    %p99 = por %p97, %p98
    %s101 = sadd.s32 %s100, 1
    %p104 = scmp.eq.s32.totalorder %s14, 1
    %p105 = scmp.ne.s32.totalorder %s100, %s102
    %p106 = scmp.eq.s32.totalorder %s14, 0
    %p107 = por %p105, %p106
    %p108 = scmp.ne.s32.totalorder %s100, %s102
    %p109 = scmp.eq.s32.totalorder %s19, 1
    %p110 = por %p108, %p109
    %p111 = scmp.ne.s32.totalorder %s102, %s103
    %p112 = scmp.eq.s32.totalorder %s19, 0
    %p113 = por %p111, %p112
    %p114 = scmp.ne.s32.totalorder %s102, %s103
    %p115 = scmp.eq.s32.totalorder %s20, 1
    %p116 = por %p114, %p115
    %p118 = scmp.ne.s32.totalorder %s103, %s117
    %p119 = scmp.eq.s32.totalorder %s20, 0
    %p120 = por %p118, %p119
    %s122 = sadd.s32 %s121, 1
    %p125 = scmp.eq.s32.totalorder %s14, 1
    %p126 = scmp.ne.s32.totalorder %s121, %s123
    %p127 = scmp.eq.s32.totalorder %s14, 0
    %p128 = por %p126, %p127
    %p129 = scmp.ne.s32.totalorder %s121, %s123
    %p130 = scmp.eq.s32.totalorder %s19, 1
    %p131 = por %p129, %p130
    %p132 = scmp.ne.s32.totalorder %s123, %s124
    %p133 = scmp.eq.s32.totalorder %s19, 0
    %p134 = por %p132, %p133
    %p135 = scmp.ne.s32.totalorder %s123, %s124
    %p136 = scmp.eq.s32.totalorder %s20, 1
    %p137 = por %p135, %p136
    %p139 = scmp.ne.s32.totalorder %s124, %s138
    %p140 = scmp.eq.s32.totalorder %s20, 0
    %p141 = por %p139, %p140
    %s143 = sadd.s32 %s142, 1
    %p146 = scmp.eq.s32.totalorder %s14, 1
    %p147 = scmp.ne.s32.totalorder %s142, %s144
    %p148 = scmp.eq.s32.totalorder %s14, 0
    %p149 = por %p147, %p148
    %p150 = scmp.ne.s32.totalorder %s142, %s144
    %p151 = scmp.eq.s32.totalorder %s19, 1
    %p152 = por %p150, %p151
    %p153 = scmp.ne.s32.totalorder %s144, %s145
    %p154 = scmp.eq.s32.totalorder %s19, 0
    %p155 = por %p153, %p154
    %p156 = scmp.ne.s32.totalorder %s144, %s145
    %p157 = scmp.eq.s32.totalorder %s20, 1
    %p158 = por %p156, %p157
    %p160 = scmp.ne.s32.totalorder %s145, %s159
    %p161 = scmp.eq.s32.totalorder %s20, 0
    %p162 = por %p160, %p161
    %s164 = sadd.s32 %s163, 1
    %p167 = scmp.eq.s32.totalorder %s14, 1
    %p168 = scmp.ne.s32.totalorder %s163, %s165
    %p169 = scmp.eq.s32.totalorder %s14, 0
    %p170 = por %p168, %p169
    %p171 = scmp.ne.s32.totalorder %s163, %s165
    %p172 = scmp.eq.s32.totalorder %s19, 1
    %p173 = por %p171, %p172
    %p174 = scmp.ne.s32.totalorder %s165, %s166
    %p175 = scmp.eq.s32.totalorder %s19, 0
    %p176 = por %p174, %p175
    %p177 = scmp.ne.s32.totalorder %s165, %s166
    %p178 = scmp.eq.s32.totalorder %s20, 1
    %p179 = por %p177, %p178
    %p181 = scmp.ne.s32.totalorder %s166, %s180
    %p182 = scmp.eq.s32.totalorder %s20, 0
    %p183 = por %p181, %p182
    %s185 = sadd.s32 %s184, 1
    %p188 = scmp.eq.s32.totalorder %s14, 1
    %p189 = scmp.ne.s32.totalorder %s184, %s186
    %p190 = scmp.eq.s32.totalorder %s14, 0
    %p191 = por %p189, %p190
    %p192 = scmp.ne.s32.totalorder %s184, %s186
    %p193 = scmp.eq.s32.totalorder %s19, 1
    %p194 = por %p192, %p193
    %p195 = scmp.ne.s32.totalorder %s186, %s187
    %p196 = scmp.eq.s32.totalorder %s19, 0
    %p197 = por %p195, %p196
    %p198 = scmp.ne.s32.totalorder %s186, %s187
    %p199 = scmp.eq.s32.totalorder %s20, 1
    %p200 = por %p198, %p199
    %p202 = scmp.ne.s32.totalorder %s187, %s201
    %p203 = scmp.eq.s32.totalorder %s20, 0
    %p204 = por %p202, %p203
    %s205 = ssub.s32 %s14, %s21
    %p206 = scmp.eq.s32.totalorder %s205, 0
    %s208 = sadd.s32 %s207, 1
    %s209 = scalar_select %p206, %s207, %s208
    %p212 = pneg %p206
    %p213 = scmp.eq.s32.totalorder %s14, 1
    %p214 = por %p212, %p213
    %p215 = scmp.ne.s32.totalorder %s207, %s210
    %p216 = scmp.eq.s32.totalorder %s14, 0
    %p217 = por %p215, %p216
    %p218 = scmp.ne.s32.totalorder %s207, %s210
    %p219 = scmp.eq.s32.totalorder %s19, 1
    %p220 = por %p218, %p219
    %p221 = scmp.ne.s32.totalorder %s210, %s211
    %p222 = scmp.eq.s32.totalorder %s19, 0
    %p223 = por %p221, %p222
    %p224 = scmp.ne.s32.totalorder %s210, %s211
    %p225 = scmp.eq.s32.totalorder %s20, 1
    %p226 = por %p224, %p225
    %p228 = scmp.ne.s32.totalorder %s211, %s227
    %p229 = scmp.eq.s32.totalorder %s20, 0
    %p230 = por %p228, %p229
    %p231 = scmp.le.s32.totalorder 1, %s14
    %p232 = scmp.lt.s32.totalorder %s14, 3
    %p233 = pnand %p231, %p232
    %p234 = pneg %p233
    // Predicated region
    $region9: #{enhance_mhsa_forward.3} parent=5 // pred_check
      _
    $region10: #{enhance_mhsa_forward.3} parent=5 // pred_check_branch
      %236 = sbr.rel (%p233) target = $region12
    $region11: #{enhance_mhsa_forward.3} parent=5 // pred_region
      %s237 = ssub.s32 %s14, 1
      // Predicated region
      $region13: #{enhance_mhsa_forward.3} parent=11 // pred_check
        %p238 = pneg %p113
      $region14: #{enhance_mhsa_forward.3} parent=11 // pred_check_branch
        %240 = sbr.rel (%p238) target = $region16
      $region15: #{enhance_mhsa_forward.3} parent=11 // pred_region
        _
      $region16: #{enhance_mhsa_forward.3} parent=11 // pred_fallthru
        _
      // Predicated region
      $region17: #{enhance_mhsa_forward.3} parent=11 // pred_check
        %p241 = pneg %p134
      $region18: #{enhance_mhsa_forward.3} parent=11 // pred_check_branch
        %243 = sbr.rel (%p241) target = $region20
      $region19: #{enhance_mhsa_forward.3} parent=11 // pred_region
        _
      $region20: #{enhance_mhsa_forward.3} parent=11 // pred_fallthru
        _
      // Predicated region
      $region21: #{enhance_mhsa_forward.3} parent=11 // pred_check
        %p244 = pneg %p155
      $region22: #{enhance_mhsa_forward.3} parent=11 // pred_check_branch
        %246 = sbr.rel (%p244) target = $region24
      $region23: #{enhance_mhsa_forward.3} parent=11 // pred_region
        _
      $region24: #{enhance_mhsa_forward.3} parent=11 // pred_fallthru
        _
      // Predicated region
      $region25: #{enhance_mhsa_forward.3} parent=11 // pred_check
        %p247 = pneg %p176
      $region26: #{enhance_mhsa_forward.3} parent=11 // pred_check_branch
        %249 = sbr.rel (%p247) target = $region28
      $region27: #{enhance_mhsa_forward.3} parent=11 // pred_region
        _
      $region28: #{enhance_mhsa_forward.3} parent=11 // pred_fallthru
        _
      // Predicated region
      $region29: #{enhance_mhsa_forward.3} parent=11 // pred_check
        %p250 = pneg %p197
      $region30: #{enhance_mhsa_forward.3} parent=11 // pred_check_branch
        %252 = sbr.rel (%p250) target = $region32
      $region31: #{enhance_mhsa_forward.3} parent=11 // pred_region
        _
      $region32: #{enhance_mhsa_forward.3} parent=11 // pred_fallthru
        _
    $region12: #{enhance_mhsa_forward.3} parent=5 // pred_fallthru
      _
    %p253 = scmp.lt.s32.totalorder %s14, 2
    // Predicated region
    $region33: #{enhance_mhsa_forward.3} parent=5 // pred_check
      %p254 = pneg %p253
    $region34: #{enhance_mhsa_forward.3} parent=5 // pred_check_branch
      %256 = sbr.rel (%p254) target = $region36
    $region35: #{enhance_mhsa_forward.3} parent=5 // pred_region
      // Predicated region
      $region37: #{enhance_mhsa_forward.3} parent=35 // pred_check
        %p257 = pneg %p34
      $region38: #{enhance_mhsa_forward.3} parent=35 // pred_check_branch
        %259 = sbr.rel (%p257) target = $region40
      $region39: #{enhance_mhsa_forward.3} parent=35 // pred_region
        %p260 = scmp.lt.s32.totalorder %s14, 1
        %s261 = scalar_select %p260, %s14, 1
        %s262 = smul.addr %s261, 32
        %s263 = smul.addr %s262, 8
        %s264 = scalar_lea.vmem %s0, %s263
      $region40: #{enhance_mhsa_forward.3} parent=35 // pred_fallthru
        _
      // Predicated region
      $region41: #{enhance_mhsa_forward.3} parent=35 // pred_check
        %p265 = pneg %p60
      $region42: #{enhance_mhsa_forward.3} parent=35 // pred_check_branch
        %267 = sbr.rel (%p265) target = $region44
      $region43: #{enhance_mhsa_forward.3} parent=35 // pred_region
        %p268 = scmp.lt.s32.totalorder %s14, 1
        %s269 = scalar_select %p268, %s14, 1
        %s270 = smul.addr %s269, 32
        %s271 = smul.addr %s270, 8
        %s272 = scalar_lea.vmem %s1, %s271
      $region44: #{enhance_mhsa_forward.3} parent=35 // pred_fallthru
        _
      // Predicated region
      $region45: #{enhance_mhsa_forward.3} parent=35 // pred_check
        %p273 = pneg %p86
      $region46: #{enhance_mhsa_forward.3} parent=35 // pred_check_branch
        %275 = sbr.rel (%p273) target = $region48
      $region47: #{enhance_mhsa_forward.3} parent=35 // pred_region
        %p276 = scmp.lt.s32.totalorder %s14, 1
        %s277 = scalar_select %p276, %s14, 1
        %s278 = smul.addr %s277, 32
        %s279 = smul.addr %s278, 8
        %s280 = scalar_lea.vmem %s2, %s279
      $region48: #{enhance_mhsa_forward.3} parent=35 // pred_fallthru
        _
    $region36: #{enhance_mhsa_forward.3} parent=5 // pred_fallthru
      _
    %p281 = scmp.le.s32.totalorder 1, %s14
    %p282 = scmp.lt.s32.totalorder %s14, 3
    %p283 = pnand %p281, %p282
    %p284 = pneg %p283
    // Predicated region
    $region49: #{enhance_mhsa_forward.3} parent=5 // pred_check
      _
    $region50: #{enhance_mhsa_forward.3} parent=5 // pred_check_branch
      %286 = sbr.rel (%p283) target = $region52
    $region51: #{enhance_mhsa_forward.3} parent=5 // pred_region
      %s287 = ssub.s32 %s14, 1
      %p288 = scmp.lt.s32.totalorder %s19, 1
      %s289 = scalar_select %p288, %s19, 1
      %s290 = smul.addr %s289, 32
      %s291 = smul.addr %s290, 8
      %s292 = scalar_lea.vmem %s0, %s291
      %p293 = pneg %p40
      %p294 = pneg %p37
      %p295 = scmp.lt.s32.totalorder %s19, 1
      %s296 = scalar_select %p295, %s19, 1
      %s297 = smul.addr %s296, 32
      %s298 = smul.addr %s297, 8
      %s299 = scalar_lea.vmem %s1, %s298
      %p300 = pneg %p66
      %p301 = pneg %p63
      %p302 = scmp.lt.s32.totalorder %s19, 1
      %s303 = scalar_select %p302, %s19, 1
      %s304 = smul.addr %s303, 32
      %s305 = smul.addr %s304, 8
      %s306 = scalar_lea.vmem %s2, %s305
      %p307 = pneg %p92
      %p308 = pneg %p89
      %p309 = pneg %p113
      %p310 = pneg %p110
      %p311 = pneg %p134
      %p312 = pneg %p131
      %p313 = pneg %p155
      %p314 = pneg %p152
      %p315 = pneg %p176
      %p316 = pneg %p173
      %p317 = pneg %p197
      %p318 = pneg %p194
      %p319 = pneg %p223
      %p320 = pneg %p220
      %p321 = scmp.lt.s32.totalorder %s19, 1
      %s322 = scalar_select %p321, %s19, 1
      %s323 = smul.addr %s322, 32
      %s324 = smul.addr %s323, 8
      %s325 = scalar_lea.vmem %s8, %s324
      %p326 = scmp.lt.s32.totalorder %s19, 1
      %s327 = scalar_select %p326, %s19, 1
      %s328 = smul.addr %s327, 32
      %s329 = smul.addr %s328, 8
      %s330 = scalar_lea.vmem %s0, %s329
      %p331 = scmp.lt.s32.totalorder %s19, 1
      %s332 = scalar_select %p331, %s19, 1
      %s333 = smul.addr %s332, 32
      %s334 = smul.addr %s333, 8
      %s335 = scalar_lea.vmem %s1, %s334
      %p336 = scmp.lt.s32.totalorder %s19, 1
      %s337 = scalar_select %p336, %s19, 1
      %s338 = smul.addr %s337, 32
      %s339 = smul.addr %s338, 8
      %s340 = scalar_lea.vmem %s2, %s339
      %p341 = scmp.lt.s32.totalorder %s19, 1
      %s342 = scalar_select %p341, %s19, 1
      %s343 = smul.addr %s342, 32
      %s344 = smul.addr %s343, 8
      %s345 = scalar_lea.vmem %s8, %s344
      %v347 = vld [vmem:[%s330] sm:$0xff]
      %v348 = vld [vmem:[%s330 + $0x8] sm:$0xff]
      %v349 = vld [vmem:[%s330 + $0x10] sm:$0xff]
      %v350 = vld [vmem:[%s330 + $0x18] sm:$0xff]
      %v351 = vld [vmem:[%s330 + $0x20] sm:$0xff]
      %v352 = vld [vmem:[%s330 + $0x28] sm:$0xff]
      %v353 = vld [vmem:[%s330 + $0x30] sm:$0xff]
      %v354 = vld [vmem:[%s330 + $0x38] sm:$0xff]
      %v355 = vld [vmem:[%s330 + $0x40] sm:$0xff]
      %v356 = vld [vmem:[%s330 + $0x48] sm:$0xff]
      %v357 = vld [vmem:[%s330 + $0x50] sm:$0xff]
      %v358 = vld [vmem:[%s330 + $0x58] sm:$0xff]
      %v359 = vld [vmem:[%s330 + $0x60] sm:$0xff]
      %v360 = vld [vmem:[%s330 + $0x68] sm:$0xff]
      %v361 = vld [vmem:[%s330 + $0x70] sm:$0xff]
      %v362 = vld [vmem:[%s330 + $0x78] sm:$0xff]
      %v363 = vld [vmem:[%s330 + $0x80] sm:$0xff]
      %v364 = vld [vmem:[%s330 + $0x88] sm:$0xff]
      %v365 = vld [vmem:[%s330 + $0x90] sm:$0xff]
      %v366 = vld [vmem:[%s330 + $0x98] sm:$0xff]
      %v367 = vld [vmem:[%s330 + $0xa0] sm:$0xff]
      %v368 = vld [vmem:[%s330 + $0xa8] sm:$0xff]
      %v369 = vld [vmem:[%s330 + $0xb0] sm:$0xff]
      %v370 = vld [vmem:[%s330 + $0xb8] sm:$0xff]
      %v371 = vld [vmem:[%s330 + $0xc0] sm:$0xff]
      %v372 = vld [vmem:[%s330 + $0xc8] sm:$0xff]
      %v373 = vld [vmem:[%s330 + $0xd0] sm:$0xff]
      %v374 = vld [vmem:[%s330 + $0xd8] sm:$0xff]
      %v375 = vld [vmem:[%s330 + $0xe0] sm:$0xff]
      %v376 = vld [vmem:[%s330 + $0xe8] sm:$0xff]
      %v377 = vld [vmem:[%s330 + $0xf0] sm:$0xff]
      %v378 = vld [vmem:[%s330 + $0xf8] sm:$0xff]
      %v379 = vpack.c.bf16 %v348, %v347
      %v380 = vpack.c.bf16 %v350, %v349
      %v381 = vpack.c.bf16 %v352, %v351
      %v382 = vpack.c.bf16 %v354, %v353
      %v383 = vpack.c.bf16 %v356, %v355
      %v384 = vpack.c.bf16 %v358, %v357
      %v385 = vpack.c.bf16 %v360, %v359
      %v386 = vpack.c.bf16 %v362, %v361
      %v387 = vpack.c.bf16 %v364, %v363
      %v388 = vpack.c.bf16 %v366, %v365
      %v389 = vpack.c.bf16 %v368, %v367
      %v390 = vpack.c.bf16 %v370, %v369
      %v391 = vpack.c.bf16 %v372, %v371
      %v392 = vpack.c.bf16 %v374, %v373
      %v393 = vpack.c.bf16 %v376, %v375
      %v394 = vpack.c.bf16 %v378, %v377
      %v395 = vld [vmem:[%s3] sm:$0xf]
      %v396 = vld [vmem:[%s3 + $0x4] sm:$0xf]
      %v397 = vld [vmem:[%s3 + $0x8] sm:$0xf]
      %v398 = vld [vmem:[%s3 + $0xc] sm:$0xf]
      %v399 = vld [vmem:[%s4] sm:$0x1]
      %v401 = vperm.slane %v399, 0
      %v407 = vunpack.c.l.b16 %v395
      %v408 = vunpack.c.l.b16 %v396
      %v409 = vunpack.c.l.b16 %v397
      %v410 = vunpack.c.l.b16 %v398
      %v411 = vpack.c.b16 %v408, %v407
      %v412 = vpack.c.b16 %v410, %v409
      %vm415 = vcmask 261120
      %v417 = vsel %vm415, %v379, 0
      %v420 = vsel %vm415, %v380, 0
      %v423 = vsel %vm415, %v381, 0
      %v426 = vsel %vm415, %v382, 0
      %v429 = vsel %vm415, %v383, 0
      %v432 = vsel %vm415, %v384, 0
      %v435 = vsel %vm415, %v385, 0
      %v438 = vsel %vm415, %v386, 0
      %v441 = vsel %vm415, %v387, 0
      %v444 = vsel %vm415, %v388, 0
      %v447 = vsel %vm415, %v389, 0
      %v450 = vsel %vm415, %v390, 0
      %v453 = vsel %vm415, %v391, 0
      %v456 = vsel %vm415, %v392, 0
      %v459 = vsel %vm415, %v393, 0
      %v462 = vsel %vm415, %v394, 0
      %464 = vmatpush.bf16.msra.mxu0 0
      %465 = vmatpush.bf16.msra.mxu0 0
      %466 = vmatpush.bf16.msra.mxu0 0
      %467 = vmatpush.bf16.msra.mxu0 0
      %468 = vmatpush.bf16.msra.mxu0 0
      %469 = vmatpush.bf16.msra.mxu0 0
      %470 = vmatpush.bf16.msra.mxu0 %v412
      %471 = vmatpush.bf16.msra.mxu0 %v411
      %472 = vmatmul.bf16.gmra.mxu0 %v417
      %v473 = vpop.f32.mrf.mxu0
      %v474 = vadd.f32 %v401, %v473
      %v475 = vpop.f32.mrf.mxu0
      %v476 = vadd.f32 %v401, %v475
      %477 = vmatmul.bf16.gmra.mxu0 %v420
      %v478 = vpop.f32.mrf.mxu0
      %v479 = vadd.f32 %v401, %v478
      %v480 = vpop.f32.mrf.mxu0
      %v481 = vadd.f32 %v401, %v480
      %482 = vmatmul.bf16.gmra.mxu0 %v423
      %v483 = vpop.f32.mrf.mxu0
      %v484 = vadd.f32 %v401, %v483
      %v485 = vpop.f32.mrf.mxu0
      %v486 = vadd.f32 %v401, %v485
      %487 = vmatmul.bf16.gmra.mxu0 %v426
      %v488 = vpop.f32.mrf.mxu0
      %v489 = vadd.f32 %v401, %v488
      %v490 = vpop.f32.mrf.mxu0
      %v491 = vadd.f32 %v401, %v490
      %492 = vmatmul.bf16.gmra.mxu0 %v429
      %v493 = vpop.f32.mrf.mxu0
      %v494 = vadd.f32 %v401, %v493
      %v495 = vpop.f32.mrf.mxu0
      %v496 = vadd.f32 %v401, %v495
      %497 = vmatmul.bf16.gmra.mxu0 %v432
      %v498 = vpop.f32.mrf.mxu0
      %v499 = vadd.f32 %v401, %v498
      %v500 = vpop.f32.mrf.mxu0
      %v501 = vadd.f32 %v401, %v500
      %502 = vmatmul.bf16.gmra.mxu0 %v435
      %v503 = vpop.f32.mrf.mxu0
      %v504 = vadd.f32 %v401, %v503
      %v505 = vpop.f32.mrf.mxu0
      %v506 = vadd.f32 %v401, %v505
      %507 = vmatmul.bf16.gmra.mxu0 %v438
      %v508 = vpop.f32.mrf.mxu0
      %v509 = vadd.f32 %v401, %v508
      %v510 = vpop.f32.mrf.mxu0
      %v511 = vadd.f32 %v401, %v510
      %512 = vmatmul.bf16.gmra.mxu0 %v441
      %v513 = vpop.f32.mrf.mxu0
      %v514 = vadd.f32 %v401, %v513
      %v515 = vpop.f32.mrf.mxu0
      %v516 = vadd.f32 %v401, %v515
      %517 = vmatmul.bf16.gmra.mxu0 %v444
      %v518 = vpop.f32.mrf.mxu0
      %v519 = vadd.f32 %v401, %v518
      %v520 = vpop.f32.mrf.mxu0
      %v521 = vadd.f32 %v401, %v520
      %522 = vmatmul.bf16.gmra.mxu0 %v447
      %v523 = vpop.f32.mrf.mxu0
      %v524 = vadd.f32 %v401, %v523
      %v525 = vpop.f32.mrf.mxu0
      %v526 = vadd.f32 %v401, %v525
      %527 = vmatmul.bf16.gmra.mxu0 %v450
      %v528 = vpop.f32.mrf.mxu0
      %v529 = vadd.f32 %v401, %v528
      %v530 = vpop.f32.mrf.mxu0
      %v531 = vadd.f32 %v401, %v530
      %532 = vmatmul.bf16.gmra.mxu0 %v453
      %v533 = vpop.f32.mrf.mxu0
      %v534 = vadd.f32 %v401, %v533
      %v535 = vpop.f32.mrf.mxu0
      %v536 = vadd.f32 %v401, %v535
      %537 = vmatmul.bf16.gmra.mxu0 %v456
      %v538 = vpop.f32.mrf.mxu0
      %v539 = vadd.f32 %v401, %v538
      %v540 = vpop.f32.mrf.mxu0
      %v541 = vadd.f32 %v401, %v540
      %542 = vmatmul.bf16.gmra.mxu0 %v459
      %v543 = vpop.f32.mrf.mxu0
      %v544 = vadd.f32 %v401, %v543
      %v545 = vpop.f32.mrf.mxu0
      %v546 = vadd.f32 %v401, %v545
      %547 = vmatmul.bf16.gmra.mxu0 %v462
      %v548 = vpop.f32.mrf.mxu0
      %v549 = vadd.f32 %v401, %v548
      %v550 = vpop.f32.mrf.mxu0
      %v551 = vadd.f32 %v401, %v550
      %552 = vdwg.mxu0
      %v553 = vld [vmem:[%s335] sm:$0xff]
      %v554 = vld [vmem:[%s335 + $0x8] sm:$0xff]
      %v555 = vld [vmem:[%s335 + $0x10] sm:$0xff]
      %v556 = vld [vmem:[%s335 + $0x18] sm:$0xff]
      %v557 = vld [vmem:[%s335 + $0x20] sm:$0xff]
      %v558 = vld [vmem:[%s335 + $0x28] sm:$0xff]
      %v559 = vld [vmem:[%s335 + $0x30] sm:$0xff]
      %v560 = vld [vmem:[%s335 + $0x38] sm:$0xff]
      %v561 = vld [vmem:[%s335 + $0x40] sm:$0xff]
      %v562 = vld [vmem:[%s335 + $0x48] sm:$0xff]
      %v563 = vld [vmem:[%s335 + $0x50] sm:$0xff]
      %v564 = vld [vmem:[%s335 + $0x58] sm:$0xff]
      %v565 = vld [vmem:[%s335 + $0x60] sm:$0xff]
      %v566 = vld [vmem:[%s335 + $0x68] sm:$0xff]
      %v567 = vld [vmem:[%s335 + $0x70] sm:$0xff]
      %v568 = vld [vmem:[%s335 + $0x78] sm:$0xff]
      %v569 = vld [vmem:[%s335 + $0x80] sm:$0xff]
      %v570 = vld [vmem:[%s335 + $0x88] sm:$0xff]
      %v571 = vld [vmem:[%s335 + $0x90] sm:$0xff]
      %v572 = vld [vmem:[%s335 + $0x98] sm:$0xff]
      %v573 = vld [vmem:[%s335 + $0xa0] sm:$0xff]
      %v574 = vld [vmem:[%s335 + $0xa8] sm:$0xff]
      %v575 = vld [vmem:[%s335 + $0xb0] sm:$0xff]
      %v576 = vld [vmem:[%s335 + $0xb8] sm:$0xff]
      %v577 = vld [vmem:[%s335 + $0xc0] sm:$0xff]
      %v578 = vld [vmem:[%s335 + $0xc8] sm:$0xff]
      %v579 = vld [vmem:[%s335 + $0xd0] sm:$0xff]
      %v580 = vld [vmem:[%s335 + $0xd8] sm:$0xff]
      %v581 = vld [vmem:[%s335 + $0xe0] sm:$0xff]
      %v582 = vld [vmem:[%s335 + $0xe8] sm:$0xff]
      %v583 = vld [vmem:[%s335 + $0xf0] sm:$0xff]
      %v584 = vld [vmem:[%s335 + $0xf8] sm:$0xff]
      %v585 = vpack.c.bf16 %v553, %v553
      %v586 = vpack.c.bf16 %v554, %v554
      %v587 = vpack.c.bf16 %v555, %v555
      %v588 = vpack.c.bf16 %v556, %v556
      %v589 = vpack.c.bf16 %v557, %v557
      %v590 = vpack.c.bf16 %v558, %v558
      %v591 = vpack.c.bf16 %v559, %v559
      %v592 = vpack.c.bf16 %v560, %v560
      %v593 = vpack.c.bf16 %v561, %v561
      %v594 = vpack.c.bf16 %v562, %v562
      %v595 = vpack.c.bf16 %v563, %v563
      %v596 = vpack.c.bf16 %v564, %v564
      %v597 = vpack.c.bf16 %v565, %v565
      %v598 = vpack.c.bf16 %v566, %v566
      %v599 = vpack.c.bf16 %v567, %v567
      %v600 = vpack.c.bf16 %v568, %v568
      %v601 = vpack.c.bf16 %v569, %v569
      %v602 = vpack.c.bf16 %v570, %v570
      %v603 = vpack.c.bf16 %v571, %v571
      %v604 = vpack.c.bf16 %v572, %v572
      %v605 = vpack.c.bf16 %v573, %v573
      %v606 = vpack.c.bf16 %v574, %v574
      %v607 = vpack.c.bf16 %v575, %v575
      %v608 = vpack.c.bf16 %v576, %v576
      %v609 = vpack.c.bf16 %v577, %v577
      %v610 = vpack.c.bf16 %v578, %v578
      %v611 = vpack.c.bf16 %v579, %v579
      %v612 = vpack.c.bf16 %v580, %v580
      %v613 = vpack.c.bf16 %v581, %v581
      %v614 = vpack.c.bf16 %v582, %v582
      %v615 = vpack.c.bf16 %v583, %v583
      %v616 = vpack.c.bf16 %v584, %v584
      %v617 = vpack.c.bf16 %v476, %v474
      %v618 = vpack.c.bf16 %v481, %v479
      %v619 = vpack.c.bf16 %v486, %v484
      %v620 = vpack.c.bf16 %v491, %v489
      %v621 = vpack.c.bf16 %v496, %v494
      %v622 = vpack.c.bf16 %v501, %v499
      %v623 = vpack.c.bf16 %v506, %v504
      %v624 = vpack.c.bf16 %v511, %v509
      %v625 = vpack.c.bf16 %v516, %v514
      %v626 = vpack.c.bf16 %v521, %v519
      %v627 = vpack.c.bf16 %v526, %v524
      %v628 = vpack.c.bf16 %v531, %v529
      %v629 = vpack.c.bf16 %v536, %v534
      %v630 = vpack.c.bf16 %v541, %v539
      %v631 = vpack.c.bf16 %v546, %v544
      %v632 = vpack.c.bf16 %v551, %v549
      %v633 = vld [vmem:[%s5] sm:$0xff]
      %v634 = vld [vmem:[%s5 + $0x8] sm:$0xff]
      %v635 = vld [vmem:[%s5 + $0x10] sm:$0xff]
      %v636 = vld [vmem:[%s5 + $0x18] sm:$0xff]
      %v637 = vld [vmem:[%s5 + $0x20] sm:$0xff]
      %v638 = vld [vmem:[%s5 + $0x28] sm:$0xff]
      %v639 = vld [vmem:[%s5 + $0x30] sm:$0xff]
      %v640 = vld [vmem:[%s5 + $0x38] sm:$0xff]
      %v641 = vld [vmem:[%s5 + $0x40] sm:$0xff]
      %v642 = vld [vmem:[%s5 + $0x48] sm:$0xff]
      %v643 = vld [vmem:[%s5 + $0x50] sm:$0xff]
      %v644 = vld [vmem:[%s5 + $0x58] sm:$0xff]
      %v645 = vld [vmem:[%s5 + $0x60] sm:$0xff]
      %v646 = vld [vmem:[%s5 + $0x68] sm:$0xff]
      %v647 = vld [vmem:[%s5 + $0x70] sm:$0xff]
      %v648 = vld [vmem:[%s5 + $0x78] sm:$0xff]
      %v649 = vld [vmem:[%s5 + $0x80] sm:$0xff]
      %v650 = vld [vmem:[%s5 + $0x88] sm:$0xff]
      %v651 = vld [vmem:[%s5 + $0x90] sm:$0xff]
      %v652 = vld [vmem:[%s5 + $0x98] sm:$0xff]
      %v653 = vld [vmem:[%s5 + $0xa0] sm:$0xff]
      %v654 = vld [vmem:[%s5 + $0xa8] sm:$0xff]
      %v655 = vld [vmem:[%s5 + $0xb0] sm:$0xff]
      %v656 = vld [vmem:[%s5 + $0xb8] sm:$0xff]
      %v657 = vld [vmem:[%s5 + $0xc0] sm:$0xff]
      %v658 = vld [vmem:[%s5 + $0xc8] sm:$0xff]
      %v659 = vld [vmem:[%s5 + $0xd0] sm:$0xff]
      %v660 = vld [vmem:[%s5 + $0xd8] sm:$0xff]
      %v661 = vld [vmem:[%s5 + $0xe0] sm:$0xff]
      %v662 = vld [vmem:[%s5 + $0xe8] sm:$0xff]
      %v663 = vld [vmem:[%s5 + $0xf0] sm:$0xff]
      %v664 = vld [vmem:[%s5 + $0xf8] sm:$0xff]
      %v665 = vld [vmem:[%s5 + $0x100] sm:$0xff]
      %v666 = vld [vmem:[%s5 + $0x108] sm:$0xff]
      %v667 = vld [vmem:[%s5 + $0x110] sm:$0xff]
      %v668 = vld [vmem:[%s5 + $0x118] sm:$0xff]
      %v669 = vld [vmem:[%s5 + $0x120] sm:$0xff]
      %v670 = vld [vmem:[%s5 + $0x128] sm:$0xff]
      %v671 = vld [vmem:[%s5 + $0x130] sm:$0xff]
      %v672 = vld [vmem:[%s5 + $0x138] sm:$0xff]
      %v673 = vld [vmem:[%s5 + $0x140] sm:$0xff]
      %v674 = vld [vmem:[%s5 + $0x148] sm:$0xff]
      %v675 = vld [vmem:[%s5 + $0x150] sm:$0xff]
      %v676 = vld [vmem:[%s5 + $0x158] sm:$0xff]
      %v677 = vld [vmem:[%s5 + $0x160] sm:$0xff]
      %v678 = vld [vmem:[%s5 + $0x168] sm:$0xff]
      %v679 = vld [vmem:[%s5 + $0x170] sm:$0xff]
      %v680 = vld [vmem:[%s5 + $0x178] sm:$0xff]
      %v681 = vld [vmem:[%s5 + $0x180] sm:$0xff]
      %v682 = vld [vmem:[%s5 + $0x188] sm:$0xff]
      %v683 = vld [vmem:[%s5 + $0x190] sm:$0xff]
      %v684 = vld [vmem:[%s5 + $0x198] sm:$0xff]
      %v685 = vld [vmem:[%s5 + $0x1a0] sm:$0xff]
      %v686 = vld [vmem:[%s5 + $0x1a8] sm:$0xff]
      %v687 = vld [vmem:[%s5 + $0x1b0] sm:$0xff]
      %v688 = vld [vmem:[%s5 + $0x1b8] sm:$0xff]
      %v689 = vld [vmem:[%s5 + $0x1c0] sm:$0xff]
      %v690 = vld [vmem:[%s5 + $0x1c8] sm:$0xff]
      %v691 = vld [vmem:[%s5 + $0x1d0] sm:$0xff]
      %v692 = vld [vmem:[%s5 + $0x1d8] sm:$0xff]
      %v693 = vld [vmem:[%s5 + $0x1e0] sm:$0xff]
      %v694 = vld [vmem:[%s5 + $0x1e8] sm:$0xff]
      %v695 = vld [vmem:[%s5 + $0x1f0] sm:$0xff]
      %v696 = vld [vmem:[%s5 + $0x1f8] sm:$0xff]
      %v729 = vunpack.c.l.b16 %v585
      %v730 = vunpack.c.l.b16 %v586
      %v731 = vunpack.c.l.b16 %v587
      %v732 = vunpack.c.l.b16 %v588
      %v733 = vunpack.c.l.b16 %v589
      %v734 = vunpack.c.l.b16 %v590
      %v735 = vunpack.c.l.b16 %v591
      %v736 = vunpack.c.l.b16 %v592
      %v737 = vunpack.c.l.b16 %v593
      %v738 = vunpack.c.l.b16 %v594
      %v739 = vunpack.c.l.b16 %v595
      %v740 = vunpack.c.l.b16 %v596
      %v741 = vunpack.c.l.b16 %v597
      %v742 = vunpack.c.l.b16 %v598
      %v743 = vunpack.c.l.b16 %v599
      %v744 = vunpack.c.l.b16 %v600
      %v745 = vunpack.c.l.b16 %v601
      %v746 = vunpack.c.l.b16 %v602
      %v747 = vunpack.c.l.b16 %v603
      %v748 = vunpack.c.l.b16 %v604
      %v749 = vunpack.c.l.b16 %v605
      %v750 = vunpack.c.l.b16 %v606
      %v751 = vunpack.c.l.b16 %v607
      %v752 = vunpack.c.l.b16 %v608
      %v753 = vunpack.c.l.b16 %v609
      %v754 = vunpack.c.l.b16 %v610
      %v755 = vunpack.c.l.b16 %v611
      %v756 = vunpack.c.l.b16 %v612
      %v757 = vunpack.c.l.b16 %v613
      %v758 = vunpack.c.l.b16 %v614
      %v759 = vunpack.c.l.b16 %v615
      %v760 = vunpack.c.l.b16 %v616
      %v761 = vpack.c.b16 %v730, %v729
      %v762 = vpack.c.b16 %v732, %v731
      %v763 = vpack.c.b16 %v734, %v733
      %v764 = vpack.c.b16 %v736, %v735
      %v765 = vpack.c.b16 %v738, %v737
      %v766 = vpack.c.b16 %v740, %v739
      %v767 = vpack.c.b16 %v742, %v741
      %v768 = vpack.c.b16 %v744, %v743
      %v769 = vpack.c.b16 %v746, %v745
      %v770 = vpack.c.b16 %v748, %v747
      %v771 = vpack.c.b16 %v750, %v749
      %v772 = vpack.c.b16 %v752, %v751
      %v773 = vpack.c.b16 %v754, %v753
      %v774 = vpack.c.b16 %v756, %v755
      %v775 = vpack.c.b16 %v758, %v757
      %v776 = vpack.c.b16 %v760, %v759
      %vm777 = vcmask 130048
      %v779 = vsel %vm777, %v617, 0
      %v782 = vsel %vm777, %v618, 0
      %v785 = vsel %vm777, %v619, 0
      %v788 = vsel %vm777, %v620, 0
      %v791 = vsel %vm777, %v621, 0
      %v794 = vsel %vm777, %v622, 0
      %v797 = vsel %vm777, %v623, 0
      %v800 = vsel %vm777, %v624, 0
      %v803 = vsel %vm777, %v625, 0
      %v806 = vsel %vm777, %v626, 0
      %v809 = vsel %vm777, %v627, 0
      %v812 = vsel %vm777, %v628, 0
      %v815 = vsel %vm777, %v629, 0
      %v818 = vsel %vm777, %v630, 0
      %v821 = vsel %vm777, %v631, 0
      %v824 = vsel %vm777, %v632, 0
      %v827 = vsel %vm777, %v761, 0
      %v830 = vsel %vm777, %v762, 0
      %v833 = vsel %vm777, %v763, 0
      %v836 = vsel %vm777, %v764, 0
      %v839 = vsel %vm777, %v765, 0
      %v842 = vsel %vm777, %v766, 0
      %v845 = vsel %vm777, %v767, 0
      %v848 = vsel %vm777, %v768, 0
      %v851 = vsel %vm777, %v769, 0
      %v854 = vsel %vm777, %v770, 0
      %v857 = vsel %vm777, %v771, 0
      %v860 = vsel %vm777, %v772, 0
      %v863 = vsel %vm777, %v773, 0
      %v866 = vsel %vm777, %v774, 0
      %v869 = vsel %vm777, %v775, 0
      %v872 = vsel %vm777, %v776, 0
      %874 = vmatpush.bf16.xpose.msra.mxu0 %v848
      %875 = vmatpush.bf16.xpose.msra.mxu0 %v845
      %876 = vmatpush.bf16.xpose.msra.mxu0 %v842
      %877 = vmatpush.bf16.xpose.msra.mxu0 %v839
      %878 = vmatpush.bf16.xpose.msra.mxu0 %v836
      %879 = vmatpush.bf16.xpose.msra.mxu0 %v833
      %880 = vmatpush.bf16.xpose.msra.mxu0 %v830
      %881 = vmatpush.bf16.xpose.msra.mxu0 %v827
      %882 = vmatmul.bf16.gmra.mxu0 %v779
      %v883 = vpop.f32.mrf.mxu0
      %v884 = vadd.f32 %v633, %v883
      %v885 = vpop.f32.mrf.mxu0
      %v886 = vadd.f32 %v635, %v885
      %887 = vmatmul.bf16.gmra.mxu0 %v782
      %v888 = vpop.f32.mrf.mxu0
      %v889 = vadd.f32 %v637, %v888
      %v890 = vpop.f32.mrf.mxu0
      %v891 = vadd.f32 %v639, %v890
      %892 = vmatmul.bf16.gmra.mxu0 %v785
      %v893 = vpop.f32.mrf.mxu0
      %v894 = vadd.f32 %v641, %v893
      %v895 = vpop.f32.mrf.mxu0
      %v896 = vadd.f32 %v643, %v895
      %897 = vmatmul.bf16.gmra.mxu0 %v788
      %v898 = vpop.f32.mrf.mxu0
      %v899 = vadd.f32 %v645, %v898
      %v900 = vpop.f32.mrf.mxu0
      %v901 = vadd.f32 %v647, %v900
      %902 = vmatmul.bf16.gmra.mxu0 %v791
      %v903 = vpop.f32.mrf.mxu0
      %v904 = vadd.f32 %v649, %v903
      %v905 = vpop.f32.mrf.mxu0
      %v906 = vadd.f32 %v651, %v905
      %907 = vmatmul.bf16.gmra.mxu0 %v794
      %v908 = vpop.f32.mrf.mxu0
      %v909 = vadd.f32 %v653, %v908
      %v910 = vpop.f32.mrf.mxu0
      %v911 = vadd.f32 %v655, %v910
      %912 = vmatmul.bf16.gmra.mxu0 %v797
      %v913 = vpop.f32.mrf.mxu0
      %v914 = vadd.f32 %v657, %v913
      %v915 = vpop.f32.mrf.mxu0
      %v916 = vadd.f32 %v659, %v915
      %917 = vmatmul.bf16.gmra.mxu0 %v800
      %v918 = vpop.f32.mrf.mxu0
      %v919 = vadd.f32 %v661, %v918
      %v920 = vpop.f32.mrf.mxu0
      %v921 = vadd.f32 %v663, %v920
      %922 = vmatmul.bf16.gmra.mxu0 %v803
      %v923 = vpop.f32.mrf.mxu0
      %v924 = vadd.f32 %v665, %v923
      %v925 = vpop.f32.mrf.mxu0
      %v926 = vadd.f32 %v667, %v925
      %927 = vmatmul.bf16.gmra.mxu0 %v806
      %v928 = vpop.f32.mrf.mxu0
      %v929 = vadd.f32 %v669, %v928
      %v930 = vpop.f32.mrf.mxu0
      %v931 = vadd.f32 %v671, %v930
      %932 = vmatmul.bf16.gmra.mxu0 %v809
      %v933 = vpop.f32.mrf.mxu0
      %v934 = vadd.f32 %v673, %v933
      %v935 = vpop.f32.mrf.mxu0
      %v936 = vadd.f32 %v675, %v935
      %937 = vmatmul.bf16.gmra.mxu0 %v812
      %v938 = vpop.f32.mrf.mxu0
      %v939 = vadd.f32 %v677, %v938
      %v940 = vpop.f32.mrf.mxu0
      %v941 = vadd.f32 %v679, %v940
      %942 = vmatmul.bf16.gmra.mxu0 %v815
      %v943 = vpop.f32.mrf.mxu0
      %v944 = vadd.f32 %v681, %v943
      %v945 = vpop.f32.mrf.mxu0
      %v946 = vadd.f32 %v683, %v945
      %947 = vmatmul.bf16.gmra.mxu0 %v818
      %v948 = vpop.f32.mrf.mxu0
      %v949 = vadd.f32 %v685, %v948
      %v950 = vpop.f32.mrf.mxu0
      %v951 = vadd.f32 %v687, %v950
      %952 = vmatmul.bf16.gmra.mxu0 %v821
      %v953 = vpop.f32.mrf.mxu0
      %v954 = vadd.f32 %v689, %v953
      %v955 = vpop.f32.mrf.mxu0
      %v956 = vadd.f32 %v691, %v955
      %957 = vmatmul.bf16.gmra.mxu0 %v824
      %v958 = vpop.f32.mrf.mxu0
      %v959 = vadd.f32 %v693, %v958
      %v960 = vpop.f32.mrf.mxu0
      %v961 = vadd.f32 %v695, %v960
      %962 = vdwg.mxu0
      %963 = vmatpush.bf16.xpose.msra.mxu0 %v872
      %964 = vmatpush.bf16.xpose.msra.mxu0 %v869
      %965 = vmatpush.bf16.xpose.msra.mxu0 %v866
      %966 = vmatpush.bf16.xpose.msra.mxu0 %v863
      %967 = vmatpush.bf16.xpose.msra.mxu0 %v860
      %968 = vmatpush.bf16.xpose.msra.mxu0 %v857
      %969 = vmatpush.bf16.xpose.msra.mxu0 %v854
      %970 = vmatpush.bf16.xpose.msra.mxu0 %v851
      %971 = vmatmul.bf16.gmra.mxu0 %v779
      %v972 = vpop.f32.mrf.mxu0
      %v973 = vadd.f32 %v634, %v972
      %v974 = vpop.f32.mrf.mxu0
      %v975 = vadd.f32 %v636, %v974
      %976 = vmatmul.bf16.gmra.mxu0 %v782
      %v977 = vpop.f32.mrf.mxu0
      %v978 = vadd.f32 %v638, %v977
      %v979 = vpop.f32.mrf.mxu0
      %v980 = vadd.f32 %v640, %v979
      %981 = vmatmul.bf16.gmra.mxu0 %v785
      %v982 = vpop.f32.mrf.mxu0
      %v983 = vadd.f32 %v642, %v982
      %v984 = vpop.f32.mrf.mxu0
      %v985 = vadd.f32 %v644, %v984
      %986 = vmatmul.bf16.gmra.mxu0 %v788
      %v987 = vpop.f32.mrf.mxu0
      %v988 = vadd.f32 %v646, %v987
      %v989 = vpop.f32.mrf.mxu0
      %v990 = vadd.f32 %v648, %v989
      %991 = vmatmul.bf16.gmra.mxu0 %v791
      %v992 = vpop.f32.mrf.mxu0
      %v993 = vadd.f32 %v650, %v992
      %v994 = vpop.f32.mrf.mxu0
      %v995 = vadd.f32 %v652, %v994
      %996 = vmatmul.bf16.gmra.mxu0 %v794
      %v997 = vpop.f32.mrf.mxu0
      %v998 = vadd.f32 %v654, %v997
      %v999 = vpop.f32.mrf.mxu0
      %v1000 = vadd.f32 %v656, %v999
      %1001 = vmatmul.bf16.gmra.mxu0 %v797
      %v1002 = vpop.f32.mrf.mxu0
      %v1003 = vadd.f32 %v658, %v1002
      %v1004 = vpop.f32.mrf.mxu0
      %v1005 = vadd.f32 %v660, %v1004
      %1006 = vmatmul.bf16.gmra.mxu0 %v800
      %v1007 = vpop.f32.mrf.mxu0
      %v1008 = vadd.f32 %v662, %v1007
      %v1009 = vpop.f32.mrf.mxu0
      %v1010 = vadd.f32 %v664, %v1009
      %1011 = vmatmul.bf16.gmra.mxu0 %v803
      %v1012 = vpop.f32.mrf.mxu0
      %v1013 = vadd.f32 %v666, %v1012
      %v1014 = vpop.f32.mrf.mxu0
      %v1015 = vadd.f32 %v668, %v1014
      %1016 = vmatmul.bf16.gmra.mxu0 %v806
      %v1017 = vpop.f32.mrf.mxu0
      %v1018 = vadd.f32 %v670, %v1017
      %v1019 = vpop.f32.mrf.mxu0
      %v1020 = vadd.f32 %v672, %v1019
      %1021 = vmatmul.bf16.gmra.mxu0 %v809
      %v1022 = vpop.f32.mrf.mxu0
      %v1023 = vadd.f32 %v674, %v1022
      %v1024 = vpop.f32.mrf.mxu0
      %v1025 = vadd.f32 %v676, %v1024
      %1026 = vmatmul.bf16.gmra.mxu0 %v812
      %v1027 = vpop.f32.mrf.mxu0
      %v1028 = vadd.f32 %v678, %v1027
      %v1029 = vpop.f32.mrf.mxu0
      %v1030 = vadd.f32 %v680, %v1029
      %1031 = vmatmul.bf16.gmra.mxu0 %v815
      %v1032 = vpop.f32.mrf.mxu0
      %v1033 = vadd.f32 %v682, %v1032
      %v1034 = vpop.f32.mrf.mxu0
      %v1035 = vadd.f32 %v684, %v1034
      %1036 = vmatmul.bf16.gmra.mxu0 %v818
      %v1037 = vpop.f32.mrf.mxu0
      %v1038 = vadd.f32 %v686, %v1037
      %v1039 = vpop.f32.mrf.mxu0
      %v1040 = vadd.f32 %v688, %v1039
      %1041 = vmatmul.bf16.gmra.mxu0 %v821
      %v1042 = vpop.f32.mrf.mxu0
      %v1043 = vadd.f32 %v690, %v1042
      %v1044 = vpop.f32.mrf.mxu0
      %v1045 = vadd.f32 %v692, %v1044
      %1046 = vmatmul.bf16.gmra.mxu0 %v824
      %v1047 = vpop.f32.mrf.mxu0
      %v1048 = vadd.f32 %v694, %v1047
      %v1049 = vpop.f32.mrf.mxu0
      %v1050 = vadd.f32 %v696, %v1049
      %1051 = vdwg.mxu0
      %v1052 = vmax.f32 %v884, %v973
      %1053 = vmax.xlane.f32.xlu0 %v1052
      %v1054 = vpop.xlane.xlu0 %1053
      %v1055 = vmax.f32 %v886, %v975
      %1056 = vmax.xlane.f32.xlu0 %v1055
      %v1057 = vpop.xlane.xlu0 %1056
      %v1058 = vmax.f32 %v889, %v978
      %1059 = vmax.xlane.f32.xlu0 %v1058
      %v1060 = vpop.xlane.xlu0 %1059
      %v1061 = vmax.f32 %v891, %v980
      %1062 = vmax.xlane.f32.xlu0 %v1061
      %v1063 = vpop.xlane.xlu0 %1062
      %v1064 = vmax.f32 %v894, %v983
      %1065 = vmax.xlane.f32.xlu0 %v1064
      %v1066 = vpop.xlane.xlu0 %1065
      %v1067 = vmax.f32 %v896, %v985
      %1068 = vmax.xlane.f32.xlu0 %v1067
      %v1069 = vpop.xlane.xlu0 %1068
      %v1070 = vmax.f32 %v899, %v988
      %1071 = vmax.xlane.f32.xlu0 %v1070
      %v1072 = vpop.xlane.xlu0 %1071
      %v1073 = vmax.f32 %v901, %v990
      %1074 = vmax.xlane.f32.xlu0 %v1073
      %v1075 = vpop.xlane.xlu0 %1074
      %v1076 = vmax.f32 %v904, %v993
      %1077 = vmax.xlane.f32.xlu0 %v1076
      %v1078 = vpop.xlane.xlu0 %1077
      %v1079 = vmax.f32 %v906, %v995
      %1080 = vmax.xlane.f32.xlu0 %v1079
      %v1081 = vpop.xlane.xlu0 %1080
      %v1082 = vmax.f32 %v909, %v998
      %1083 = vmax.xlane.f32.xlu0 %v1082
      %v1084 = vpop.xlane.xlu0 %1083
      %v1085 = vmax.f32 %v911, %v1000
      %1086 = vmax.xlane.f32.xlu0 %v1085
      %v1087 = vpop.xlane.xlu0 %1086
      %v1088 = vmax.f32 %v914, %v1003
      %1089 = vmax.xlane.f32.xlu0 %v1088
      %v1090 = vpop.xlane.xlu0 %1089
      %v1091 = vmax.f32 %v916, %v1005
      %1092 = vmax.xlane.f32.xlu0 %v1091
      %v1093 = vpop.xlane.xlu0 %1092
      %v1094 = vmax.f32 %v919, %v1008
      %1095 = vmax.xlane.f32.xlu0 %v1094
      %v1096 = vpop.xlane.xlu0 %1095
      %v1097 = vmax.f32 %v921, %v1010
      %1098 = vmax.xlane.f32.xlu0 %v1097
      %v1099 = vpop.xlane.xlu0 %1098
      %v1100 = vmax.f32 %v924, %v1013
      %1101 = vmax.xlane.f32.xlu0 %v1100
      %v1102 = vpop.xlane.xlu0 %1101
      %v1103 = vmax.f32 %v926, %v1015
      %1104 = vmax.xlane.f32.xlu0 %v1103
      %v1105 = vpop.xlane.xlu0 %1104
      %v1106 = vmax.f32 %v929, %v1018
      %1107 = vmax.xlane.f32.xlu0 %v1106
      %v1108 = vpop.xlane.xlu0 %1107
      %v1109 = vmax.f32 %v931, %v1020
      %1110 = vmax.xlane.f32.xlu0 %v1109
      %v1111 = vpop.xlane.xlu0 %1110
      %v1112 = vmax.f32 %v934, %v1023
      %1113 = vmax.xlane.f32.xlu0 %v1112
      %v1114 = vpop.xlane.xlu0 %1113
      %v1115 = vmax.f32 %v936, %v1025
      %1116 = vmax.xlane.f32.xlu0 %v1115
      %v1117 = vpop.xlane.xlu0 %1116
      %v1118 = vmax.f32 %v939, %v1028
      %1119 = vmax.xlane.f32.xlu0 %v1118
      %v1120 = vpop.xlane.xlu0 %1119
      %v1121 = vmax.f32 %v941, %v1030
      %1122 = vmax.xlane.f32.xlu0 %v1121
      %v1123 = vpop.xlane.xlu0 %1122
      %v1124 = vmax.f32 %v944, %v1033
      %1125 = vmax.xlane.f32.xlu0 %v1124
      %v1126 = vpop.xlane.xlu0 %1125
      %v1127 = vmax.f32 %v946, %v1035
      %1128 = vmax.xlane.f32.xlu0 %v1127
      %v1129 = vpop.xlane.xlu0 %1128
      %v1130 = vmax.f32 %v949, %v1038
      %1131 = vmax.xlane.f32.xlu0 %v1130
      %v1132 = vpop.xlane.xlu0 %1131
      %v1133 = vmax.f32 %v951, %v1040
      %1134 = vmax.xlane.f32.xlu0 %v1133
      %v1135 = vpop.xlane.xlu0 %1134
      %v1136 = vmax.f32 %v954, %v1043
      %1137 = vmax.xlane.f32.xlu0 %v1136
      %v1138 = vpop.xlane.xlu0 %1137
      %v1139 = vmax.f32 %v956, %v1045
      %1140 = vmax.xlane.f32.xlu0 %v1139
      %v1141 = vpop.xlane.xlu0 %1140
      %v1142 = vmax.f32 %v959, %v1048
      %1143 = vmax.xlane.f32.xlu0 %v1142
      %v1144 = vpop.xlane.xlu0 %1143
      %v1145 = vmax.f32 %v961, %v1050
      %1146 = vmax.xlane.f32.xlu0 %v1145
      %v1147 = vpop.xlane.xlu0 %1146
      %v1148 = vsub.f32 %v884, %v1054
      %v1149 = vsub.f32 %v973, %v1054
      %v1150 = vsub.f32 %v886, %v1057
      %v1151 = vsub.f32 %v975, %v1057
      %v1152 = vsub.f32 %v889, %v1060
      %v1153 = vsub.f32 %v978, %v1060
      %v1154 = vsub.f32 %v891, %v1063
      %v1155 = vsub.f32 %v980, %v1063
      %v1156 = vsub.f32 %v894, %v1066
      %v1157 = vsub.f32 %v983, %v1066
      %v1158 = vsub.f32 %v896, %v1069
      %v1159 = vsub.f32 %v985, %v1069
      %v1160 = vsub.f32 %v899, %v1072
      %v1161 = vsub.f32 %v988, %v1072
      %v1162 = vsub.f32 %v901, %v1075
      %v1163 = vsub.f32 %v990, %v1075
      %v1164 = vsub.f32 %v904, %v1078
      %v1165 = vsub.f32 %v993, %v1078
      %v1166 = vsub.f32 %v906, %v1081
      %v1167 = vsub.f32 %v995, %v1081
      %v1168 = vsub.f32 %v909, %v1084
      %v1169 = vsub.f32 %v998, %v1084
      %v1170 = vsub.f32 %v911, %v1087
      %v1171 = vsub.f32 %v1000, %v1087
      %v1172 = vsub.f32 %v914, %v1090
      %v1173 = vsub.f32 %v1003, %v1090
      %v1174 = vsub.f32 %v916, %v1093
      %v1175 = vsub.f32 %v1005, %v1093
      %v1176 = vsub.f32 %v919, %v1096
      %v1177 = vsub.f32 %v1008, %v1096
      %v1178 = vsub.f32 %v921, %v1099
      %v1179 = vsub.f32 %v1010, %v1099
      %v1180 = vsub.f32 %v924, %v1102
      %v1181 = vsub.f32 %v1013, %v1102
      %v1182 = vsub.f32 %v926, %v1105
      %v1183 = vsub.f32 %v1015, %v1105
      %v1184 = vsub.f32 %v929, %v1108
      %v1185 = vsub.f32 %v1018, %v1108
      %v1186 = vsub.f32 %v931, %v1111
      %v1187 = vsub.f32 %v1020, %v1111
      %v1188 = vsub.f32 %v934, %v1114
      %v1189 = vsub.f32 %v1023, %v1114
      %v1190 = vsub.f32 %v936, %v1117
      %v1191 = vsub.f32 %v1025, %v1117
      %v1192 = vsub.f32 %v939, %v1120
      %v1193 = vsub.f32 %v1028, %v1120
      %v1194 = vsub.f32 %v941, %v1123
      %v1195 = vsub.f32 %v1030, %v1123
      %v1196 = vsub.f32 %v944, %v1126
      %v1197 = vsub.f32 %v1033, %v1126
      %v1198 = vsub.f32 %v946, %v1129
      %v1199 = vsub.f32 %v1035, %v1129
      %v1200 = vsub.f32 %v949, %v1132
      %v1201 = vsub.f32 %v1038, %v1132
      %v1202 = vsub.f32 %v951, %v1135
      %v1203 = vsub.f32 %v1040, %v1135
      %v1204 = vsub.f32 %v954, %v1138
      %v1205 = vsub.f32 %v1043, %v1138
      %v1206 = vsub.f32 %v956, %v1141
      %v1207 = vsub.f32 %v1045, %v1141
      %v1208 = vsub.f32 %v959, %v1144
      %v1209 = vsub.f32 %v1048, %v1144
      %v1210 = vsub.f32 %v961, %v1147
      %v1211 = vsub.f32 %v1050, %v1147
      %v1212 = vmul.f32 %v1148, 1.442695
      %v1213 = vpow.pop %v1212
      %v1214 = vmul.f32 %v1149, 1.442695
      %v1215 = vpow.pop %v1214
      %v1216 = vmul.f32 %v1150, 1.442695
      %v1217 = vpow.pop %v1216
      %v1218 = vmul.f32 %v1151, 1.442695
      %v1219 = vpow.pop %v1218
      %v1220 = vmul.f32 %v1152, 1.442695
      %v1221 = vpow.pop %v1220
      %v1222 = vmul.f32 %v1153, 1.442695
      %v1223 = vpow.pop %v1222
      %v1224 = vmul.f32 %v1154, 1.442695
      %v1225 = vpow.pop %v1224
      %v1226 = vmul.f32 %v1155, 1.442695
      %v1227 = vpow.pop %v1226
      %v1228 = vmul.f32 %v1156, 1.442695
      %v1229 = vpow.pop %v1228
      %v1230 = vmul.f32 %v1157, 1.442695
      %v1231 = vpow.pop %v1230
      %v1232 = vmul.f32 %v1158, 1.442695
      %v1233 = vpow.pop %v1232
      %v1234 = vmul.f32 %v1159, 1.442695
      %v1235 = vpow.pop %v1234
      %v1236 = vmul.f32 %v1160, 1.442695
      %v1237 = vpow.pop %v1236
      %v1238 = vmul.f32 %v1161, 1.442695
      %v1239 = vpow.pop %v1238
      %v1240 = vmul.f32 %v1162, 1.442695
      %v1241 = vpow.pop %v1240
      %v1242 = vmul.f32 %v1163, 1.442695
      %v1243 = vpow.pop %v1242
      %v1244 = vmul.f32 %v1164, 1.442695
      %v1245 = vpow.pop %v1244
      %v1246 = vmul.f32 %v1165, 1.442695
      %v1247 = vpow.pop %v1246
      %v1248 = vmul.f32 %v1166, 1.442695
      %v1249 = vpow.pop %v1248
      %v1250 = vmul.f32 %v1167, 1.442695
      %v1251 = vpow.pop %v1250
      %v1252 = vmul.f32 %v1168, 1.442695
      %v1253 = vpow.pop %v1252
      %v1254 = vmul.f32 %v1169, 1.442695
      %v1255 = vpow.pop %v1254
      %v1256 = vmul.f32 %v1170, 1.442695
      %v1257 = vpow.pop %v1256
      %v1258 = vmul.f32 %v1171, 1.442695
      %v1259 = vpow.pop %v1258
      %v1260 = vmul.f32 %v1172, 1.442695
      %v1261 = vpow.pop %v1260
      %v1262 = vmul.f32 %v1173, 1.442695
      %v1263 = vpow.pop %v1262
      %v1264 = vmul.f32 %v1174, 1.442695
      %v1265 = vpow.pop %v1264
      %v1266 = vmul.f32 %v1175, 1.442695
      %v1267 = vpow.pop %v1266
      %v1268 = vmul.f32 %v1176, 1.442695
      %v1269 = vpow.pop %v1268
      %v1270 = vmul.f32 %v1177, 1.442695
      %v1271 = vpow.pop %v1270
      %v1272 = vmul.f32 %v1178, 1.442695
      %v1273 = vpow.pop %v1272
      %v1274 = vmul.f32 %v1179, 1.442695
      %v1275 = vpow.pop %v1274
      %v1276 = vmul.f32 %v1180, 1.442695
      %v1277 = vpow.pop %v1276
      %v1278 = vmul.f32 %v1181, 1.442695
      %v1279 = vpow.pop %v1278
      %v1280 = vmul.f32 %v1182, 1.442695
      %v1281 = vpow.pop %v1280
      %v1282 = vmul.f32 %v1183, 1.442695
      %v1283 = vpow.pop %v1282
      %v1284 = vmul.f32 %v1184, 1.442695
      %v1285 = vpow.pop %v1284
      %v1286 = vmul.f32 %v1185, 1.442695
      %v1287 = vpow.pop %v1286
      %v1288 = vmul.f32 %v1186, 1.442695
      %v1289 = vpow.pop %v1288
      %v1290 = vmul.f32 %v1187, 1.442695
      %v1291 = vpow.pop %v1290
      %v1292 = vmul.f32 %v1188, 1.442695
      %v1293 = vpow.pop %v1292
      %v1294 = vmul.f32 %v1189, 1.442695
      %v1295 = vpow.pop %v1294
      %v1296 = vmul.f32 %v1190, 1.442695
      %v1297 = vpow.pop %v1296
      %v1298 = vmul.f32 %v1191, 1.442695
      %v1299 = vpow.pop %v1298
      %v1300 = vmul.f32 %v1192, 1.442695
      %v1301 = vpow.pop %v1300
      %v1302 = vmul.f32 %v1193, 1.442695
      %v1303 = vpow.pop %v1302
      %v1304 = vmul.f32 %v1194, 1.442695
      %v1305 = vpow.pop %v1304
      %v1306 = vmul.f32 %v1195, 1.442695
      %v1307 = vpow.pop %v1306
      %v1308 = vmul.f32 %v1196, 1.442695
      %v1309 = vpow.pop %v1308
      %v1310 = vmul.f32 %v1197, 1.442695
      %v1311 = vpow.pop %v1310
      %v1312 = vmul.f32 %v1198, 1.442695
      %v1313 = vpow.pop %v1312
      %v1314 = vmul.f32 %v1199, 1.442695
      %v1315 = vpow.pop %v1314
      %v1316 = vmul.f32 %v1200, 1.442695
      %v1317 = vpow.pop %v1316
      %v1318 = vmul.f32 %v1201, 1.442695
      %v1319 = vpow.pop %v1318
      %v1320 = vmul.f32 %v1202, 1.442695
      %v1321 = vpow.pop %v1320
      %v1322 = vmul.f32 %v1203, 1.442695
      %v1323 = vpow.pop %v1322
      %v1324 = vmul.f32 %v1204, 1.442695
      %v1325 = vpow.pop %v1324
      %v1326 = vmul.f32 %v1205, 1.442695
      %v1327 = vpow.pop %v1326
      %v1328 = vmul.f32 %v1206, 1.442695
      %v1329 = vpow.pop %v1328
      %v1330 = vmul.f32 %v1207, 1.442695
      %v1331 = vpow.pop %v1330
      %v1332 = vmul.f32 %v1208, 1.442695
      %v1333 = vpow.pop %v1332
      %v1334 = vmul.f32 %v1209, 1.442695
      %v1335 = vpow.pop %v1334
      %v1336 = vmul.f32 %v1210, 1.442695
      %v1337 = vpow.pop %v1336
      %v1338 = vmul.f32 %v1211, 1.442695
      %v1339 = vpow.pop %v1338
      %v1340 = vadd.f32 %v1213, %v1215
      %1341 = vadd.xlane.f32.xlu0 %v1340
      %v1342 = vpop.xlane.xlu0 %1341
      %v1343 = vadd.f32 %v1217, %v1219
      %1344 = vadd.xlane.f32.xlu0 %v1343
      %v1345 = vpop.xlane.xlu0 %1344
      %v1346 = vadd.f32 %v1221, %v1223
      %1347 = vadd.xlane.f32.xlu0 %v1346
      %v1348 = vpop.xlane.xlu0 %1347
      %v1349 = vadd.f32 %v1225, %v1227
      %1350 = vadd.xlane.f32.xlu0 %v1349
      %v1351 = vpop.xlane.xlu0 %1350
      %v1352 = vadd.f32 %v1229, %v1231
      %1353 = vadd.xlane.f32.xlu0 %v1352
      %v1354 = vpop.xlane.xlu0 %1353
      %v1355 = vadd.f32 %v1233, %v1235
      %1356 = vadd.xlane.f32.xlu0 %v1355
      %v1357 = vpop.xlane.xlu0 %1356
      %v1358 = vadd.f32 %v1237, %v1239
      %1359 = vadd.xlane.f32.xlu0 %v1358
      %v1360 = vpop.xlane.xlu0 %1359
      %v1361 = vadd.f32 %v1241, %v1243
      %1362 = vadd.xlane.f32.xlu0 %v1361
      %v1363 = vpop.xlane.xlu0 %1362
      %v1364 = vadd.f32 %v1245, %v1247
      %1365 = vadd.xlane.f32.xlu0 %v1364
      %v1366 = vpop.xlane.xlu0 %1365
      %v1367 = vadd.f32 %v1249, %v1251
      %1368 = vadd.xlane.f32.xlu0 %v1367
      %v1369 = vpop.xlane.xlu0 %1368
      %v1370 = vadd.f32 %v1253, %v1255
      %1371 = vadd.xlane.f32.xlu0 %v1370
      %v1372 = vpop.xlane.xlu0 %1371
      %v1373 = vadd.f32 %v1257, %v1259
      %1374 = vadd.xlane.f32.xlu0 %v1373
      %v1375 = vpop.xlane.xlu0 %1374
      %v1376 = vadd.f32 %v1261, %v1263
      %1377 = vadd.xlane.f32.xlu0 %v1376
      %v1378 = vpop.xlane.xlu0 %1377
      %v1379 = vadd.f32 %v1265, %v1267
      %1380 = vadd.xlane.f32.xlu0 %v1379
      %v1381 = vpop.xlane.xlu0 %1380
      %v1382 = vadd.f32 %v1269, %v1271
      %1383 = vadd.xlane.f32.xlu0 %v1382
      %v1384 = vpop.xlane.xlu0 %1383
      %v1385 = vadd.f32 %v1273, %v1275
      %1386 = vadd.xlane.f32.xlu0 %v1385
      %v1387 = vpop.xlane.xlu0 %1386
      %v1388 = vadd.f32 %v1277, %v1279
      %1389 = vadd.xlane.f32.xlu0 %v1388
      %v1390 = vpop.xlane.xlu0 %1389
      %v1391 = vadd.f32 %v1281, %v1283
      %1392 = vadd.xlane.f32.xlu0 %v1391
      %v1393 = vpop.xlane.xlu0 %1392
      %v1394 = vadd.f32 %v1285, %v1287
      %1395 = vadd.xlane.f32.xlu0 %v1394
      %v1396 = vpop.xlane.xlu0 %1395
      %v1397 = vadd.f32 %v1289, %v1291
      %1398 = vadd.xlane.f32.xlu0 %v1397
      %v1399 = vpop.xlane.xlu0 %1398
      %v1400 = vadd.f32 %v1293, %v1295
      %1401 = vadd.xlane.f32.xlu0 %v1400
      %v1402 = vpop.xlane.xlu0 %1401
      %v1403 = vadd.f32 %v1297, %v1299
      %1404 = vadd.xlane.f32.xlu0 %v1403
      %v1405 = vpop.xlane.xlu0 %1404
      %v1406 = vadd.f32 %v1301, %v1303
      %1407 = vadd.xlane.f32.xlu0 %v1406
      %v1408 = vpop.xlane.xlu0 %1407
      %v1409 = vadd.f32 %v1305, %v1307
      %1410 = vadd.xlane.f32.xlu0 %v1409
      %v1411 = vpop.xlane.xlu0 %1410
      %v1412 = vadd.f32 %v1309, %v1311
      %1413 = vadd.xlane.f32.xlu0 %v1412
      %v1414 = vpop.xlane.xlu0 %1413
      %v1415 = vadd.f32 %v1313, %v1315
      %1416 = vadd.xlane.f32.xlu0 %v1415
      %v1417 = vpop.xlane.xlu0 %1416
      %v1418 = vadd.f32 %v1317, %v1319
      %1419 = vadd.xlane.f32.xlu0 %v1418
      %v1420 = vpop.xlane.xlu0 %1419
      %v1421 = vadd.f32 %v1321, %v1323
      %1422 = vadd.xlane.f32.xlu0 %v1421
      %v1423 = vpop.xlane.xlu0 %1422
      %v1424 = vadd.f32 %v1325, %v1327
      %1425 = vadd.xlane.f32.xlu0 %v1424
      %v1426 = vpop.xlane.xlu0 %1425
      %v1427 = vadd.f32 %v1329, %v1331
      %1428 = vadd.xlane.f32.xlu0 %v1427
      %v1429 = vpop.xlane.xlu0 %1428
      %v1430 = vadd.f32 %v1333, %v1335
      %1431 = vadd.xlane.f32.xlu0 %v1430
      %v1432 = vpop.xlane.xlu0 %1431
      %v1433 = vadd.f32 %v1337, %v1339
      %1434 = vadd.xlane.f32.xlu0 %v1433
      %v1435 = vpop.xlane.xlu0 %1434
      %v1436 = vrcp.pop %v1342
      %v1437 = vrcp.pop %v1345
      %v1438 = vrcp.pop %v1348
      %v1439 = vrcp.pop %v1351
      %v1440 = vrcp.pop %v1354
      %v1441 = vrcp.pop %v1357
      %v1442 = vrcp.pop %v1360
      %v1443 = vrcp.pop %v1363
      %v1444 = vrcp.pop %v1366
      %v1445 = vrcp.pop %v1369
      %v1446 = vrcp.pop %v1372
      %v1447 = vrcp.pop %v1375
      %v1448 = vrcp.pop %v1378
      %v1449 = vrcp.pop %v1381
      %v1450 = vrcp.pop %v1384
      %v1451 = vrcp.pop %v1387
      %v1452 = vrcp.pop %v1390
      %v1453 = vrcp.pop %v1393
      %v1454 = vrcp.pop %v1396
      %v1455 = vrcp.pop %v1399
      %v1456 = vrcp.pop %v1402
      %v1457 = vrcp.pop %v1405
      %v1458 = vrcp.pop %v1408
      %v1459 = vrcp.pop %v1411
      %v1460 = vrcp.pop %v1414
      %v1461 = vrcp.pop %v1417
      %v1462 = vrcp.pop %v1420
      %v1463 = vrcp.pop %v1423
      %v1464 = vrcp.pop %v1426
      %v1465 = vrcp.pop %v1429
      %v1466 = vrcp.pop %v1432
      %v1467 = vrcp.pop %v1435
      %v1468 = vmul.f32 %v1213, %v1436
      %v1469 = vmul.f32 %v1215, %v1436
      %v1470 = vmul.f32 %v1217, %v1437
      %v1471 = vmul.f32 %v1219, %v1437
      %v1472 = vmul.f32 %v1221, %v1438
      %v1473 = vmul.f32 %v1223, %v1438
      %v1474 = vmul.f32 %v1225, %v1439
      %v1475 = vmul.f32 %v1227, %v1439
      %v1476 = vmul.f32 %v1229, %v1440
      %v1477 = vmul.f32 %v1231, %v1440
      %v1478 = vmul.f32 %v1233, %v1441
      %v1479 = vmul.f32 %v1235, %v1441
      %v1480 = vmul.f32 %v1237, %v1442
      %v1481 = vmul.f32 %v1239, %v1442
      %v1482 = vmul.f32 %v1241, %v1443
      %v1483 = vmul.f32 %v1243, %v1443
      %v1484 = vmul.f32 %v1245, %v1444
      %v1485 = vmul.f32 %v1247, %v1444
      %v1486 = vmul.f32 %v1249, %v1445
      %v1487 = vmul.f32 %v1251, %v1445
      %v1488 = vmul.f32 %v1253, %v1446
      %v1489 = vmul.f32 %v1255, %v1446
      %v1490 = vmul.f32 %v1257, %v1447
      %v1491 = vmul.f32 %v1259, %v1447
      %v1492 = vmul.f32 %v1261, %v1448
      %v1493 = vmul.f32 %v1263, %v1448
      %v1494 = vmul.f32 %v1265, %v1449
      %v1495 = vmul.f32 %v1267, %v1449
      %v1496 = vmul.f32 %v1269, %v1450
      %v1497 = vmul.f32 %v1271, %v1450
      %v1498 = vmul.f32 %v1273, %v1451
      %v1499 = vmul.f32 %v1275, %v1451
      %v1500 = vmul.f32 %v1277, %v1452
      %v1501 = vmul.f32 %v1279, %v1452
      %v1502 = vmul.f32 %v1281, %v1453
      %v1503 = vmul.f32 %v1283, %v1453
      %v1504 = vmul.f32 %v1285, %v1454
      %v1505 = vmul.f32 %v1287, %v1454
      %v1506 = vmul.f32 %v1289, %v1455
      %v1507 = vmul.f32 %v1291, %v1455
      %v1508 = vmul.f32 %v1293, %v1456
      %v1509 = vmul.f32 %v1295, %v1456
      %v1510 = vmul.f32 %v1297, %v1457
      %v1511 = vmul.f32 %v1299, %v1457
      %v1512 = vmul.f32 %v1301, %v1458
      %v1513 = vmul.f32 %v1303, %v1458
      %v1514 = vmul.f32 %v1305, %v1459
      %v1515 = vmul.f32 %v1307, %v1459
      %v1516 = vmul.f32 %v1309, %v1460
      %v1517 = vmul.f32 %v1311, %v1460
      %v1518 = vmul.f32 %v1313, %v1461
      %v1519 = vmul.f32 %v1315, %v1461
      %v1520 = vmul.f32 %v1317, %v1462
      %v1521 = vmul.f32 %v1319, %v1462
      %v1522 = vmul.f32 %v1321, %v1463
      %v1523 = vmul.f32 %v1323, %v1463
      %v1524 = vmul.f32 %v1325, %v1464
      %v1525 = vmul.f32 %v1327, %v1464
      %v1526 = vmul.f32 %v1329, %v1465
      %v1527 = vmul.f32 %v1331, %v1465
      %v1528 = vmul.f32 %v1333, %v1466
      %v1529 = vmul.f32 %v1335, %v1466
      %v1530 = vmul.f32 %v1337, %v1467
      %v1531 = vmul.f32 %v1339, %v1467
      %v1532 = vpack.c.bf16 %v1470, %v1468
      %v1533 = vpack.c.bf16 %v1471, %v1469
      %v1534 = vpack.c.bf16 %v1474, %v1472
      %v1535 = vpack.c.bf16 %v1475, %v1473
      %v1536 = vpack.c.bf16 %v1478, %v1476
      %v1537 = vpack.c.bf16 %v1479, %v1477
      %v1538 = vpack.c.bf16 %v1482, %v1480
      %v1539 = vpack.c.bf16 %v1483, %v1481
      %v1540 = vpack.c.bf16 %v1486, %v1484
      %v1541 = vpack.c.bf16 %v1487, %v1485
      %v1542 = vpack.c.bf16 %v1490, %v1488
      %v1543 = vpack.c.bf16 %v1491, %v1489
      %v1544 = vpack.c.bf16 %v1494, %v1492
      %v1545 = vpack.c.bf16 %v1495, %v1493
      %v1546 = vpack.c.bf16 %v1498, %v1496
      %v1547 = vpack.c.bf16 %v1499, %v1497
      %v1548 = vpack.c.bf16 %v1502, %v1500
      %v1549 = vpack.c.bf16 %v1503, %v1501
      %v1550 = vpack.c.bf16 %v1506, %v1504
      %v1551 = vpack.c.bf16 %v1507, %v1505
      %v1552 = vpack.c.bf16 %v1510, %v1508
      %v1553 = vpack.c.bf16 %v1511, %v1509
      %v1554 = vpack.c.bf16 %v1514, %v1512
      %v1555 = vpack.c.bf16 %v1515, %v1513
      %v1556 = vpack.c.bf16 %v1518, %v1516
      %v1557 = vpack.c.bf16 %v1519, %v1517
      %v1558 = vpack.c.bf16 %v1522, %v1520
      %v1559 = vpack.c.bf16 %v1523, %v1521
      %v1560 = vpack.c.bf16 %v1526, %v1524
      %v1561 = vpack.c.bf16 %v1527, %v1525
      %v1562 = vpack.c.bf16 %v1530, %v1528
      %v1563 = vpack.c.bf16 %v1531, %v1529
      %1564 = vrot.lane.b32.xlu0 %v761, 64
      %v1565 = vpop.permute.xlu0 %1564
      %1566 = vrot.lane.b32.xlu0 %v762, 64
      %v1567 = vpop.permute.xlu0 %1566
      %1568 = vrot.lane.b32.xlu0 %v763, 64
      %v1569 = vpop.permute.xlu0 %1568
      %1570 = vrot.lane.b32.xlu0 %v764, 64
      %v1571 = vpop.permute.xlu0 %1570
      %1572 = vrot.lane.b32.xlu0 %v765, 64
      %v1573 = vpop.permute.xlu0 %1572
      %1574 = vrot.lane.b32.xlu0 %v766, 64
      %v1575 = vpop.permute.xlu0 %1574
      %1576 = vrot.lane.b32.xlu0 %v767, 64
      %v1577 = vpop.permute.xlu0 %1576
      %1578 = vrot.lane.b32.xlu0 %v768, 64
      %v1579 = vpop.permute.xlu0 %1578
      %1580 = vrot.lane.b32.xlu0 %v769, 64
      %v1581 = vpop.permute.xlu0 %1580
      %1582 = vrot.lane.b32.xlu0 %v770, 64
      %v1583 = vpop.permute.xlu0 %1582
      %1584 = vrot.lane.b32.xlu0 %v771, 64
      %v1585 = vpop.permute.xlu0 %1584
      %1586 = vrot.lane.b32.xlu0 %v772, 64
      %v1587 = vpop.permute.xlu0 %1586
      %1588 = vrot.lane.b32.xlu0 %v773, 64
      %v1589 = vpop.permute.xlu0 %1588
      %1590 = vrot.lane.b32.xlu0 %v774, 64
      %v1591 = vpop.permute.xlu0 %1590
      %1592 = vrot.lane.b32.xlu0 %v775, 64
      %v1593 = vpop.permute.xlu0 %1592
      %1594 = vrot.lane.b32.xlu0 %v776, 64
      %v1595 = vpop.permute.xlu0 %1594
      %1612 = vmatpush.bf16.msra.mxu0 %v1579
      %1613 = vmatpush.bf16.msra.mxu0 %v1577
      %1614 = vmatpush.bf16.msra.mxu0 %v1575
      %1615 = vmatpush.bf16.msra.mxu0 %v1573
      %1616 = vmatpush.bf16.msra.mxu0 %v1571
      %1617 = vmatpush.bf16.msra.mxu0 %v1569
      %1618 = vmatpush.bf16.msra.mxu0 %v1567
      %1619 = vmatpush.bf16.msra.mxu0 %v1565
      %1620 = vmatmul.bf16.gmra.mxu0 %v1532
      %v1621 = vpop.f32.mrf.mxu0
      %v1622 = vadd.f32 0.0, %v1621
      %v1623 = vpop.f32.mrf.mxu0
      %v1624 = vadd.f32 0.0, %v1623
      %1625 = vmatmul.bf16.gmra.mxu0 %v1534
      %v1626 = vpop.f32.mrf.mxu0
      %v1627 = vadd.f32 0.0, %v1626
      %v1628 = vpop.f32.mrf.mxu0
      %v1629 = vadd.f32 0.0, %v1628
      %1630 = vmatmul.bf16.gmra.mxu0 %v1536
      %v1631 = vpop.f32.mrf.mxu0
      %v1632 = vadd.f32 0.0, %v1631
      %v1633 = vpop.f32.mrf.mxu0
      %v1634 = vadd.f32 0.0, %v1633
      %1635 = vmatmul.bf16.gmra.mxu0 %v1538
      %v1636 = vpop.f32.mrf.mxu0
      %v1637 = vadd.f32 0.0, %v1636
      %v1638 = vpop.f32.mrf.mxu0
      %v1639 = vadd.f32 0.0, %v1638
      %1640 = vmatmul.bf16.gmra.mxu0 %v1540
      %v1641 = vpop.f32.mrf.mxu0
      %v1642 = vadd.f32 0.0, %v1641
      %v1643 = vpop.f32.mrf.mxu0
      %v1644 = vadd.f32 0.0, %v1643
      %1645 = vmatmul.bf16.gmra.mxu0 %v1542
      %v1646 = vpop.f32.mrf.mxu0
      %v1647 = vadd.f32 0.0, %v1646
      %v1648 = vpop.f32.mrf.mxu0
      %v1649 = vadd.f32 0.0, %v1648
      %1650 = vmatmul.bf16.gmra.mxu0 %v1544
      %v1651 = vpop.f32.mrf.mxu0
      %v1652 = vadd.f32 0.0, %v1651
      %v1653 = vpop.f32.mrf.mxu0
      %v1654 = vadd.f32 0.0, %v1653
      %1655 = vmatmul.bf16.gmra.mxu0 %v1546
      %v1656 = vpop.f32.mrf.mxu0
      %v1657 = vadd.f32 0.0, %v1656
      %v1658 = vpop.f32.mrf.mxu0
      %v1659 = vadd.f32 0.0, %v1658
      %1660 = vmatmul.bf16.gmra.mxu0 %v1548
      %v1661 = vpop.f32.mrf.mxu0
      %v1662 = vadd.f32 0.0, %v1661
      %v1663 = vpop.f32.mrf.mxu0
      %v1664 = vadd.f32 0.0, %v1663
      %1665 = vmatmul.bf16.gmra.mxu0 %v1550
      %v1666 = vpop.f32.mrf.mxu0
      %v1667 = vadd.f32 0.0, %v1666
      %v1668 = vpop.f32.mrf.mxu0
      %v1669 = vadd.f32 0.0, %v1668
      %1670 = vmatmul.bf16.gmra.mxu0 %v1552
      %v1671 = vpop.f32.mrf.mxu0
      %v1672 = vadd.f32 0.0, %v1671
      %v1673 = vpop.f32.mrf.mxu0
      %v1674 = vadd.f32 0.0, %v1673
      %1675 = vmatmul.bf16.gmra.mxu0 %v1554
      %v1676 = vpop.f32.mrf.mxu0
      %v1677 = vadd.f32 0.0, %v1676
      %v1678 = vpop.f32.mrf.mxu0
      %v1679 = vadd.f32 0.0, %v1678
      %1680 = vmatmul.bf16.gmra.mxu0 %v1556
      %v1681 = vpop.f32.mrf.mxu0
      %v1682 = vadd.f32 0.0, %v1681
      %v1683 = vpop.f32.mrf.mxu0
      %v1684 = vadd.f32 0.0, %v1683
      %1685 = vmatmul.bf16.gmra.mxu0 %v1558
      %v1686 = vpop.f32.mrf.mxu0
      %v1687 = vadd.f32 0.0, %v1686
      %v1688 = vpop.f32.mrf.mxu0
      %v1689 = vadd.f32 0.0, %v1688
      %1690 = vmatmul.bf16.gmra.mxu0 %v1560
      %v1691 = vpop.f32.mrf.mxu0
      %v1692 = vadd.f32 0.0, %v1691
      %v1693 = vpop.f32.mrf.mxu0
      %v1694 = vadd.f32 0.0, %v1693
      %1695 = vmatmul.bf16.gmra.mxu0 %v1562
      %v1696 = vpop.f32.mrf.mxu0
      %v1697 = vadd.f32 0.0, %v1696
      %v1698 = vpop.f32.mrf.mxu0
      %v1699 = vadd.f32 0.0, %v1698
      %1700 = vdwg.mxu0
      %1701 = vmatpush.bf16.msra.mxu0 %v1595
      %1702 = vmatpush.bf16.msra.mxu0 %v1593
      %1703 = vmatpush.bf16.msra.mxu0 %v1591
      %1704 = vmatpush.bf16.msra.mxu0 %v1589
      %1705 = vmatpush.bf16.msra.mxu0 %v1587
      %1706 = vmatpush.bf16.msra.mxu0 %v1585
      %1707 = vmatpush.bf16.msra.mxu0 %v1583
      %1708 = vmatpush.bf16.msra.mxu0 %v1581
      %1709 = vmatmul.bf16.gmra.mxu0 %v1533
      %v1710 = vpop.f32.mrf.mxu0
      %v1711 = vadd.f32 %v1622, %v1710
      %v1712 = vpop.f32.mrf.mxu0
      %v1713 = vadd.f32 %v1624, %v1712
      %1714 = vmatmul.bf16.gmra.mxu0 %v1535
      %v1715 = vpop.f32.mrf.mxu0
      %v1716 = vadd.f32 %v1627, %v1715
      %v1717 = vpop.f32.mrf.mxu0
      %v1718 = vadd.f32 %v1629, %v1717
      %1719 = vmatmul.bf16.gmra.mxu0 %v1537
      %v1720 = vpop.f32.mrf.mxu0
      %v1721 = vadd.f32 %v1632, %v1720
      %v1722 = vpop.f32.mrf.mxu0
      %v1723 = vadd.f32 %v1634, %v1722
      %1724 = vmatmul.bf16.gmra.mxu0 %v1539
      %v1725 = vpop.f32.mrf.mxu0
      %v1726 = vadd.f32 %v1637, %v1725
      %v1727 = vpop.f32.mrf.mxu0
      %v1728 = vadd.f32 %v1639, %v1727
      %1729 = vmatmul.bf16.gmra.mxu0 %v1541
      %v1730 = vpop.f32.mrf.mxu0
      %v1731 = vadd.f32 %v1642, %v1730
      %v1732 = vpop.f32.mrf.mxu0
      %v1733 = vadd.f32 %v1644, %v1732
      %1734 = vmatmul.bf16.gmra.mxu0 %v1543
      %v1735 = vpop.f32.mrf.mxu0
      %v1736 = vadd.f32 %v1647, %v1735
      %v1737 = vpop.f32.mrf.mxu0
      %v1738 = vadd.f32 %v1649, %v1737
      %1739 = vmatmul.bf16.gmra.mxu0 %v1545
      %v1740 = vpop.f32.mrf.mxu0
      %v1741 = vadd.f32 %v1652, %v1740
      %v1742 = vpop.f32.mrf.mxu0
      %v1743 = vadd.f32 %v1654, %v1742
      %1744 = vmatmul.bf16.gmra.mxu0 %v1547
      %v1745 = vpop.f32.mrf.mxu0
      %v1746 = vadd.f32 %v1657, %v1745
      %v1747 = vpop.f32.mrf.mxu0
      %v1748 = vadd.f32 %v1659, %v1747
      %1749 = vmatmul.bf16.gmra.mxu0 %v1549
      %v1750 = vpop.f32.mrf.mxu0
      %v1751 = vadd.f32 %v1662, %v1750
      %v1752 = vpop.f32.mrf.mxu0
      %v1753 = vadd.f32 %v1664, %v1752
      %1754 = vmatmul.bf16.gmra.mxu0 %v1551
      %v1755 = vpop.f32.mrf.mxu0
      %v1756 = vadd.f32 %v1667, %v1755
      %v1757 = vpop.f32.mrf.mxu0
      %v1758 = vadd.f32 %v1669, %v1757
      %1759 = vmatmul.bf16.gmra.mxu0 %v1553
      %v1760 = vpop.f32.mrf.mxu0
      %v1761 = vadd.f32 %v1672, %v1760
      %v1762 = vpop.f32.mrf.mxu0
      %v1763 = vadd.f32 %v1674, %v1762
      %1764 = vmatmul.bf16.gmra.mxu0 %v1555
      %v1765 = vpop.f32.mrf.mxu0
      %v1766 = vadd.f32 %v1677, %v1765
      %v1767 = vpop.f32.mrf.mxu0
      %v1768 = vadd.f32 %v1679, %v1767
      %1769 = vmatmul.bf16.gmra.mxu0 %v1557
      %v1770 = vpop.f32.mrf.mxu0
      %v1771 = vadd.f32 %v1682, %v1770
      %v1772 = vpop.f32.mrf.mxu0
      %v1773 = vadd.f32 %v1684, %v1772
      %1774 = vmatmul.bf16.gmra.mxu0 %v1559
      %v1775 = vpop.f32.mrf.mxu0
      %v1776 = vadd.f32 %v1687, %v1775
      %v1777 = vpop.f32.mrf.mxu0
      %v1778 = vadd.f32 %v1689, %v1777
      %1779 = vmatmul.bf16.gmra.mxu0 %v1561
      %v1780 = vpop.f32.mrf.mxu0
      %v1781 = vadd.f32 %v1692, %v1780
      %v1782 = vpop.f32.mrf.mxu0
      %v1783 = vadd.f32 %v1694, %v1782
      %1784 = vmatmul.bf16.gmra.mxu0 %v1563
      %v1785 = vpop.f32.mrf.mxu0
      %v1786 = vadd.f32 %v1697, %v1785
      %v1787 = vpop.f32.mrf.mxu0
      %v1788 = vadd.f32 %v1699, %v1787
      %1789 = vdwg.mxu0
      %s1790 = scalar_lea.vmem %s5, 512
      %v1791 = vld [vmem:[%s1790] sm:$0xff]
      %v1792 = vld [vmem:[%s1790 + $0x8] sm:$0xff]
      %v1793 = vld [vmem:[%s1790 + $0x10] sm:$0xff]
      %v1794 = vld [vmem:[%s1790 + $0x18] sm:$0xff]
      %v1795 = vld [vmem:[%s1790 + $0x20] sm:$0xff]
      %v1796 = vld [vmem:[%s1790 + $0x28] sm:$0xff]
      %v1797 = vld [vmem:[%s1790 + $0x30] sm:$0xff]
      %v1798 = vld [vmem:[%s1790 + $0x38] sm:$0xff]
      %v1799 = vld [vmem:[%s1790 + $0x40] sm:$0xff]
      %v1800 = vld [vmem:[%s1790 + $0x48] sm:$0xff]
      %v1801 = vld [vmem:[%s1790 + $0x50] sm:$0xff]
      %v1802 = vld [vmem:[%s1790 + $0x58] sm:$0xff]
      %v1803 = vld [vmem:[%s1790 + $0x60] sm:$0xff]
      %v1804 = vld [vmem:[%s1790 + $0x68] sm:$0xff]
      %v1805 = vld [vmem:[%s1790 + $0x70] sm:$0xff]
      %v1806 = vld [vmem:[%s1790 + $0x78] sm:$0xff]
      %v1807 = vld [vmem:[%s1790 + $0x80] sm:$0xff]
      %v1808 = vld [vmem:[%s1790 + $0x88] sm:$0xff]
      %v1809 = vld [vmem:[%s1790 + $0x90] sm:$0xff]
      %v1810 = vld [vmem:[%s1790 + $0x98] sm:$0xff]
      %v1811 = vld [vmem:[%s1790 + $0xa0] sm:$0xff]
      %v1812 = vld [vmem:[%s1790 + $0xa8] sm:$0xff]
      %v1813 = vld [vmem:[%s1790 + $0xb0] sm:$0xff]
      %v1814 = vld [vmem:[%s1790 + $0xb8] sm:$0xff]
      %v1815 = vld [vmem:[%s1790 + $0xc0] sm:$0xff]
      %v1816 = vld [vmem:[%s1790 + $0xc8] sm:$0xff]
      %v1817 = vld [vmem:[%s1790 + $0xd0] sm:$0xff]
      %v1818 = vld [vmem:[%s1790 + $0xd8] sm:$0xff]
      %v1819 = vld [vmem:[%s1790 + $0xe0] sm:$0xff]
      %v1820 = vld [vmem:[%s1790 + $0xe8] sm:$0xff]
      %v1821 = vld [vmem:[%s1790 + $0xf0] sm:$0xff]
      %v1822 = vld [vmem:[%s1790 + $0xf8] sm:$0xff]
      %v1823 = vld [vmem:[%s1790 + $0x100] sm:$0xff]
      %v1824 = vld [vmem:[%s1790 + $0x108] sm:$0xff]
      %v1825 = vld [vmem:[%s1790 + $0x110] sm:$0xff]
      %v1826 = vld [vmem:[%s1790 + $0x118] sm:$0xff]
      %v1827 = vld [vmem:[%s1790 + $0x120] sm:$0xff]
      %v1828 = vld [vmem:[%s1790 + $0x128] sm:$0xff]
      %v1829 = vld [vmem:[%s1790 + $0x130] sm:$0xff]
      %v1830 = vld [vmem:[%s1790 + $0x138] sm:$0xff]
      %v1831 = vld [vmem:[%s1790 + $0x140] sm:$0xff]
      %v1832 = vld [vmem:[%s1790 + $0x148] sm:$0xff]
      %v1833 = vld [vmem:[%s1790 + $0x150] sm:$0xff]
      %v1834 = vld [vmem:[%s1790 + $0x158] sm:$0xff]
      %v1835 = vld [vmem:[%s1790 + $0x160] sm:$0xff]
      %v1836 = vld [vmem:[%s1790 + $0x168] sm:$0xff]
      %v1837 = vld [vmem:[%s1790 + $0x170] sm:$0xff]
      %v1838 = vld [vmem:[%s1790 + $0x178] sm:$0xff]
      %v1839 = vld [vmem:[%s1790 + $0x180] sm:$0xff]
      %v1840 = vld [vmem:[%s1790 + $0x188] sm:$0xff]
      %v1841 = vld [vmem:[%s1790 + $0x190] sm:$0xff]
      %v1842 = vld [vmem:[%s1790 + $0x198] sm:$0xff]
      %v1843 = vld [vmem:[%s1790 + $0x1a0] sm:$0xff]
      %v1844 = vld [vmem:[%s1790 + $0x1a8] sm:$0xff]
      %v1845 = vld [vmem:[%s1790 + $0x1b0] sm:$0xff]
      %v1846 = vld [vmem:[%s1790 + $0x1b8] sm:$0xff]
      %v1847 = vld [vmem:[%s1790 + $0x1c0] sm:$0xff]
      %v1848 = vld [vmem:[%s1790 + $0x1c8] sm:$0xff]
      %v1849 = vld [vmem:[%s1790 + $0x1d0] sm:$0xff]
      %v1850 = vld [vmem:[%s1790 + $0x1d8] sm:$0xff]
      %v1851 = vld [vmem:[%s1790 + $0x1e0] sm:$0xff]
      %v1852 = vld [vmem:[%s1790 + $0x1e8] sm:$0xff]
      %v1853 = vld [vmem:[%s1790 + $0x1f0] sm:$0xff]
      %v1854 = vld [vmem:[%s1790 + $0x1f8] sm:$0xff]
      %1871 = vrot.lane.b32.xlu0 %v617, 112
      %v1872 = vpop.permute.xlu0 %1871
      %1873 = vrot.lane.b32.xlu0 %v618, 112
      %v1874 = vpop.permute.xlu0 %1873
      %1875 = vrot.lane.b32.xlu0 %v619, 112
      %v1876 = vpop.permute.xlu0 %1875
      %1877 = vrot.lane.b32.xlu0 %v620, 112
      %v1878 = vpop.permute.xlu0 %1877
      %1879 = vrot.lane.b32.xlu0 %v621, 112
      %v1880 = vpop.permute.xlu0 %1879
      %1881 = vrot.lane.b32.xlu0 %v622, 112
      %v1882 = vpop.permute.xlu0 %1881
      %1883 = vrot.lane.b32.xlu0 %v623, 112
      %v1884 = vpop.permute.xlu0 %1883
      %1885 = vrot.lane.b32.xlu0 %v624, 112
      %v1886 = vpop.permute.xlu0 %1885
      %1887 = vrot.lane.b32.xlu0 %v625, 112
      %v1888 = vpop.permute.xlu0 %1887
      %1889 = vrot.lane.b32.xlu0 %v626, 112
      %v1890 = vpop.permute.xlu0 %1889
      %1891 = vrot.lane.b32.xlu0 %v627, 112
      %v1892 = vpop.permute.xlu0 %1891
      %1893 = vrot.lane.b32.xlu0 %v628, 112
      %v1894 = vpop.permute.xlu0 %1893
      %1895 = vrot.lane.b32.xlu0 %v629, 112
      %v1896 = vpop.permute.xlu0 %1895
      %1897 = vrot.lane.b32.xlu0 %v630, 112
      %v1898 = vpop.permute.xlu0 %1897
      %1899 = vrot.lane.b32.xlu0 %v631, 112
      %v1900 = vpop.permute.xlu0 %1899
      %1901 = vrot.lane.b32.xlu0 %v632, 112
      %v1902 = vpop.permute.xlu0 %1901
      %1903 = vrot.lane.b32.xlu0 %v761, 112
      %v1904 = vpop.permute.xlu0 %1903
      %1905 = vrot.lane.b32.xlu0 %v762, 112
      %v1906 = vpop.permute.xlu0 %1905
      %1907 = vrot.lane.b32.xlu0 %v763, 112
      %v1908 = vpop.permute.xlu0 %1907
      %1909 = vrot.lane.b32.xlu0 %v764, 112
      %v1910 = vpop.permute.xlu0 %1909
      %1911 = vrot.lane.b32.xlu0 %v765, 112
      %v1912 = vpop.permute.xlu0 %1911
      %1913 = vrot.lane.b32.xlu0 %v766, 112
      %v1914 = vpop.permute.xlu0 %1913
      %1915 = vrot.lane.b32.xlu0 %v767, 112
      %v1916 = vpop.permute.xlu0 %1915
      %1917 = vrot.lane.b32.xlu0 %v768, 112
      %v1918 = vpop.permute.xlu0 %1917
      %1919 = vrot.lane.b32.xlu0 %v769, 112
      %v1920 = vpop.permute.xlu0 %1919
      %1921 = vrot.lane.b32.xlu0 %v770, 112
      %v1922 = vpop.permute.xlu0 %1921
      %1923 = vrot.lane.b32.xlu0 %v771, 112
      %v1924 = vpop.permute.xlu0 %1923
      %1925 = vrot.lane.b32.xlu0 %v772, 112
      %v1926 = vpop.permute.xlu0 %1925
      %1927 = vrot.lane.b32.xlu0 %v773, 112
      %v1928 = vpop.permute.xlu0 %1927
      %1929 = vrot.lane.b32.xlu0 %v774, 112
      %v1930 = vpop.permute.xlu0 %1929
      %1931 = vrot.lane.b32.xlu0 %v775, 112
      %v1932 = vpop.permute.xlu0 %1931
      %1933 = vrot.lane.b32.xlu0 %v776, 112
      %v1934 = vpop.permute.xlu0 %1933
      %v1936 = vsel %vm777, %v1872, 0
      %v1939 = vsel %vm777, %v1874, 0
      %v1942 = vsel %vm777, %v1876, 0
      %v1945 = vsel %vm777, %v1878, 0
      %v1948 = vsel %vm777, %v1880, 0
      %v1951 = vsel %vm777, %v1882, 0
      %v1954 = vsel %vm777, %v1884, 0
      %v1957 = vsel %vm777, %v1886, 0
      %v1960 = vsel %vm777, %v1888, 0
      %v1963 = vsel %vm777, %v1890, 0
      %v1966 = vsel %vm777, %v1892, 0
      %v1969 = vsel %vm777, %v1894, 0
      %v1972 = vsel %vm777, %v1896, 0
      %v1975 = vsel %vm777, %v1898, 0
      %v1978 = vsel %vm777, %v1900, 0
      %v1981 = vsel %vm777, %v1902, 0
      %v1984 = vsel %vm777, %v1904, 0
      %v1987 = vsel %vm777, %v1906, 0
      %v1990 = vsel %vm777, %v1908, 0
      %v1993 = vsel %vm777, %v1910, 0
      %v1996 = vsel %vm777, %v1912, 0
      %v1999 = vsel %vm777, %v1914, 0
      %v2002 = vsel %vm777, %v1916, 0
      %v2005 = vsel %vm777, %v1918, 0
      %v2008 = vsel %vm777, %v1920, 0
      %v2011 = vsel %vm777, %v1922, 0
      %v2014 = vsel %vm777, %v1924, 0
      %v2017 = vsel %vm777, %v1926, 0
      %v2020 = vsel %vm777, %v1928, 0
      %v2023 = vsel %vm777, %v1930, 0
      %v2026 = vsel %vm777, %v1932, 0
      %v2029 = vsel %vm777, %v1934, 0
      %2031 = vmatpush.bf16.xpose.msra.mxu0 %v2005
      %2032 = vmatpush.bf16.xpose.msra.mxu0 %v2002
      %2033 = vmatpush.bf16.xpose.msra.mxu0 %v1999
      %2034 = vmatpush.bf16.xpose.msra.mxu0 %v1996
      %2035 = vmatpush.bf16.xpose.msra.mxu0 %v1993
      %2036 = vmatpush.bf16.xpose.msra.mxu0 %v1990
      %2037 = vmatpush.bf16.xpose.msra.mxu0 %v1987
      %2038 = vmatpush.bf16.xpose.msra.mxu0 %v1984
      %2039 = vmatmul.bf16.gmra.mxu0 %v1936
      %v2040 = vpop.f32.mrf.mxu0
      %v2041 = vadd.f32 %v1791, %v2040
      %v2042 = vpop.f32.mrf.mxu0
      %v2043 = vadd.f32 %v1793, %v2042
      %2044 = vmatmul.bf16.gmra.mxu0 %v1939
      %v2045 = vpop.f32.mrf.mxu0
      %v2046 = vadd.f32 %v1795, %v2045
      %v2047 = vpop.f32.mrf.mxu0
      %v2048 = vadd.f32 %v1797, %v2047
      %2049 = vmatmul.bf16.gmra.mxu0 %v1942
      %v2050 = vpop.f32.mrf.mxu0
      %v2051 = vadd.f32 %v1799, %v2050
      %v2052 = vpop.f32.mrf.mxu0
      %v2053 = vadd.f32 %v1801, %v2052
      %2054 = vmatmul.bf16.gmra.mxu0 %v1945
      %v2055 = vpop.f32.mrf.mxu0
      %v2056 = vadd.f32 %v1803, %v2055
      %v2057 = vpop.f32.mrf.mxu0
      %v2058 = vadd.f32 %v1805, %v2057
      %2059 = vmatmul.bf16.gmra.mxu0 %v1948
      %v2060 = vpop.f32.mrf.mxu0
      %v2061 = vadd.f32 %v1807, %v2060
      %v2062 = vpop.f32.mrf.mxu0
      %v2063 = vadd.f32 %v1809, %v2062
      %2064 = vmatmul.bf16.gmra.mxu0 %v1951
      %v2065 = vpop.f32.mrf.mxu0
      %v2066 = vadd.f32 %v1811, %v2065
      %v2067 = vpop.f32.mrf.mxu0
      %v2068 = vadd.f32 %v1813, %v2067
      %2069 = vmatmul.bf16.gmra.mxu0 %v1954
      %v2070 = vpop.f32.mrf.mxu0
      %v2071 = vadd.f32 %v1815, %v2070
      %v2072 = vpop.f32.mrf.mxu0
      %v2073 = vadd.f32 %v1817, %v2072
      %2074 = vmatmul.bf16.gmra.mxu0 %v1957
      %v2075 = vpop.f32.mrf.mxu0
      %v2076 = vadd.f32 %v1819, %v2075
      %v2077 = vpop.f32.mrf.mxu0
      %v2078 = vadd.f32 %v1821, %v2077
      %2079 = vmatmul.bf16.gmra.mxu0 %v1960
      %v2080 = vpop.f32.mrf.mxu0
      %v2081 = vadd.f32 %v1823, %v2080
      %v2082 = vpop.f32.mrf.mxu0
      %v2083 = vadd.f32 %v1825, %v2082
      %2084 = vmatmul.bf16.gmra.mxu0 %v1963
      %v2085 = vpop.f32.mrf.mxu0
      %v2086 = vadd.f32 %v1827, %v2085
      %v2087 = vpop.f32.mrf.mxu0
      %v2088 = vadd.f32 %v1829, %v2087
      %2089 = vmatmul.bf16.gmra.mxu0 %v1966
      %v2090 = vpop.f32.mrf.mxu0
      %v2091 = vadd.f32 %v1831, %v2090
      %v2092 = vpop.f32.mrf.mxu0
      %v2093 = vadd.f32 %v1833, %v2092
      %2094 = vmatmul.bf16.gmra.mxu0 %v1969
      %v2095 = vpop.f32.mrf.mxu0
      %v2096 = vadd.f32 %v1835, %v2095
      %v2097 = vpop.f32.mrf.mxu0
      %v2098 = vadd.f32 %v1837, %v2097
      %2099 = vmatmul.bf16.gmra.mxu0 %v1972
      %v2100 = vpop.f32.mrf.mxu0
      %v2101 = vadd.f32 %v1839, %v2100
      %v2102 = vpop.f32.mrf.mxu0
      %v2103 = vadd.f32 %v1841, %v2102
      %2104 = vmatmul.bf16.gmra.mxu0 %v1975
      %v2105 = vpop.f32.mrf.mxu0
      %v2106 = vadd.f32 %v1843, %v2105
      %v2107 = vpop.f32.mrf.mxu0
      %v2108 = vadd.f32 %v1845, %v2107
      %2109 = vmatmul.bf16.gmra.mxu0 %v1978
      %v2110 = vpop.f32.mrf.mxu0
      %v2111 = vadd.f32 %v1847, %v2110
      %v2112 = vpop.f32.mrf.mxu0
      %v2113 = vadd.f32 %v1849, %v2112
      %2114 = vmatmul.bf16.gmra.mxu0 %v1981
      %v2115 = vpop.f32.mrf.mxu0
      %v2116 = vadd.f32 %v1851, %v2115
      %v2117 = vpop.f32.mrf.mxu0
      %v2118 = vadd.f32 %v1853, %v2117
      %2119 = vdwg.mxu0
      %2120 = vmatpush.bf16.xpose.msra.mxu0 %v2029
      %2121 = vmatpush.bf16.xpose.msra.mxu0 %v2026
      %2122 = vmatpush.bf16.xpose.msra.mxu0 %v2023
      %2123 = vmatpush.bf16.xpose.msra.mxu0 %v2020
      %2124 = vmatpush.bf16.xpose.msra.mxu0 %v2017
      %2125 = vmatpush.bf16.xpose.msra.mxu0 %v2014
      %2126 = vmatpush.bf16.xpose.msra.mxu0 %v2011
      %2127 = vmatpush.bf16.xpose.msra.mxu0 %v2008
      %2128 = vmatmul.bf16.gmra.mxu0 %v1936
      %v2129 = vpop.f32.mrf.mxu0
      %v2130 = vadd.f32 %v1792, %v2129
      %v2131 = vpop.f32.mrf.mxu0
      %v2132 = vadd.f32 %v1794, %v2131
      %2133 = vmatmul.bf16.gmra.mxu0 %v1939
      %v2134 = vpop.f32.mrf.mxu0
      %v2135 = vadd.f32 %v1796, %v2134
      %v2136 = vpop.f32.mrf.mxu0
      %v2137 = vadd.f32 %v1798, %v2136
      %2138 = vmatmul.bf16.gmra.mxu0 %v1942
      %v2139 = vpop.f32.mrf.mxu0
      %v2140 = vadd.f32 %v1800, %v2139
      %v2141 = vpop.f32.mrf.mxu0
      %v2142 = vadd.f32 %v1802, %v2141
      %2143 = vmatmul.bf16.gmra.mxu0 %v1945
      %v2144 = vpop.f32.mrf.mxu0
      %v2145 = vadd.f32 %v1804, %v2144
      %v2146 = vpop.f32.mrf.mxu0
      %v2147 = vadd.f32 %v1806, %v2146
      %2148 = vmatmul.bf16.gmra.mxu0 %v1948
      %v2149 = vpop.f32.mrf.mxu0
      %v2150 = vadd.f32 %v1808, %v2149
      %v2151 = vpop.f32.mrf.mxu0
      %v2152 = vadd.f32 %v1810, %v2151
      %2153 = vmatmul.bf16.gmra.mxu0 %v1951
      %v2154 = vpop.f32.mrf.mxu0
      %v2155 = vadd.f32 %v1812, %v2154
      %v2156 = vpop.f32.mrf.mxu0
      %v2157 = vadd.f32 %v1814, %v2156
      %2158 = vmatmul.bf16.gmra.mxu0 %v1954
      %v2159 = vpop.f32.mrf.mxu0
      %v2160 = vadd.f32 %v1816, %v2159
      %v2161 = vpop.f32.mrf.mxu0
      %v2162 = vadd.f32 %v1818, %v2161
      %2163 = vmatmul.bf16.gmra.mxu0 %v1957
      %v2164 = vpop.f32.mrf.mxu0
      %v2165 = vadd.f32 %v1820, %v2164
      %v2166 = vpop.f32.mrf.mxu0
      %v2167 = vadd.f32 %v1822, %v2166
      %2168 = vmatmul.bf16.gmra.mxu0 %v1960
      %v2169 = vpop.f32.mrf.mxu0
      %v2170 = vadd.f32 %v1824, %v2169
      %v2171 = vpop.f32.mrf.mxu0
      %v2172 = vadd.f32 %v1826, %v2171
      %2173 = vmatmul.bf16.gmra.mxu0 %v1963
      %v2174 = vpop.f32.mrf.mxu0
      %v2175 = vadd.f32 %v1828, %v2174
      %v2176 = vpop.f32.mrf.mxu0
      %v2177 = vadd.f32 %v1830, %v2176
      %2178 = vmatmul.bf16.gmra.mxu0 %v1966
      %v2179 = vpop.f32.mrf.mxu0
      %v2180 = vadd.f32 %v1832, %v2179
      %v2181 = vpop.f32.mrf.mxu0
      %v2182 = vadd.f32 %v1834, %v2181
      %2183 = vmatmul.bf16.gmra.mxu0 %v1969
      %v2184 = vpop.f32.mrf.mxu0
      %v2185 = vadd.f32 %v1836, %v2184
      %v2186 = vpop.f32.mrf.mxu0
      %v2187 = vadd.f32 %v1838, %v2186
      %2188 = vmatmul.bf16.gmra.mxu0 %v1972
      %v2189 = vpop.f32.mrf.mxu0
      %v2190 = vadd.f32 %v1840, %v2189
      %v2191 = vpop.f32.mrf.mxu0
      %v2192 = vadd.f32 %v1842, %v2191
      %2193 = vmatmul.bf16.gmra.mxu0 %v1975
      %v2194 = vpop.f32.mrf.mxu0
      %v2195 = vadd.f32 %v1844, %v2194
      %v2196 = vpop.f32.mrf.mxu0
      %v2197 = vadd.f32 %v1846, %v2196
      %2198 = vmatmul.bf16.gmra.mxu0 %v1978
      %v2199 = vpop.f32.mrf.mxu0
      %v2200 = vadd.f32 %v1848, %v2199
      %v2201 = vpop.f32.mrf.mxu0
      %v2202 = vadd.f32 %v1850, %v2201
      %2203 = vmatmul.bf16.gmra.mxu0 %v1981
      %v2204 = vpop.f32.mrf.mxu0
      %v2205 = vadd.f32 %v1852, %v2204
      %v2206 = vpop.f32.mrf.mxu0
      %v2207 = vadd.f32 %v1854, %v2206
      %2208 = vdwg.mxu0
      %v2209 = vmax.f32 %v2041, %v2130
      %2210 = vmax.xlane.f32.xlu0 %v2209
      %v2211 = vpop.xlane.xlu0 %2210
      %v2212 = vmax.f32 %v2043, %v2132
      %2213 = vmax.xlane.f32.xlu0 %v2212
      %v2214 = vpop.xlane.xlu0 %2213
      %v2215 = vmax.f32 %v2046, %v2135
      %2216 = vmax.xlane.f32.xlu0 %v2215
      %v2217 = vpop.xlane.xlu0 %2216
      %v2218 = vmax.f32 %v2048, %v2137
      %2219 = vmax.xlane.f32.xlu0 %v2218
      %v2220 = vpop.xlane.xlu0 %2219
      %v2221 = vmax.f32 %v2051, %v2140
      %2222 = vmax.xlane.f32.xlu0 %v2221
      %v2223 = vpop.xlane.xlu0 %2222
      %v2224 = vmax.f32 %v2053, %v2142
      %2225 = vmax.xlane.f32.xlu0 %v2224
      %v2226 = vpop.xlane.xlu0 %2225
      %v2227 = vmax.f32 %v2056, %v2145
      %2228 = vmax.xlane.f32.xlu0 %v2227
      %v2229 = vpop.xlane.xlu0 %2228
      %v2230 = vmax.f32 %v2058, %v2147
      %2231 = vmax.xlane.f32.xlu0 %v2230
      %v2232 = vpop.xlane.xlu0 %2231
      %v2233 = vmax.f32 %v2061, %v2150
      %2234 = vmax.xlane.f32.xlu0 %v2233
      %v2235 = vpop.xlane.xlu0 %2234
      %v2236 = vmax.f32 %v2063, %v2152
      %2237 = vmax.xlane.f32.xlu0 %v2236
      %v2238 = vpop.xlane.xlu0 %2237
      %v2239 = vmax.f32 %v2066, %v2155
      %2240 = vmax.xlane.f32.xlu0 %v2239
      %v2241 = vpop.xlane.xlu0 %2240
      %v2242 = vmax.f32 %v2068, %v2157
      %2243 = vmax.xlane.f32.xlu0 %v2242
      %v2244 = vpop.xlane.xlu0 %2243
      %v2245 = vmax.f32 %v2071, %v2160
      %2246 = vmax.xlane.f32.xlu0 %v2245
      %v2247 = vpop.xlane.xlu0 %2246
      %v2248 = vmax.f32 %v2073, %v2162
      %2249 = vmax.xlane.f32.xlu0 %v2248
      %v2250 = vpop.xlane.xlu0 %2249
      %v2251 = vmax.f32 %v2076, %v2165
      %2252 = vmax.xlane.f32.xlu0 %v2251
      %v2253 = vpop.xlane.xlu0 %2252
      %v2254 = vmax.f32 %v2078, %v2167
      %2255 = vmax.xlane.f32.xlu0 %v2254
      %v2256 = vpop.xlane.xlu0 %2255
      %v2257 = vmax.f32 %v2081, %v2170
      %2258 = vmax.xlane.f32.xlu0 %v2257
      %v2259 = vpop.xlane.xlu0 %2258
      %v2260 = vmax.f32 %v2083, %v2172
      %2261 = vmax.xlane.f32.xlu0 %v2260
      %v2262 = vpop.xlane.xlu0 %2261
      %v2263 = vmax.f32 %v2086, %v2175
      %2264 = vmax.xlane.f32.xlu0 %v2263
      %v2265 = vpop.xlane.xlu0 %2264
      %v2266 = vmax.f32 %v2088, %v2177
      %2267 = vmax.xlane.f32.xlu0 %v2266
      %v2268 = vpop.xlane.xlu0 %2267
      %v2269 = vmax.f32 %v2091, %v2180
      %2270 = vmax.xlane.f32.xlu0 %v2269
      %v2271 = vpop.xlane.xlu0 %2270
      %v2272 = vmax.f32 %v2093, %v2182
      %2273 = vmax.xlane.f32.xlu0 %v2272
      %v2274 = vpop.xlane.xlu0 %2273
      %v2275 = vmax.f32 %v2096, %v2185
      %2276 = vmax.xlane.f32.xlu0 %v2275
      %v2277 = vpop.xlane.xlu0 %2276
      %v2278 = vmax.f32 %v2098, %v2187
      %2279 = vmax.xlane.f32.xlu0 %v2278
      %v2280 = vpop.xlane.xlu0 %2279
      %v2281 = vmax.f32 %v2101, %v2190
      %2282 = vmax.xlane.f32.xlu0 %v2281
      %v2283 = vpop.xlane.xlu0 %2282
      %v2284 = vmax.f32 %v2103, %v2192
      %2285 = vmax.xlane.f32.xlu0 %v2284
      %v2286 = vpop.xlane.xlu0 %2285
      %v2287 = vmax.f32 %v2106, %v2195
      %2288 = vmax.xlane.f32.xlu0 %v2287
      %v2289 = vpop.xlane.xlu0 %2288
      %v2290 = vmax.f32 %v2108, %v2197
      %2291 = vmax.xlane.f32.xlu0 %v2290
      %v2292 = vpop.xlane.xlu0 %2291
      %v2293 = vmax.f32 %v2111, %v2200
      %2294 = vmax.xlane.f32.xlu0 %v2293
      %v2295 = vpop.xlane.xlu0 %2294
      %v2296 = vmax.f32 %v2113, %v2202
      %2297 = vmax.xlane.f32.xlu0 %v2296
      %v2298 = vpop.xlane.xlu0 %2297
      %v2299 = vmax.f32 %v2116, %v2205
      %2300 = vmax.xlane.f32.xlu0 %v2299
      %v2301 = vpop.xlane.xlu0 %2300
      %v2302 = vmax.f32 %v2118, %v2207
      %2303 = vmax.xlane.f32.xlu0 %v2302
      %v2304 = vpop.xlane.xlu0 %2303
      %v2305 = vsub.f32 %v2041, %v2211
      %v2306 = vsub.f32 %v2130, %v2211
      %v2307 = vsub.f32 %v2043, %v2214
      %v2308 = vsub.f32 %v2132, %v2214
      %v2309 = vsub.f32 %v2046, %v2217
      %v2310 = vsub.f32 %v2135, %v2217
      %v2311 = vsub.f32 %v2048, %v2220
      %v2312 = vsub.f32 %v2137, %v2220
      %v2313 = vsub.f32 %v2051, %v2223
      %v2314 = vsub.f32 %v2140, %v2223
      %v2315 = vsub.f32 %v2053, %v2226
      %v2316 = vsub.f32 %v2142, %v2226
      %v2317 = vsub.f32 %v2056, %v2229
      %v2318 = vsub.f32 %v2145, %v2229
      %v2319 = vsub.f32 %v2058, %v2232
      %v2320 = vsub.f32 %v2147, %v2232
      %v2321 = vsub.f32 %v2061, %v2235
      %v2322 = vsub.f32 %v2150, %v2235
      %v2323 = vsub.f32 %v2063, %v2238
      %v2324 = vsub.f32 %v2152, %v2238
      %v2325 = vsub.f32 %v2066, %v2241
      %v2326 = vsub.f32 %v2155, %v2241
      %v2327 = vsub.f32 %v2068, %v2244
      %v2328 = vsub.f32 %v2157, %v2244
      %v2329 = vsub.f32 %v2071, %v2247
      %v2330 = vsub.f32 %v2160, %v2247
      %v2331 = vsub.f32 %v2073, %v2250
      %v2332 = vsub.f32 %v2162, %v2250
      %v2333 = vsub.f32 %v2076, %v2253
      %v2334 = vsub.f32 %v2165, %v2253
      %v2335 = vsub.f32 %v2078, %v2256
      %v2336 = vsub.f32 %v2167, %v2256
      %v2337 = vsub.f32 %v2081, %v2259
      %v2338 = vsub.f32 %v2170, %v2259
      %v2339 = vsub.f32 %v2083, %v2262
      %v2340 = vsub.f32 %v2172, %v2262
      %v2341 = vsub.f32 %v2086, %v2265
      %v2342 = vsub.f32 %v2175, %v2265
      %v2343 = vsub.f32 %v2088, %v2268
      %v2344 = vsub.f32 %v2177, %v2268
      %v2345 = vsub.f32 %v2091, %v2271
      %v2346 = vsub.f32 %v2180, %v2271
      %v2347 = vsub.f32 %v2093, %v2274
      %v2348 = vsub.f32 %v2182, %v2274
      %v2349 = vsub.f32 %v2096, %v2277
      %v2350 = vsub.f32 %v2185, %v2277
      %v2351 = vsub.f32 %v2098, %v2280
      %v2352 = vsub.f32 %v2187, %v2280
      %v2353 = vsub.f32 %v2101, %v2283
      %v2354 = vsub.f32 %v2190, %v2283
      %v2355 = vsub.f32 %v2103, %v2286
      %v2356 = vsub.f32 %v2192, %v2286
      %v2357 = vsub.f32 %v2106, %v2289
      %v2358 = vsub.f32 %v2195, %v2289
      %v2359 = vsub.f32 %v2108, %v2292
      %v2360 = vsub.f32 %v2197, %v2292
      %v2361 = vsub.f32 %v2111, %v2295
      %v2362 = vsub.f32 %v2200, %v2295
      %v2363 = vsub.f32 %v2113, %v2298
      %v2364 = vsub.f32 %v2202, %v2298
      %v2365 = vsub.f32 %v2116, %v2301
      %v2366 = vsub.f32 %v2205, %v2301
      %v2367 = vsub.f32 %v2118, %v2304
      %v2368 = vsub.f32 %v2207, %v2304
      %v2369 = vmul.f32 %v2305, 1.442695
      %v2370 = vpow.pop %v2369
      %v2371 = vmul.f32 %v2306, 1.442695
      %v2372 = vpow.pop %v2371
      %v2373 = vmul.f32 %v2307, 1.442695
      %v2374 = vpow.pop %v2373
      %v2375 = vmul.f32 %v2308, 1.442695
      %v2376 = vpow.pop %v2375
      %v2377 = vmul.f32 %v2309, 1.442695
      %v2378 = vpow.pop %v2377
      %v2379 = vmul.f32 %v2310, 1.442695
      %v2380 = vpow.pop %v2379
      %v2381 = vmul.f32 %v2311, 1.442695
      %v2382 = vpow.pop %v2381
      %v2383 = vmul.f32 %v2312, 1.442695
      %v2384 = vpow.pop %v2383
      %v2385 = vmul.f32 %v2313, 1.442695
      %v2386 = vpow.pop %v2385
      %v2387 = vmul.f32 %v2314, 1.442695
      %v2388 = vpow.pop %v2387
      %v2389 = vmul.f32 %v2315, 1.442695
      %v2390 = vpow.pop %v2389
      %v2391 = vmul.f32 %v2316, 1.442695
      %v2392 = vpow.pop %v2391
      %v2393 = vmul.f32 %v2317, 1.442695
      %v2394 = vpow.pop %v2393
      %v2395 = vmul.f32 %v2318, 1.442695
      %v2396 = vpow.pop %v2395
      %v2397 = vmul.f32 %v2319, 1.442695
      %v2398 = vpow.pop %v2397
      %v2399 = vmul.f32 %v2320, 1.442695
      %v2400 = vpow.pop %v2399
      %v2401 = vmul.f32 %v2321, 1.442695
      %v2402 = vpow.pop %v2401
      %v2403 = vmul.f32 %v2322, 1.442695
      %v2404 = vpow.pop %v2403
      %v2405 = vmul.f32 %v2323, 1.442695
      %v2406 = vpow.pop %v2405
      %v2407 = vmul.f32 %v2324, 1.442695
      %v2408 = vpow.pop %v2407
      %v2409 = vmul.f32 %v2325, 1.442695
      %v2410 = vpow.pop %v2409
      %v2411 = vmul.f32 %v2326, 1.442695
      %v2412 = vpow.pop %v2411
      %v2413 = vmul.f32 %v2327, 1.442695
      %v2414 = vpow.pop %v2413
      %v2415 = vmul.f32 %v2328, 1.442695
      %v2416 = vpow.pop %v2415
      %v2417 = vmul.f32 %v2329, 1.442695
      %v2418 = vpow.pop %v2417
      %v2419 = vmul.f32 %v2330, 1.442695
      %v2420 = vpow.pop %v2419
      %v2421 = vmul.f32 %v2331, 1.442695
      %v2422 = vpow.pop %v2421
      %v2423 = vmul.f32 %v2332, 1.442695
      %v2424 = vpow.pop %v2423
      %v2425 = vmul.f32 %v2333, 1.442695
      %v2426 = vpow.pop %v2425
      %v2427 = vmul.f32 %v2334, 1.442695
      %v2428 = vpow.pop %v2427
      %v2429 = vmul.f32 %v2335, 1.442695
      %v2430 = vpow.pop %v2429
      %v2431 = vmul.f32 %v2336, 1.442695
      %v2432 = vpow.pop %v2431
      %v2433 = vmul.f32 %v2337, 1.442695
      %v2434 = vpow.pop %v2433
      %v2435 = vmul.f32 %v2338, 1.442695
      %v2436 = vpow.pop %v2435
      %v2437 = vmul.f32 %v2339, 1.442695
      %v2438 = vpow.pop %v2437
      %v2439 = vmul.f32 %v2340, 1.442695
      %v2440 = vpow.pop %v2439
      %v2441 = vmul.f32 %v2341, 1.442695
      %v2442 = vpow.pop %v2441
      %v2443 = vmul.f32 %v2342, 1.442695
      %v2444 = vpow.pop %v2443
      %v2445 = vmul.f32 %v2343, 1.442695
      %v2446 = vpow.pop %v2445
      %v2447 = vmul.f32 %v2344, 1.442695
      %v2448 = vpow.pop %v2447
      %v2449 = vmul.f32 %v2345, 1.442695
      %v2450 = vpow.pop %v2449
      %v2451 = vmul.f32 %v2346, 1.442695
      %v2452 = vpow.pop %v2451
      %v2453 = vmul.f32 %v2347, 1.442695
      %v2454 = vpow.pop %v2453
      %v2455 = vmul.f32 %v2348, 1.442695
      %v2456 = vpow.pop %v2455
      %v2457 = vmul.f32 %v2349, 1.442695
      %v2458 = vpow.pop %v2457
      %v2459 = vmul.f32 %v2350, 1.442695
      %v2460 = vpow.pop %v2459
      %v2461 = vmul.f32 %v2351, 1.442695
      %v2462 = vpow.pop %v2461
      %v2463 = vmul.f32 %v2352, 1.442695
      %v2464 = vpow.pop %v2463
      %v2465 = vmul.f32 %v2353, 1.442695
      %v2466 = vpow.pop %v2465
      %v2467 = vmul.f32 %v2354, 1.442695
      %v2468 = vpow.pop %v2467
      %v2469 = vmul.f32 %v2355, 1.442695
      %v2470 = vpow.pop %v2469
      %v2471 = vmul.f32 %v2356, 1.442695
      %v2472 = vpow.pop %v2471
      %v2473 = vmul.f32 %v2357, 1.442695
      %v2474 = vpow.pop %v2473
      %v2475 = vmul.f32 %v2358, 1.442695
      %v2476 = vpow.pop %v2475
      %v2477 = vmul.f32 %v2359, 1.442695
      %v2478 = vpow.pop %v2477
      %v2479 = vmul.f32 %v2360, 1.442695
      %v2480 = vpow.pop %v2479
      %v2481 = vmul.f32 %v2361, 1.442695
      %v2482 = vpow.pop %v2481
      %v2483 = vmul.f32 %v2362, 1.442695
      %v2484 = vpow.pop %v2483
      %v2485 = vmul.f32 %v2363, 1.442695
      %v2486 = vpow.pop %v2485
      %v2487 = vmul.f32 %v2364, 1.442695
      %v2488 = vpow.pop %v2487
      %v2489 = vmul.f32 %v2365, 1.442695
      %v2490 = vpow.pop %v2489
      %v2491 = vmul.f32 %v2366, 1.442695
      %v2492 = vpow.pop %v2491
      %v2493 = vmul.f32 %v2367, 1.442695
      %v2494 = vpow.pop %v2493
      %v2495 = vmul.f32 %v2368, 1.442695
      %v2496 = vpow.pop %v2495
      %v2497 = vadd.f32 %v2370, %v2372
      %2498 = vadd.xlane.f32.xlu0 %v2497
      %v2499 = vpop.xlane.xlu0 %2498
      %v2500 = vadd.f32 %v2374, %v2376
      %2501 = vadd.xlane.f32.xlu0 %v2500
      %v2502 = vpop.xlane.xlu0 %2501
      %v2503 = vadd.f32 %v2378, %v2380
      %2504 = vadd.xlane.f32.xlu0 %v2503
      %v2505 = vpop.xlane.xlu0 %2504
      %v2506 = vadd.f32 %v2382, %v2384
      %2507 = vadd.xlane.f32.xlu0 %v2506
      %v2508 = vpop.xlane.xlu0 %2507
      %v2509 = vadd.f32 %v2386, %v2388
      %2510 = vadd.xlane.f32.xlu0 %v2509
      %v2511 = vpop.xlane.xlu0 %2510
      %v2512 = vadd.f32 %v2390, %v2392
      %2513 = vadd.xlane.f32.xlu0 %v2512
      %v2514 = vpop.xlane.xlu0 %2513
      %v2515 = vadd.f32 %v2394, %v2396
      %2516 = vadd.xlane.f32.xlu0 %v2515
      %v2517 = vpop.xlane.xlu0 %2516
      %v2518 = vadd.f32 %v2398, %v2400
      %2519 = vadd.xlane.f32.xlu0 %v2518
      %v2520 = vpop.xlane.xlu0 %2519
      %v2521 = vadd.f32 %v2402, %v2404
      %2522 = vadd.xlane.f32.xlu0 %v2521
      %v2523 = vpop.xlane.xlu0 %2522
      %v2524 = vadd.f32 %v2406, %v2408
      %2525 = vadd.xlane.f32.xlu0 %v2524
      %v2526 = vpop.xlane.xlu0 %2525
      %v2527 = vadd.f32 %v2410, %v2412
      %2528 = vadd.xlane.f32.xlu0 %v2527
      %v2529 = vpop.xlane.xlu0 %2528
      %v2530 = vadd.f32 %v2414, %v2416
      %2531 = vadd.xlane.f32.xlu0 %v2530
      %v2532 = vpop.xlane.xlu0 %2531
      %v2533 = vadd.f32 %v2418, %v2420
      %2534 = vadd.xlane.f32.xlu0 %v2533
      %v2535 = vpop.xlane.xlu0 %2534
      %v2536 = vadd.f32 %v2422, %v2424
      %2537 = vadd.xlane.f32.xlu0 %v2536
      %v2538 = vpop.xlane.xlu0 %2537
      %v2539 = vadd.f32 %v2426, %v2428
      %2540 = vadd.xlane.f32.xlu0 %v2539
      %v2541 = vpop.xlane.xlu0 %2540
      %v2542 = vadd.f32 %v2430, %v2432
      %2543 = vadd.xlane.f32.xlu0 %v2542
      %v2544 = vpop.xlane.xlu0 %2543
      %v2545 = vadd.f32 %v2434, %v2436
      %2546 = vadd.xlane.f32.xlu0 %v2545
      %v2547 = vpop.xlane.xlu0 %2546
      %v2548 = vadd.f32 %v2438, %v2440
      %2549 = vadd.xlane.f32.xlu0 %v2548
      %v2550 = vpop.xlane.xlu0 %2549
      %v2551 = vadd.f32 %v2442, %v2444
      %2552 = vadd.xlane.f32.xlu0 %v2551
      %v2553 = vpop.xlane.xlu0 %2552
      %v2554 = vadd.f32 %v2446, %v2448
      %2555 = vadd.xlane.f32.xlu0 %v2554
      %v2556 = vpop.xlane.xlu0 %2555
      %v2557 = vadd.f32 %v2450, %v2452
      %2558 = vadd.xlane.f32.xlu0 %v2557
      %v2559 = vpop.xlane.xlu0 %2558
      %v2560 = vadd.f32 %v2454, %v2456
      %2561 = vadd.xlane.f32.xlu0 %v2560
      %v2562 = vpop.xlane.xlu0 %2561
      %v2563 = vadd.f32 %v2458, %v2460
      %2564 = vadd.xlane.f32.xlu0 %v2563
      %v2565 = vpop.xlane.xlu0 %2564
      %v2566 = vadd.f32 %v2462, %v2464
      %2567 = vadd.xlane.f32.xlu0 %v2566
      %v2568 = vpop.xlane.xlu0 %2567
      %v2569 = vadd.f32 %v2466, %v2468
      %2570 = vadd.xlane.f32.xlu0 %v2569
      %v2571 = vpop.xlane.xlu0 %2570
      %v2572 = vadd.f32 %v2470, %v2472
      %2573 = vadd.xlane.f32.xlu0 %v2572
      %v2574 = vpop.xlane.xlu0 %2573
      %v2575 = vadd.f32 %v2474, %v2476
      %2576 = vadd.xlane.f32.xlu0 %v2575
      %v2577 = vpop.xlane.xlu0 %2576
      %v2578 = vadd.f32 %v2478, %v2480
      %2579 = vadd.xlane.f32.xlu0 %v2578
      %v2580 = vpop.xlane.xlu0 %2579
      %v2581 = vadd.f32 %v2482, %v2484
      %2582 = vadd.xlane.f32.xlu0 %v2581
      %v2583 = vpop.xlane.xlu0 %2582
      %v2584 = vadd.f32 %v2486, %v2488
      %2585 = vadd.xlane.f32.xlu0 %v2584
      %v2586 = vpop.xlane.xlu0 %2585
      %v2587 = vadd.f32 %v2490, %v2492
      %2588 = vadd.xlane.f32.xlu0 %v2587
      %v2589 = vpop.xlane.xlu0 %2588
      %v2590 = vadd.f32 %v2494, %v2496
      %2591 = vadd.xlane.f32.xlu0 %v2590
      %v2592 = vpop.xlane.xlu0 %2591
      %v2593 = vrcp.pop %v2499
      %v2594 = vrcp.pop %v2502
      %v2595 = vrcp.pop %v2505
      %v2596 = vrcp.pop %v2508
      %v2597 = vrcp.pop %v2511
      %v2598 = vrcp.pop %v2514
      %v2599 = vrcp.pop %v2517
      %v2600 = vrcp.pop %v2520
      %v2601 = vrcp.pop %v2523
      %v2602 = vrcp.pop %v2526
      %v2603 = vrcp.pop %v2529
      %v2604 = vrcp.pop %v2532
      %v2605 = vrcp.pop %v2535
      %v2606 = vrcp.pop %v2538
      %v2607 = vrcp.pop %v2541
      %v2608 = vrcp.pop %v2544
      %v2609 = vrcp.pop %v2547
      %v2610 = vrcp.pop %v2550
      %v2611 = vrcp.pop %v2553
      %v2612 = vrcp.pop %v2556
      %v2613 = vrcp.pop %v2559
      %v2614 = vrcp.pop %v2562
      %v2615 = vrcp.pop %v2565
      %v2616 = vrcp.pop %v2568
      %v2617 = vrcp.pop %v2571
      %v2618 = vrcp.pop %v2574
      %v2619 = vrcp.pop %v2577
      %v2620 = vrcp.pop %v2580
      %v2621 = vrcp.pop %v2583
      %v2622 = vrcp.pop %v2586
      %v2623 = vrcp.pop %v2589
      %v2624 = vrcp.pop %v2592
      %v2625 = vmul.f32 %v2370, %v2593
      %v2626 = vmul.f32 %v2372, %v2593
      %v2627 = vmul.f32 %v2374, %v2594
      %v2628 = vmul.f32 %v2376, %v2594
      %v2629 = vmul.f32 %v2378, %v2595
      %v2630 = vmul.f32 %v2380, %v2595
      %v2631 = vmul.f32 %v2382, %v2596
      %v2632 = vmul.f32 %v2384, %v2596
      %v2633 = vmul.f32 %v2386, %v2597
      %v2634 = vmul.f32 %v2388, %v2597
      %v2635 = vmul.f32 %v2390, %v2598
      %v2636 = vmul.f32 %v2392, %v2598
      %v2637 = vmul.f32 %v2394, %v2599
      %v2638 = vmul.f32 %v2396, %v2599
      %v2639 = vmul.f32 %v2398, %v2600
      %v2640 = vmul.f32 %v2400, %v2600
      %v2641 = vmul.f32 %v2402, %v2601
      %v2642 = vmul.f32 %v2404, %v2601
      %v2643 = vmul.f32 %v2406, %v2602
      %v2644 = vmul.f32 %v2408, %v2602
      %v2645 = vmul.f32 %v2410, %v2603
      %v2646 = vmul.f32 %v2412, %v2603
      %v2647 = vmul.f32 %v2414, %v2604
      %v2648 = vmul.f32 %v2416, %v2604
      %v2649 = vmul.f32 %v2418, %v2605
      %v2650 = vmul.f32 %v2420, %v2605
      %v2651 = vmul.f32 %v2422, %v2606
      %v2652 = vmul.f32 %v2424, %v2606
      %v2653 = vmul.f32 %v2426, %v2607
      %v2654 = vmul.f32 %v2428, %v2607
      %v2655 = vmul.f32 %v2430, %v2608
      %v2656 = vmul.f32 %v2432, %v2608
      %v2657 = vmul.f32 %v2434, %v2609
      %v2658 = vmul.f32 %v2436, %v2609
      %v2659 = vmul.f32 %v2438, %v2610
      %v2660 = vmul.f32 %v2440, %v2610
      %v2661 = vmul.f32 %v2442, %v2611
      %v2662 = vmul.f32 %v2444, %v2611
      %v2663 = vmul.f32 %v2446, %v2612
      %v2664 = vmul.f32 %v2448, %v2612
      %v2665 = vmul.f32 %v2450, %v2613
      %v2666 = vmul.f32 %v2452, %v2613
      %v2667 = vmul.f32 %v2454, %v2614
      %v2668 = vmul.f32 %v2456, %v2614
      %v2669 = vmul.f32 %v2458, %v2615
      %v2670 = vmul.f32 %v2460, %v2615
      %v2671 = vmul.f32 %v2462, %v2616
      %v2672 = vmul.f32 %v2464, %v2616
      %v2673 = vmul.f32 %v2466, %v2617
      %v2674 = vmul.f32 %v2468, %v2617
      %v2675 = vmul.f32 %v2470, %v2618
      %v2676 = vmul.f32 %v2472, %v2618
      %v2677 = vmul.f32 %v2474, %v2619
      %v2678 = vmul.f32 %v2476, %v2619
      %v2679 = vmul.f32 %v2478, %v2620
      %v2680 = vmul.f32 %v2480, %v2620
      %v2681 = vmul.f32 %v2482, %v2621
      %v2682 = vmul.f32 %v2484, %v2621
      %v2683 = vmul.f32 %v2486, %v2622
      %v2684 = vmul.f32 %v2488, %v2622
      %v2685 = vmul.f32 %v2490, %v2623
      %v2686 = vmul.f32 %v2492, %v2623
      %v2687 = vmul.f32 %v2494, %v2624
      %v2688 = vmul.f32 %v2496, %v2624
      %v2689 = vpack.c.bf16 %v2627, %v2625
      %v2690 = vpack.c.bf16 %v2628, %v2626
      %v2691 = vpack.c.bf16 %v2631, %v2629
      %v2692 = vpack.c.bf16 %v2632, %v2630
      %v2693 = vpack.c.bf16 %v2635, %v2633
      %v2694 = vpack.c.bf16 %v2636, %v2634
      %v2695 = vpack.c.bf16 %v2639, %v2637
      %v2696 = vpack.c.bf16 %v2640, %v2638
      %v2697 = vpack.c.bf16 %v2643, %v2641
      %v2698 = vpack.c.bf16 %v2644, %v2642
      %v2699 = vpack.c.bf16 %v2647, %v2645
      %v2700 = vpack.c.bf16 %v2648, %v2646
      %v2701 = vpack.c.bf16 %v2651, %v2649
      %v2702 = vpack.c.bf16 %v2652, %v2650
      %v2703 = vpack.c.bf16 %v2655, %v2653
      %v2704 = vpack.c.bf16 %v2656, %v2654
      %v2705 = vpack.c.bf16 %v2659, %v2657
      %v2706 = vpack.c.bf16 %v2660, %v2658
      %v2707 = vpack.c.bf16 %v2663, %v2661
      %v2708 = vpack.c.bf16 %v2664, %v2662
      %v2709 = vpack.c.bf16 %v2667, %v2665
      %v2710 = vpack.c.bf16 %v2668, %v2666
      %v2711 = vpack.c.bf16 %v2671, %v2669
      %v2712 = vpack.c.bf16 %v2672, %v2670
      %v2713 = vpack.c.bf16 %v2675, %v2673
      %v2714 = vpack.c.bf16 %v2676, %v2674
      %v2715 = vpack.c.bf16 %v2679, %v2677
      %v2716 = vpack.c.bf16 %v2680, %v2678
      %v2717 = vpack.c.bf16 %v2683, %v2681
      %v2718 = vpack.c.bf16 %v2684, %v2682
      %v2719 = vpack.c.bf16 %v2687, %v2685
      %v2720 = vpack.c.bf16 %v2688, %v2686
      %2721 = vrot.lane.b32.xlu0 %v761, 48
      %v2722 = vpop.permute.xlu0 %2721
      %2723 = vrot.lane.b32.xlu0 %v762, 48
      %v2724 = vpop.permute.xlu0 %2723
      %2725 = vrot.lane.b32.xlu0 %v763, 48
      %v2726 = vpop.permute.xlu0 %2725
      %2727 = vrot.lane.b32.xlu0 %v764, 48
      %v2728 = vpop.permute.xlu0 %2727
      %2729 = vrot.lane.b32.xlu0 %v765, 48
      %v2730 = vpop.permute.xlu0 %2729
      %2731 = vrot.lane.b32.xlu0 %v766, 48
      %v2732 = vpop.permute.xlu0 %2731
      %2733 = vrot.lane.b32.xlu0 %v767, 48
      %v2734 = vpop.permute.xlu0 %2733
      %2735 = vrot.lane.b32.xlu0 %v768, 48
      %v2736 = vpop.permute.xlu0 %2735
      %2737 = vrot.lane.b32.xlu0 %v769, 48
      %v2738 = vpop.permute.xlu0 %2737
      %2739 = vrot.lane.b32.xlu0 %v770, 48
      %v2740 = vpop.permute.xlu0 %2739
      %2741 = vrot.lane.b32.xlu0 %v771, 48
      %v2742 = vpop.permute.xlu0 %2741
      %2743 = vrot.lane.b32.xlu0 %v772, 48
      %v2744 = vpop.permute.xlu0 %2743
      %2745 = vrot.lane.b32.xlu0 %v773, 48
      %v2746 = vpop.permute.xlu0 %2745
      %2747 = vrot.lane.b32.xlu0 %v774, 48
      %v2748 = vpop.permute.xlu0 %2747
      %2749 = vrot.lane.b32.xlu0 %v775, 48
      %v2750 = vpop.permute.xlu0 %2749
      %2751 = vrot.lane.b32.xlu0 %v776, 48
      %v2752 = vpop.permute.xlu0 %2751
      %2769 = vmatpush.bf16.msra.mxu0 %v2736
      %2770 = vmatpush.bf16.msra.mxu0 %v2734
      %2771 = vmatpush.bf16.msra.mxu0 %v2732
      %2772 = vmatpush.bf16.msra.mxu0 %v2730
      %2773 = vmatpush.bf16.msra.mxu0 %v2728
      %2774 = vmatpush.bf16.msra.mxu0 %v2726
      %2775 = vmatpush.bf16.msra.mxu0 %v2724
      %2776 = vmatpush.bf16.msra.mxu0 %v2722
      %2777 = vmatmul.bf16.gmra.mxu0 %v2689
      %v2778 = vpop.f32.mrf.mxu0
      %v2779 = vadd.f32 0.0, %v2778
      %v2780 = vpop.f32.mrf.mxu0
      %v2781 = vadd.f32 0.0, %v2780
      %2782 = vmatmul.bf16.gmra.mxu0 %v2691
      %v2783 = vpop.f32.mrf.mxu0
      %v2784 = vadd.f32 0.0, %v2783
      %v2785 = vpop.f32.mrf.mxu0
      %v2786 = vadd.f32 0.0, %v2785
      %2787 = vmatmul.bf16.gmra.mxu0 %v2693
      %v2788 = vpop.f32.mrf.mxu0
      %v2789 = vadd.f32 0.0, %v2788
      %v2790 = vpop.f32.mrf.mxu0
      %v2791 = vadd.f32 0.0, %v2790
      %2792 = vmatmul.bf16.gmra.mxu0 %v2695
      %v2793 = vpop.f32.mrf.mxu0
      %v2794 = vadd.f32 0.0, %v2793
      %v2795 = vpop.f32.mrf.mxu0
      %v2796 = vadd.f32 0.0, %v2795
      %2797 = vmatmul.bf16.gmra.mxu0 %v2697
      %v2798 = vpop.f32.mrf.mxu0
      %v2799 = vadd.f32 0.0, %v2798
      %v2800 = vpop.f32.mrf.mxu0
      %v2801 = vadd.f32 0.0, %v2800
      %2802 = vmatmul.bf16.gmra.mxu0 %v2699
      %v2803 = vpop.f32.mrf.mxu0
      %v2804 = vadd.f32 0.0, %v2803
      %v2805 = vpop.f32.mrf.mxu0
      %v2806 = vadd.f32 0.0, %v2805
      %2807 = vmatmul.bf16.gmra.mxu0 %v2701
      %v2808 = vpop.f32.mrf.mxu0
      %v2809 = vadd.f32 0.0, %v2808
      %v2810 = vpop.f32.mrf.mxu0
      %v2811 = vadd.f32 0.0, %v2810
      %2812 = vmatmul.bf16.gmra.mxu0 %v2703
      %v2813 = vpop.f32.mrf.mxu0
      %v2814 = vadd.f32 0.0, %v2813
      %v2815 = vpop.f32.mrf.mxu0
      %v2816 = vadd.f32 0.0, %v2815
      %2817 = vmatmul.bf16.gmra.mxu0 %v2705
      %v2818 = vpop.f32.mrf.mxu0
      %v2819 = vadd.f32 0.0, %v2818
      %v2820 = vpop.f32.mrf.mxu0
      %v2821 = vadd.f32 0.0, %v2820
      %2822 = vmatmul.bf16.gmra.mxu0 %v2707
      %v2823 = vpop.f32.mrf.mxu0
      %v2824 = vadd.f32 0.0, %v2823
      %v2825 = vpop.f32.mrf.mxu0
      %v2826 = vadd.f32 0.0, %v2825
      %2827 = vmatmul.bf16.gmra.mxu0 %v2709
      %v2828 = vpop.f32.mrf.mxu0
      %v2829 = vadd.f32 0.0, %v2828
      %v2830 = vpop.f32.mrf.mxu0
      %v2831 = vadd.f32 0.0, %v2830
      %2832 = vmatmul.bf16.gmra.mxu0 %v2711
      %v2833 = vpop.f32.mrf.mxu0
      %v2834 = vadd.f32 0.0, %v2833
      %v2835 = vpop.f32.mrf.mxu0
      %v2836 = vadd.f32 0.0, %v2835
      %2837 = vmatmul.bf16.gmra.mxu0 %v2713
      %v2838 = vpop.f32.mrf.mxu0
      %v2839 = vadd.f32 0.0, %v2838
      %v2840 = vpop.f32.mrf.mxu0
      %v2841 = vadd.f32 0.0, %v2840
      %2842 = vmatmul.bf16.gmra.mxu0 %v2715
      %v2843 = vpop.f32.mrf.mxu0
      %v2844 = vadd.f32 0.0, %v2843
      %v2845 = vpop.f32.mrf.mxu0
      %v2846 = vadd.f32 0.0, %v2845
      %2847 = vmatmul.bf16.gmra.mxu0 %v2717
      %v2848 = vpop.f32.mrf.mxu0
      %v2849 = vadd.f32 0.0, %v2848
      %v2850 = vpop.f32.mrf.mxu0
      %v2851 = vadd.f32 0.0, %v2850
      %2852 = vmatmul.bf16.gmra.mxu0 %v2719
      %v2853 = vpop.f32.mrf.mxu0
      %v2854 = vadd.f32 0.0, %v2853
      %v2855 = vpop.f32.mrf.mxu0
      %v2856 = vadd.f32 0.0, %v2855
      %2857 = vdwg.mxu0
      %2858 = vmatpush.bf16.msra.mxu0 %v2752
      %2859 = vmatpush.bf16.msra.mxu0 %v2750
      %2860 = vmatpush.bf16.msra.mxu0 %v2748
      %2861 = vmatpush.bf16.msra.mxu0 %v2746
      %2862 = vmatpush.bf16.msra.mxu0 %v2744
      %2863 = vmatpush.bf16.msra.mxu0 %v2742
      %2864 = vmatpush.bf16.msra.mxu0 %v2740
      %2865 = vmatpush.bf16.msra.mxu0 %v2738
      %2866 = vmatmul.bf16.gmra.mxu0 %v2690
      %v2867 = vpop.f32.mrf.mxu0
      %v2868 = vadd.f32 %v2779, %v2867
      %v2869 = vpop.f32.mrf.mxu0
      %v2870 = vadd.f32 %v2781, %v2869
      %2871 = vmatmul.bf16.gmra.mxu0 %v2692
      %v2872 = vpop.f32.mrf.mxu0
      %v2873 = vadd.f32 %v2784, %v2872
      %v2874 = vpop.f32.mrf.mxu0
      %v2875 = vadd.f32 %v2786, %v2874
      %2876 = vmatmul.bf16.gmra.mxu0 %v2694
      %v2877 = vpop.f32.mrf.mxu0
      %v2878 = vadd.f32 %v2789, %v2877
      %v2879 = vpop.f32.mrf.mxu0
      %v2880 = vadd.f32 %v2791, %v2879
      %2881 = vmatmul.bf16.gmra.mxu0 %v2696
      %v2882 = vpop.f32.mrf.mxu0
      %v2883 = vadd.f32 %v2794, %v2882
      %v2884 = vpop.f32.mrf.mxu0
      %v2885 = vadd.f32 %v2796, %v2884
      %2886 = vmatmul.bf16.gmra.mxu0 %v2698
      %v2887 = vpop.f32.mrf.mxu0
      %v2888 = vadd.f32 %v2799, %v2887
      %v2889 = vpop.f32.mrf.mxu0
      %v2890 = vadd.f32 %v2801, %v2889
      %2891 = vmatmul.bf16.gmra.mxu0 %v2700
      %v2892 = vpop.f32.mrf.mxu0
      %v2893 = vadd.f32 %v2804, %v2892
      %v2894 = vpop.f32.mrf.mxu0
      %v2895 = vadd.f32 %v2806, %v2894
      %2896 = vmatmul.bf16.gmra.mxu0 %v2702
      %v2897 = vpop.f32.mrf.mxu0
      %v2898 = vadd.f32 %v2809, %v2897
      %v2899 = vpop.f32.mrf.mxu0
      %v2900 = vadd.f32 %v2811, %v2899
      %2901 = vmatmul.bf16.gmra.mxu0 %v2704
      %v2902 = vpop.f32.mrf.mxu0
      %v2903 = vadd.f32 %v2814, %v2902
      %v2904 = vpop.f32.mrf.mxu0
      %v2905 = vadd.f32 %v2816, %v2904
      %2906 = vmatmul.bf16.gmra.mxu0 %v2706
      %v2907 = vpop.f32.mrf.mxu0
      %v2908 = vadd.f32 %v2819, %v2907
      %v2909 = vpop.f32.mrf.mxu0
      %v2910 = vadd.f32 %v2821, %v2909
      %2911 = vmatmul.bf16.gmra.mxu0 %v2708
      %v2912 = vpop.f32.mrf.mxu0
      %v2913 = vadd.f32 %v2824, %v2912
      %v2914 = vpop.f32.mrf.mxu0
      %v2915 = vadd.f32 %v2826, %v2914
      %2916 = vmatmul.bf16.gmra.mxu0 %v2710
      %v2917 = vpop.f32.mrf.mxu0
      %v2918 = vadd.f32 %v2829, %v2917
      %v2919 = vpop.f32.mrf.mxu0
      %v2920 = vadd.f32 %v2831, %v2919
      %2921 = vmatmul.bf16.gmra.mxu0 %v2712
      %v2922 = vpop.f32.mrf.mxu0
      %v2923 = vadd.f32 %v2834, %v2922
      %v2924 = vpop.f32.mrf.mxu0
      %v2925 = vadd.f32 %v2836, %v2924
      %2926 = vmatmul.bf16.gmra.mxu0 %v2714
      %v2927 = vpop.f32.mrf.mxu0
      %v2928 = vadd.f32 %v2839, %v2927
      %v2929 = vpop.f32.mrf.mxu0
      %v2930 = vadd.f32 %v2841, %v2929
      %2931 = vmatmul.bf16.gmra.mxu0 %v2716
      %v2932 = vpop.f32.mrf.mxu0
      %v2933 = vadd.f32 %v2844, %v2932
      %v2934 = vpop.f32.mrf.mxu0
      %v2935 = vadd.f32 %v2846, %v2934
      %2936 = vmatmul.bf16.gmra.mxu0 %v2718
      %v2937 = vpop.f32.mrf.mxu0
      %v2938 = vadd.f32 %v2849, %v2937
      %v2939 = vpop.f32.mrf.mxu0
      %v2940 = vadd.f32 %v2851, %v2939
      %2941 = vmatmul.bf16.gmra.mxu0 %v2720
      %v2942 = vpop.f32.mrf.mxu0
      %v2943 = vadd.f32 %v2854, %v2942
      %v2944 = vpop.f32.mrf.mxu0
      %v2945 = vadd.f32 %v2856, %v2944
      %2946 = vdwg.mxu0
      %s2947 = scalar_lea.vmem %s5, 1024
      %v2948 = vld [vmem:[%s2947] sm:$0xff]
      %v2949 = vld [vmem:[%s2947 + $0x8] sm:$0xff]
      %v2950 = vld [vmem:[%s2947 + $0x10] sm:$0xff]
      %v2951 = vld [vmem:[%s2947 + $0x18] sm:$0xff]
      %v2952 = vld [vmem:[%s2947 + $0x20] sm:$0xff]
      %v2953 = vld [vmem:[%s2947 + $0x28] sm:$0xff]
      %v2954 = vld [vmem:[%s2947 + $0x30] sm:$0xff]
      %v2955 = vld [vmem:[%s2947 + $0x38] sm:$0xff]
      %v2956 = vld [vmem:[%s2947 + $0x40] sm:$0xff]
      %v2957 = vld [vmem:[%s2947 + $0x48] sm:$0xff]
      %v2958 = vld [vmem:[%s2947 + $0x50] sm:$0xff]
      %v2959 = vld [vmem:[%s2947 + $0x58] sm:$0xff]
      %v2960 = vld [vmem:[%s2947 + $0x60] sm:$0xff]
      %v2961 = vld [vmem:[%s2947 + $0x68] sm:$0xff]
      %v2962 = vld [vmem:[%s2947 + $0x70] sm:$0xff]
      %v2963 = vld [vmem:[%s2947 + $0x78] sm:$0xff]
      %v2964 = vld [vmem:[%s2947 + $0x80] sm:$0xff]
      %v2965 = vld [vmem:[%s2947 + $0x88] sm:$0xff]
      %v2966 = vld [vmem:[%s2947 + $0x90] sm:$0xff]
      %v2967 = vld [vmem:[%s2947 + $0x98] sm:$0xff]
      %v2968 = vld [vmem:[%s2947 + $0xa0] sm:$0xff]
      %v2969 = vld [vmem:[%s2947 + $0xa8] sm:$0xff]
      %v2970 = vld [vmem:[%s2947 + $0xb0] sm:$0xff]
      %v2971 = vld [vmem:[%s2947 + $0xb8] sm:$0xff]
      %v2972 = vld [vmem:[%s2947 + $0xc0] sm:$0xff]
      %v2973 = vld [vmem:[%s2947 + $0xc8] sm:$0xff]
      %v2974 = vld [vmem:[%s2947 + $0xd0] sm:$0xff]
      %v2975 = vld [vmem:[%s2947 + $0xd8] sm:$0xff]
      %v2976 = vld [vmem:[%s2947 + $0xe0] sm:$0xff]
      %v2977 = vld [vmem:[%s2947 + $0xe8] sm:$0xff]
      %v2978 = vld [vmem:[%s2947 + $0xf0] sm:$0xff]
      %v2979 = vld [vmem:[%s2947 + $0xf8] sm:$0xff]
      %v2980 = vld [vmem:[%s2947 + $0x100] sm:$0xff]
      %v2981 = vld [vmem:[%s2947 + $0x108] sm:$0xff]
      %v2982 = vld [vmem:[%s2947 + $0x110] sm:$0xff]
      %v2983 = vld [vmem:[%s2947 + $0x118] sm:$0xff]
      %v2984 = vld [vmem:[%s2947 + $0x120] sm:$0xff]
      %v2985 = vld [vmem:[%s2947 + $0x128] sm:$0xff]
      %v2986 = vld [vmem:[%s2947 + $0x130] sm:$0xff]
      %v2987 = vld [vmem:[%s2947 + $0x138] sm:$0xff]
      %v2988 = vld [vmem:[%s2947 + $0x140] sm:$0xff]
      %v2989 = vld [vmem:[%s2947 + $0x148] sm:$0xff]
      %v2990 = vld [vmem:[%s2947 + $0x150] sm:$0xff]
      %v2991 = vld [vmem:[%s2947 + $0x158] sm:$0xff]
      %v2992 = vld [vmem:[%s2947 + $0x160] sm:$0xff]
      %v2993 = vld [vmem:[%s2947 + $0x168] sm:$0xff]
      %v2994 = vld [vmem:[%s2947 + $0x170] sm:$0xff]
      %v2995 = vld [vmem:[%s2947 + $0x178] sm:$0xff]
      %v2996 = vld [vmem:[%s2947 + $0x180] sm:$0xff]
      %v2997 = vld [vmem:[%s2947 + $0x188] sm:$0xff]
      %v2998 = vld [vmem:[%s2947 + $0x190] sm:$0xff]
      %v2999 = vld [vmem:[%s2947 + $0x198] sm:$0xff]
      %v3000 = vld [vmem:[%s2947 + $0x1a0] sm:$0xff]
      %v3001 = vld [vmem:[%s2947 + $0x1a8] sm:$0xff]
      %v3002 = vld [vmem:[%s2947 + $0x1b0] sm:$0xff]
      %v3003 = vld [vmem:[%s2947 + $0x1b8] sm:$0xff]
      %v3004 = vld [vmem:[%s2947 + $0x1c0] sm:$0xff]
      %v3005 = vld [vmem:[%s2947 + $0x1c8] sm:$0xff]
      %v3006 = vld [vmem:[%s2947 + $0x1d0] sm:$0xff]
      %v3007 = vld [vmem:[%s2947 + $0x1d8] sm:$0xff]
      %v3008 = vld [vmem:[%s2947 + $0x1e0] sm:$0xff]
      %v3009 = vld [vmem:[%s2947 + $0x1e8] sm:$0xff]
      %v3010 = vld [vmem:[%s2947 + $0x1f0] sm:$0xff]
      %v3011 = vld [vmem:[%s2947 + $0x1f8] sm:$0xff]
      %3012 = vrot.lane.b32.xlu0 %v617, 96
      %v3013 = vpop.permute.xlu0 %3012
      %3014 = vrot.lane.b32.xlu0 %v618, 96
      %v3015 = vpop.permute.xlu0 %3014
      %3016 = vrot.lane.b32.xlu0 %v619, 96
      %v3017 = vpop.permute.xlu0 %3016
      %3018 = vrot.lane.b32.xlu0 %v620, 96
      %v3019 = vpop.permute.xlu0 %3018
      %3020 = vrot.lane.b32.xlu0 %v621, 96
      %v3021 = vpop.permute.xlu0 %3020
      %3022 = vrot.lane.b32.xlu0 %v622, 96
      %v3023 = vpop.permute.xlu0 %3022
      %3024 = vrot.lane.b32.xlu0 %v623, 96
      %v3025 = vpop.permute.xlu0 %3024
      %3026 = vrot.lane.b32.xlu0 %v624, 96
      %v3027 = vpop.permute.xlu0 %3026
      %3028 = vrot.lane.b32.xlu0 %v625, 96
      %v3029 = vpop.permute.xlu0 %3028
      %3030 = vrot.lane.b32.xlu0 %v626, 96
      %v3031 = vpop.permute.xlu0 %3030
      %3032 = vrot.lane.b32.xlu0 %v627, 96
      %v3033 = vpop.permute.xlu0 %3032
      %3034 = vrot.lane.b32.xlu0 %v628, 96
      %v3035 = vpop.permute.xlu0 %3034
      %3036 = vrot.lane.b32.xlu0 %v629, 96
      %v3037 = vpop.permute.xlu0 %3036
      %3038 = vrot.lane.b32.xlu0 %v630, 96
      %v3039 = vpop.permute.xlu0 %3038
      %3040 = vrot.lane.b32.xlu0 %v631, 96
      %v3041 = vpop.permute.xlu0 %3040
      %3042 = vrot.lane.b32.xlu0 %v632, 96
      %v3043 = vpop.permute.xlu0 %3042
      %3044 = vrot.lane.b32.xlu0 %v761, 96
      %v3045 = vpop.permute.xlu0 %3044
      %3046 = vrot.lane.b32.xlu0 %v762, 96
      %v3047 = vpop.permute.xlu0 %3046
      %3048 = vrot.lane.b32.xlu0 %v763, 96
      %v3049 = vpop.permute.xlu0 %3048
      %3050 = vrot.lane.b32.xlu0 %v764, 96
      %v3051 = vpop.permute.xlu0 %3050
      %3052 = vrot.lane.b32.xlu0 %v765, 96
      %v3053 = vpop.permute.xlu0 %3052
      %3054 = vrot.lane.b32.xlu0 %v766, 96
      %v3055 = vpop.permute.xlu0 %3054
      %3056 = vrot.lane.b32.xlu0 %v767, 96
      %v3057 = vpop.permute.xlu0 %3056
      %3058 = vrot.lane.b32.xlu0 %v768, 96
      %v3059 = vpop.permute.xlu0 %3058
      %3060 = vrot.lane.b32.xlu0 %v769, 96
      %v3061 = vpop.permute.xlu0 %3060
      %3062 = vrot.lane.b32.xlu0 %v770, 96
      %v3063 = vpop.permute.xlu0 %3062
      %3064 = vrot.lane.b32.xlu0 %v771, 96
      %v3065 = vpop.permute.xlu0 %3064
      %3066 = vrot.lane.b32.xlu0 %v772, 96
      %v3067 = vpop.permute.xlu0 %3066
      %3068 = vrot.lane.b32.xlu0 %v773, 96
      %v3069 = vpop.permute.xlu0 %3068
      %3070 = vrot.lane.b32.xlu0 %v774, 96
      %v3071 = vpop.permute.xlu0 %3070
      %3072 = vrot.lane.b32.xlu0 %v775, 96
      %v3073 = vpop.permute.xlu0 %3072
      %3074 = vrot.lane.b32.xlu0 %v776, 96
      %v3075 = vpop.permute.xlu0 %3074
      %v3077 = vsel %vm777, %v3013, 0
      %v3080 = vsel %vm777, %v3015, 0
      %v3083 = vsel %vm777, %v3017, 0
      %v3086 = vsel %vm777, %v3019, 0
      %v3089 = vsel %vm777, %v3021, 0
      %v3092 = vsel %vm777, %v3023, 0
      %v3095 = vsel %vm777, %v3025, 0
      %v3098 = vsel %vm777, %v3027, 0
      %v3101 = vsel %vm777, %v3029, 0
      %v3104 = vsel %vm777, %v3031, 0
      %v3107 = vsel %vm777, %v3033, 0
      %v3110 = vsel %vm777, %v3035, 0
      %v3113 = vsel %vm777, %v3037, 0
      %v3116 = vsel %vm777, %v3039, 0
      %v3119 = vsel %vm777, %v3041, 0
      %v3122 = vsel %vm777, %v3043, 0
      %v3125 = vsel %vm777, %v3045, 0
      %v3128 = vsel %vm777, %v3047, 0
      %v3131 = vsel %vm777, %v3049, 0
      %v3134 = vsel %vm777, %v3051, 0
      %v3137 = vsel %vm777, %v3053, 0
      %v3140 = vsel %vm777, %v3055, 0
      %v3143 = vsel %vm777, %v3057, 0
      %v3146 = vsel %vm777, %v3059, 0
      %v3149 = vsel %vm777, %v3061, 0
      %v3152 = vsel %vm777, %v3063, 0
      %v3155 = vsel %vm777, %v3065, 0
      %v3158 = vsel %vm777, %v3067, 0
      %v3161 = vsel %vm777, %v3069, 0
      %v3164 = vsel %vm777, %v3071, 0
      %v3167 = vsel %vm777, %v3073, 0
      %v3170 = vsel %vm777, %v3075, 0
      %3172 = vmatpush.bf16.xpose.msra.mxu0 %v3146
      %3173 = vmatpush.bf16.xpose.msra.mxu0 %v3143
      %3174 = vmatpush.bf16.xpose.msra.mxu0 %v3140
      %3175 = vmatpush.bf16.xpose.msra.mxu0 %v3137
      %3176 = vmatpush.bf16.xpose.msra.mxu0 %v3134
      %3177 = vmatpush.bf16.xpose.msra.mxu0 %v3131
      %3178 = vmatpush.bf16.xpose.msra.mxu0 %v3128
      %3179 = vmatpush.bf16.xpose.msra.mxu0 %v3125
      %3180 = vmatmul.bf16.gmra.mxu0 %v3077
      %v3181 = vpop.f32.mrf.mxu0
      %v3182 = vadd.f32 %v2948, %v3181
      %v3183 = vpop.f32.mrf.mxu0
      %v3184 = vadd.f32 %v2950, %v3183
      %3185 = vmatmul.bf16.gmra.mxu0 %v3080
      %v3186 = vpop.f32.mrf.mxu0
      %v3187 = vadd.f32 %v2952, %v3186
      %v3188 = vpop.f32.mrf.mxu0
      %v3189 = vadd.f32 %v2954, %v3188
      %3190 = vmatmul.bf16.gmra.mxu0 %v3083
      %v3191 = vpop.f32.mrf.mxu0
      %v3192 = vadd.f32 %v2956, %v3191
      %v3193 = vpop.f32.mrf.mxu0
      %v3194 = vadd.f32 %v2958, %v3193
      %3195 = vmatmul.bf16.gmra.mxu0 %v3086
      %v3196 = vpop.f32.mrf.mxu0
      %v3197 = vadd.f32 %v2960, %v3196
      %v3198 = vpop.f32.mrf.mxu0
      %v3199 = vadd.f32 %v2962, %v3198
      %3200 = vmatmul.bf16.gmra.mxu0 %v3089
      %v3201 = vpop.f32.mrf.mxu0
      %v3202 = vadd.f32 %v2964, %v3201
      %v3203 = vpop.f32.mrf.mxu0
      %v3204 = vadd.f32 %v2966, %v3203
      %3205 = vmatmul.bf16.gmra.mxu0 %v3092
      %v3206 = vpop.f32.mrf.mxu0
      %v3207 = vadd.f32 %v2968, %v3206
      %v3208 = vpop.f32.mrf.mxu0
      %v3209 = vadd.f32 %v2970, %v3208
      %3210 = vmatmul.bf16.gmra.mxu0 %v3095
      %v3211 = vpop.f32.mrf.mxu0
      %v3212 = vadd.f32 %v2972, %v3211
      %v3213 = vpop.f32.mrf.mxu0
      %v3214 = vadd.f32 %v2974, %v3213
      %3215 = vmatmul.bf16.gmra.mxu0 %v3098
      %v3216 = vpop.f32.mrf.mxu0
      %v3217 = vadd.f32 %v2976, %v3216
      %v3218 = vpop.f32.mrf.mxu0
      %v3219 = vadd.f32 %v2978, %v3218
      %3220 = vmatmul.bf16.gmra.mxu0 %v3101
      %v3221 = vpop.f32.mrf.mxu0
      %v3222 = vadd.f32 %v2980, %v3221
      %v3223 = vpop.f32.mrf.mxu0
      %v3224 = vadd.f32 %v2982, %v3223
      %3225 = vmatmul.bf16.gmra.mxu0 %v3104
      %v3226 = vpop.f32.mrf.mxu0
      %v3227 = vadd.f32 %v2984, %v3226
      %v3228 = vpop.f32.mrf.mxu0
      %v3229 = vadd.f32 %v2986, %v3228
      %3230 = vmatmul.bf16.gmra.mxu0 %v3107
      %v3231 = vpop.f32.mrf.mxu0
      %v3232 = vadd.f32 %v2988, %v3231
      %v3233 = vpop.f32.mrf.mxu0
      %v3234 = vadd.f32 %v2990, %v3233
      %3235 = vmatmul.bf16.gmra.mxu0 %v3110
      %v3236 = vpop.f32.mrf.mxu0
      %v3237 = vadd.f32 %v2992, %v3236
      %v3238 = vpop.f32.mrf.mxu0
      %v3239 = vadd.f32 %v2994, %v3238
      %3240 = vmatmul.bf16.gmra.mxu0 %v3113
      %v3241 = vpop.f32.mrf.mxu0
      %v3242 = vadd.f32 %v2996, %v3241
      %v3243 = vpop.f32.mrf.mxu0
      %v3244 = vadd.f32 %v2998, %v3243
      %3245 = vmatmul.bf16.gmra.mxu0 %v3116
      %v3246 = vpop.f32.mrf.mxu0
      %v3247 = vadd.f32 %v3000, %v3246
      %v3248 = vpop.f32.mrf.mxu0
      %v3249 = vadd.f32 %v3002, %v3248
      %3250 = vmatmul.bf16.gmra.mxu0 %v3119
      %v3251 = vpop.f32.mrf.mxu0
      %v3252 = vadd.f32 %v3004, %v3251
      %v3253 = vpop.f32.mrf.mxu0
      %v3254 = vadd.f32 %v3006, %v3253
      %3255 = vmatmul.bf16.gmra.mxu0 %v3122
      %v3256 = vpop.f32.mrf.mxu0
      %v3257 = vadd.f32 %v3008, %v3256
      %v3258 = vpop.f32.mrf.mxu0
      %v3259 = vadd.f32 %v3010, %v3258
      %3260 = vdwg.mxu0
      %3261 = vmatpush.bf16.xpose.msra.mxu0 %v3170
      %3262 = vmatpush.bf16.xpose.msra.mxu0 %v3167
      %3263 = vmatpush.bf16.xpose.msra.mxu0 %v3164
      %3264 = vmatpush.bf16.xpose.msra.mxu0 %v3161
      %3265 = vmatpush.bf16.xpose.msra.mxu0 %v3158
      %3266 = vmatpush.bf16.xpose.msra.mxu0 %v3155
      %3267 = vmatpush.bf16.xpose.msra.mxu0 %v3152
      %3268 = vmatpush.bf16.xpose.msra.mxu0 %v3149
      %3269 = vmatmul.bf16.gmra.mxu0 %v3077
      %v3270 = vpop.f32.mrf.mxu0
      %v3271 = vadd.f32 %v2949, %v3270
      %v3272 = vpop.f32.mrf.mxu0
      %v3273 = vadd.f32 %v2951, %v3272
      %3274 = vmatmul.bf16.gmra.mxu0 %v3080
      %v3275 = vpop.f32.mrf.mxu0
      %v3276 = vadd.f32 %v2953, %v3275
      %v3277 = vpop.f32.mrf.mxu0
      %v3278 = vadd.f32 %v2955, %v3277
      %3279 = vmatmul.bf16.gmra.mxu0 %v3083
      %v3280 = vpop.f32.mrf.mxu0
      %v3281 = vadd.f32 %v2957, %v3280
      %v3282 = vpop.f32.mrf.mxu0
      %v3283 = vadd.f32 %v2959, %v3282
      %3284 = vmatmul.bf16.gmra.mxu0 %v3086
      %v3285 = vpop.f32.mrf.mxu0
      %v3286 = vadd.f32 %v2961, %v3285
      %v3287 = vpop.f32.mrf.mxu0
      %v3288 = vadd.f32 %v2963, %v3287
      %3289 = vmatmul.bf16.gmra.mxu0 %v3089
      %v3290 = vpop.f32.mrf.mxu0
      %v3291 = vadd.f32 %v2965, %v3290
      %v3292 = vpop.f32.mrf.mxu0
      %v3293 = vadd.f32 %v2967, %v3292
      %3294 = vmatmul.bf16.gmra.mxu0 %v3092
      %v3295 = vpop.f32.mrf.mxu0
      %v3296 = vadd.f32 %v2969, %v3295
      %v3297 = vpop.f32.mrf.mxu0
      %v3298 = vadd.f32 %v2971, %v3297
      %3299 = vmatmul.bf16.gmra.mxu0 %v3095
      %v3300 = vpop.f32.mrf.mxu0
      %v3301 = vadd.f32 %v2973, %v3300
      %v3302 = vpop.f32.mrf.mxu0
      %v3303 = vadd.f32 %v2975, %v3302
      %3304 = vmatmul.bf16.gmra.mxu0 %v3098
      %v3305 = vpop.f32.mrf.mxu0
      %v3306 = vadd.f32 %v2977, %v3305
      %v3307 = vpop.f32.mrf.mxu0
      %v3308 = vadd.f32 %v2979, %v3307
      %3309 = vmatmul.bf16.gmra.mxu0 %v3101
      %v3310 = vpop.f32.mrf.mxu0
      %v3311 = vadd.f32 %v2981, %v3310
      %v3312 = vpop.f32.mrf.mxu0
      %v3313 = vadd.f32 %v2983, %v3312
      %3314 = vmatmul.bf16.gmra.mxu0 %v3104
      %v3315 = vpop.f32.mrf.mxu0
      %v3316 = vadd.f32 %v2985, %v3315
      %v3317 = vpop.f32.mrf.mxu0
      %v3318 = vadd.f32 %v2987, %v3317
      %3319 = vmatmul.bf16.gmra.mxu0 %v3107
      %v3320 = vpop.f32.mrf.mxu0
      %v3321 = vadd.f32 %v2989, %v3320
      %v3322 = vpop.f32.mrf.mxu0
      %v3323 = vadd.f32 %v2991, %v3322
      %3324 = vmatmul.bf16.gmra.mxu0 %v3110
      %v3325 = vpop.f32.mrf.mxu0
      %v3326 = vadd.f32 %v2993, %v3325
      %v3327 = vpop.f32.mrf.mxu0
      %v3328 = vadd.f32 %v2995, %v3327
      %3329 = vmatmul.bf16.gmra.mxu0 %v3113
      %v3330 = vpop.f32.mrf.mxu0
      %v3331 = vadd.f32 %v2997, %v3330
      %v3332 = vpop.f32.mrf.mxu0
      %v3333 = vadd.f32 %v2999, %v3332
      %3334 = vmatmul.bf16.gmra.mxu0 %v3116
      %v3335 = vpop.f32.mrf.mxu0
      %v3336 = vadd.f32 %v3001, %v3335
      %v3337 = vpop.f32.mrf.mxu0
      %v3338 = vadd.f32 %v3003, %v3337
      %3339 = vmatmul.bf16.gmra.mxu0 %v3119
      %v3340 = vpop.f32.mrf.mxu0
      %v3341 = vadd.f32 %v3005, %v3340
      %v3342 = vpop.f32.mrf.mxu0
      %v3343 = vadd.f32 %v3007, %v3342
      %3344 = vmatmul.bf16.gmra.mxu0 %v3122
      %v3345 = vpop.f32.mrf.mxu0
      %v3346 = vadd.f32 %v3009, %v3345
      %v3347 = vpop.f32.mrf.mxu0
      %v3348 = vadd.f32 %v3011, %v3347
      %3349 = vdwg.mxu0
      %v3350 = vmax.f32 %v3182, %v3271
      %3351 = vmax.xlane.f32.xlu0 %v3350
      %v3352 = vpop.xlane.xlu0 %3351
      %v3353 = vmax.f32 %v3184, %v3273
      %3354 = vmax.xlane.f32.xlu0 %v3353
      %v3355 = vpop.xlane.xlu0 %3354
      %v3356 = vmax.f32 %v3187, %v3276
      %3357 = vmax.xlane.f32.xlu0 %v3356
      %v3358 = vpop.xlane.xlu0 %3357
      %v3359 = vmax.f32 %v3189, %v3278
      %3360 = vmax.xlane.f32.xlu0 %v3359
      %v3361 = vpop.xlane.xlu0 %3360
      %v3362 = vmax.f32 %v3192, %v3281
      %3363 = vmax.xlane.f32.xlu0 %v3362
      %v3364 = vpop.xlane.xlu0 %3363
      %v3365 = vmax.f32 %v3194, %v3283
      %3366 = vmax.xlane.f32.xlu0 %v3365
      %v3367 = vpop.xlane.xlu0 %3366
      %v3368 = vmax.f32 %v3197, %v3286
      %3369 = vmax.xlane.f32.xlu0 %v3368
      %v3370 = vpop.xlane.xlu0 %3369
      %v3371 = vmax.f32 %v3199, %v3288
      %3372 = vmax.xlane.f32.xlu0 %v3371
      %v3373 = vpop.xlane.xlu0 %3372
      %v3374 = vmax.f32 %v3202, %v3291
      %3375 = vmax.xlane.f32.xlu0 %v3374
      %v3376 = vpop.xlane.xlu0 %3375
      %v3377 = vmax.f32 %v3204, %v3293
      %3378 = vmax.xlane.f32.xlu0 %v3377
      %v3379 = vpop.xlane.xlu0 %3378
      %v3380 = vmax.f32 %v3207, %v3296
      %3381 = vmax.xlane.f32.xlu0 %v3380
      %v3382 = vpop.xlane.xlu0 %3381
      %v3383 = vmax.f32 %v3209, %v3298
      %3384 = vmax.xlane.f32.xlu0 %v3383
      %v3385 = vpop.xlane.xlu0 %3384
      %v3386 = vmax.f32 %v3212, %v3301
      %3387 = vmax.xlane.f32.xlu0 %v3386
      %v3388 = vpop.xlane.xlu0 %3387
      %v3389 = vmax.f32 %v3214, %v3303
      %3390 = vmax.xlane.f32.xlu0 %v3389
      %v3391 = vpop.xlane.xlu0 %3390
      %v3392 = vmax.f32 %v3217, %v3306
      %3393 = vmax.xlane.f32.xlu0 %v3392
      %v3394 = vpop.xlane.xlu0 %3393
      %v3395 = vmax.f32 %v3219, %v3308
      %3396 = vmax.xlane.f32.xlu0 %v3395
      %v3397 = vpop.xlane.xlu0 %3396
      %v3398 = vmax.f32 %v3222, %v3311
      %3399 = vmax.xlane.f32.xlu0 %v3398
      %v3400 = vpop.xlane.xlu0 %3399
      %v3401 = vmax.f32 %v3224, %v3313
      %3402 = vmax.xlane.f32.xlu0 %v3401
      %v3403 = vpop.xlane.xlu0 %3402
      %v3404 = vmax.f32 %v3227, %v3316
      %3405 = vmax.xlane.f32.xlu0 %v3404
      %v3406 = vpop.xlane.xlu0 %3405
      %v3407 = vmax.f32 %v3229, %v3318
      %3408 = vmax.xlane.f32.xlu0 %v3407
      %v3409 = vpop.xlane.xlu0 %3408
      %v3410 = vmax.f32 %v3232, %v3321
      %3411 = vmax.xlane.f32.xlu0 %v3410
      %v3412 = vpop.xlane.xlu0 %3411
      %v3413 = vmax.f32 %v3234, %v3323
      %3414 = vmax.xlane.f32.xlu0 %v3413
      %v3415 = vpop.xlane.xlu0 %3414
      %v3416 = vmax.f32 %v3237, %v3326
      %3417 = vmax.xlane.f32.xlu0 %v3416
      %v3418 = vpop.xlane.xlu0 %3417
      %v3419 = vmax.f32 %v3239, %v3328
      %3420 = vmax.xlane.f32.xlu0 %v3419
      %v3421 = vpop.xlane.xlu0 %3420
      %v3422 = vmax.f32 %v3242, %v3331
      %3423 = vmax.xlane.f32.xlu0 %v3422
      %v3424 = vpop.xlane.xlu0 %3423
      %v3425 = vmax.f32 %v3244, %v3333
      %3426 = vmax.xlane.f32.xlu0 %v3425
      %v3427 = vpop.xlane.xlu0 %3426
      %v3428 = vmax.f32 %v3247, %v3336
      %3429 = vmax.xlane.f32.xlu0 %v3428
      %v3430 = vpop.xlane.xlu0 %3429
      %v3431 = vmax.f32 %v3249, %v3338
      %3432 = vmax.xlane.f32.xlu0 %v3431
      %v3433 = vpop.xlane.xlu0 %3432
      %v3434 = vmax.f32 %v3252, %v3341
      %3435 = vmax.xlane.f32.xlu0 %v3434
      %v3436 = vpop.xlane.xlu0 %3435
      %v3437 = vmax.f32 %v3254, %v3343
      %3438 = vmax.xlane.f32.xlu0 %v3437
      %v3439 = vpop.xlane.xlu0 %3438
      %v3440 = vmax.f32 %v3257, %v3346
      %3441 = vmax.xlane.f32.xlu0 %v3440
      %v3442 = vpop.xlane.xlu0 %3441
      %v3443 = vmax.f32 %v3259, %v3348
      %3444 = vmax.xlane.f32.xlu0 %v3443
      %v3445 = vpop.xlane.xlu0 %3444
      %v3446 = vsub.f32 %v3182, %v3352
      %v3447 = vsub.f32 %v3271, %v3352
      %v3448 = vsub.f32 %v3184, %v3355
      %v3449 = vsub.f32 %v3273, %v3355
      %v3450 = vsub.f32 %v3187, %v3358
      %v3451 = vsub.f32 %v3276, %v3358
      %v3452 = vsub.f32 %v3189, %v3361
      %v3453 = vsub.f32 %v3278, %v3361
      %v3454 = vsub.f32 %v3192, %v3364
      %v3455 = vsub.f32 %v3281, %v3364
      %v3456 = vsub.f32 %v3194, %v3367
      %v3457 = vsub.f32 %v3283, %v3367
      %v3458 = vsub.f32 %v3197, %v3370
      %v3459 = vsub.f32 %v3286, %v3370
      %v3460 = vsub.f32 %v3199, %v3373
      %v3461 = vsub.f32 %v3288, %v3373
      %v3462 = vsub.f32 %v3202, %v3376
      %v3463 = vsub.f32 %v3291, %v3376
      %v3464 = vsub.f32 %v3204, %v3379
      %v3465 = vsub.f32 %v3293, %v3379
      %v3466 = vsub.f32 %v3207, %v3382
      %v3467 = vsub.f32 %v3296, %v3382
      %v3468 = vsub.f32 %v3209, %v3385
      %v3469 = vsub.f32 %v3298, %v3385
      %v3470 = vsub.f32 %v3212, %v3388
      %v3471 = vsub.f32 %v3301, %v3388
      %v3472 = vsub.f32 %v3214, %v3391
      %v3473 = vsub.f32 %v3303, %v3391
      %v3474 = vsub.f32 %v3217, %v3394
      %v3475 = vsub.f32 %v3306, %v3394
      %v3476 = vsub.f32 %v3219, %v3397
      %v3477 = vsub.f32 %v3308, %v3397
      %v3478 = vsub.f32 %v3222, %v3400
      %v3479 = vsub.f32 %v3311, %v3400
      %v3480 = vsub.f32 %v3224, %v3403
      %v3481 = vsub.f32 %v3313, %v3403
      %v3482 = vsub.f32 %v3227, %v3406
      %v3483 = vsub.f32 %v3316, %v3406
      %v3484 = vsub.f32 %v3229, %v3409
      %v3485 = vsub.f32 %v3318, %v3409
      %v3486 = vsub.f32 %v3232, %v3412
      %v3487 = vsub.f32 %v3321, %v3412
      %v3488 = vsub.f32 %v3234, %v3415
      %v3489 = vsub.f32 %v3323, %v3415
      %v3490 = vsub.f32 %v3237, %v3418
      %v3491 = vsub.f32 %v3326, %v3418
      %v3492 = vsub.f32 %v3239, %v3421
      %v3493 = vsub.f32 %v3328, %v3421
      %v3494 = vsub.f32 %v3242, %v3424
      %v3495 = vsub.f32 %v3331, %v3424
      %v3496 = vsub.f32 %v3244, %v3427
      %v3497 = vsub.f32 %v3333, %v3427
      %v3498 = vsub.f32 %v3247, %v3430
      %v3499 = vsub.f32 %v3336, %v3430
      %v3500 = vsub.f32 %v3249, %v3433
      %v3501 = vsub.f32 %v3338, %v3433
      %v3502 = vsub.f32 %v3252, %v3436
      %v3503 = vsub.f32 %v3341, %v3436
      %v3504 = vsub.f32 %v3254, %v3439
      %v3505 = vsub.f32 %v3343, %v3439
      %v3506 = vsub.f32 %v3257, %v3442
      %v3507 = vsub.f32 %v3346, %v3442
      %v3508 = vsub.f32 %v3259, %v3445
      %v3509 = vsub.f32 %v3348, %v3445
      %v3510 = vmul.f32 %v3446, 1.442695
      %v3511 = vpow.pop %v3510
      %v3512 = vmul.f32 %v3447, 1.442695
      %v3513 = vpow.pop %v3512
      %v3514 = vmul.f32 %v3448, 1.442695
      %v3515 = vpow.pop %v3514
      %v3516 = vmul.f32 %v3449, 1.442695
      %v3517 = vpow.pop %v3516
      %v3518 = vmul.f32 %v3450, 1.442695
      %v3519 = vpow.pop %v3518
      %v3520 = vmul.f32 %v3451, 1.442695
      %v3521 = vpow.pop %v3520
      %v3522 = vmul.f32 %v3452, 1.442695
      %v3523 = vpow.pop %v3522
      %v3524 = vmul.f32 %v3453, 1.442695
      %v3525 = vpow.pop %v3524
      %v3526 = vmul.f32 %v3454, 1.442695
      %v3527 = vpow.pop %v3526
      %v3528 = vmul.f32 %v3455, 1.442695
      %v3529 = vpow.pop %v3528
      %v3530 = vmul.f32 %v3456, 1.442695
      %v3531 = vpow.pop %v3530
      %v3532 = vmul.f32 %v3457, 1.442695
      %v3533 = vpow.pop %v3532
      %v3534 = vmul.f32 %v3458, 1.442695
      %v3535 = vpow.pop %v3534
      %v3536 = vmul.f32 %v3459, 1.442695
      %v3537 = vpow.pop %v3536
      %v3538 = vmul.f32 %v3460, 1.442695
      %v3539 = vpow.pop %v3538
      %v3540 = vmul.f32 %v3461, 1.442695
      %v3541 = vpow.pop %v3540
      %v3542 = vmul.f32 %v3462, 1.442695
      %v3543 = vpow.pop %v3542
      %v3544 = vmul.f32 %v3463, 1.442695
      %v3545 = vpow.pop %v3544
      %v3546 = vmul.f32 %v3464, 1.442695
      %v3547 = vpow.pop %v3546
      %v3548 = vmul.f32 %v3465, 1.442695
      %v3549 = vpow.pop %v3548
      %v3550 = vmul.f32 %v3466, 1.442695
      %v3551 = vpow.pop %v3550
      %v3552 = vmul.f32 %v3467, 1.442695
      %v3553 = vpow.pop %v3552
      %v3554 = vmul.f32 %v3468, 1.442695
      %v3555 = vpow.pop %v3554
      %v3556 = vmul.f32 %v3469, 1.442695
      %v3557 = vpow.pop %v3556
      %v3558 = vmul.f32 %v3470, 1.442695
      %v3559 = vpow.pop %v3558
      %v3560 = vmul.f32 %v3471, 1.442695
      %v3561 = vpow.pop %v3560
      %v3562 = vmul.f32 %v3472, 1.442695
      %v3563 = vpow.pop %v3562
      %v3564 = vmul.f32 %v3473, 1.442695
      %v3565 = vpow.pop %v3564
      %v3566 = vmul.f32 %v3474, 1.442695
      %v3567 = vpow.pop %v3566
      %v3568 = vmul.f32 %v3475, 1.442695
      %v3569 = vpow.pop %v3568
      %v3570 = vmul.f32 %v3476, 1.442695
      %v3571 = vpow.pop %v3570
      %v3572 = vmul.f32 %v3477, 1.442695
      %v3573 = vpow.pop %v3572
      %v3574 = vmul.f32 %v3478, 1.442695
      %v3575 = vpow.pop %v3574
      %v3576 = vmul.f32 %v3479, 1.442695
      %v3577 = vpow.pop %v3576
      %v3578 = vmul.f32 %v3480, 1.442695
      %v3579 = vpow.pop %v3578
      %v3580 = vmul.f32 %v3481, 1.442695
      %v3581 = vpow.pop %v3580
      %v3582 = vmul.f32 %v3482, 1.442695
      %v3583 = vpow.pop %v3582
      %v3584 = vmul.f32 %v3483, 1.442695
      %v3585 = vpow.pop %v3584
      %v3586 = vmul.f32 %v3484, 1.442695
      %v3587 = vpow.pop %v3586
      %v3588 = vmul.f32 %v3485, 1.442695
      %v3589 = vpow.pop %v3588
      %v3590 = vmul.f32 %v3486, 1.442695
      %v3591 = vpow.pop %v3590
      %v3592 = vmul.f32 %v3487, 1.442695
      %v3593 = vpow.pop %v3592
      %v3594 = vmul.f32 %v3488, 1.442695
      %v3595 = vpow.pop %v3594
      %v3596 = vmul.f32 %v3489, 1.442695
      %v3597 = vpow.pop %v3596
      %v3598 = vmul.f32 %v3490, 1.442695
      %v3599 = vpow.pop %v3598
      %v3600 = vmul.f32 %v3491, 1.442695
      %v3601 = vpow.pop %v3600
      %v3602 = vmul.f32 %v3492, 1.442695
      %v3603 = vpow.pop %v3602
      %v3604 = vmul.f32 %v3493, 1.442695
      %v3605 = vpow.pop %v3604
      %v3606 = vmul.f32 %v3494, 1.442695
      %v3607 = vpow.pop %v3606
      %v3608 = vmul.f32 %v3495, 1.442695
      %v3609 = vpow.pop %v3608
      %v3610 = vmul.f32 %v3496, 1.442695
      %v3611 = vpow.pop %v3610
      %v3612 = vmul.f32 %v3497, 1.442695
      %v3613 = vpow.pop %v3612
      %v3614 = vmul.f32 %v3498, 1.442695
      %v3615 = vpow.pop %v3614
      %v3616 = vmul.f32 %v3499, 1.442695
      %v3617 = vpow.pop %v3616
      %v3618 = vmul.f32 %v3500, 1.442695
      %v3619 = vpow.pop %v3618
      %v3620 = vmul.f32 %v3501, 1.442695
      %v3621 = vpow.pop %v3620
      %v3622 = vmul.f32 %v3502, 1.442695
      %v3623 = vpow.pop %v3622
      %v3624 = vmul.f32 %v3503, 1.442695
      %v3625 = vpow.pop %v3624
      %v3626 = vmul.f32 %v3504, 1.442695
      %v3627 = vpow.pop %v3626
      %v3628 = vmul.f32 %v3505, 1.442695
      %v3629 = vpow.pop %v3628
      %v3630 = vmul.f32 %v3506, 1.442695
      %v3631 = vpow.pop %v3630
      %v3632 = vmul.f32 %v3507, 1.442695
      %v3633 = vpow.pop %v3632
      %v3634 = vmul.f32 %v3508, 1.442695
      %v3635 = vpow.pop %v3634
      %v3636 = vmul.f32 %v3509, 1.442695
      %v3637 = vpow.pop %v3636
      %v3638 = vadd.f32 %v3511, %v3513
      %3639 = vadd.xlane.f32.xlu0 %v3638
      %v3640 = vpop.xlane.xlu0 %3639
      %v3641 = vadd.f32 %v3515, %v3517
      %3642 = vadd.xlane.f32.xlu0 %v3641
      %v3643 = vpop.xlane.xlu0 %3642
      %v3644 = vadd.f32 %v3519, %v3521
      %3645 = vadd.xlane.f32.xlu0 %v3644
      %v3646 = vpop.xlane.xlu0 %3645
      %v3647 = vadd.f32 %v3523, %v3525
      %3648 = vadd.xlane.f32.xlu0 %v3647
      %v3649 = vpop.xlane.xlu0 %3648
      %v3650 = vadd.f32 %v3527, %v3529
      %3651 = vadd.xlane.f32.xlu0 %v3650
      %v3652 = vpop.xlane.xlu0 %3651
      %v3653 = vadd.f32 %v3531, %v3533
      %3654 = vadd.xlane.f32.xlu0 %v3653
      %v3655 = vpop.xlane.xlu0 %3654
      %v3656 = vadd.f32 %v3535, %v3537
      %3657 = vadd.xlane.f32.xlu0 %v3656
      %v3658 = vpop.xlane.xlu0 %3657
      %v3659 = vadd.f32 %v3539, %v3541
      %3660 = vadd.xlane.f32.xlu0 %v3659
      %v3661 = vpop.xlane.xlu0 %3660
      %v3662 = vadd.f32 %v3543, %v3545
      %3663 = vadd.xlane.f32.xlu0 %v3662
      %v3664 = vpop.xlane.xlu0 %3663
      %v3665 = vadd.f32 %v3547, %v3549
      %3666 = vadd.xlane.f32.xlu0 %v3665
      %v3667 = vpop.xlane.xlu0 %3666
      %v3668 = vadd.f32 %v3551, %v3553
      %3669 = vadd.xlane.f32.xlu0 %v3668
      %v3670 = vpop.xlane.xlu0 %3669
      %v3671 = vadd.f32 %v3555, %v3557
      %3672 = vadd.xlane.f32.xlu0 %v3671
      %v3673 = vpop.xlane.xlu0 %3672
      %v3674 = vadd.f32 %v3559, %v3561
      %3675 = vadd.xlane.f32.xlu0 %v3674
      %v3676 = vpop.xlane.xlu0 %3675
      %v3677 = vadd.f32 %v3563, %v3565
      %3678 = vadd.xlane.f32.xlu0 %v3677
      %v3679 = vpop.xlane.xlu0 %3678
      %v3680 = vadd.f32 %v3567, %v3569
      %3681 = vadd.xlane.f32.xlu0 %v3680
      %v3682 = vpop.xlane.xlu0 %3681
      %v3683 = vadd.f32 %v3571, %v3573
      %3684 = vadd.xlane.f32.xlu0 %v3683
      %v3685 = vpop.xlane.xlu0 %3684
      %v3686 = vadd.f32 %v3575, %v3577
      %3687 = vadd.xlane.f32.xlu0 %v3686
      %v3688 = vpop.xlane.xlu0 %3687
      %v3689 = vadd.f32 %v3579, %v3581
      %3690 = vadd.xlane.f32.xlu0 %v3689
      %v3691 = vpop.xlane.xlu0 %3690
      %v3692 = vadd.f32 %v3583, %v3585
      %3693 = vadd.xlane.f32.xlu0 %v3692
      %v3694 = vpop.xlane.xlu0 %3693
      %v3695 = vadd.f32 %v3587, %v3589
      %3696 = vadd.xlane.f32.xlu0 %v3695
      %v3697 = vpop.xlane.xlu0 %3696
      %v3698 = vadd.f32 %v3591, %v3593
      %3699 = vadd.xlane.f32.xlu0 %v3698
      %v3700 = vpop.xlane.xlu0 %3699
      %v3701 = vadd.f32 %v3595, %v3597
      %3702 = vadd.xlane.f32.xlu0 %v3701
      %v3703 = vpop.xlane.xlu0 %3702
      %v3704 = vadd.f32 %v3599, %v3601
      %3705 = vadd.xlane.f32.xlu0 %v3704
      %v3706 = vpop.xlane.xlu0 %3705
      %v3707 = vadd.f32 %v3603, %v3605
      %3708 = vadd.xlane.f32.xlu0 %v3707
      %v3709 = vpop.xlane.xlu0 %3708
      %v3710 = vadd.f32 %v3607, %v3609
      %3711 = vadd.xlane.f32.xlu0 %v3710
      %v3712 = vpop.xlane.xlu0 %3711
      %v3713 = vadd.f32 %v3611, %v3613
      %3714 = vadd.xlane.f32.xlu0 %v3713
      %v3715 = vpop.xlane.xlu0 %3714
      %v3716 = vadd.f32 %v3615, %v3617
      %3717 = vadd.xlane.f32.xlu0 %v3716
      %v3718 = vpop.xlane.xlu0 %3717
      %v3719 = vadd.f32 %v3619, %v3621
      %3720 = vadd.xlane.f32.xlu0 %v3719
      %v3721 = vpop.xlane.xlu0 %3720
      %v3722 = vadd.f32 %v3623, %v3625
      %3723 = vadd.xlane.f32.xlu0 %v3722
      %v3724 = vpop.xlane.xlu0 %3723
      %v3725 = vadd.f32 %v3627, %v3629
      %3726 = vadd.xlane.f32.xlu0 %v3725
      %v3727 = vpop.xlane.xlu0 %3726
      %v3728 = vadd.f32 %v3631, %v3633
      %3729 = vadd.xlane.f32.xlu0 %v3728
      %v3730 = vpop.xlane.xlu0 %3729
      %v3731 = vadd.f32 %v3635, %v3637
      %3732 = vadd.xlane.f32.xlu0 %v3731
      %v3733 = vpop.xlane.xlu0 %3732
      %v3734 = vrcp.pop %v3640
      %v3735 = vrcp.pop %v3643
      %v3736 = vrcp.pop %v3646
      %v3737 = vrcp.pop %v3649
      %v3738 = vrcp.pop %v3652
      %v3739 = vrcp.pop %v3655
      %v3740 = vrcp.pop %v3658
      %v3741 = vrcp.pop %v3661
      %v3742 = vrcp.pop %v3664
      %v3743 = vrcp.pop %v3667
      %v3744 = vrcp.pop %v3670
      %v3745 = vrcp.pop %v3673
      %v3746 = vrcp.pop %v3676
      %v3747 = vrcp.pop %v3679
      %v3748 = vrcp.pop %v3682
      %v3749 = vrcp.pop %v3685
      %v3750 = vrcp.pop %v3688
      %v3751 = vrcp.pop %v3691
      %v3752 = vrcp.pop %v3694
      %v3753 = vrcp.pop %v3697
      %v3754 = vrcp.pop %v3700
      %v3755 = vrcp.pop %v3703
      %v3756 = vrcp.pop %v3706
      %v3757 = vrcp.pop %v3709
      %v3758 = vrcp.pop %v3712
      %v3759 = vrcp.pop %v3715
      %v3760 = vrcp.pop %v3718
      %v3761 = vrcp.pop %v3721
      %v3762 = vrcp.pop %v3724
      %v3763 = vrcp.pop %v3727
      %v3764 = vrcp.pop %v3730
      %v3765 = vrcp.pop %v3733
      %v3766 = vmul.f32 %v3511, %v3734
      %v3767 = vmul.f32 %v3513, %v3734
      %v3768 = vmul.f32 %v3515, %v3735
      %v3769 = vmul.f32 %v3517, %v3735
      %v3770 = vmul.f32 %v3519, %v3736
      %v3771 = vmul.f32 %v3521, %v3736
      %v3772 = vmul.f32 %v3523, %v3737
      %v3773 = vmul.f32 %v3525, %v3737
      %v3774 = vmul.f32 %v3527, %v3738
      %v3775 = vmul.f32 %v3529, %v3738
      %v3776 = vmul.f32 %v3531, %v3739
      %v3777 = vmul.f32 %v3533, %v3739
      %v3778 = vmul.f32 %v3535, %v3740
      %v3779 = vmul.f32 %v3537, %v3740
      %v3780 = vmul.f32 %v3539, %v3741
      %v3781 = vmul.f32 %v3541, %v3741
      %v3782 = vmul.f32 %v3543, %v3742
      %v3783 = vmul.f32 %v3545, %v3742
      %v3784 = vmul.f32 %v3547, %v3743
      %v3785 = vmul.f32 %v3549, %v3743
      %v3786 = vmul.f32 %v3551, %v3744
      %v3787 = vmul.f32 %v3553, %v3744
      %v3788 = vmul.f32 %v3555, %v3745
      %v3789 = vmul.f32 %v3557, %v3745
      %v3790 = vmul.f32 %v3559, %v3746
      %v3791 = vmul.f32 %v3561, %v3746
      %v3792 = vmul.f32 %v3563, %v3747
      %v3793 = vmul.f32 %v3565, %v3747
      %v3794 = vmul.f32 %v3567, %v3748
      %v3795 = vmul.f32 %v3569, %v3748
      %v3796 = vmul.f32 %v3571, %v3749
      %v3797 = vmul.f32 %v3573, %v3749
      %v3798 = vmul.f32 %v3575, %v3750
      %v3799 = vmul.f32 %v3577, %v3750
      %v3800 = vmul.f32 %v3579, %v3751
      %v3801 = vmul.f32 %v3581, %v3751
      %v3802 = vmul.f32 %v3583, %v3752
      %v3803 = vmul.f32 %v3585, %v3752
      %v3804 = vmul.f32 %v3587, %v3753
      %v3805 = vmul.f32 %v3589, %v3753
      %v3806 = vmul.f32 %v3591, %v3754
      %v3807 = vmul.f32 %v3593, %v3754
      %v3808 = vmul.f32 %v3595, %v3755
      %v3809 = vmul.f32 %v3597, %v3755
      %v3810 = vmul.f32 %v3599, %v3756
      %v3811 = vmul.f32 %v3601, %v3756
      %v3812 = vmul.f32 %v3603, %v3757
      %v3813 = vmul.f32 %v3605, %v3757
      %v3814 = vmul.f32 %v3607, %v3758
      %v3815 = vmul.f32 %v3609, %v3758
      %v3816 = vmul.f32 %v3611, %v3759
      %v3817 = vmul.f32 %v3613, %v3759
      %v3818 = vmul.f32 %v3615, %v3760
      %v3819 = vmul.f32 %v3617, %v3760
      %v3820 = vmul.f32 %v3619, %v3761
      %v3821 = vmul.f32 %v3621, %v3761
      %v3822 = vmul.f32 %v3623, %v3762
      %v3823 = vmul.f32 %v3625, %v3762
      %v3824 = vmul.f32 %v3627, %v3763
      %v3825 = vmul.f32 %v3629, %v3763
      %v3826 = vmul.f32 %v3631, %v3764
      %v3827 = vmul.f32 %v3633, %v3764
      %v3828 = vmul.f32 %v3635, %v3765
      %v3829 = vmul.f32 %v3637, %v3765
      %v3830 = vpack.c.bf16 %v3768, %v3766
      %v3831 = vpack.c.bf16 %v3769, %v3767
      %v3832 = vpack.c.bf16 %v3772, %v3770
      %v3833 = vpack.c.bf16 %v3773, %v3771
      %v3834 = vpack.c.bf16 %v3776, %v3774
      %v3835 = vpack.c.bf16 %v3777, %v3775
      %v3836 = vpack.c.bf16 %v3780, %v3778
      %v3837 = vpack.c.bf16 %v3781, %v3779
      %v3838 = vpack.c.bf16 %v3784, %v3782
      %v3839 = vpack.c.bf16 %v3785, %v3783
      %v3840 = vpack.c.bf16 %v3788, %v3786
      %v3841 = vpack.c.bf16 %v3789, %v3787
      %v3842 = vpack.c.bf16 %v3792, %v3790
      %v3843 = vpack.c.bf16 %v3793, %v3791
      %v3844 = vpack.c.bf16 %v3796, %v3794
      %v3845 = vpack.c.bf16 %v3797, %v3795
      %v3846 = vpack.c.bf16 %v3800, %v3798
      %v3847 = vpack.c.bf16 %v3801, %v3799
      %v3848 = vpack.c.bf16 %v3804, %v3802
      %v3849 = vpack.c.bf16 %v3805, %v3803
      %v3850 = vpack.c.bf16 %v3808, %v3806
      %v3851 = vpack.c.bf16 %v3809, %v3807
      %v3852 = vpack.c.bf16 %v3812, %v3810
      %v3853 = vpack.c.bf16 %v3813, %v3811
      %v3854 = vpack.c.bf16 %v3816, %v3814
      %v3855 = vpack.c.bf16 %v3817, %v3815
      %v3856 = vpack.c.bf16 %v3820, %v3818
      %v3857 = vpack.c.bf16 %v3821, %v3819
      %v3858 = vpack.c.bf16 %v3824, %v3822
      %v3859 = vpack.c.bf16 %v3825, %v3823
      %v3860 = vpack.c.bf16 %v3828, %v3826
      %v3861 = vpack.c.bf16 %v3829, %v3827
      %3862 = vrot.lane.b32.xlu0 %v761, 32
      %v3863 = vpop.permute.xlu0 %3862
      %3864 = vrot.lane.b32.xlu0 %v762, 32
      %v3865 = vpop.permute.xlu0 %3864
      %3866 = vrot.lane.b32.xlu0 %v763, 32
      %v3867 = vpop.permute.xlu0 %3866
      %3868 = vrot.lane.b32.xlu0 %v764, 32
      %v3869 = vpop.permute.xlu0 %3868
      %3870 = vrot.lane.b32.xlu0 %v765, 32
      %v3871 = vpop.permute.xlu0 %3870
      %3872 = vrot.lane.b32.xlu0 %v766, 32
      %v3873 = vpop.permute.xlu0 %3872
      %3874 = vrot.lane.b32.xlu0 %v767, 32
      %v3875 = vpop.permute.xlu0 %3874
      %3876 = vrot.lane.b32.xlu0 %v768, 32
      %v3877 = vpop.permute.xlu0 %3876
      %3878 = vrot.lane.b32.xlu0 %v769, 32
      %v3879 = vpop.permute.xlu0 %3878
      %3880 = vrot.lane.b32.xlu0 %v770, 32
      %v3881 = vpop.permute.xlu0 %3880
      %3882 = vrot.lane.b32.xlu0 %v771, 32
      %v3883 = vpop.permute.xlu0 %3882
      %3884 = vrot.lane.b32.xlu0 %v772, 32
      %v3885 = vpop.permute.xlu0 %3884
      %3886 = vrot.lane.b32.xlu0 %v773, 32
      %v3887 = vpop.permute.xlu0 %3886
      %3888 = vrot.lane.b32.xlu0 %v774, 32
      %v3889 = vpop.permute.xlu0 %3888
      %3890 = vrot.lane.b32.xlu0 %v775, 32
      %v3891 = vpop.permute.xlu0 %3890
      %3892 = vrot.lane.b32.xlu0 %v776, 32
      %v3893 = vpop.permute.xlu0 %3892
      %3910 = vmatpush.bf16.msra.mxu0 %v3877
      %3911 = vmatpush.bf16.msra.mxu0 %v3875
      %3912 = vmatpush.bf16.msra.mxu0 %v3873
      %3913 = vmatpush.bf16.msra.mxu0 %v3871
      %3914 = vmatpush.bf16.msra.mxu0 %v3869
      %3915 = vmatpush.bf16.msra.mxu0 %v3867
      %3916 = vmatpush.bf16.msra.mxu0 %v3865
      %3917 = vmatpush.bf16.msra.mxu0 %v3863
      %3918 = vmatmul.bf16.gmra.mxu0 %v3830
      %v3919 = vpop.f32.mrf.mxu0
      %v3920 = vadd.f32 0.0, %v3919
      %v3921 = vpop.f32.mrf.mxu0
      %v3922 = vadd.f32 0.0, %v3921
      %3923 = vmatmul.bf16.gmra.mxu0 %v3832
      %v3924 = vpop.f32.mrf.mxu0
      %v3925 = vadd.f32 0.0, %v3924
      %v3926 = vpop.f32.mrf.mxu0
      %v3927 = vadd.f32 0.0, %v3926
      %3928 = vmatmul.bf16.gmra.mxu0 %v3834
      %v3929 = vpop.f32.mrf.mxu0
      %v3930 = vadd.f32 0.0, %v3929
      %v3931 = vpop.f32.mrf.mxu0
      %v3932 = vadd.f32 0.0, %v3931
      %3933 = vmatmul.bf16.gmra.mxu0 %v3836
      %v3934 = vpop.f32.mrf.mxu0
      %v3935 = vadd.f32 0.0, %v3934
      %v3936 = vpop.f32.mrf.mxu0
      %v3937 = vadd.f32 0.0, %v3936
      %3938 = vmatmul.bf16.gmra.mxu0 %v3838
      %v3939 = vpop.f32.mrf.mxu0
      %v3940 = vadd.f32 0.0, %v3939
      %v3941 = vpop.f32.mrf.mxu0
      %v3942 = vadd.f32 0.0, %v3941
      %3943 = vmatmul.bf16.gmra.mxu0 %v3840
      %v3944 = vpop.f32.mrf.mxu0
      %v3945 = vadd.f32 0.0, %v3944
      %v3946 = vpop.f32.mrf.mxu0
      %v3947 = vadd.f32 0.0, %v3946
      %3948 = vmatmul.bf16.gmra.mxu0 %v3842
      %v3949 = vpop.f32.mrf.mxu0
      %v3950 = vadd.f32 0.0, %v3949
      %v3951 = vpop.f32.mrf.mxu0
      %v3952 = vadd.f32 0.0, %v3951
      %3953 = vmatmul.bf16.gmra.mxu0 %v3844
      %v3954 = vpop.f32.mrf.mxu0
      %v3955 = vadd.f32 0.0, %v3954
      %v3956 = vpop.f32.mrf.mxu0
      %v3957 = vadd.f32 0.0, %v3956
      %3958 = vmatmul.bf16.gmra.mxu0 %v3846
      %v3959 = vpop.f32.mrf.mxu0
      %v3960 = vadd.f32 0.0, %v3959
      %v3961 = vpop.f32.mrf.mxu0
      %v3962 = vadd.f32 0.0, %v3961
      %3963 = vmatmul.bf16.gmra.mxu0 %v3848
      %v3964 = vpop.f32.mrf.mxu0
      %v3965 = vadd.f32 0.0, %v3964
      %v3966 = vpop.f32.mrf.mxu0
      %v3967 = vadd.f32 0.0, %v3966
      %3968 = vmatmul.bf16.gmra.mxu0 %v3850
      %v3969 = vpop.f32.mrf.mxu0
      %v3970 = vadd.f32 0.0, %v3969
      %v3971 = vpop.f32.mrf.mxu0
      %v3972 = vadd.f32 0.0, %v3971
      %3973 = vmatmul.bf16.gmra.mxu0 %v3852
      %v3974 = vpop.f32.mrf.mxu0
      %v3975 = vadd.f32 0.0, %v3974
      %v3976 = vpop.f32.mrf.mxu0
      %v3977 = vadd.f32 0.0, %v3976
      %3978 = vmatmul.bf16.gmra.mxu0 %v3854
      %v3979 = vpop.f32.mrf.mxu0
      %v3980 = vadd.f32 0.0, %v3979
      %v3981 = vpop.f32.mrf.mxu0
      %v3982 = vadd.f32 0.0, %v3981
      %3983 = vmatmul.bf16.gmra.mxu0 %v3856
      %v3984 = vpop.f32.mrf.mxu0
      %v3985 = vadd.f32 0.0, %v3984
      %v3986 = vpop.f32.mrf.mxu0
      %v3987 = vadd.f32 0.0, %v3986
      %3988 = vmatmul.bf16.gmra.mxu0 %v3858
      %v3989 = vpop.f32.mrf.mxu0
      %v3990 = vadd.f32 0.0, %v3989
      %v3991 = vpop.f32.mrf.mxu0
      %v3992 = vadd.f32 0.0, %v3991
      %3993 = vmatmul.bf16.gmra.mxu0 %v3860
      %v3994 = vpop.f32.mrf.mxu0
      %v3995 = vadd.f32 0.0, %v3994
      %v3996 = vpop.f32.mrf.mxu0
      %v3997 = vadd.f32 0.0, %v3996
      %3998 = vdwg.mxu0
      %3999 = vmatpush.bf16.msra.mxu0 %v3893
      %4000 = vmatpush.bf16.msra.mxu0 %v3891
      %4001 = vmatpush.bf16.msra.mxu0 %v3889
      %4002 = vmatpush.bf16.msra.mxu0 %v3887
      %4003 = vmatpush.bf16.msra.mxu0 %v3885
      %4004 = vmatpush.bf16.msra.mxu0 %v3883
      %4005 = vmatpush.bf16.msra.mxu0 %v3881
      %4006 = vmatpush.bf16.msra.mxu0 %v3879
      %4007 = vmatmul.bf16.gmra.mxu0 %v3831
      %v4008 = vpop.f32.mrf.mxu0
      %v4009 = vadd.f32 %v3920, %v4008
      %v4010 = vpop.f32.mrf.mxu0
      %v4011 = vadd.f32 %v3922, %v4010
      %4012 = vmatmul.bf16.gmra.mxu0 %v3833
      %v4013 = vpop.f32.mrf.mxu0
      %v4014 = vadd.f32 %v3925, %v4013
      %v4015 = vpop.f32.mrf.mxu0
      %v4016 = vadd.f32 %v3927, %v4015
      %4017 = vmatmul.bf16.gmra.mxu0 %v3835
      %v4018 = vpop.f32.mrf.mxu0
      %v4019 = vadd.f32 %v3930, %v4018
      %v4020 = vpop.f32.mrf.mxu0
      %v4021 = vadd.f32 %v3932, %v4020
      %4022 = vmatmul.bf16.gmra.mxu0 %v3837
      %v4023 = vpop.f32.mrf.mxu0
      %v4024 = vadd.f32 %v3935, %v4023
      %v4025 = vpop.f32.mrf.mxu0
      %v4026 = vadd.f32 %v3937, %v4025
      %4027 = vmatmul.bf16.gmra.mxu0 %v3839
      %v4028 = vpop.f32.mrf.mxu0
      %v4029 = vadd.f32 %v3940, %v4028
      %v4030 = vpop.f32.mrf.mxu0
      %v4031 = vadd.f32 %v3942, %v4030
      %4032 = vmatmul.bf16.gmra.mxu0 %v3841
      %v4033 = vpop.f32.mrf.mxu0
      %v4034 = vadd.f32 %v3945, %v4033
      %v4035 = vpop.f32.mrf.mxu0
      %v4036 = vadd.f32 %v3947, %v4035
      %4037 = vmatmul.bf16.gmra.mxu0 %v3843
      %v4038 = vpop.f32.mrf.mxu0
      %v4039 = vadd.f32 %v3950, %v4038
      %v4040 = vpop.f32.mrf.mxu0
      %v4041 = vadd.f32 %v3952, %v4040
      %4042 = vmatmul.bf16.gmra.mxu0 %v3845
      %v4043 = vpop.f32.mrf.mxu0
      %v4044 = vadd.f32 %v3955, %v4043
      %v4045 = vpop.f32.mrf.mxu0
      %v4046 = vadd.f32 %v3957, %v4045
      %4047 = vmatmul.bf16.gmra.mxu0 %v3847
      %v4048 = vpop.f32.mrf.mxu0
      %v4049 = vadd.f32 %v3960, %v4048
      %v4050 = vpop.f32.mrf.mxu0
      %v4051 = vadd.f32 %v3962, %v4050
      %4052 = vmatmul.bf16.gmra.mxu0 %v3849
      %v4053 = vpop.f32.mrf.mxu0
      %v4054 = vadd.f32 %v3965, %v4053
      %v4055 = vpop.f32.mrf.mxu0
      %v4056 = vadd.f32 %v3967, %v4055
      %4057 = vmatmul.bf16.gmra.mxu0 %v3851
      %v4058 = vpop.f32.mrf.mxu0
      %v4059 = vadd.f32 %v3970, %v4058
      %v4060 = vpop.f32.mrf.mxu0
      %v4061 = vadd.f32 %v3972, %v4060
      %4062 = vmatmul.bf16.gmra.mxu0 %v3853
      %v4063 = vpop.f32.mrf.mxu0
      %v4064 = vadd.f32 %v3975, %v4063
      %v4065 = vpop.f32.mrf.mxu0
      %v4066 = vadd.f32 %v3977, %v4065
      %4067 = vmatmul.bf16.gmra.mxu0 %v3855
      %v4068 = vpop.f32.mrf.mxu0
      %v4069 = vadd.f32 %v3980, %v4068
      %v4070 = vpop.f32.mrf.mxu0
      %v4071 = vadd.f32 %v3982, %v4070
      %4072 = vmatmul.bf16.gmra.mxu0 %v3857
      %v4073 = vpop.f32.mrf.mxu0
      %v4074 = vadd.f32 %v3985, %v4073
      %v4075 = vpop.f32.mrf.mxu0
      %v4076 = vadd.f32 %v3987, %v4075
      %4077 = vmatmul.bf16.gmra.mxu0 %v3859
      %v4078 = vpop.f32.mrf.mxu0
      %v4079 = vadd.f32 %v3990, %v4078
      %v4080 = vpop.f32.mrf.mxu0
      %v4081 = vadd.f32 %v3992, %v4080
      %4082 = vmatmul.bf16.gmra.mxu0 %v3861
      %v4083 = vpop.f32.mrf.mxu0
      %v4084 = vadd.f32 %v3995, %v4083
      %v4085 = vpop.f32.mrf.mxu0
      %v4086 = vadd.f32 %v3997, %v4085
      %4087 = vdwg.mxu0
      %s4088 = scalar_lea.vmem %s5, 1536
      %v4089 = vld [vmem:[%s4088] sm:$0xff]
      %v4090 = vld [vmem:[%s4088 + $0x8] sm:$0xff]
      %v4091 = vld [vmem:[%s4088 + $0x10] sm:$0xff]
      %v4092 = vld [vmem:[%s4088 + $0x18] sm:$0xff]
      %v4093 = vld [vmem:[%s4088 + $0x20] sm:$0xff]
      %v4094 = vld [vmem:[%s4088 + $0x28] sm:$0xff]
      %v4095 = vld [vmem:[%s4088 + $0x30] sm:$0xff]
      %v4096 = vld [vmem:[%s4088 + $0x38] sm:$0xff]
      %v4097 = vld [vmem:[%s4088 + $0x40] sm:$0xff]
      %v4098 = vld [vmem:[%s4088 + $0x48] sm:$0xff]
      %v4099 = vld [vmem:[%s4088 + $0x50] sm:$0xff]
      %v4100 = vld [vmem:[%s4088 + $0x58] sm:$0xff]
      %v4101 = vld [vmem:[%s4088 + $0x60] sm:$0xff]
      %v4102 = vld [vmem:[%s4088 + $0x68] sm:$0xff]
      %v4103 = vld [vmem:[%s4088 + $0x70] sm:$0xff]
      %v4104 = vld [vmem:[%s4088 + $0x78] sm:$0xff]
      %v4105 = vld [vmem:[%s4088 + $0x80] sm:$0xff]
      %v4106 = vld [vmem:[%s4088 + $0x88] sm:$0xff]
      %v4107 = vld [vmem:[%s4088 + $0x90] sm:$0xff]
      %v4108 = vld [vmem:[%s4088 + $0x98] sm:$0xff]
      %v4109 = vld [vmem:[%s4088 + $0xa0] sm:$0xff]
      %v4110 = vld [vmem:[%s4088 + $0xa8] sm:$0xff]
      %v4111 = vld [vmem:[%s4088 + $0xb0] sm:$0xff]
      %v4112 = vld [vmem:[%s4088 + $0xb8] sm:$0xff]
      %v4113 = vld [vmem:[%s4088 + $0xc0] sm:$0xff]
      %v4114 = vld [vmem:[%s4088 + $0xc8] sm:$0xff]
      %v4115 = vld [vmem:[%s4088 + $0xd0] sm:$0xff]
      %v4116 = vld [vmem:[%s4088 + $0xd8] sm:$0xff]
      %v4117 = vld [vmem:[%s4088 + $0xe0] sm:$0xff]
      %v4118 = vld [vmem:[%s4088 + $0xe8] sm:$0xff]
      %v4119 = vld [vmem:[%s4088 + $0xf0] sm:$0xff]
      %v4120 = vld [vmem:[%s4088 + $0xf8] sm:$0xff]
      %v4121 = vld [vmem:[%s4088 + $0x100] sm:$0xff]
      %v4122 = vld [vmem:[%s4088 + $0x108] sm:$0xff]
      %v4123 = vld [vmem:[%s4088 + $0x110] sm:$0xff]
      %v4124 = vld [vmem:[%s4088 + $0x118] sm:$0xff]
      %v4125 = vld [vmem:[%s4088 + $0x120] sm:$0xff]
      %v4126 = vld [vmem:[%s4088 + $0x128] sm:$0xff]
      %v4127 = vld [vmem:[%s4088 + $0x130] sm:$0xff]
      %v4128 = vld [vmem:[%s4088 + $0x138] sm:$0xff]
      %v4129 = vld [vmem:[%s4088 + $0x140] sm:$0xff]
      %v4130 = vld [vmem:[%s4088 + $0x148] sm:$0xff]
      %v4131 = vld [vmem:[%s4088 + $0x150] sm:$0xff]
      %v4132 = vld [vmem:[%s4088 + $0x158] sm:$0xff]
      %v4133 = vld [vmem:[%s4088 + $0x160] sm:$0xff]
      %v4134 = vld [vmem:[%s4088 + $0x168] sm:$0xff]
      %v4135 = vld [vmem:[%s4088 + $0x170] sm:$0xff]
      %v4136 = vld [vmem:[%s4088 + $0x178] sm:$0xff]
      %v4137 = vld [vmem:[%s4088 + $0x180] sm:$0xff]
      %v4138 = vld [vmem:[%s4088 + $0x188] sm:$0xff]
      %v4139 = vld [vmem:[%s4088 + $0x190] sm:$0xff]
      %v4140 = vld [vmem:[%s4088 + $0x198] sm:$0xff]
      %v4141 = vld [vmem:[%s4088 + $0x1a0] sm:$0xff]
      %v4142 = vld [vmem:[%s4088 + $0x1a8] sm:$0xff]
      %v4143 = vld [vmem:[%s4088 + $0x1b0] sm:$0xff]
      %v4144 = vld [vmem:[%s4088 + $0x1b8] sm:$0xff]
      %v4145 = vld [vmem:[%s4088 + $0x1c0] sm:$0xff]
      %v4146 = vld [vmem:[%s4088 + $0x1c8] sm:$0xff]
      %v4147 = vld [vmem:[%s4088 + $0x1d0] sm:$0xff]
      %v4148 = vld [vmem:[%s4088 + $0x1d8] sm:$0xff]
      %v4149 = vld [vmem:[%s4088 + $0x1e0] sm:$0xff]
      %v4150 = vld [vmem:[%s4088 + $0x1e8] sm:$0xff]
      %v4151 = vld [vmem:[%s4088 + $0x1f0] sm:$0xff]
      %v4152 = vld [vmem:[%s4088 + $0x1f8] sm:$0xff]
      %4153 = vrot.lane.b32.xlu0 %v617, 80
      %v4154 = vpop.permute.xlu0 %4153
      %4155 = vrot.lane.b32.xlu0 %v618, 80
      %v4156 = vpop.permute.xlu0 %4155
      %4157 = vrot.lane.b32.xlu0 %v619, 80
      %v4158 = vpop.permute.xlu0 %4157
      %4159 = vrot.lane.b32.xlu0 %v620, 80
      %v4160 = vpop.permute.xlu0 %4159
      %4161 = vrot.lane.b32.xlu0 %v621, 80
      %v4162 = vpop.permute.xlu0 %4161
      %4163 = vrot.lane.b32.xlu0 %v622, 80
      %v4164 = vpop.permute.xlu0 %4163
      %4165 = vrot.lane.b32.xlu0 %v623, 80
      %v4166 = vpop.permute.xlu0 %4165
      %4167 = vrot.lane.b32.xlu0 %v624, 80
      %v4168 = vpop.permute.xlu0 %4167
      %4169 = vrot.lane.b32.xlu0 %v625, 80
      %v4170 = vpop.permute.xlu0 %4169
      %4171 = vrot.lane.b32.xlu0 %v626, 80
      %v4172 = vpop.permute.xlu0 %4171
      %4173 = vrot.lane.b32.xlu0 %v627, 80
      %v4174 = vpop.permute.xlu0 %4173
      %4175 = vrot.lane.b32.xlu0 %v628, 80
      %v4176 = vpop.permute.xlu0 %4175
      %4177 = vrot.lane.b32.xlu0 %v629, 80
      %v4178 = vpop.permute.xlu0 %4177
      %4179 = vrot.lane.b32.xlu0 %v630, 80
      %v4180 = vpop.permute.xlu0 %4179
      %4181 = vrot.lane.b32.xlu0 %v631, 80
      %v4182 = vpop.permute.xlu0 %4181
      %4183 = vrot.lane.b32.xlu0 %v632, 80
      %v4184 = vpop.permute.xlu0 %4183
      %4185 = vrot.lane.b32.xlu0 %v761, 80
      %v4186 = vpop.permute.xlu0 %4185
      %4187 = vrot.lane.b32.xlu0 %v762, 80
      %v4188 = vpop.permute.xlu0 %4187
      %4189 = vrot.lane.b32.xlu0 %v763, 80
      %v4190 = vpop.permute.xlu0 %4189
      %4191 = vrot.lane.b32.xlu0 %v764, 80
      %v4192 = vpop.permute.xlu0 %4191
      %4193 = vrot.lane.b32.xlu0 %v765, 80
      %v4194 = vpop.permute.xlu0 %4193
      %4195 = vrot.lane.b32.xlu0 %v766, 80
      %v4196 = vpop.permute.xlu0 %4195
      %4197 = vrot.lane.b32.xlu0 %v767, 80
      %v4198 = vpop.permute.xlu0 %4197
      %4199 = vrot.lane.b32.xlu0 %v768, 80
      %v4200 = vpop.permute.xlu0 %4199
      %4201 = vrot.lane.b32.xlu0 %v769, 80
      %v4202 = vpop.permute.xlu0 %4201
      %4203 = vrot.lane.b32.xlu0 %v770, 80
      %v4204 = vpop.permute.xlu0 %4203
      %4205 = vrot.lane.b32.xlu0 %v771, 80
      %v4206 = vpop.permute.xlu0 %4205
      %4207 = vrot.lane.b32.xlu0 %v772, 80
      %v4208 = vpop.permute.xlu0 %4207
      %4209 = vrot.lane.b32.xlu0 %v773, 80
      %v4210 = vpop.permute.xlu0 %4209
      %4211 = vrot.lane.b32.xlu0 %v774, 80
      %v4212 = vpop.permute.xlu0 %4211
      %4213 = vrot.lane.b32.xlu0 %v775, 80
      %v4214 = vpop.permute.xlu0 %4213
      %4215 = vrot.lane.b32.xlu0 %v776, 80
      %v4216 = vpop.permute.xlu0 %4215
      %v4218 = vsel %vm777, %v4154, 0
      %v4221 = vsel %vm777, %v4156, 0
      %v4224 = vsel %vm777, %v4158, 0
      %v4227 = vsel %vm777, %v4160, 0
      %v4230 = vsel %vm777, %v4162, 0
      %v4233 = vsel %vm777, %v4164, 0
      %v4236 = vsel %vm777, %v4166, 0
      %v4239 = vsel %vm777, %v4168, 0
      %v4242 = vsel %vm777, %v4170, 0
      %v4245 = vsel %vm777, %v4172, 0
      %v4248 = vsel %vm777, %v4174, 0
      %v4251 = vsel %vm777, %v4176, 0
      %v4254 = vsel %vm777, %v4178, 0
      %v4257 = vsel %vm777, %v4180, 0
      %v4260 = vsel %vm777, %v4182, 0
      %v4263 = vsel %vm777, %v4184, 0
      %v4266 = vsel %vm777, %v4186, 0
      %v4269 = vsel %vm777, %v4188, 0
      %v4272 = vsel %vm777, %v4190, 0
      %v4275 = vsel %vm777, %v4192, 0
      %v4278 = vsel %vm777, %v4194, 0
      %v4281 = vsel %vm777, %v4196, 0
      %v4284 = vsel %vm777, %v4198, 0
      %v4287 = vsel %vm777, %v4200, 0
      %v4290 = vsel %vm777, %v4202, 0
      %v4293 = vsel %vm777, %v4204, 0
      %v4296 = vsel %vm777, %v4206, 0
      %v4299 = vsel %vm777, %v4208, 0
      %v4302 = vsel %vm777, %v4210, 0
      %v4305 = vsel %vm777, %v4212, 0
      %v4308 = vsel %vm777, %v4214, 0
      %v4311 = vsel %vm777, %v4216, 0
      %4313 = vmatpush.bf16.xpose.msra.mxu0 %v4287
      %4314 = vmatpush.bf16.xpose.msra.mxu0 %v4284
      %4315 = vmatpush.bf16.xpose.msra.mxu0 %v4281
      %4316 = vmatpush.bf16.xpose.msra.mxu0 %v4278
      %4317 = vmatpush.bf16.xpose.msra.mxu0 %v4275
      %4318 = vmatpush.bf16.xpose.msra.mxu0 %v4272
      %4319 = vmatpush.bf16.xpose.msra.mxu0 %v4269
      %4320 = vmatpush.bf16.xpose.msra.mxu0 %v4266
      %4321 = vmatmul.bf16.gmra.mxu0 %v4218
      %v4322 = vpop.f32.mrf.mxu0
      %v4323 = vadd.f32 %v4089, %v4322
      %v4324 = vpop.f32.mrf.mxu0
      %v4325 = vadd.f32 %v4091, %v4324
      %4326 = vmatmul.bf16.gmra.mxu0 %v4221
      %v4327 = vpop.f32.mrf.mxu0
      %v4328 = vadd.f32 %v4093, %v4327
      %v4329 = vpop.f32.mrf.mxu0
      %v4330 = vadd.f32 %v4095, %v4329
      %4331 = vmatmul.bf16.gmra.mxu0 %v4224
      %v4332 = vpop.f32.mrf.mxu0
      %v4333 = vadd.f32 %v4097, %v4332
      %v4334 = vpop.f32.mrf.mxu0
      %v4335 = vadd.f32 %v4099, %v4334
      %4336 = vmatmul.bf16.gmra.mxu0 %v4227
      %v4337 = vpop.f32.mrf.mxu0
      %v4338 = vadd.f32 %v4101, %v4337
      %v4339 = vpop.f32.mrf.mxu0
      %v4340 = vadd.f32 %v4103, %v4339
      %4341 = vmatmul.bf16.gmra.mxu0 %v4230
      %v4342 = vpop.f32.mrf.mxu0
      %v4343 = vadd.f32 %v4105, %v4342
      %v4344 = vpop.f32.mrf.mxu0
      %v4345 = vadd.f32 %v4107, %v4344
      %4346 = vmatmul.bf16.gmra.mxu0 %v4233
      %v4347 = vpop.f32.mrf.mxu0
      %v4348 = vadd.f32 %v4109, %v4347
      %v4349 = vpop.f32.mrf.mxu0
      %v4350 = vadd.f32 %v4111, %v4349
      %4351 = vmatmul.bf16.gmra.mxu0 %v4236
      %v4352 = vpop.f32.mrf.mxu0
      %v4353 = vadd.f32 %v4113, %v4352
      %v4354 = vpop.f32.mrf.mxu0
      %v4355 = vadd.f32 %v4115, %v4354
      %4356 = vmatmul.bf16.gmra.mxu0 %v4239
      %v4357 = vpop.f32.mrf.mxu0
      %v4358 = vadd.f32 %v4117, %v4357
      %v4359 = vpop.f32.mrf.mxu0
      %v4360 = vadd.f32 %v4119, %v4359
      %4361 = vmatmul.bf16.gmra.mxu0 %v4242
      %v4362 = vpop.f32.mrf.mxu0
      %v4363 = vadd.f32 %v4121, %v4362
      %v4364 = vpop.f32.mrf.mxu0
      %v4365 = vadd.f32 %v4123, %v4364
      %4366 = vmatmul.bf16.gmra.mxu0 %v4245
      %v4367 = vpop.f32.mrf.mxu0
      %v4368 = vadd.f32 %v4125, %v4367
      %v4369 = vpop.f32.mrf.mxu0
      %v4370 = vadd.f32 %v4127, %v4369
      %4371 = vmatmul.bf16.gmra.mxu0 %v4248
      %v4372 = vpop.f32.mrf.mxu0
      %v4373 = vadd.f32 %v4129, %v4372
      %v4374 = vpop.f32.mrf.mxu0
      %v4375 = vadd.f32 %v4131, %v4374
      %4376 = vmatmul.bf16.gmra.mxu0 %v4251
      %v4377 = vpop.f32.mrf.mxu0
      %v4378 = vadd.f32 %v4133, %v4377
      %v4379 = vpop.f32.mrf.mxu0
      %v4380 = vadd.f32 %v4135, %v4379
      %4381 = vmatmul.bf16.gmra.mxu0 %v4254
      %v4382 = vpop.f32.mrf.mxu0
      %v4383 = vadd.f32 %v4137, %v4382
      %v4384 = vpop.f32.mrf.mxu0
      %v4385 = vadd.f32 %v4139, %v4384
      %4386 = vmatmul.bf16.gmra.mxu0 %v4257
      %v4387 = vpop.f32.mrf.mxu0
      %v4388 = vadd.f32 %v4141, %v4387
      %v4389 = vpop.f32.mrf.mxu0
      %v4390 = vadd.f32 %v4143, %v4389
      %4391 = vmatmul.bf16.gmra.mxu0 %v4260
      %v4392 = vpop.f32.mrf.mxu0
      %v4393 = vadd.f32 %v4145, %v4392
      %v4394 = vpop.f32.mrf.mxu0
      %v4395 = vadd.f32 %v4147, %v4394
      %4396 = vmatmul.bf16.gmra.mxu0 %v4263
      %v4397 = vpop.f32.mrf.mxu0
      %v4398 = vadd.f32 %v4149, %v4397
      %v4399 = vpop.f32.mrf.mxu0
      %v4400 = vadd.f32 %v4151, %v4399
      %4401 = vdwg.mxu0
      %4402 = vmatpush.bf16.xpose.msra.mxu0 %v4311
      %4403 = vmatpush.bf16.xpose.msra.mxu0 %v4308
      %4404 = vmatpush.bf16.xpose.msra.mxu0 %v4305
      %4405 = vmatpush.bf16.xpose.msra.mxu0 %v4302
      %4406 = vmatpush.bf16.xpose.msra.mxu0 %v4299
      %4407 = vmatpush.bf16.xpose.msra.mxu0 %v4296
      %4408 = vmatpush.bf16.xpose.msra.mxu0 %v4293
      %4409 = vmatpush.bf16.xpose.msra.mxu0 %v4290
      %4410 = vmatmul.bf16.gmra.mxu0 %v4218
      %v4411 = vpop.f32.mrf.mxu0
      %v4412 = vadd.f32 %v4090, %v4411
      %v4413 = vpop.f32.mrf.mxu0
      %v4414 = vadd.f32 %v4092, %v4413
      %4415 = vmatmul.bf16.gmra.mxu0 %v4221
      %v4416 = vpop.f32.mrf.mxu0
      %v4417 = vadd.f32 %v4094, %v4416
      %v4418 = vpop.f32.mrf.mxu0
      %v4419 = vadd.f32 %v4096, %v4418
      %4420 = vmatmul.bf16.gmra.mxu0 %v4224
      %v4421 = vpop.f32.mrf.mxu0
      %v4422 = vadd.f32 %v4098, %v4421
      %v4423 = vpop.f32.mrf.mxu0
      %v4424 = vadd.f32 %v4100, %v4423
      %4425 = vmatmul.bf16.gmra.mxu0 %v4227
      %v4426 = vpop.f32.mrf.mxu0
      %v4427 = vadd.f32 %v4102, %v4426
      %v4428 = vpop.f32.mrf.mxu0
      %v4429 = vadd.f32 %v4104, %v4428
      %4430 = vmatmul.bf16.gmra.mxu0 %v4230
      %v4431 = vpop.f32.mrf.mxu0
      %v4432 = vadd.f32 %v4106, %v4431
      %v4433 = vpop.f32.mrf.mxu0
      %v4434 = vadd.f32 %v4108, %v4433
      %4435 = vmatmul.bf16.gmra.mxu0 %v4233
      %v4436 = vpop.f32.mrf.mxu0
      %v4437 = vadd.f32 %v4110, %v4436
      %v4438 = vpop.f32.mrf.mxu0
      %v4439 = vadd.f32 %v4112, %v4438
      %4440 = vmatmul.bf16.gmra.mxu0 %v4236
      %v4441 = vpop.f32.mrf.mxu0
      %v4442 = vadd.f32 %v4114, %v4441
      %v4443 = vpop.f32.mrf.mxu0
      %v4444 = vadd.f32 %v4116, %v4443
      %4445 = vmatmul.bf16.gmra.mxu0 %v4239
      %v4446 = vpop.f32.mrf.mxu0
      %v4447 = vadd.f32 %v4118, %v4446
      %v4448 = vpop.f32.mrf.mxu0
      %v4449 = vadd.f32 %v4120, %v4448
      %4450 = vmatmul.bf16.gmra.mxu0 %v4242
      %v4451 = vpop.f32.mrf.mxu0
      %v4452 = vadd.f32 %v4122, %v4451
      %v4453 = vpop.f32.mrf.mxu0
      %v4454 = vadd.f32 %v4124, %v4453
      %4455 = vmatmul.bf16.gmra.mxu0 %v4245
      %v4456 = vpop.f32.mrf.mxu0
      %v4457 = vadd.f32 %v4126, %v4456
      %v4458 = vpop.f32.mrf.mxu0
      %v4459 = vadd.f32 %v4128, %v4458
      %4460 = vmatmul.bf16.gmra.mxu0 %v4248
      %v4461 = vpop.f32.mrf.mxu0
      %v4462 = vadd.f32 %v4130, %v4461
      %v4463 = vpop.f32.mrf.mxu0
      %v4464 = vadd.f32 %v4132, %v4463
      %4465 = vmatmul.bf16.gmra.mxu0 %v4251
      %v4466 = vpop.f32.mrf.mxu0
      %v4467 = vadd.f32 %v4134, %v4466
      %v4468 = vpop.f32.mrf.mxu0
      %v4469 = vadd.f32 %v4136, %v4468
      %4470 = vmatmul.bf16.gmra.mxu0 %v4254
      %v4471 = vpop.f32.mrf.mxu0
      %v4472 = vadd.f32 %v4138, %v4471
      %v4473 = vpop.f32.mrf.mxu0
      %v4474 = vadd.f32 %v4140, %v4473
      %4475 = vmatmul.bf16.gmra.mxu0 %v4257
      %v4476 = vpop.f32.mrf.mxu0
      %v4477 = vadd.f32 %v4142, %v4476
      %v4478 = vpop.f32.mrf.mxu0
      %v4479 = vadd.f32 %v4144, %v4478
      %4480 = vmatmul.bf16.gmra.mxu0 %v4260
      %v4481 = vpop.f32.mrf.mxu0
      %v4482 = vadd.f32 %v4146, %v4481
      %v4483 = vpop.f32.mrf.mxu0
      %v4484 = vadd.f32 %v4148, %v4483
      %4485 = vmatmul.bf16.gmra.mxu0 %v4263
      %v4486 = vpop.f32.mrf.mxu0
      %v4487 = vadd.f32 %v4150, %v4486
      %v4488 = vpop.f32.mrf.mxu0
      %v4489 = vadd.f32 %v4152, %v4488
      %4490 = vdwg.mxu0
      %v4491 = vmax.f32 %v4323, %v4412
      %4492 = vmax.xlane.f32.xlu0 %v4491
      %v4493 = vpop.xlane.xlu0 %4492
      %v4494 = vmax.f32 %v4325, %v4414
      %4495 = vmax.xlane.f32.xlu0 %v4494
      %v4496 = vpop.xlane.xlu0 %4495
      %v4497 = vmax.f32 %v4328, %v4417
      %4498 = vmax.xlane.f32.xlu0 %v4497
      %v4499 = vpop.xlane.xlu0 %4498
      %v4500 = vmax.f32 %v4330, %v4419
      %4501 = vmax.xlane.f32.xlu0 %v4500
      %v4502 = vpop.xlane.xlu0 %4501
      %v4503 = vmax.f32 %v4333, %v4422
      %4504 = vmax.xlane.f32.xlu0 %v4503
      %v4505 = vpop.xlane.xlu0 %4504
      %v4506 = vmax.f32 %v4335, %v4424
      %4507 = vmax.xlane.f32.xlu0 %v4506
      %v4508 = vpop.xlane.xlu0 %4507
      %v4509 = vmax.f32 %v4338, %v4427
      %4510 = vmax.xlane.f32.xlu0 %v4509
      %v4511 = vpop.xlane.xlu0 %4510
      %v4512 = vmax.f32 %v4340, %v4429
      %4513 = vmax.xlane.f32.xlu0 %v4512
      %v4514 = vpop.xlane.xlu0 %4513
      %v4515 = vmax.f32 %v4343, %v4432
      %4516 = vmax.xlane.f32.xlu0 %v4515
      %v4517 = vpop.xlane.xlu0 %4516
      %v4518 = vmax.f32 %v4345, %v4434
      %4519 = vmax.xlane.f32.xlu0 %v4518
      %v4520 = vpop.xlane.xlu0 %4519
      %v4521 = vmax.f32 %v4348, %v4437
      %4522 = vmax.xlane.f32.xlu0 %v4521
      %v4523 = vpop.xlane.xlu0 %4522
      %v4524 = vmax.f32 %v4350, %v4439
      %4525 = vmax.xlane.f32.xlu0 %v4524
      %v4526 = vpop.xlane.xlu0 %4525
      %v4527 = vmax.f32 %v4353, %v4442
      %4528 = vmax.xlane.f32.xlu0 %v4527
      %v4529 = vpop.xlane.xlu0 %4528
      %v4530 = vmax.f32 %v4355, %v4444
      %4531 = vmax.xlane.f32.xlu0 %v4530
      %v4532 = vpop.xlane.xlu0 %4531
      %v4533 = vmax.f32 %v4358, %v4447
      %4534 = vmax.xlane.f32.xlu0 %v4533
      %v4535 = vpop.xlane.xlu0 %4534
      %v4536 = vmax.f32 %v4360, %v4449
      %4537 = vmax.xlane.f32.xlu0 %v4536
      %v4538 = vpop.xlane.xlu0 %4537
      %v4539 = vmax.f32 %v4363, %v4452
      %4540 = vmax.xlane.f32.xlu0 %v4539
      %v4541 = vpop.xlane.xlu0 %4540
      %v4542 = vmax.f32 %v4365, %v4454
      %4543 = vmax.xlane.f32.xlu0 %v4542
      %v4544 = vpop.xlane.xlu0 %4543
      %v4545 = vmax.f32 %v4368, %v4457
      %4546 = vmax.xlane.f32.xlu0 %v4545
      %v4547 = vpop.xlane.xlu0 %4546
      %v4548 = vmax.f32 %v4370, %v4459
      %4549 = vmax.xlane.f32.xlu0 %v4548
      %v4550 = vpop.xlane.xlu0 %4549
      %v4551 = vmax.f32 %v4373, %v4462
      %4552 = vmax.xlane.f32.xlu0 %v4551
      %v4553 = vpop.xlane.xlu0 %4552
      %v4554 = vmax.f32 %v4375, %v4464
      %4555 = vmax.xlane.f32.xlu0 %v4554
      %v4556 = vpop.xlane.xlu0 %4555
      %v4557 = vmax.f32 %v4378, %v4467
      %4558 = vmax.xlane.f32.xlu0 %v4557
      %v4559 = vpop.xlane.xlu0 %4558
      %v4560 = vmax.f32 %v4380, %v4469
      %4561 = vmax.xlane.f32.xlu0 %v4560
      %v4562 = vpop.xlane.xlu0 %4561
      %v4563 = vmax.f32 %v4383, %v4472
      %4564 = vmax.xlane.f32.xlu0 %v4563
      %v4565 = vpop.xlane.xlu0 %4564
      %v4566 = vmax.f32 %v4385, %v4474
      %4567 = vmax.xlane.f32.xlu0 %v4566
      %v4568 = vpop.xlane.xlu0 %4567
      %v4569 = vmax.f32 %v4388, %v4477
      %4570 = vmax.xlane.f32.xlu0 %v4569
      %v4571 = vpop.xlane.xlu0 %4570
      %v4572 = vmax.f32 %v4390, %v4479
      %4573 = vmax.xlane.f32.xlu0 %v4572
      %v4574 = vpop.xlane.xlu0 %4573
      %v4575 = vmax.f32 %v4393, %v4482
      %4576 = vmax.xlane.f32.xlu0 %v4575
      %v4577 = vpop.xlane.xlu0 %4576
      %v4578 = vmax.f32 %v4395, %v4484
      %4579 = vmax.xlane.f32.xlu0 %v4578
      %v4580 = vpop.xlane.xlu0 %4579
      %v4581 = vmax.f32 %v4398, %v4487
      %4582 = vmax.xlane.f32.xlu0 %v4581
      %v4583 = vpop.xlane.xlu0 %4582
      %v4584 = vmax.f32 %v4400, %v4489
      %4585 = vmax.xlane.f32.xlu0 %v4584
      %v4586 = vpop.xlane.xlu0 %4585
      %v4587 = vsub.f32 %v4323, %v4493
      %v4588 = vsub.f32 %v4412, %v4493
      %v4589 = vsub.f32 %v4325, %v4496
      %v4590 = vsub.f32 %v4414, %v4496
      %v4591 = vsub.f32 %v4328, %v4499
      %v4592 = vsub.f32 %v4417, %v4499
      %v4593 = vsub.f32 %v4330, %v4502
      %v4594 = vsub.f32 %v4419, %v4502
      %v4595 = vsub.f32 %v4333, %v4505
      %v4596 = vsub.f32 %v4422, %v4505
      %v4597 = vsub.f32 %v4335, %v4508
      %v4598 = vsub.f32 %v4424, %v4508
      %v4599 = vsub.f32 %v4338, %v4511
      %v4600 = vsub.f32 %v4427, %v4511
      %v4601 = vsub.f32 %v4340, %v4514
      %v4602 = vsub.f32 %v4429, %v4514
      %v4603 = vsub.f32 %v4343, %v4517
      %v4604 = vsub.f32 %v4432, %v4517
      %v4605 = vsub.f32 %v4345, %v4520
      %v4606 = vsub.f32 %v4434, %v4520
      %v4607 = vsub.f32 %v4348, %v4523
      %v4608 = vsub.f32 %v4437, %v4523
      %v4609 = vsub.f32 %v4350, %v4526
      %v4610 = vsub.f32 %v4439, %v4526
      %v4611 = vsub.f32 %v4353, %v4529
      %v4612 = vsub.f32 %v4442, %v4529
      %v4613 = vsub.f32 %v4355, %v4532
      %v4614 = vsub.f32 %v4444, %v4532
      %v4615 = vsub.f32 %v4358, %v4535
      %v4616 = vsub.f32 %v4447, %v4535
      %v4617 = vsub.f32 %v4360, %v4538
      %v4618 = vsub.f32 %v4449, %v4538
      %v4619 = vsub.f32 %v4363, %v4541
      %v4620 = vsub.f32 %v4452, %v4541
      %v4621 = vsub.f32 %v4365, %v4544
      %v4622 = vsub.f32 %v4454, %v4544
      %v4623 = vsub.f32 %v4368, %v4547
      %v4624 = vsub.f32 %v4457, %v4547
      %v4625 = vsub.f32 %v4370, %v4550
      %v4626 = vsub.f32 %v4459, %v4550
      %v4627 = vsub.f32 %v4373, %v4553
      %v4628 = vsub.f32 %v4462, %v4553
      %v4629 = vsub.f32 %v4375, %v4556
      %v4630 = vsub.f32 %v4464, %v4556
      %v4631 = vsub.f32 %v4378, %v4559
      %v4632 = vsub.f32 %v4467, %v4559
      %v4633 = vsub.f32 %v4380, %v4562
      %v4634 = vsub.f32 %v4469, %v4562
      %v4635 = vsub.f32 %v4383, %v4565
      %v4636 = vsub.f32 %v4472, %v4565
      %v4637 = vsub.f32 %v4385, %v4568
      %v4638 = vsub.f32 %v4474, %v4568
      %v4639 = vsub.f32 %v4388, %v4571
      %v4640 = vsub.f32 %v4477, %v4571
      %v4641 = vsub.f32 %v4390, %v4574
      %v4642 = vsub.f32 %v4479, %v4574
      %v4643 = vsub.f32 %v4393, %v4577
      %v4644 = vsub.f32 %v4482, %v4577
      %v4645 = vsub.f32 %v4395, %v4580
      %v4646 = vsub.f32 %v4484, %v4580
      %v4647 = vsub.f32 %v4398, %v4583
      %v4648 = vsub.f32 %v4487, %v4583
      %v4649 = vsub.f32 %v4400, %v4586
      %v4650 = vsub.f32 %v4489, %v4586
      %v4651 = vmul.f32 %v4587, 1.442695
      %v4652 = vpow.pop %v4651
      %v4653 = vmul.f32 %v4588, 1.442695
      %v4654 = vpow.pop %v4653
      %v4655 = vmul.f32 %v4589, 1.442695
      %v4656 = vpow.pop %v4655
      %v4657 = vmul.f32 %v4590, 1.442695
      %v4658 = vpow.pop %v4657
      %v4659 = vmul.f32 %v4591, 1.442695
      %v4660 = vpow.pop %v4659
      %v4661 = vmul.f32 %v4592, 1.442695
      %v4662 = vpow.pop %v4661
      %v4663 = vmul.f32 %v4593, 1.442695
      %v4664 = vpow.pop %v4663
      %v4665 = vmul.f32 %v4594, 1.442695
      %v4666 = vpow.pop %v4665
      %v4667 = vmul.f32 %v4595, 1.442695
      %v4668 = vpow.pop %v4667
      %v4669 = vmul.f32 %v4596, 1.442695
      %v4670 = vpow.pop %v4669
      %v4671 = vmul.f32 %v4597, 1.442695
      %v4672 = vpow.pop %v4671
      %v4673 = vmul.f32 %v4598, 1.442695
      %v4674 = vpow.pop %v4673
      %v4675 = vmul.f32 %v4599, 1.442695
      %v4676 = vpow.pop %v4675
      %v4677 = vmul.f32 %v4600, 1.442695
      %v4678 = vpow.pop %v4677
      %v4679 = vmul.f32 %v4601, 1.442695
      %v4680 = vpow.pop %v4679
      %v4681 = vmul.f32 %v4602, 1.442695
      %v4682 = vpow.pop %v4681
      %v4683 = vmul.f32 %v4603, 1.442695
      %v4684 = vpow.pop %v4683
      %v4685 = vmul.f32 %v4604, 1.442695
      %v4686 = vpow.pop %v4685
      %v4687 = vmul.f32 %v4605, 1.442695
      %v4688 = vpow.pop %v4687
      %v4689 = vmul.f32 %v4606, 1.442695
      %v4690 = vpow.pop %v4689
      %v4691 = vmul.f32 %v4607, 1.442695
      %v4692 = vpow.pop %v4691
      %v4693 = vmul.f32 %v4608, 1.442695
      %v4694 = vpow.pop %v4693
      %v4695 = vmul.f32 %v4609, 1.442695
      %v4696 = vpow.pop %v4695
      %v4697 = vmul.f32 %v4610, 1.442695
      %v4698 = vpow.pop %v4697
      %v4699 = vmul.f32 %v4611, 1.442695
      %v4700 = vpow.pop %v4699
      %v4701 = vmul.f32 %v4612, 1.442695
      %v4702 = vpow.pop %v4701
      %v4703 = vmul.f32 %v4613, 1.442695
      %v4704 = vpow.pop %v4703
      %v4705 = vmul.f32 %v4614, 1.442695
      %v4706 = vpow.pop %v4705
      %v4707 = vmul.f32 %v4615, 1.442695
      %v4708 = vpow.pop %v4707
      %v4709 = vmul.f32 %v4616, 1.442695
      %v4710 = vpow.pop %v4709
      %v4711 = vmul.f32 %v4617, 1.442695
      %v4712 = vpow.pop %v4711
      %v4713 = vmul.f32 %v4618, 1.442695
      %v4714 = vpow.pop %v4713
      %v4715 = vmul.f32 %v4619, 1.442695
      %v4716 = vpow.pop %v4715
      %v4717 = vmul.f32 %v4620, 1.442695
      %v4718 = vpow.pop %v4717
      %v4719 = vmul.f32 %v4621, 1.442695
      %v4720 = vpow.pop %v4719
      %v4721 = vmul.f32 %v4622, 1.442695
      %v4722 = vpow.pop %v4721
      %v4723 = vmul.f32 %v4623, 1.442695
      %v4724 = vpow.pop %v4723
      %v4725 = vmul.f32 %v4624, 1.442695
      %v4726 = vpow.pop %v4725
      %v4727 = vmul.f32 %v4625, 1.442695
      %v4728 = vpow.pop %v4727
      %v4729 = vmul.f32 %v4626, 1.442695
      %v4730 = vpow.pop %v4729
      %v4731 = vmul.f32 %v4627, 1.442695
      %v4732 = vpow.pop %v4731
      %v4733 = vmul.f32 %v4628, 1.442695
      %v4734 = vpow.pop %v4733
      %v4735 = vmul.f32 %v4629, 1.442695
      %v4736 = vpow.pop %v4735
      %v4737 = vmul.f32 %v4630, 1.442695
      %v4738 = vpow.pop %v4737
      %v4739 = vmul.f32 %v4631, 1.442695
      %v4740 = vpow.pop %v4739
      %v4741 = vmul.f32 %v4632, 1.442695
      %v4742 = vpow.pop %v4741
      %v4743 = vmul.f32 %v4633, 1.442695
      %v4744 = vpow.pop %v4743
      %v4745 = vmul.f32 %v4634, 1.442695
      %v4746 = vpow.pop %v4745
      %v4747 = vmul.f32 %v4635, 1.442695
      %v4748 = vpow.pop %v4747
      %v4749 = vmul.f32 %v4636, 1.442695
      %v4750 = vpow.pop %v4749
      %v4751 = vmul.f32 %v4637, 1.442695
      %v4752 = vpow.pop %v4751
      %v4753 = vmul.f32 %v4638, 1.442695
      %v4754 = vpow.pop %v4753
      %v4755 = vmul.f32 %v4639, 1.442695
      %v4756 = vpow.pop %v4755
      %v4757 = vmul.f32 %v4640, 1.442695
      %v4758 = vpow.pop %v4757
      %v4759 = vmul.f32 %v4641, 1.442695
      %v4760 = vpow.pop %v4759
      %v4761 = vmul.f32 %v4642, 1.442695
      %v4762 = vpow.pop %v4761
      %v4763 = vmul.f32 %v4643, 1.442695
      %v4764 = vpow.pop %v4763
      %v4765 = vmul.f32 %v4644, 1.442695
      %v4766 = vpow.pop %v4765
      %v4767 = vmul.f32 %v4645, 1.442695
      %v4768 = vpow.pop %v4767
      %v4769 = vmul.f32 %v4646, 1.442695
      %v4770 = vpow.pop %v4769
      %v4771 = vmul.f32 %v4647, 1.442695
      %v4772 = vpow.pop %v4771
      %v4773 = vmul.f32 %v4648, 1.442695
      %v4774 = vpow.pop %v4773
      %v4775 = vmul.f32 %v4649, 1.442695
      %v4776 = vpow.pop %v4775
      %v4777 = vmul.f32 %v4650, 1.442695
      %v4778 = vpow.pop %v4777
      %v4779 = vadd.f32 %v4652, %v4654
      %4780 = vadd.xlane.f32.xlu0 %v4779
      %v4781 = vpop.xlane.xlu0 %4780
      %v4782 = vadd.f32 %v4656, %v4658
      %4783 = vadd.xlane.f32.xlu0 %v4782
      %v4784 = vpop.xlane.xlu0 %4783
      %v4785 = vadd.f32 %v4660, %v4662
      %4786 = vadd.xlane.f32.xlu0 %v4785
      %v4787 = vpop.xlane.xlu0 %4786
      %v4788 = vadd.f32 %v4664, %v4666
      %4789 = vadd.xlane.f32.xlu0 %v4788
      %v4790 = vpop.xlane.xlu0 %4789
      %v4791 = vadd.f32 %v4668, %v4670
      %4792 = vadd.xlane.f32.xlu0 %v4791
      %v4793 = vpop.xlane.xlu0 %4792
      %v4794 = vadd.f32 %v4672, %v4674
      %4795 = vadd.xlane.f32.xlu0 %v4794
      %v4796 = vpop.xlane.xlu0 %4795
      %v4797 = vadd.f32 %v4676, %v4678
      %4798 = vadd.xlane.f32.xlu0 %v4797
      %v4799 = vpop.xlane.xlu0 %4798
      %v4800 = vadd.f32 %v4680, %v4682
      %4801 = vadd.xlane.f32.xlu0 %v4800
      %v4802 = vpop.xlane.xlu0 %4801
      %v4803 = vadd.f32 %v4684, %v4686
      %4804 = vadd.xlane.f32.xlu0 %v4803
      %v4805 = vpop.xlane.xlu0 %4804
      %v4806 = vadd.f32 %v4688, %v4690
      %4807 = vadd.xlane.f32.xlu0 %v4806
      %v4808 = vpop.xlane.xlu0 %4807
      %v4809 = vadd.f32 %v4692, %v4694
      %4810 = vadd.xlane.f32.xlu0 %v4809
      %v4811 = vpop.xlane.xlu0 %4810
      %v4812 = vadd.f32 %v4696, %v4698
      %4813 = vadd.xlane.f32.xlu0 %v4812
      %v4814 = vpop.xlane.xlu0 %4813
      %v4815 = vadd.f32 %v4700, %v4702
      %4816 = vadd.xlane.f32.xlu0 %v4815
      %v4817 = vpop.xlane.xlu0 %4816
      %v4818 = vadd.f32 %v4704, %v4706
      %4819 = vadd.xlane.f32.xlu0 %v4818
      %v4820 = vpop.xlane.xlu0 %4819
      %v4821 = vadd.f32 %v4708, %v4710
      %4822 = vadd.xlane.f32.xlu0 %v4821
      %v4823 = vpop.xlane.xlu0 %4822
      %v4824 = vadd.f32 %v4712, %v4714
      %4825 = vadd.xlane.f32.xlu0 %v4824
      %v4826 = vpop.xlane.xlu0 %4825
      %v4827 = vadd.f32 %v4716, %v4718
      %4828 = vadd.xlane.f32.xlu0 %v4827
      %v4829 = vpop.xlane.xlu0 %4828
      %v4830 = vadd.f32 %v4720, %v4722
      %4831 = vadd.xlane.f32.xlu0 %v4830
      %v4832 = vpop.xlane.xlu0 %4831
      %v4833 = vadd.f32 %v4724, %v4726
      %4834 = vadd.xlane.f32.xlu0 %v4833
      %v4835 = vpop.xlane.xlu0 %4834
      %v4836 = vadd.f32 %v4728, %v4730
      %4837 = vadd.xlane.f32.xlu0 %v4836
      %v4838 = vpop.xlane.xlu0 %4837
      %v4839 = vadd.f32 %v4732, %v4734
      %4840 = vadd.xlane.f32.xlu0 %v4839
      %v4841 = vpop.xlane.xlu0 %4840
      %v4842 = vadd.f32 %v4736, %v4738
      %4843 = vadd.xlane.f32.xlu0 %v4842
      %v4844 = vpop.xlane.xlu0 %4843
      %v4845 = vadd.f32 %v4740, %v4742
      %4846 = vadd.xlane.f32.xlu0 %v4845
      %v4847 = vpop.xlane.xlu0 %4846
      %v4848 = vadd.f32 %v4744, %v4746
      %4849 = vadd.xlane.f32.xlu0 %v4848
      %v4850 = vpop.xlane.xlu0 %4849
      %v4851 = vadd.f32 %v4748, %v4750
      %4852 = vadd.xlane.f32.xlu0 %v4851
      %v4853 = vpop.xlane.xlu0 %4852
      %v4854 = vadd.f32 %v4752, %v4754
      %4855 = vadd.xlane.f32.xlu0 %v4854
      %v4856 = vpop.xlane.xlu0 %4855
      %v4857 = vadd.f32 %v4756, %v4758
      %4858 = vadd.xlane.f32.xlu0 %v4857
      %v4859 = vpop.xlane.xlu0 %4858
      %v4860 = vadd.f32 %v4760, %v4762
      %4861 = vadd.xlane.f32.xlu0 %v4860
      %v4862 = vpop.xlane.xlu0 %4861
      %v4863 = vadd.f32 %v4764, %v4766
      %4864 = vadd.xlane.f32.xlu0 %v4863
      %v4865 = vpop.xlane.xlu0 %4864
      %v4866 = vadd.f32 %v4768, %v4770
      %4867 = vadd.xlane.f32.xlu0 %v4866
      %v4868 = vpop.xlane.xlu0 %4867
      %v4869 = vadd.f32 %v4772, %v4774
      %4870 = vadd.xlane.f32.xlu0 %v4869
      %v4871 = vpop.xlane.xlu0 %4870
      %v4872 = vadd.f32 %v4776, %v4778
      %4873 = vadd.xlane.f32.xlu0 %v4872
      %v4874 = vpop.xlane.xlu0 %4873
      %v4875 = vrcp.pop %v4781
      %v4876 = vrcp.pop %v4784
      %v4877 = vrcp.pop %v4787
      %v4878 = vrcp.pop %v4790
      %v4879 = vrcp.pop %v4793
      %v4880 = vrcp.pop %v4796
      %v4881 = vrcp.pop %v4799
      %v4882 = vrcp.pop %v4802
      %v4883 = vrcp.pop %v4805
      %v4884 = vrcp.pop %v4808
      %v4885 = vrcp.pop %v4811
      %v4886 = vrcp.pop %v4814
      %v4887 = vrcp.pop %v4817
      %v4888 = vrcp.pop %v4820
      %v4889 = vrcp.pop %v4823
      %v4890 = vrcp.pop %v4826
      %v4891 = vrcp.pop %v4829
      %v4892 = vrcp.pop %v4832
      %v4893 = vrcp.pop %v4835
      %v4894 = vrcp.pop %v4838
      %v4895 = vrcp.pop %v4841
      %v4896 = vrcp.pop %v4844
      %v4897 = vrcp.pop %v4847
      %v4898 = vrcp.pop %v4850
      %v4899 = vrcp.pop %v4853
      %v4900 = vrcp.pop %v4856
      %v4901 = vrcp.pop %v4859
      %v4902 = vrcp.pop %v4862
      %v4903 = vrcp.pop %v4865
      %v4904 = vrcp.pop %v4868
      %v4905 = vrcp.pop %v4871
      %v4906 = vrcp.pop %v4874
      %v4907 = vmul.f32 %v4652, %v4875
      %v4908 = vmul.f32 %v4654, %v4875
      %v4909 = vmul.f32 %v4656, %v4876
      %v4910 = vmul.f32 %v4658, %v4876
      %v4911 = vmul.f32 %v4660, %v4877
      %v4912 = vmul.f32 %v4662, %v4877
      %v4913 = vmul.f32 %v4664, %v4878
      %v4914 = vmul.f32 %v4666, %v4878
      %v4915 = vmul.f32 %v4668, %v4879
      %v4916 = vmul.f32 %v4670, %v4879
      %v4917 = vmul.f32 %v4672, %v4880
      %v4918 = vmul.f32 %v4674, %v4880
      %v4919 = vmul.f32 %v4676, %v4881
      %v4920 = vmul.f32 %v4678, %v4881
      %v4921 = vmul.f32 %v4680, %v4882
      %v4922 = vmul.f32 %v4682, %v4882
      %v4923 = vmul.f32 %v4684, %v4883
      %v4924 = vmul.f32 %v4686, %v4883
      %v4925 = vmul.f32 %v4688, %v4884
      %v4926 = vmul.f32 %v4690, %v4884
      %v4927 = vmul.f32 %v4692, %v4885
      %v4928 = vmul.f32 %v4694, %v4885
      %v4929 = vmul.f32 %v4696, %v4886
      %v4930 = vmul.f32 %v4698, %v4886
      %v4931 = vmul.f32 %v4700, %v4887
      %v4932 = vmul.f32 %v4702, %v4887
      %v4933 = vmul.f32 %v4704, %v4888
      %v4934 = vmul.f32 %v4706, %v4888
      %v4935 = vmul.f32 %v4708, %v4889
      %v4936 = vmul.f32 %v4710, %v4889
      %v4937 = vmul.f32 %v4712, %v4890
      %v4938 = vmul.f32 %v4714, %v4890
      %v4939 = vmul.f32 %v4716, %v4891
      %v4940 = vmul.f32 %v4718, %v4891
      %v4941 = vmul.f32 %v4720, %v4892
      %v4942 = vmul.f32 %v4722, %v4892
      %v4943 = vmul.f32 %v4724, %v4893
      %v4944 = vmul.f32 %v4726, %v4893
      %v4945 = vmul.f32 %v4728, %v4894
      %v4946 = vmul.f32 %v4730, %v4894
      %v4947 = vmul.f32 %v4732, %v4895
      %v4948 = vmul.f32 %v4734, %v4895
      %v4949 = vmul.f32 %v4736, %v4896
      %v4950 = vmul.f32 %v4738, %v4896
      %v4951 = vmul.f32 %v4740, %v4897
      %v4952 = vmul.f32 %v4742, %v4897
      %v4953 = vmul.f32 %v4744, %v4898
      %v4954 = vmul.f32 %v4746, %v4898
      %v4955 = vmul.f32 %v4748, %v4899
      %v4956 = vmul.f32 %v4750, %v4899
      %v4957 = vmul.f32 %v4752, %v4900
      %v4958 = vmul.f32 %v4754, %v4900
      %v4959 = vmul.f32 %v4756, %v4901
      %v4960 = vmul.f32 %v4758, %v4901
      %v4961 = vmul.f32 %v4760, %v4902
      %v4962 = vmul.f32 %v4762, %v4902
      %v4963 = vmul.f32 %v4764, %v4903
      %v4964 = vmul.f32 %v4766, %v4903
      %v4965 = vmul.f32 %v4768, %v4904
      %v4966 = vmul.f32 %v4770, %v4904
      %v4967 = vmul.f32 %v4772, %v4905
      %v4968 = vmul.f32 %v4774, %v4905
      %v4969 = vmul.f32 %v4776, %v4906
      %v4970 = vmul.f32 %v4778, %v4906
      %v4971 = vpack.c.bf16 %v4909, %v4907
      %v4972 = vpack.c.bf16 %v4910, %v4908
      %v4973 = vpack.c.bf16 %v4913, %v4911
      %v4974 = vpack.c.bf16 %v4914, %v4912
      %v4975 = vpack.c.bf16 %v4917, %v4915
      %v4976 = vpack.c.bf16 %v4918, %v4916
      %v4977 = vpack.c.bf16 %v4921, %v4919
      %v4978 = vpack.c.bf16 %v4922, %v4920
      %v4979 = vpack.c.bf16 %v4925, %v4923
      %v4980 = vpack.c.bf16 %v4926, %v4924
      %v4981 = vpack.c.bf16 %v4929, %v4927
      %v4982 = vpack.c.bf16 %v4930, %v4928
      %v4983 = vpack.c.bf16 %v4933, %v4931
      %v4984 = vpack.c.bf16 %v4934, %v4932
      %v4985 = vpack.c.bf16 %v4937, %v4935
      %v4986 = vpack.c.bf16 %v4938, %v4936
      %v4987 = vpack.c.bf16 %v4941, %v4939
      %v4988 = vpack.c.bf16 %v4942, %v4940
      %v4989 = vpack.c.bf16 %v4945, %v4943
      %v4990 = vpack.c.bf16 %v4946, %v4944
      %v4991 = vpack.c.bf16 %v4949, %v4947
      %v4992 = vpack.c.bf16 %v4950, %v4948
      %v4993 = vpack.c.bf16 %v4953, %v4951
      %v4994 = vpack.c.bf16 %v4954, %v4952
      %v4995 = vpack.c.bf16 %v4957, %v4955
      %v4996 = vpack.c.bf16 %v4958, %v4956
      %v4997 = vpack.c.bf16 %v4961, %v4959
      %v4998 = vpack.c.bf16 %v4962, %v4960
      %v4999 = vpack.c.bf16 %v4965, %v4963
      %v5000 = vpack.c.bf16 %v4966, %v4964
      %v5001 = vpack.c.bf16 %v4969, %v4967
      %v5002 = vpack.c.bf16 %v4970, %v4968
      %5003 = vrot.lane.b32.xlu0 %v761, 16
      %v5004 = vpop.permute.xlu0 %5003
      %5005 = vrot.lane.b32.xlu0 %v762, 16
      %v5006 = vpop.permute.xlu0 %5005
      %5007 = vrot.lane.b32.xlu0 %v763, 16
      %v5008 = vpop.permute.xlu0 %5007
      %5009 = vrot.lane.b32.xlu0 %v764, 16
      %v5010 = vpop.permute.xlu0 %5009
      %5011 = vrot.lane.b32.xlu0 %v765, 16
      %v5012 = vpop.permute.xlu0 %5011
      %5013 = vrot.lane.b32.xlu0 %v766, 16
      %v5014 = vpop.permute.xlu0 %5013
      %5015 = vrot.lane.b32.xlu0 %v767, 16
      %v5016 = vpop.permute.xlu0 %5015
      %5017 = vrot.lane.b32.xlu0 %v768, 16
      %v5018 = vpop.permute.xlu0 %5017
      %5019 = vrot.lane.b32.xlu0 %v769, 16
      %v5020 = vpop.permute.xlu0 %5019
      %5021 = vrot.lane.b32.xlu0 %v770, 16
      %v5022 = vpop.permute.xlu0 %5021
      %5023 = vrot.lane.b32.xlu0 %v771, 16
      %v5024 = vpop.permute.xlu0 %5023
      %5025 = vrot.lane.b32.xlu0 %v772, 16
      %v5026 = vpop.permute.xlu0 %5025
      %5027 = vrot.lane.b32.xlu0 %v773, 16
      %v5028 = vpop.permute.xlu0 %5027
      %5029 = vrot.lane.b32.xlu0 %v774, 16
      %v5030 = vpop.permute.xlu0 %5029
      %5031 = vrot.lane.b32.xlu0 %v775, 16
      %v5032 = vpop.permute.xlu0 %5031
      %5033 = vrot.lane.b32.xlu0 %v776, 16
      %v5034 = vpop.permute.xlu0 %5033
      %5051 = vmatpush.bf16.msra.mxu0 %v5018
      %5052 = vmatpush.bf16.msra.mxu0 %v5016
      %5053 = vmatpush.bf16.msra.mxu0 %v5014
      %5054 = vmatpush.bf16.msra.mxu0 %v5012
      %5055 = vmatpush.bf16.msra.mxu0 %v5010
      %5056 = vmatpush.bf16.msra.mxu0 %v5008
      %5057 = vmatpush.bf16.msra.mxu0 %v5006
      %5058 = vmatpush.bf16.msra.mxu0 %v5004
      %5059 = vmatmul.bf16.gmra.mxu0 %v4971
      %v5060 = vpop.f32.mrf.mxu0
      %v5061 = vadd.f32 0.0, %v5060
      %v5062 = vpop.f32.mrf.mxu0
      %v5063 = vadd.f32 0.0, %v5062
      %5064 = vmatmul.bf16.gmra.mxu0 %v4973
      %v5065 = vpop.f32.mrf.mxu0
      %v5066 = vadd.f32 0.0, %v5065
      %v5067 = vpop.f32.mrf.mxu0
      %v5068 = vadd.f32 0.0, %v5067
      %5069 = vmatmul.bf16.gmra.mxu0 %v4975
      %v5070 = vpop.f32.mrf.mxu0
      %v5071 = vadd.f32 0.0, %v5070
      %v5072 = vpop.f32.mrf.mxu0
      %v5073 = vadd.f32 0.0, %v5072
      %5074 = vmatmul.bf16.gmra.mxu0 %v4977
      %v5075 = vpop.f32.mrf.mxu0
      %v5076 = vadd.f32 0.0, %v5075
      %v5077 = vpop.f32.mrf.mxu0
      %v5078 = vadd.f32 0.0, %v5077
      %5079 = vmatmul.bf16.gmra.mxu0 %v4979
      %v5080 = vpop.f32.mrf.mxu0
      %v5081 = vadd.f32 0.0, %v5080
      %v5082 = vpop.f32.mrf.mxu0
      %v5083 = vadd.f32 0.0, %v5082
      %5084 = vmatmul.bf16.gmra.mxu0 %v4981
      %v5085 = vpop.f32.mrf.mxu0
      %v5086 = vadd.f32 0.0, %v5085
      %v5087 = vpop.f32.mrf.mxu0
      %v5088 = vadd.f32 0.0, %v5087
      %5089 = vmatmul.bf16.gmra.mxu0 %v4983
      %v5090 = vpop.f32.mrf.mxu0
      %v5091 = vadd.f32 0.0, %v5090
      %v5092 = vpop.f32.mrf.mxu0
      %v5093 = vadd.f32 0.0, %v5092
      %5094 = vmatmul.bf16.gmra.mxu0 %v4985
      %v5095 = vpop.f32.mrf.mxu0
      %v5096 = vadd.f32 0.0, %v5095
      %v5097 = vpop.f32.mrf.mxu0
      %v5098 = vadd.f32 0.0, %v5097
      %5099 = vmatmul.bf16.gmra.mxu0 %v4987
      %v5100 = vpop.f32.mrf.mxu0
      %v5101 = vadd.f32 0.0, %v5100
      %v5102 = vpop.f32.mrf.mxu0
      %v5103 = vadd.f32 0.0, %v5102
      %5104 = vmatmul.bf16.gmra.mxu0 %v4989
      %v5105 = vpop.f32.mrf.mxu0
      %v5106 = vadd.f32 0.0, %v5105
      %v5107 = vpop.f32.mrf.mxu0
      %v5108 = vadd.f32 0.0, %v5107
      %5109 = vmatmul.bf16.gmra.mxu0 %v4991
      %v5110 = vpop.f32.mrf.mxu0
      %v5111 = vadd.f32 0.0, %v5110
      %v5112 = vpop.f32.mrf.mxu0
      %v5113 = vadd.f32 0.0, %v5112
      %5114 = vmatmul.bf16.gmra.mxu0 %v4993
      %v5115 = vpop.f32.mrf.mxu0
      %v5116 = vadd.f32 0.0, %v5115
      %v5117 = vpop.f32.mrf.mxu0
      %v5118 = vadd.f32 0.0, %v5117
      %5119 = vmatmul.bf16.gmra.mxu0 %v4995
      %v5120 = vpop.f32.mrf.mxu0
      %v5121 = vadd.f32 0.0, %v5120
      %v5122 = vpop.f32.mrf.mxu0
      %v5123 = vadd.f32 0.0, %v5122
      %5124 = vmatmul.bf16.gmra.mxu0 %v4997
      %v5125 = vpop.f32.mrf.mxu0
      %v5126 = vadd.f32 0.0, %v5125
      %v5127 = vpop.f32.mrf.mxu0
      %v5128 = vadd.f32 0.0, %v5127
      %5129 = vmatmul.bf16.gmra.mxu0 %v4999
      %v5130 = vpop.f32.mrf.mxu0
      %v5131 = vadd.f32 0.0, %v5130
      %v5132 = vpop.f32.mrf.mxu0
      %v5133 = vadd.f32 0.0, %v5132
      %5134 = vmatmul.bf16.gmra.mxu0 %v5001
      %v5135 = vpop.f32.mrf.mxu0
      %v5136 = vadd.f32 0.0, %v5135
      %v5137 = vpop.f32.mrf.mxu0
      %v5138 = vadd.f32 0.0, %v5137
      %5139 = vdwg.mxu0
      %5140 = vmatpush.bf16.msra.mxu0 %v5034
      %5141 = vmatpush.bf16.msra.mxu0 %v5032
      %5142 = vmatpush.bf16.msra.mxu0 %v5030
      %5143 = vmatpush.bf16.msra.mxu0 %v5028
      %5144 = vmatpush.bf16.msra.mxu0 %v5026
      %5145 = vmatpush.bf16.msra.mxu0 %v5024
      %5146 = vmatpush.bf16.msra.mxu0 %v5022
      %5147 = vmatpush.bf16.msra.mxu0 %v5020
      %5148 = vmatmul.bf16.gmra.mxu0 %v4972
      %v5149 = vpop.f32.mrf.mxu0
      %v5150 = vadd.f32 %v5061, %v5149
      %v5151 = vpop.f32.mrf.mxu0
      %v5152 = vadd.f32 %v5063, %v5151
      %5153 = vmatmul.bf16.gmra.mxu0 %v4974
      %v5154 = vpop.f32.mrf.mxu0
      %v5155 = vadd.f32 %v5066, %v5154
      %v5156 = vpop.f32.mrf.mxu0
      %v5157 = vadd.f32 %v5068, %v5156
      %5158 = vmatmul.bf16.gmra.mxu0 %v4976
      %v5159 = vpop.f32.mrf.mxu0
      %v5160 = vadd.f32 %v5071, %v5159
      %v5161 = vpop.f32.mrf.mxu0
      %v5162 = vadd.f32 %v5073, %v5161
      %5163 = vmatmul.bf16.gmra.mxu0 %v4978
      %v5164 = vpop.f32.mrf.mxu0
      %v5165 = vadd.f32 %v5076, %v5164
      %v5166 = vpop.f32.mrf.mxu0
      %v5167 = vadd.f32 %v5078, %v5166
      %5168 = vmatmul.bf16.gmra.mxu0 %v4980
      %v5169 = vpop.f32.mrf.mxu0
      %v5170 = vadd.f32 %v5081, %v5169
      %v5171 = vpop.f32.mrf.mxu0
      %v5172 = vadd.f32 %v5083, %v5171
      %5173 = vmatmul.bf16.gmra.mxu0 %v4982
      %v5174 = vpop.f32.mrf.mxu0
      %v5175 = vadd.f32 %v5086, %v5174
      %v5176 = vpop.f32.mrf.mxu0
      %v5177 = vadd.f32 %v5088, %v5176
      %5178 = vmatmul.bf16.gmra.mxu0 %v4984
      %v5179 = vpop.f32.mrf.mxu0
      %v5180 = vadd.f32 %v5091, %v5179
      %v5181 = vpop.f32.mrf.mxu0
      %v5182 = vadd.f32 %v5093, %v5181
      %5183 = vmatmul.bf16.gmra.mxu0 %v4986
      %v5184 = vpop.f32.mrf.mxu0
      %v5185 = vadd.f32 %v5096, %v5184
      %v5186 = vpop.f32.mrf.mxu0
      %v5187 = vadd.f32 %v5098, %v5186
      %5188 = vmatmul.bf16.gmra.mxu0 %v4988
      %v5189 = vpop.f32.mrf.mxu0
      %v5190 = vadd.f32 %v5101, %v5189
      %v5191 = vpop.f32.mrf.mxu0
      %v5192 = vadd.f32 %v5103, %v5191
      %5193 = vmatmul.bf16.gmra.mxu0 %v4990
      %v5194 = vpop.f32.mrf.mxu0
      %v5195 = vadd.f32 %v5106, %v5194
      %v5196 = vpop.f32.mrf.mxu0
      %v5197 = vadd.f32 %v5108, %v5196
      %5198 = vmatmul.bf16.gmra.mxu0 %v4992
      %v5199 = vpop.f32.mrf.mxu0
      %v5200 = vadd.f32 %v5111, %v5199
      %v5201 = vpop.f32.mrf.mxu0
      %v5202 = vadd.f32 %v5113, %v5201
      %5203 = vmatmul.bf16.gmra.mxu0 %v4994
      %v5204 = vpop.f32.mrf.mxu0
      %v5205 = vadd.f32 %v5116, %v5204
      %v5206 = vpop.f32.mrf.mxu0
      %v5207 = vadd.f32 %v5118, %v5206
      %5208 = vmatmul.bf16.gmra.mxu0 %v4996
      %v5209 = vpop.f32.mrf.mxu0
      %v5210 = vadd.f32 %v5121, %v5209
      %v5211 = vpop.f32.mrf.mxu0
      %v5212 = vadd.f32 %v5123, %v5211
      %5213 = vmatmul.bf16.gmra.mxu0 %v4998
      %v5214 = vpop.f32.mrf.mxu0
      %v5215 = vadd.f32 %v5126, %v5214
      %v5216 = vpop.f32.mrf.mxu0
      %v5217 = vadd.f32 %v5128, %v5216
      %5218 = vmatmul.bf16.gmra.mxu0 %v5000
      %v5219 = vpop.f32.mrf.mxu0
      %v5220 = vadd.f32 %v5131, %v5219
      %v5221 = vpop.f32.mrf.mxu0
      %v5222 = vadd.f32 %v5133, %v5221
      %5223 = vmatmul.bf16.gmra.mxu0 %v5002
      %v5224 = vpop.f32.mrf.mxu0
      %v5225 = vadd.f32 %v5136, %v5224
      %v5226 = vpop.f32.mrf.mxu0
      %v5227 = vadd.f32 %v5138, %v5226
      %5228 = vdwg.mxu0
      %5261 = vrot.lane.b32.xlu0 %v2868, 16
      %v5262 = vpop.permute.xlu0 %5261
      %5263 = vrot.lane.b32.xlu0 %v2870, 16
      %v5264 = vpop.permute.xlu0 %5263
      %5265 = vrot.lane.b32.xlu0 %v2873, 16
      %v5266 = vpop.permute.xlu0 %5265
      %5267 = vrot.lane.b32.xlu0 %v2875, 16
      %v5268 = vpop.permute.xlu0 %5267
      %5269 = vrot.lane.b32.xlu0 %v2878, 16
      %v5270 = vpop.permute.xlu0 %5269
      %5271 = vrot.lane.b32.xlu0 %v2880, 16
      %v5272 = vpop.permute.xlu0 %5271
      %5273 = vrot.lane.b32.xlu0 %v2883, 16
      %v5274 = vpop.permute.xlu0 %5273
      %5275 = vrot.lane.b32.xlu0 %v2885, 16
      %v5276 = vpop.permute.xlu0 %5275
      %5277 = vrot.lane.b32.xlu0 %v2888, 16
      %v5278 = vpop.permute.xlu0 %5277
      %5279 = vrot.lane.b32.xlu0 %v2890, 16
      %v5280 = vpop.permute.xlu0 %5279
      %5281 = vrot.lane.b32.xlu0 %v2893, 16
      %v5282 = vpop.permute.xlu0 %5281
      %5283 = vrot.lane.b32.xlu0 %v2895, 16
      %v5284 = vpop.permute.xlu0 %5283
      %5285 = vrot.lane.b32.xlu0 %v2898, 16
      %v5286 = vpop.permute.xlu0 %5285
      %5287 = vrot.lane.b32.xlu0 %v2900, 16
      %v5288 = vpop.permute.xlu0 %5287
      %5289 = vrot.lane.b32.xlu0 %v2903, 16
      %v5290 = vpop.permute.xlu0 %5289
      %5291 = vrot.lane.b32.xlu0 %v2905, 16
      %v5292 = vpop.permute.xlu0 %5291
      %5293 = vrot.lane.b32.xlu0 %v2908, 16
      %v5294 = vpop.permute.xlu0 %5293
      %5295 = vrot.lane.b32.xlu0 %v2910, 16
      %v5296 = vpop.permute.xlu0 %5295
      %5297 = vrot.lane.b32.xlu0 %v2913, 16
      %v5298 = vpop.permute.xlu0 %5297
      %5299 = vrot.lane.b32.xlu0 %v2915, 16
      %v5300 = vpop.permute.xlu0 %5299
      %5301 = vrot.lane.b32.xlu0 %v2918, 16
      %v5302 = vpop.permute.xlu0 %5301
      %5303 = vrot.lane.b32.xlu0 %v2920, 16
      %v5304 = vpop.permute.xlu0 %5303
      %5305 = vrot.lane.b32.xlu0 %v2923, 16
      %v5306 = vpop.permute.xlu0 %5305
      %5307 = vrot.lane.b32.xlu0 %v2925, 16
      %v5308 = vpop.permute.xlu0 %5307
      %5309 = vrot.lane.b32.xlu0 %v2928, 16
      %v5310 = vpop.permute.xlu0 %5309
      %5311 = vrot.lane.b32.xlu0 %v2930, 16
      %v5312 = vpop.permute.xlu0 %5311
      %5313 = vrot.lane.b32.xlu0 %v2933, 16
      %v5314 = vpop.permute.xlu0 %5313
      %5315 = vrot.lane.b32.xlu0 %v2935, 16
      %v5316 = vpop.permute.xlu0 %5315
      %5317 = vrot.lane.b32.xlu0 %v2938, 16
      %v5318 = vpop.permute.xlu0 %5317
      %5319 = vrot.lane.b32.xlu0 %v2940, 16
      %v5320 = vpop.permute.xlu0 %5319
      %5321 = vrot.lane.b32.xlu0 %v2943, 16
      %v5322 = vpop.permute.xlu0 %5321
      %5323 = vrot.lane.b32.xlu0 %v2945, 16
      %v5324 = vpop.permute.xlu0 %5323
      %5389 = vrot.lane.b32.xlu0 %v4009, 32
      %v5390 = vpop.permute.xlu0 %5389
      %5391 = vrot.lane.b32.xlu0 %v4011, 32
      %v5392 = vpop.permute.xlu0 %5391
      %5393 = vrot.lane.b32.xlu0 %v4014, 32
      %v5394 = vpop.permute.xlu0 %5393
      %5395 = vrot.lane.b32.xlu0 %v4016, 32
      %v5396 = vpop.permute.xlu0 %5395
      %5397 = vrot.lane.b32.xlu0 %v4019, 32
      %v5398 = vpop.permute.xlu0 %5397
      %5399 = vrot.lane.b32.xlu0 %v4021, 32
      %v5400 = vpop.permute.xlu0 %5399
      %5401 = vrot.lane.b32.xlu0 %v4024, 32
      %v5402 = vpop.permute.xlu0 %5401
      %5403 = vrot.lane.b32.xlu0 %v4026, 32
      %v5404 = vpop.permute.xlu0 %5403
      %5405 = vrot.lane.b32.xlu0 %v4029, 32
      %v5406 = vpop.permute.xlu0 %5405
      %5407 = vrot.lane.b32.xlu0 %v4031, 32
      %v5408 = vpop.permute.xlu0 %5407
      %5409 = vrot.lane.b32.xlu0 %v4034, 32
      %v5410 = vpop.permute.xlu0 %5409
      %5411 = vrot.lane.b32.xlu0 %v4036, 32
      %v5412 = vpop.permute.xlu0 %5411
      %5413 = vrot.lane.b32.xlu0 %v4039, 32
      %v5414 = vpop.permute.xlu0 %5413
      %5415 = vrot.lane.b32.xlu0 %v4041, 32
      %v5416 = vpop.permute.xlu0 %5415
      %5417 = vrot.lane.b32.xlu0 %v4044, 32
      %v5418 = vpop.permute.xlu0 %5417
      %5419 = vrot.lane.b32.xlu0 %v4046, 32
      %v5420 = vpop.permute.xlu0 %5419
      %5421 = vrot.lane.b32.xlu0 %v4049, 32
      %v5422 = vpop.permute.xlu0 %5421
      %5423 = vrot.lane.b32.xlu0 %v4051, 32
      %v5424 = vpop.permute.xlu0 %5423
      %5425 = vrot.lane.b32.xlu0 %v4054, 32
      %v5426 = vpop.permute.xlu0 %5425
      %5427 = vrot.lane.b32.xlu0 %v4056, 32
      %v5428 = vpop.permute.xlu0 %5427
      %5429 = vrot.lane.b32.xlu0 %v4059, 32
      %v5430 = vpop.permute.xlu0 %5429
      %5431 = vrot.lane.b32.xlu0 %v4061, 32
      %v5432 = vpop.permute.xlu0 %5431
      %5433 = vrot.lane.b32.xlu0 %v4064, 32
      %v5434 = vpop.permute.xlu0 %5433
      %5435 = vrot.lane.b32.xlu0 %v4066, 32
      %v5436 = vpop.permute.xlu0 %5435
      %5437 = vrot.lane.b32.xlu0 %v4069, 32
      %v5438 = vpop.permute.xlu0 %5437
      %5439 = vrot.lane.b32.xlu0 %v4071, 32
      %v5440 = vpop.permute.xlu0 %5439
      %5441 = vrot.lane.b32.xlu0 %v4074, 32
      %v5442 = vpop.permute.xlu0 %5441
      %5443 = vrot.lane.b32.xlu0 %v4076, 32
      %v5444 = vpop.permute.xlu0 %5443
      %5445 = vrot.lane.b32.xlu0 %v4079, 32
      %v5446 = vpop.permute.xlu0 %5445
      %5447 = vrot.lane.b32.xlu0 %v4081, 32
      %v5448 = vpop.permute.xlu0 %5447
      %5449 = vrot.lane.b32.xlu0 %v4084, 32
      %v5450 = vpop.permute.xlu0 %5449
      %5451 = vrot.lane.b32.xlu0 %v4086, 32
      %v5452 = vpop.permute.xlu0 %5451
      %5517 = vrot.lane.b32.xlu0 %v5150, 48
      %v5518 = vpop.permute.xlu0 %5517
      %5519 = vrot.lane.b32.xlu0 %v5152, 48
      %v5520 = vpop.permute.xlu0 %5519
      %5521 = vrot.lane.b32.xlu0 %v5155, 48
      %v5522 = vpop.permute.xlu0 %5521
      %5523 = vrot.lane.b32.xlu0 %v5157, 48
      %v5524 = vpop.permute.xlu0 %5523
      %5525 = vrot.lane.b32.xlu0 %v5160, 48
      %v5526 = vpop.permute.xlu0 %5525
      %5527 = vrot.lane.b32.xlu0 %v5162, 48
      %v5528 = vpop.permute.xlu0 %5527
      %5529 = vrot.lane.b32.xlu0 %v5165, 48
      %v5530 = vpop.permute.xlu0 %5529
      %5531 = vrot.lane.b32.xlu0 %v5167, 48
      %v5532 = vpop.permute.xlu0 %5531
      %5533 = vrot.lane.b32.xlu0 %v5170, 48
      %v5534 = vpop.permute.xlu0 %5533
      %5535 = vrot.lane.b32.xlu0 %v5172, 48
      %v5536 = vpop.permute.xlu0 %5535
      %5537 = vrot.lane.b32.xlu0 %v5175, 48
      %v5538 = vpop.permute.xlu0 %5537
      %5539 = vrot.lane.b32.xlu0 %v5177, 48
      %v5540 = vpop.permute.xlu0 %5539
      %5541 = vrot.lane.b32.xlu0 %v5180, 48
      %v5542 = vpop.permute.xlu0 %5541
      %5543 = vrot.lane.b32.xlu0 %v5182, 48
      %v5544 = vpop.permute.xlu0 %5543
      %5545 = vrot.lane.b32.xlu0 %v5185, 48
      %v5546 = vpop.permute.xlu0 %5545
      %5547 = vrot.lane.b32.xlu0 %v5187, 48
      %v5548 = vpop.permute.xlu0 %5547
      %5549 = vrot.lane.b32.xlu0 %v5190, 48
      %v5550 = vpop.permute.xlu0 %5549
      %5551 = vrot.lane.b32.xlu0 %v5192, 48
      %v5552 = vpop.permute.xlu0 %5551
      %5553 = vrot.lane.b32.xlu0 %v5195, 48
      %v5554 = vpop.permute.xlu0 %5553
      %5555 = vrot.lane.b32.xlu0 %v5197, 48
      %v5556 = vpop.permute.xlu0 %5555
      %5557 = vrot.lane.b32.xlu0 %v5200, 48
      %v5558 = vpop.permute.xlu0 %5557
      %5559 = vrot.lane.b32.xlu0 %v5202, 48
      %v5560 = vpop.permute.xlu0 %5559
      %5561 = vrot.lane.b32.xlu0 %v5205, 48
      %v5562 = vpop.permute.xlu0 %5561
      %5563 = vrot.lane.b32.xlu0 %v5207, 48
      %v5564 = vpop.permute.xlu0 %5563
      %5565 = vrot.lane.b32.xlu0 %v5210, 48
      %v5566 = vpop.permute.xlu0 %5565
      %5567 = vrot.lane.b32.xlu0 %v5212, 48
      %v5568 = vpop.permute.xlu0 %5567
      %5569 = vrot.lane.b32.xlu0 %v5215, 48
      %v5570 = vpop.permute.xlu0 %5569
      %5571 = vrot.lane.b32.xlu0 %v5217, 48
      %v5572 = vpop.permute.xlu0 %5571
      %5573 = vrot.lane.b32.xlu0 %v5220, 48
      %v5574 = vpop.permute.xlu0 %5573
      %5575 = vrot.lane.b32.xlu0 %v5222, 48
      %v5576 = vpop.permute.xlu0 %5575
      %5577 = vrot.lane.b32.xlu0 %v5225, 48
      %v5578 = vpop.permute.xlu0 %5577
      %5579 = vrot.lane.b32.xlu0 %v5227, 48
      %v5580 = vpop.permute.xlu0 %5579
      %v5613 = vsel %vm777, %v1711, %v5262
      %v5614 = vsel %vm777, %v1713, %v5264
      %v5615 = vsel %vm777, %v1716, %v5266
      %v5616 = vsel %vm777, %v1718, %v5268
      %v5617 = vsel %vm777, %v1721, %v5270
      %v5618 = vsel %vm777, %v1723, %v5272
      %v5619 = vsel %vm777, %v1726, %v5274
      %v5620 = vsel %vm777, %v1728, %v5276
      %v5621 = vsel %vm777, %v1731, %v5278
      %v5622 = vsel %vm777, %v1733, %v5280
      %v5623 = vsel %vm777, %v1736, %v5282
      %v5624 = vsel %vm777, %v1738, %v5284
      %v5625 = vsel %vm777, %v1741, %v5286
      %v5626 = vsel %vm777, %v1743, %v5288
      %v5627 = vsel %vm777, %v1746, %v5290
      %v5628 = vsel %vm777, %v1748, %v5292
      %v5629 = vsel %vm777, %v1751, %v5294
      %v5630 = vsel %vm777, %v1753, %v5296
      %v5631 = vsel %vm777, %v1756, %v5298
      %v5632 = vsel %vm777, %v1758, %v5300
      %v5633 = vsel %vm777, %v1761, %v5302
      %v5634 = vsel %vm777, %v1763, %v5304
      %v5635 = vsel %vm777, %v1766, %v5306
      %v5636 = vsel %vm777, %v1768, %v5308
      %v5637 = vsel %vm777, %v1771, %v5310
      %v5638 = vsel %vm777, %v1773, %v5312
      %v5639 = vsel %vm777, %v1776, %v5314
      %v5640 = vsel %vm777, %v1778, %v5316
      %v5641 = vsel %vm777, %v1781, %v5318
      %v5642 = vsel %vm777, %v1783, %v5320
      %v5643 = vsel %vm777, %v1786, %v5322
      %v5644 = vsel %vm777, %v1788, %v5324
      %v5645 = vsel %vm415, %v5613, %v5390
      %v5646 = vsel %vm415, %v5614, %v5392
      %v5647 = vsel %vm415, %v5615, %v5394
      %v5648 = vsel %vm415, %v5616, %v5396
      %v5649 = vsel %vm415, %v5617, %v5398
      %v5650 = vsel %vm415, %v5618, %v5400
      %v5651 = vsel %vm415, %v5619, %v5402
      %v5652 = vsel %vm415, %v5620, %v5404
      %v5653 = vsel %vm415, %v5621, %v5406
      %v5654 = vsel %vm415, %v5622, %v5408
      %v5655 = vsel %vm415, %v5623, %v5410
      %v5656 = vsel %vm415, %v5624, %v5412
      %v5657 = vsel %vm415, %v5625, %v5414
      %v5658 = vsel %vm415, %v5626, %v5416
      %v5659 = vsel %vm415, %v5627, %v5418
      %v5660 = vsel %vm415, %v5628, %v5420
      %v5661 = vsel %vm415, %v5629, %v5422
      %v5662 = vsel %vm415, %v5630, %v5424
      %v5663 = vsel %vm415, %v5631, %v5426
      %v5664 = vsel %vm415, %v5632, %v5428
      %v5665 = vsel %vm415, %v5633, %v5430
      %v5666 = vsel %vm415, %v5634, %v5432
      %v5667 = vsel %vm415, %v5635, %v5434
      %v5668 = vsel %vm415, %v5636, %v5436
      %v5669 = vsel %vm415, %v5637, %v5438
      %v5670 = vsel %vm415, %v5638, %v5440
      %v5671 = vsel %vm415, %v5639, %v5442
      %v5672 = vsel %vm415, %v5640, %v5444
      %v5673 = vsel %vm415, %v5641, %v5446
      %v5674 = vsel %vm415, %v5642, %v5448
      %v5675 = vsel %vm415, %v5643, %v5450
      %v5676 = vsel %vm415, %v5644, %v5452
      %vm5677 = vcmask 392192
      %v5678 = vsel %vm5677, %v5645, %v5518
      %v5679 = vsel %vm5677, %v5646, %v5520
      %v5680 = vsel %vm5677, %v5647, %v5522
      %v5681 = vsel %vm5677, %v5648, %v5524
      %v5682 = vsel %vm5677, %v5649, %v5526
      %v5683 = vsel %vm5677, %v5650, %v5528
      %v5684 = vsel %vm5677, %v5651, %v5530
      %v5685 = vsel %vm5677, %v5652, %v5532
      %v5686 = vsel %vm5677, %v5653, %v5534
      %v5687 = vsel %vm5677, %v5654, %v5536
      %v5688 = vsel %vm5677, %v5655, %v5538
      %v5689 = vsel %vm5677, %v5656, %v5540
      %v5690 = vsel %vm5677, %v5657, %v5542
      %v5691 = vsel %vm5677, %v5658, %v5544
      %v5692 = vsel %vm5677, %v5659, %v5546
      %v5693 = vsel %vm5677, %v5660, %v5548
      %v5694 = vsel %vm5677, %v5661, %v5550
      %v5695 = vsel %vm5677, %v5662, %v5552
      %v5696 = vsel %vm5677, %v5663, %v5554
      %v5697 = vsel %vm5677, %v5664, %v5556
      %v5698 = vsel %vm5677, %v5665, %v5558
      %v5699 = vsel %vm5677, %v5666, %v5560
      %v5700 = vsel %vm5677, %v5667, %v5562
      %v5701 = vsel %vm5677, %v5668, %v5564
      %v5702 = vsel %vm5677, %v5669, %v5566
      %v5703 = vsel %vm5677, %v5670, %v5568
      %v5704 = vsel %vm5677, %v5671, %v5570
      %v5705 = vsel %vm5677, %v5672, %v5572
      %v5706 = vsel %vm5677, %v5673, %v5574
      %v5707 = vsel %vm5677, %v5674, %v5576
      %v5708 = vsel %vm5677, %v5675, %v5578
      %v5709 = vsel %vm5677, %v5676, %v5580
      %v5710 = vpack.c.bf16 %v5679, %v5678
      %v5711 = vpack.c.bf16 %v5681, %v5680
      %v5712 = vpack.c.bf16 %v5683, %v5682
      %v5713 = vpack.c.bf16 %v5685, %v5684
      %v5714 = vpack.c.bf16 %v5687, %v5686
      %v5715 = vpack.c.bf16 %v5689, %v5688
      %v5716 = vpack.c.bf16 %v5691, %v5690
      %v5717 = vpack.c.bf16 %v5693, %v5692
      %v5718 = vpack.c.bf16 %v5695, %v5694
      %v5719 = vpack.c.bf16 %v5697, %v5696
      %v5720 = vpack.c.bf16 %v5699, %v5698
      %v5721 = vpack.c.bf16 %v5701, %v5700
      %v5722 = vpack.c.bf16 %v5703, %v5702
      %v5723 = vpack.c.bf16 %v5705, %v5704
      %v5724 = vpack.c.bf16 %v5707, %v5706
      %v5725 = vpack.c.bf16 %v5709, %v5708
      %v5726 = vld [vmem:[%s6] sm:$0xf]
      %v5727 = vld [vmem:[%s6 + $0x4] sm:$0xf]
      %v5728 = vld [vmem:[%s6 + $0x8] sm:$0xf]
      %v5729 = vld [vmem:[%s6 + $0xc] sm:$0xf]
      %v5730 = vld [vmem:[%s6 + $0x10] sm:$0xf]
      %v5731 = vld [vmem:[%s6 + $0x14] sm:$0xf]
      %v5732 = vld [vmem:[%s6 + $0x18] sm:$0xf]
      %v5733 = vld [vmem:[%s6 + $0x1c] sm:$0xf]
      %v5734 = vld [vmem:[%s7] sm:$0x1]
      %v5736 = vperm.slane %v5734, 0
      %v5746 = vunpack.c.l.b16 %v5726
      %v5747 = vunpack.c.l.b16 %v5727
      %v5748 = vunpack.c.l.b16 %v5728
      %v5749 = vunpack.c.l.b16 %v5729
      %v5750 = vunpack.c.l.b16 %v5730
      %v5751 = vunpack.c.l.b16 %v5731
      %v5752 = vunpack.c.l.b16 %v5732
      %v5753 = vunpack.c.l.b16 %v5733
      %v5754 = vpack.c.b16 %v5747, %v5746
      %v5755 = vpack.c.b16 %v5749, %v5748
      %v5756 = vpack.c.b16 %v5751, %v5750
      %v5757 = vpack.c.b16 %v5753, %v5752
      %vm5762 = vcmask 523264
      %v5764 = vsel %vm5762, %v5710, 0
      %v5767 = vsel %vm5762, %v5711, 0
      %v5770 = vsel %vm5762, %v5712, 0
      %v5773 = vsel %vm5762, %v5713, 0
      %v5776 = vsel %vm5762, %v5714, 0
      %v5779 = vsel %vm5762, %v5715, 0
      %v5782 = vsel %vm5762, %v5716, 0
      %v5785 = vsel %vm5762, %v5717, 0
      %v5788 = vsel %vm5762, %v5718, 0
      %v5791 = vsel %vm5762, %v5719, 0
      %v5794 = vsel %vm5762, %v5720, 0
      %v5797 = vsel %vm5762, %v5721, 0
      %v5800 = vsel %vm5762, %v5722, 0
      %v5803 = vsel %vm5762, %v5723, 0
      %v5806 = vsel %vm5762, %v5724, 0
      %v5809 = vsel %vm5762, %v5725, 0
      %5811 = vmatpush.bf16.msra.mxu0 0
      %5812 = vmatpush.bf16.msra.mxu0 0
      %5813 = vmatpush.bf16.msra.mxu0 0
      %5814 = vmatpush.bf16.msra.mxu0 0
      %5815 = vmatpush.bf16.msra.mxu0 %v5757
      %5816 = vmatpush.bf16.msra.mxu0 %v5756
      %5817 = vmatpush.bf16.msra.mxu0 %v5755
      %5818 = vmatpush.bf16.msra.mxu0 %v5754
      %5819 = vmatmul.bf16.gmra.mxu0 %v5764
      %v5820 = vpop.f32.mrf.mxu0
      %v5821 = vadd.f32 %v5736, %v5820
      %v5822 = vpop.f32.mrf.mxu0
      %v5823 = vadd.f32 %v5736, %v5822
      %5824 = vmatmul.bf16.gmra.mxu0 %v5767
      %v5825 = vpop.f32.mrf.mxu0
      %v5826 = vadd.f32 %v5736, %v5825
      %v5827 = vpop.f32.mrf.mxu0
      %v5828 = vadd.f32 %v5736, %v5827
      %5829 = vmatmul.bf16.gmra.mxu0 %v5770
      %v5830 = vpop.f32.mrf.mxu0
      %v5831 = vadd.f32 %v5736, %v5830
      %v5832 = vpop.f32.mrf.mxu0
      %v5833 = vadd.f32 %v5736, %v5832
      %5834 = vmatmul.bf16.gmra.mxu0 %v5773
      %v5835 = vpop.f32.mrf.mxu0
      %v5836 = vadd.f32 %v5736, %v5835
      %v5837 = vpop.f32.mrf.mxu0
      %v5838 = vadd.f32 %v5736, %v5837
      %5839 = vmatmul.bf16.gmra.mxu0 %v5776
      %v5840 = vpop.f32.mrf.mxu0
      %v5841 = vadd.f32 %v5736, %v5840
      %v5842 = vpop.f32.mrf.mxu0
      %v5843 = vadd.f32 %v5736, %v5842
      %5844 = vmatmul.bf16.gmra.mxu0 %v5779
      %v5845 = vpop.f32.mrf.mxu0
      %v5846 = vadd.f32 %v5736, %v5845
      %v5847 = vpop.f32.mrf.mxu0
      %v5848 = vadd.f32 %v5736, %v5847
      %5849 = vmatmul.bf16.gmra.mxu0 %v5782
      %v5850 = vpop.f32.mrf.mxu0
      %v5851 = vadd.f32 %v5736, %v5850
      %v5852 = vpop.f32.mrf.mxu0
      %v5853 = vadd.f32 %v5736, %v5852
      %5854 = vmatmul.bf16.gmra.mxu0 %v5785
      %v5855 = vpop.f32.mrf.mxu0
      %v5856 = vadd.f32 %v5736, %v5855
      %v5857 = vpop.f32.mrf.mxu0
      %v5858 = vadd.f32 %v5736, %v5857
      %5859 = vmatmul.bf16.gmra.mxu0 %v5788
      %v5860 = vpop.f32.mrf.mxu0
      %v5861 = vadd.f32 %v5736, %v5860
      %v5862 = vpop.f32.mrf.mxu0
      %v5863 = vadd.f32 %v5736, %v5862
      %5864 = vmatmul.bf16.gmra.mxu0 %v5791
      %v5865 = vpop.f32.mrf.mxu0
      %v5866 = vadd.f32 %v5736, %v5865
      %v5867 = vpop.f32.mrf.mxu0
      %v5868 = vadd.f32 %v5736, %v5867
      %5869 = vmatmul.bf16.gmra.mxu0 %v5794
      %v5870 = vpop.f32.mrf.mxu0
      %v5871 = vadd.f32 %v5736, %v5870
      %v5872 = vpop.f32.mrf.mxu0
      %v5873 = vadd.f32 %v5736, %v5872
      %5874 = vmatmul.bf16.gmra.mxu0 %v5797
      %v5875 = vpop.f32.mrf.mxu0
      %v5876 = vadd.f32 %v5736, %v5875
      %v5877 = vpop.f32.mrf.mxu0
      %v5878 = vadd.f32 %v5736, %v5877
      %5879 = vmatmul.bf16.gmra.mxu0 %v5800
      %v5880 = vpop.f32.mrf.mxu0
      %v5881 = vadd.f32 %v5736, %v5880
      %v5882 = vpop.f32.mrf.mxu0
      %v5883 = vadd.f32 %v5736, %v5882
      %5884 = vmatmul.bf16.gmra.mxu0 %v5803
      %v5885 = vpop.f32.mrf.mxu0
      %v5886 = vadd.f32 %v5736, %v5885
      %v5887 = vpop.f32.mrf.mxu0
      %v5888 = vadd.f32 %v5736, %v5887
      %5889 = vmatmul.bf16.gmra.mxu0 %v5806
      %v5890 = vpop.f32.mrf.mxu0
      %v5891 = vadd.f32 %v5736, %v5890
      %v5892 = vpop.f32.mrf.mxu0
      %v5893 = vadd.f32 %v5736, %v5892
      %5894 = vmatmul.bf16.gmra.mxu0 %v5809
      %v5895 = vpop.f32.mrf.mxu0
      %v5896 = vadd.f32 %v5736, %v5895
      %v5897 = vpop.f32.mrf.mxu0
      %v5898 = vadd.f32 %v5736, %v5897
      %5899 = vdwg.mxu0
      %v5900 = vld [vmem:[%s340] sm:$0xff]
      %v5901 = vld [vmem:[%s340 + $0x8] sm:$0xff]
      %v5902 = vld [vmem:[%s340 + $0x10] sm:$0xff]
      %v5903 = vld [vmem:[%s340 + $0x18] sm:$0xff]
      %v5904 = vld [vmem:[%s340 + $0x20] sm:$0xff]
      %v5905 = vld [vmem:[%s340 + $0x28] sm:$0xff]
      %v5906 = vld [vmem:[%s340 + $0x30] sm:$0xff]
      %v5907 = vld [vmem:[%s340 + $0x38] sm:$0xff]
      %v5908 = vld [vmem:[%s340 + $0x40] sm:$0xff]
      %v5909 = vld [vmem:[%s340 + $0x48] sm:$0xff]
      %v5910 = vld [vmem:[%s340 + $0x50] sm:$0xff]
      %v5911 = vld [vmem:[%s340 + $0x58] sm:$0xff]
      %v5912 = vld [vmem:[%s340 + $0x60] sm:$0xff]
      %v5913 = vld [vmem:[%s340 + $0x68] sm:$0xff]
      %v5914 = vld [vmem:[%s340 + $0x70] sm:$0xff]
      %v5915 = vld [vmem:[%s340 + $0x78] sm:$0xff]
      %v5916 = vld [vmem:[%s340 + $0x80] sm:$0xff]
      %v5917 = vld [vmem:[%s340 + $0x88] sm:$0xff]
      %v5918 = vld [vmem:[%s340 + $0x90] sm:$0xff]
      %v5919 = vld [vmem:[%s340 + $0x98] sm:$0xff]
      %v5920 = vld [vmem:[%s340 + $0xa0] sm:$0xff]
      %v5921 = vld [vmem:[%s340 + $0xa8] sm:$0xff]
      %v5922 = vld [vmem:[%s340 + $0xb0] sm:$0xff]
      %v5923 = vld [vmem:[%s340 + $0xb8] sm:$0xff]
      %v5924 = vld [vmem:[%s340 + $0xc0] sm:$0xff]
      %v5925 = vld [vmem:[%s340 + $0xc8] sm:$0xff]
      %v5926 = vld [vmem:[%s340 + $0xd0] sm:$0xff]
      %v5927 = vld [vmem:[%s340 + $0xd8] sm:$0xff]
      %v5928 = vld [vmem:[%s340 + $0xe0] sm:$0xff]
      %v5929 = vld [vmem:[%s340 + $0xe8] sm:$0xff]
      %v5930 = vld [vmem:[%s340 + $0xf0] sm:$0xff]
      %v5931 = vld [vmem:[%s340 + $0xf8] sm:$0xff]
      %v5932 = vadd.f32 %v5821, %v5900
      %v5933 = vadd.f32 %v5823, %v5901
      %v5934 = vadd.f32 %v5826, %v5902
      %v5935 = vadd.f32 %v5828, %v5903
      %v5936 = vadd.f32 %v5831, %v5904
      %v5937 = vadd.f32 %v5833, %v5905
      %v5938 = vadd.f32 %v5836, %v5906
      %v5939 = vadd.f32 %v5838, %v5907
      %v5940 = vadd.f32 %v5841, %v5908
      %v5941 = vadd.f32 %v5843, %v5909
      %v5942 = vadd.f32 %v5846, %v5910
      %v5943 = vadd.f32 %v5848, %v5911
      %v5944 = vadd.f32 %v5851, %v5912
      %v5945 = vadd.f32 %v5853, %v5913
      %v5946 = vadd.f32 %v5856, %v5914
      %v5947 = vadd.f32 %v5858, %v5915
      %v5948 = vadd.f32 %v5861, %v5916
      %v5949 = vadd.f32 %v5863, %v5917
      %v5950 = vadd.f32 %v5866, %v5918
      %v5951 = vadd.f32 %v5868, %v5919
      %v5952 = vadd.f32 %v5871, %v5920
      %v5953 = vadd.f32 %v5873, %v5921
      %v5954 = vadd.f32 %v5876, %v5922
      %v5955 = vadd.f32 %v5878, %v5923
      %v5956 = vadd.f32 %v5881, %v5924
      %v5957 = vadd.f32 %v5883, %v5925
      %v5958 = vadd.f32 %v5886, %v5926
      %v5959 = vadd.f32 %v5888, %v5927
      %v5960 = vadd.f32 %v5891, %v5928
      %v5961 = vadd.f32 %v5893, %v5929
      %v5962 = vadd.f32 %v5896, %v5930
      %v5963 = vadd.f32 %v5898, %v5931
      %5964 = vst.msk [vmem:[%s345] sm:$0xff] %vm415, %v5932
      %5965 = vst.msk [vmem:[%s345 + $0x8] sm:$0xff] %vm415, %v5933
      %5966 = vst.msk [vmem:[%s345 + $0x10] sm:$0xff] %vm415, %v5934
      %5967 = vst.msk [vmem:[%s345 + $0x18] sm:$0xff] %vm415, %v5935
      %5968 = vst.msk [vmem:[%s345 + $0x20] sm:$0xff] %vm415, %v5936
      %5969 = vst.msk [vmem:[%s345 + $0x28] sm:$0xff] %vm415, %v5937
      %5970 = vst.msk [vmem:[%s345 + $0x30] sm:$0xff] %vm415, %v5938
      %5971 = vst.msk [vmem:[%s345 + $0x38] sm:$0xff] %vm415, %v5939
      %5972 = vst.msk [vmem:[%s345 + $0x40] sm:$0xff] %vm415, %v5940
      %5973 = vst.msk [vmem:[%s345 + $0x48] sm:$0xff] %vm415, %v5941
      %5974 = vst.msk [vmem:[%s345 + $0x50] sm:$0xff] %vm415, %v5942
      %5975 = vst.msk [vmem:[%s345 + $0x58] sm:$0xff] %vm415, %v5943
      %5976 = vst.msk [vmem:[%s345 + $0x60] sm:$0xff] %vm415, %v5944
      %5977 = vst.msk [vmem:[%s345 + $0x68] sm:$0xff] %vm415, %v5945
      %5978 = vst.msk [vmem:[%s345 + $0x70] sm:$0xff] %vm415, %v5946
      %5979 = vst.msk [vmem:[%s345 + $0x78] sm:$0xff] %vm415, %v5947
      %5980 = vst.msk [vmem:[%s345 + $0x80] sm:$0xff] %vm415, %v5948
      %5981 = vst.msk [vmem:[%s345 + $0x88] sm:$0xff] %vm415, %v5949
      %5982 = vst.msk [vmem:[%s345 + $0x90] sm:$0xff] %vm415, %v5950
      %5983 = vst.msk [vmem:[%s345 + $0x98] sm:$0xff] %vm415, %v5951
      %5984 = vst.msk [vmem:[%s345 + $0xa0] sm:$0xff] %vm415, %v5952
      %5985 = vst.msk [vmem:[%s345 + $0xa8] sm:$0xff] %vm415, %v5953
      %5986 = vst.msk [vmem:[%s345 + $0xb0] sm:$0xff] %vm415, %v5954
      %5987 = vst.msk [vmem:[%s345 + $0xb8] sm:$0xff] %vm415, %v5955
      %5988 = vst.msk [vmem:[%s345 + $0xc0] sm:$0xff] %vm415, %v5956
      %5989 = vst.msk [vmem:[%s345 + $0xc8] sm:$0xff] %vm415, %v5957
      %5990 = vst.msk [vmem:[%s345 + $0xd0] sm:$0xff] %vm415, %v5958
      %5991 = vst.msk [vmem:[%s345 + $0xd8] sm:$0xff] %vm415, %v5959
      %5992 = vst.msk [vmem:[%s345 + $0xe0] sm:$0xff] %vm415, %v5960
      %5993 = vst.msk [vmem:[%s345 + $0xe8] sm:$0xff] %vm415, %v5961
      %5994 = vst.msk [vmem:[%s345 + $0xf0] sm:$0xff] %vm415, %v5962
      %5995 = vst.msk [vmem:[%s345 + $0xf8] sm:$0xff] %vm415, %v5963
      %p5996 = scmp.lt.s32.totalorder %s19, 1
      %s5997 = scalar_select %p5996, %s19, 1
      %s5998 = smul.addr %s5997, 32
      %s5999 = smul.addr %s5998, 8
      %s6000 = scalar_lea.vmem %s8, %s5999
      // Predicated region
      $region53: #{enhance_mhsa_forward.3} parent=51 // pred_check
        %p6001 = pneg %p220
      $region54: #{enhance_mhsa_forward.3} parent=51 // pred_check_branch
        %6003 = sbr.rel (%p6001) target = $region56
      $region55: #{enhance_mhsa_forward.3} parent=51 // pred_region
        _
      $region56: #{enhance_mhsa_forward.3} parent=51 // pred_fallthru
        _
    $region52: #{enhance_mhsa_forward.3} parent=5 // pred_fallthru
      _
    %p6004 = scmp.le.s32.totalorder 2, %s14
    // Predicated region
    $region57: #{enhance_mhsa_forward.3} parent=5 // pred_check
      %p6005 = pneg %p6004
    $region58: #{enhance_mhsa_forward.3} parent=5 // pred_check_branch
      %6007 = sbr.rel (%p6005) target = $region60
    $region59: #{enhance_mhsa_forward.3} parent=5 // pred_region
      %s6008 = ssub.s32 %s14, 2
      // Predicated region
      $region61: #{enhance_mhsa_forward.3} parent=59 // pred_check
        %p6009 = pneg %p226
      $region62: #{enhance_mhsa_forward.3} parent=59 // pred_check_branch
        %6011 = sbr.rel (%p6009) target = $region64
      $region63: #{enhance_mhsa_forward.3} parent=59 // pred_region
        %p6012 = scmp.lt.s32.totalorder %s20, 1
        %s6013 = scalar_select %p6012, %s20, 1
        %s6014 = smul.addr %s6013, 32
        %s6015 = smul.addr %s6014, 8
        %s6016 = scalar_lea.vmem %s8, %s6015
      $region64: #{enhance_mhsa_forward.3} parent=59 // pred_fallthru
        _
    $region60: #{enhance_mhsa_forward.3} parent=5 // pred_fallthru
      _
  $region6: #{enhance_mhsa_forward.3} parent=0 // loop_footer
    %s18 = sadd.s32 1, %s14
  $region7: #{enhance_mhsa_forward.3} parent=0 // loop_footer_branch
    %13 = sbr.rel target = $region3
  $region8: #{enhance_mhsa_forward.3} parent=0 // loop_exit
    _

</llo_original>
